<compile_context>
chip_gen: v7x
topology: tpu7x:2x2x1
jax: 0.10.0
libtpu: 0.0.40
codegen_flags: <defaults>
</compile_context>

<pallas_src>
import numpy as np
import jax
import jax.numpy as jnp
from jax import lax
from jax.experimental import pallas as pl
from jax.experimental.pallas import tpu as pltpu

LANE = 128                           # lane tile: pad H to a multiple of this
VMEM_LIMIT_BYTES = 48 * 1024 * 1024  # safe on v5e/v6e (128 MiB) and v7x (64 MiB)
TILE_VMEM_BUDGET = 36 * 1024 * 1024  # per-grid-step activation/scratch budget


def _round_up(x, m):
    return ((x + m - 1) // m) * m


def _full_spec(arr):
    return pl.BlockSpec(arr.shape, lambda i: (0,) * arr.ndim)


def _pick_row_tile(n, bytes_per_row, budget=TILE_VMEM_BUDGET):
    """Largest multiple-of-8 divisor of n fitting the VMEM budget; prefer >=2
    grid steps so v7x's two TensorCores both get work.  Falls back to n."""
    cands = [c for c in (512, 256, 128, 64, 32, 16, 8) if c <= n and n % c == 0]
    for c in cands:
        if c * bytes_per_row <= budget and n // c >= 2:
            return c
    for c in cands:
        if c * bytes_per_row <= budget:
            return c
    return cands[-1] if cands else n


# ----------------------------------------------------------------------------
# Fused bidirectional GRU layer kernel (both directions, one launch).
# x is time-major (T, N, Din); output is time-major (T, N, 2*Hp).
# Weight layout (pre-fused at init):
#   wi : (Din_p, 6*Hp) bf16  = [fwd r|z|n gates (3Hp) | bwd r|z|n gates (3Hp)]
#   bi : (1, 6*Hp) f32
#   whf/whb : (Hp, 3*Hp) bf16 ;  bhf/bhb : (1, 3*Hp) f32
# Padded lanes of the hidden state stay exactly zero (zero-padded weights).
# ----------------------------------------------------------------------------
def bigru_kernel(x_ref, wi_ref, bi_ref, whf_ref, bhf_ref, whb_ref, bhb_ref,
                 out_ref, gif_ref, gib_ref):
    T, N, Din = x_ref.shape
    Hp3 = whf_ref.shape[1]
    Hp = Hp3 // 3
    f32 = jnp.float32
    bf16 = jnp.bfloat16

    # Hoisted input projection for all timesteps and BOTH directions:
    # one (T*N, Din) x (Din, 6Hp) bf16 matmul, f32 accumulate, biases folded in.
    x2 = x_ref[...].reshape(T * N, Din).astype(bf16)
    proj = jnp.dot(x2, wi_ref[...], preferred_element_type=f32) + bi_ref[...]
    gif_ref[...] = proj[:, :Hp3].reshape(T, N, Hp3)   # lane-aligned split
    gib_ref[...] = proj[:, Hp3:].reshape(T, N, Hp3)

    # Hoist hidden-bias broadcasts (JAX does not CSE broadcast_in_dim) and the
    # bf16 hidden weights out of the serial loop.
    bhf = jnp.broadcast_to(bhf_ref[...], (N, Hp3))
    bhb = jnp.broadcast_to(bhb_ref[...], (N, Hp3))
    whf = whf_ref[...]
    whb = whb_ref[...]

    def gru_cell(gi, h, wh, bh):
        # gi already contains W_i x + b_i for the r|z|n gates (lane-aligned blocks).
        gh = jnp.dot(h.astype(bf16), wh, preferred_element_type=f32) + bh   # (N,3Hp)
        r = jax.nn.sigmoid(gi[:, :Hp] + gh[:, :Hp])
        z = jax.nn.sigmoid(gi[:, Hp:2 * Hp] + gh[:, Hp:2 * Hp])
        n = jnp.tanh(gi[:, 2 * Hp:] + r * gh[:, 2 * Hp:])
        return (1.0 - z) * n + z * h                                        # PyTorch

    def step(t, carry):
        h_f, h_b = carry
        # forward direction processes input time t
        h_f = gru_cell(gif_ref[t], h_f, whf, bhf)
        out_ref[t, :, :Hp] = h_f                  # lane-aligned dense store
        # backward direction processes input time T-1-t
        tb = T - 1 - t
        h_b = gru_cell(gib_ref[tb], h_b, whb, bhb)
        out_ref[tb, :, Hp:2 * Hp] = h_b           # lane-aligned dense store
        return (h_f, h_b)

    h0 = jnp.zeros((N, Hp), f32)
    lax.fori_loop(0, T, step, (h0, h0), unroll=min(T, 8))


def bigru_layer_tm(x_tnd, p):
    """x_tnd: (T, N, Din) time-major -> (T, N, 2*Hp) time-major."""
    T, N, Din = x_tnd.shape
    Hp = p["whf"].shape[0]
    Hp3 = 3 * Hp

    # Rough per-batch-row VMEM: double-buffered in/out blocks + gate scratch + temp.
    bytes_per_row = 4 * T * (2 * Din + 4 * Hp + 12 * Hp)
    bn = _pick_row_tile(N, bytes_per_row)

    ce = pl.CostEstimate(
        flops=int(2 * T * N * Din * 6 * Hp           # fused input projection
                  + 4 * T * N * Hp * Hp3             # fwd+bwd hidden matmuls
                  + 14 * T * N * Hp),                # gate elementwise
        transcendentals=int(6 * T * N * Hp),         # 2x sigmoid + tanh per dir
        bytes_accessed=int(4 * T * N * (Din + 2 * Hp)
                           + 2 * (Din * 6 * Hp + 2 * Hp * Hp3) + 36 * Hp))

    return pl.pallas_call(
        bigru_kernel,
        out_shape=jax.ShapeDtypeStruct((T, N, 2 * Hp), jnp.float32),
        grid=(N // bn,),
        in_specs=[pl.BlockSpec((T, bn, Din), lambda i: (0, i, 0)),
                  _full_spec(p["wi"]), _full_spec(p["bi"]),
                  _full_spec(p["whf"]), _full_spec(p["bhf"]),
                  _full_spec(p["whb"]), _full_spec(p["bhb"])],
        out_specs=pl.BlockSpec((T, bn, 2 * Hp), lambda i: (0, i, 0)),
        scratch_shapes=[pltpu.VMEM((T, bn, Hp3), jnp.float32),   # fwd input gates
                        pltpu.VMEM((T, bn, Hp3), jnp.float32)],  # bwd input gates
        compiler_params=pltpu.CompilerParams(
            dimension_semantics=("parallel",),          # batch axis across TCs
            vmem_limit_bytes=VMEM_LIMIT_BYTES),
        cost_estimate=ce,
    )(x_tnd, p["wi"], p["bi"], p["whf"], p["bhf"], p["whb"], p["bhb"])


def bigru_stack(x_ntd, layers):
    """(N, T, Din) batch-major -> (N, T, 2*Hp); time-major internally (one
    transpose in, one out, instead of two per layer)."""
    h = jnp.transpose(x_ntd, (1, 0, 2))
    for lp in layers:
        h = bigru_layer_tm(h, lp)
        # TODO(synk): nn.GRU inter-layer dropout (p=0.5) omitted (eval semantics).
    return jnp.transpose(h, (1, 0, 2))


# ----------------------------------------------------------------------------
# Word-level SeqAttentionLayer kernel: tanh(xW+b).u -> softmax over seq -> sum.
# Gridded over rows; scores kept lane-major as (n, T), softmax over last axis.
# ----------------------------------------------------------------------------
def attention_kernel(x_ref, w_ref, b_ref, u_ref, out_ref):
    n, t, d = x_ref.shape
    a = w_ref.shape[1]
    f32 = jnp.float32
    x = x_ref[...]
    x2 = x.reshape(n * t, d).astype(jnp.bfloat16)
    att = jnp.tanh(jnp.dot(x2, w_ref[...], preferred_element_type=f32)
                   + b_ref[...])                                        # (n*t, a)
    scores = jnp.sum(att.reshape(n, t, a) * u_ref[...][None], axis=-1)  # (n, t)
    m = jnp.max(scores, axis=-1, keepdims=True)
    e = jnp.exp(scores - m)
    wgt = e / jnp.sum(e, axis=-1, keepdims=True)                        # exact softmax
    out_ref[...] = jnp.sum(x * wgt[:, :, None], axis=1)                 # (n, d)


def run_attention(x_ntd, p):
    N, T, D = x_ntd.shape
    bytes_per_row = 4 * (2 * T * D + 2 * D)
    bn = _pick_row_tile(N, bytes_per_row)
    return pl.pallas_call(
        attention_kernel,
        out_shape=jax.ShapeDtypeStruct((N, D), jnp.float32),
        grid=(N // bn,),
        in_specs=[pl.BlockSpec((bn, T, D), lambda i: (i, 0, 0)),
                  _full_spec(p["w"]), _full_spec(p["b"]), _full_spec(p["u"])],
        out_specs=pl.BlockSpec((bn, D), lambda i: (i, 0)),
        compiler_params=pltpu.CompilerParams(
            dimension_semantics=("parallel",),
            vmem_limit_bytes=VMEM_LIMIT_BYTES),
    )(x_ntd, p["w"], p["b"], p["u"])


# ----------------------------------------------------------------------------
# Fused sentence attention + Linear head + log_softmax (one launch, gridded).
# ----------------------------------------------------------------------------
def att_head_kernel(x_ref, w_ref, b_ref, u_ref, wf_ref, bf_ref, out_ref):
    n, t, d = x_ref.shape
    a = w_ref.shape[1]
    f32 = jnp.float32
    x = x_ref[...]
    x2 = x.reshape(n * t, d).astype(jnp.bfloat16)
    att = jnp.tanh(jnp.dot(x2, w_ref[...], preferred_element_type=f32)
                   + b_ref[...])                                        # (n*t, a)
    scores = jnp.sum(att.reshape(n, t, a) * u_ref[...][None], axis=-1)  # (n, t)
    m = jnp.max(scores, axis=-1, keepdims=True)
    e = jnp.exp(scores - m)
    wgt = e / jnp.sum(e, axis=-1, keepdims=True)
    doc_vec = jnp.sum(x * wgt[:, :, None], axis=1)                      # (n, d)
    logits = jnp.dot(doc_vec, wf_ref[...], preferred_element_type=f32) + bf_ref[...]
    mm = jnp.max(logits, axis=-1, keepdims=True)
    s = logits - mm
    lse = jnp.log(jnp.sum(jnp.exp(s), axis=-1, keepdims=True))
    out_ref[...] = s - lse                                              # log-probs


def run_att_head(x_ntd, att_p, fn_p):
    N, T, D = x_ntd.shape
    nclass = fn_p["w"].shape[1]
    bytes_per_row = 4 * (2 * T * D + 2 * nclass)
    bn = _pick_row_tile(N, bytes_per_row)
    return pl.pallas_call(
        att_head_kernel,
        out_shape=jax.ShapeDtypeStruct((N, nclass), jnp.float32),
        grid=(N // bn,),
        in_specs=[pl.BlockSpec((bn, T, D), lambda i: (i, 0, 0)),
                  _full_spec(att_p["w"]), _full_spec(att_p["b"]),
                  _full_spec(att_p["u"]),
                  _full_spec(fn_p["w"]), _full_spec(fn_p["b"])],
        out_specs=pl.BlockSpec((bn, nclass), lambda i: (i, 0)),
        compiler_params=pltpu.CompilerParams(
            dimension_semantics=("parallel",),
            vmem_limit_bytes=VMEM_LIMIT_BYTES),
    )(x_ntd, att_p["w"], att_p["b"], att_p["u"], fn_p["w"], fn_p["b"])


# ----------------------------------------------------------------------------
# Deterministic parameter construction (synthetic, mirrors module shapes).
# Unpadded weights are drawn exactly as before, then zero-padded to the
# lane-aligned (Hp) layout; the padded computation is mathematically identical
# to the unpadded module (padded hidden lanes stay exactly zero).
# ----------------------------------------------------------------------------
def _uniform(key, shape, scale):
    return jax.random.uniform(key, shape, jnp.float32, -scale, scale)


def _pad_gate_cols(w, h, hp):
    """(..., 3h) with r|z|n column blocks -> (..., 3hp), blocks at 0/hp/2hp."""
    if hp == h:
        return w
    pads = [(0, 0)] * (w.ndim - 1) + [(0, hp - h)]
    blocks = [jnp.pad(w[..., g * h:(g + 1) * h], pads) for g in range(3)]
    return jnp.concatenate(blocks, axis=-1)


def _pad_bidir_rows(w, h, hp):
    """(2h, C) rows laid out [fwd h | bwd h] -> (2hp, C) with zero pad rows."""
    if hp == h:
        return w
    z = jnp.zeros((hp - h, w.shape[1]), w.dtype)
    return jnp.concatenate([w[:h], z, w[h:], z], axis=0)


def init_gru_dir(key, din, h):
    ks = jax.random.split(key, 4)
    s = 1.0 / np.sqrt(h)
    return dict(wi=_uniform(ks[0], (din, 3 * h), s),
                wh=_uniform(ks[1], (h, 3 * h), s),
                bi=_uniform(ks[2], (1, 3 * h), s),
                bh=_uniform(ks[3], (1, 3 * h), s))


def init_bigru_layer(key, din, h, hp, input_bidir_padded):
    kf, kb = jax.random.split(key)

    def pad_dir(d):
        wi = _pad_gate_cols(d["wi"], h, hp)                    # (din, 3hp)
        if input_bidir_padded:                                 # din == 2h here
            wi = _pad_bidir_rows(wi, h, hp)                    # (2hp, 3hp)
        wh = _pad_gate_cols(jnp.pad(d["wh"], [(0, hp - h), (0, 0)]), h, hp)
        bi = _pad_gate_cols(d["bi"], h, hp)
        bh = _pad_gate_cols(d["bh"], h, hp)
        return wi, wh, bi, bh

    wif, whf, bif, bhf = pad_dir(init_gru_dir(kf, din, h))
    wib, whb, bib, bhb = pad_dir(init_gru_dir(kb, din, h))
    return dict(
        wi=jnp.concatenate([wif, wib], axis=1).astype(jnp.bfloat16),  # (din_p, 6hp)
        bi=jnp.concatenate([bif, bib], axis=1),                       # (1, 6hp) f32
        whf=whf.astype(jnp.bfloat16), bhf=bhf,
        whb=whb.astype(jnp.bfloat16), bhb=bhb)


def init_bigru(key, din, h, hp, num_layers=2, input_bidir_padded=False):
    layers, k = [], key
    in_dim, in_bidir = din, input_bidir_padded
    for _ in range(num_layers):
        k, kl = jax.random.split(k)
        layers.append(init_bigru_layer(kl, in_dim, h, hp, in_bidir))
        in_dim, in_bidir = 2 * h, True
    return layers


def init_attention(key, h, hp, attention_size):
    k1, k2, k3 = jax.random.split(key, 3)
    input_dim = 2 * h
    s = 1.0 / np.sqrt(input_dim)
    w = _pad_bidir_rows(_uniform(k1, (input_dim, attention_size), s), h, hp)
    return dict(w=w.astype(jnp.bfloat16),
                b=_uniform(k2, (1, attention_size), s),
                u=_uniform(k3, (1, attention_size), 1.0 / np.sqrt(attention_size)))


def init_linear(key, h, hp, dout):
    k1, k2 = jax.random.split(key)
    din = 2 * h
    s = 1.0 / np.sqrt(din)
    w = _pad_bidir_rows(_uniform(k1, (din, dout), s), h, hp)
    return dict(w=w, b=_uniform(k2, (1, dout), s))


def init_han_params(key, vocab_size, emb_dim, hidden, num_sentences, num_words, nclass):
    hp = _round_up(hidden, LANE)
    k_emb, k_wrnn, k_watt, k_srnn, k_satt, k_fn = jax.random.split(key, 6)
    return dict(
        embedding=jax.random.normal(k_emb, (vocab_size, emb_dim), jnp.float32),
        word_rnn=init_bigru(k_wrnn, emb_dim, hidden, hp, num_layers=2,
                            input_bidir_padded=False),
        word_att=init_attention(k_watt, hidden, hp, num_words),
        sentence_rnn=init_bigru(k_srnn, 2 * hidden, hidden, hp, num_layers=2,
                                input_bidir_padded=True),
        sentence_att=init_attention(k_satt, hidden, hp, num_sentences),
        fn=init_linear(k_fn, hidden, hp, nclass))


# ----------------------------------------------------------------------------
# Full HanClassifier.forward
# ----------------------------------------------------------------------------
def han_forward(doc_input, params):
    assert doc_input.ndim == 3, "input is not hierarchical sequence"
    B, S, W = doc_input.shape
    emb = params["embedding"][doc_input]              # (B, S, W, E) gather (glue op)
    E = emb.shape[-1]
    x = emb.reshape(B * S, W, E)                      # TimeDistributed flatten
    word_seq = bigru_stack(x, params["word_rnn"])             # (B*S, W, 2Hp)
    sent_vec = run_attention(word_seq, params["word_att"])    # (B*S, 2Hp)
    doc_encoded = sent_vec.reshape(B, S, -1)                  # (B, S, 2Hp)
    sent_seq = bigru_stack(doc_encoded, params["sentence_rnn"])   # (B, S, 2Hp)
    # sentence attention + Linear + log_softmax fused into one kernel
    return run_att_head(sent_seq, params["sentence_att"], params["fn"])


if __name__ == "__main__":
    B, S, W = 2, 4, 6            # batch, num_sentences, num_words
    vocab, E, H, nclass = 50, 16, 8, 4
    key = jax.random.PRNGKey(0)
    k_params, k_inp = jax.random.split(key)
    params = init_han_params(k_params, vocab, E, H,
                             num_sentences=S, num_words=W, nclass=nclass)
    doc_input = jax.random.randint(k_inp, (B, S, W), 0, vocab, dtype=jnp.int32)

    out = jax.jit(han_forward)(doc_input, params)
    jax.block_until_ready(out)
    assert out.shape == (B, nclass)
    assert bool(jnp.all(jnp.isfinite(out)))
    print("KERNEL_OK")
</pallas_src>

<mosaic_0001>
module attributes {stable_mosaic.version = 11 : i64} {
  func.func @bigru_kernel(%arg0: i32, %arg1: memref<6x8x16xf32, #tpu.memory_space<vmem>>, %arg2: memref<16x768xbf16, #tpu.memory_space<vmem>>, %arg3: memref<1x768xf32, #tpu.memory_space<vmem>>, %arg4: memref<128x384xbf16, #tpu.memory_space<vmem>>, %arg5: memref<1x384xf32, #tpu.memory_space<vmem>>, %arg6: memref<128x384xbf16, #tpu.memory_space<vmem>>, %arg7: memref<1x384xf32, #tpu.memory_space<vmem>>, %arg8: memref<6x8x256xf32, #tpu.memory_space<vmem>>, %arg9: memref<6x8x384xf32, #tpu.memory_space<vmem>>, %arg10: memref<6x8x384xf32, #tpu.memory_space<vmem>>) attributes {dimension_semantics = [#tpu.dimension_semantics<parallel>], iteration_bounds = array<i64: 1>, scalar_prefetch = 0 : i64, scratch_operands = 2 : i64, tpu.core_type = #tpu.core_type<tc>, window_params = [{transform_indices = @transform_0, window_bounds = array<i64: 6, 8, 16>}, {pipeline_mode = #tpu.pipeline_mode<synchronous>, transform_indices = @transform_1, window_bounds = array<i64: 16, 768>}, {pipeline_mode = #tpu.pipeline_mode<synchronous>, transform_indices = @transform_2, window_bounds = array<i64: 1, 768>}, {pipeline_mode = #tpu.pipeline_mode<synchronous>, transform_indices = @transform_3, window_bounds = array<i64: 128, 384>}, {pipeline_mode = #tpu.pipeline_mode<synchronous>, transform_indices = @transform_4, window_bounds = array<i64: 1, 384>}, {pipeline_mode = #tpu.pipeline_mode<synchronous>, transform_indices = @transform_5, window_bounds = array<i64: 128, 384>}, {pipeline_mode = #tpu.pipeline_mode<synchronous>, transform_indices = @transform_6, window_bounds = array<i64: 1, 384>}, {transform_indices = @transform_7, window_bounds = array<i64: 6, 8, 256>}]} {
    %c0 = arith.constant 0 : index
    %c0_0 = arith.constant 0 : index
    %c0_1 = arith.constant 0 : index
    %0 = vector.load %arg1[%c0, %c0_0, %c0_1] : memref<6x8x16xf32, #tpu.memory_space<vmem>>, vector<6x8x16xf32>
    %1 = vector.shape_cast %0 : vector<6x8x16xf32> to vector<48x16xf32>
    %2 = arith.truncf %1 : vector<48x16xf32> to vector<48x16xbf16>
    %c0_2 = arith.constant 0 : index
    %c0_3 = arith.constant 0 : index
    %3 = vector.load %arg2[%c0_2, %c0_3] : memref<16x768xbf16, #tpu.memory_space<vmem>>, vector<16x768xbf16>
    %cst = arith.constant dense<0.000000e+00> : vector<48x768xf32>
    %4 = tpu.matmul %2, %3, %cst {dimension_numbers = #tpu.dot_dimension_numbers<[1], [0], [0], [1], [0, 0, 1, 1], [], []>} : vector<48x16xbf16>, vector<16x768xbf16>, vector<48x768xf32> -> vector<48x768xf32>
    %c0_4 = arith.constant 0 : index
    %c0_5 = arith.constant 0 : index
    %5 = vector.load %arg3[%c0_4, %c0_5] : memref<1x768xf32, #tpu.memory_space<vmem>>, vector<1x768xf32>
    %6 = vector.broadcast %5 : vector<1x768xf32> to vector<48x768xf32>
    %7 = arith.addf %4, %6 : vector<48x768xf32>
    %8 = vector.extract_strided_slice %7 {offsets = [0, 0], sizes = [48, 384], strides = [1, 1]} : vector<48x768xf32> to vector<48x384xf32>
    %9 = vector.shape_cast %8 : vector<48x384xf32> to vector<6x8x384xf32>
    %c0_6 = arith.constant 0 : index
    %c0_7 = arith.constant 0 : index
    %c0_8 = arith.constant 0 : index
    %10 = vector.load %arg9[%c0_6, %c0_7, %c0_8] : memref<6x8x384xf32, #tpu.memory_space<vmem>>, vector<6x8x384xf32>
    tpu.vector_store %arg9[%c0_6, %c0_7, %c0_8], %9 {strides = array<i32>} : memref<6x8x384xf32, #tpu.memory_space<vmem>>, vector<6x8x384xf32>,
    %11 = vector.extract_strided_slice %7 {offsets = [0, 384], sizes = [48, 384], strides = [1, 1]} : vector<48x768xf32> to vector<48x384xf32>
    %12 = vector.shape_cast %11 : vector<48x384xf32> to vector<6x8x384xf32>
    %c0_9 = arith.constant 0 : index
    %c0_10 = arith.constant 0 : index
    %c0_11 = arith.constant 0 : index
    %13 = vector.load %arg10[%c0_9, %c0_10, %c0_11] : memref<6x8x384xf32, #tpu.memory_space<vmem>>, vector<6x8x384xf32>
    tpu.vector_store %arg10[%c0_9, %c0_10, %c0_11], %12 {strides = array<i32>} : memref<6x8x384xf32, #tpu.memory_space<vmem>>, vector<6x8x384xf32>,
    %c0_12 = arith.constant 0 : index
    %c0_13 = arith.constant 0 : index
    %14 = vector.load %arg5[%c0_12, %c0_13] : memref<1x384xf32, #tpu.memory_space<vmem>>, vector<1x384xf32>
    %15 = vector.shape_cast %14 : vector<1x384xf32> to vector<1x384xf32>
    %16 = vector.broadcast %15 : vector<1x384xf32> to vector<8x384xf32>
    %c0_14 = arith.constant 0 : index
    %c0_15 = arith.constant 0 : index
    %17 = vector.load %arg7[%c0_14, %c0_15] : memref<1x384xf32, #tpu.memory_space<vmem>>, vector<1x384xf32>
    %18 = vector.shape_cast %17 : vector<1x384xf32> to vector<1x384xf32>
    %19 = vector.broadcast %18 : vector<1x384xf32> to vector<8x384xf32>
    %c0_16 = arith.constant 0 : index
    %c0_17 = arith.constant 0 : index
    %20 = vector.load %arg4[%c0_16, %c0_17] : memref<128x384xbf16, #tpu.memory_space<vmem>>, vector<128x384xbf16>
    %c0_18 = arith.constant 0 : index
    %c0_19 = arith.constant 0 : index
    %21 = vector.load %arg6[%c0_18, %c0_19] : memref<128x384xbf16, #tpu.memory_space<vmem>>, vector<128x384xbf16>
    %cst_20 = arith.constant 0.000000e+00 : f32
    %22 = vector.broadcast %cst_20 : f32 to vector<8x128xf32>
    %c0_i32 = arith.constant 0 : i32
    %23 = arith.index_cast %c0_i32 : i32 to index
    %c0_21 = arith.constant 0 : index
    %c0_22 = arith.constant 0 : index
    %24 = vector.load %arg9[%23, %c0_21, %c0_22] : memref<6x8x384xf32, #tpu.memory_space<vmem>>, vector<1x8x384xf32>
    %25 = vector.shape_cast %24 : vector<1x8x384xf32> to vector<8x384xf32>
    %26 = arith.truncf %22 : vector<8x128xf32> to vector<8x128xbf16>
    %cst_23 = arith.constant dense<0.000000e+00> : vector<8x384xf32>
    %27 = tpu.matmul %26, %20, %cst_23 {dimension_numbers = #tpu.dot_dimension_numbers<[1], [0], [0], [1], [0, 0, 1, 1], [], []>} : vector<8x128xbf16>, vector<128x384xbf16>, vector<8x384xf32> -> vector<8x384xf32>
    %28 = arith.addf %27, %16 : vector<8x384xf32>
    %29 = vector.extract_strided_slice %25 {offsets = [0, 0], sizes = [8, 128], strides = [1, 1]} : vector<8x384xf32> to vector<8x128xf32>
    %30 = vector.extract_strided_slice %28 {offsets = [0, 0], sizes = [8, 128], strides = [1, 1]} : vector<8x384xf32> to vector<8x128xf32>
    %31 = arith.addf %29, %30 : vector<8x128xf32>
    %32 = arith.negf %31 : vector<8x128xf32>
    %33 = math.exp %32 : vector<8x128xf32>
    %cst_24 = arith.constant 1.000000e+00 : f32
    %34 = vector.broadcast %cst_24 : f32 to vector<8x128xf32>
    %35 = arith.addf %34, %33 : vector<8x128xf32>
    %36 = arith.divf %34, %35 : vector<8x128xf32>
    %37 = vector.extract_strided_slice %25 {offsets = [0, 128], sizes = [8, 128], strides = [1, 1]} : vector<8x384xf32> to vector<8x128xf32>
    %38 = vector.extract_strided_slice %28 {offsets = [0, 128], sizes = [8, 128], strides = [1, 1]} : vector<8x384xf32> to vector<8x128xf32>
    %39 = arith.addf %37, %38 : vector<8x128xf32>
    %40 = arith.negf %39 : vector<8x128xf32>
    %41 = math.exp %40 : vector<8x128xf32>
    %cst_25 = arith.constant 1.000000e+00 : f32
    %42 = vector.broadcast %cst_25 : f32 to vector<8x128xf32>
    %43 = arith.addf %42, %41 : vector<8x128xf32>
    %44 = arith.divf %42, %43 : vector<8x128xf32>
    %45 = vector.extract_strided_slice %25 {offsets = [0, 256], sizes = [8, 128], strides = [1, 1]} : vector<8x384xf32> to vector<8x128xf32>
    %46 = vector.extract_strided_slice %28 {offsets = [0, 256], sizes = [8, 128], strides = [1, 1]} : vector<8x384xf32> to vector<8x128xf32>
    %47 = arith.mulf %36, %46 : vector<8x128xf32>
    %48 = arith.addf %45, %47 : vector<8x128xf32>
    %49 = math.tanh %48 : vector<8x128xf32>
    %cst_26 = arith.constant 1.000000e+00 : f32
    %50 = vector.broadcast %cst_26 : f32 to vector<8x128xf32>
    %51 = arith.subf %50, %44 : vector<8x128xf32>
    %52 = arith.mulf %51, %49 : vector<8x128xf32>
    %53 = arith.mulf %44, %22 : vector<8x128xf32>
    %54 = arith.addf %52, %53 : vector<8x128xf32>
    %55 = arith.index_cast %c0_i32 : i32 to index
    %c0_27 = arith.constant 0 : index
    %c0_28 = arith.constant 0 : index
    %56 = vector.load %arg8[%55, %c0_27, %c0_28] : memref<6x8x256xf32, #tpu.memory_space<vmem>>, vector<1x8x128xf32>
    %57 = vector.shape_cast %56 : vector<1x8x128xf32> to vector<8x128xf32>
    %58 = vector.shape_cast %54 : vector<8x128xf32> to vector<1x8x128xf32>
    tpu.vector_store %arg8[%55, %c0_27, %c0_28], %58 {strides = array<i32>} : memref<6x8x256xf32, #tpu.memory_space<vmem>>, vector<1x8x128xf32>,
    %c5_i32 = arith.constant 5 : i32
    %59 = arith.subi %c5_i32, %c0_i32 : i32
    %60 = arith.index_cast %59 : i32 to index
    %c0_29 = arith.constant 0 : index
    %c0_30 = arith.constant 0 : index
    %61 = vector.load %arg10[%60, %c0_29, %c0_30] : memref<6x8x384xf32, #tpu.memory_space<vmem>>, vector<1x8x384xf32>
    %62 = vector.shape_cast %61 : vector<1x8x384xf32> to vector<8x384xf32>
    %63 = arith.truncf %22 : vector<8x128xf32> to vector<8x128xbf16>
    %cst_31 = arith.constant dense<0.000000e+00> : vector<8x384xf32>
    %64 = tpu.matmul %63, %21, %cst_31 {dimension_numbers = #tpu.dot_dimension_numbers<[1], [0], [0], [1], [0, 0, 1, 1], [], []>} : vector<8x128xbf16>, vector<128x384xbf16>, vector<8x384xf32> -> vector<8x384xf32>
    %65 = arith.addf %64, %19 : vector<8x384xf32>
    %66 = vector.extract_strided_slice %62 {offsets = [0, 0], sizes = [8, 128], strides = [1, 1]} : vector<8x384xf32> to vector<8x128xf32>
    %67 = vector.extract_strided_slice %65 {offsets = [0, 0], sizes = [8, 128], strides = [1, 1]} : vector<8x384xf32> to vector<8x128xf32>
    %68 = arith.addf %66, %67 : vector<8x128xf32>
    %69 = arith.negf %68 : vector<8x128xf32>
    %70 = math.exp %69 : vector<8x128xf32>
    %cst_32 = arith.constant 1.000000e+00 : f32
    %71 = vector.broadcast %cst_32 : f32 to vector<8x128xf32>
    %72 = arith.addf %71, %70 : vector<8x128xf32>
    %73 = arith.divf %71, %72 : vector<8x128xf32>
    %74 = vector.extract_strided_slice %62 {offsets = [0, 128], sizes = [8, 128], strides = [1, 1]} : vector<8x384xf32> to vector<8x128xf32>
    %75 = vector.extract_strided_slice %65 {offsets = [0, 128], sizes = [8, 128], strides = [1, 1]} : vector<8x384xf32> to vector<8x128xf32>
    %76 = arith.addf %74, %75 : vector<8x128xf32>
    %77 = arith.negf %76 : vector<8x128xf32>
    %78 = math.exp %77 : vector<8x128xf32>
    %cst_33 = arith.constant 1.000000e+00 : f32
    %79 = vector.broadcast %cst_33 : f32 to vector<8x128xf32>
    %80 = arith.addf %79, %78 : vector<8x128xf32>
    %81 = arith.divf %79, %80 : vector<8x128xf32>
    %82 = vector.extract_strided_slice %62 {offsets = [0, 256], sizes = [8, 128], strides = [1, 1]} : vector<8x384xf32> to vector<8x128xf32>
    %83 = vector.extract_strided_slice %65 {offsets = [0, 256], sizes = [8, 128], strides = [1, 1]} : vector<8x384xf32> to vector<8x128xf32>
    %84 = arith.mulf %73, %83 : vector<8x128xf32>
    %85 = arith.addf %82, %84 : vector<8x128xf32>
    %86 = math.tanh %85 : vector<8x128xf32>
    %cst_34 = arith.constant 1.000000e+00 : f32
    %87 = vector.broadcast %cst_34 : f32 to vector<8x128xf32>
    %88 = arith.subf %87, %81 : vector<8x128xf32>
    %89 = arith.mulf %88, %86 : vector<8x128xf32>
    %90 = arith.mulf %81, %22 : vector<8x128xf32>
    %91 = arith.addf %89, %90 : vector<8x128xf32>
    %92 = arith.index_cast %59 : i32 to index
    %c0_35 = arith.constant 0 : index
    %c128 = arith.constant 128 : index
    %93 = vector.load %arg8[%92, %c0_35, %c128] : memref<6x8x256xf32, #tpu.memory_space<vmem>>, vector<1x8x128xf32>
    %94 = vector.shape_cast %93 : vector<1x8x128xf32> to vector<8x128xf32>
    %95 = vector.shape_cast %91 : vector<8x128xf32> to vector<1x8x128xf32>
    tpu.vector_store %arg8[%92, %c0_35, %c128], %95 {strides = array<i32>} : memref<6x8x256xf32, #tpu.memory_space<vmem>>, vector<1x8x128xf32>,
    %c1_i32 = arith.constant 1 : i32
    %96 = arith.index_cast %c1_i32 : i32 to index
    %c0_36 = arith.constant 0 : index
    %c0_37 = arith.constant 0 : index
    %97 = vector.load %arg9[%96, %c0_36, %c0_37] : memref<6x8x384xf32, #tpu.memory_space<vmem>>, vector<1x8x384xf32>
    %98 = vector.shape_cast %97 : vector<1x8x384xf32> to vector<8x384xf32>
    %99 = arith.truncf %54 : vector<8x128xf32> to vector<8x128xbf16>
    %cst_38 = arith.constant dense<0.000000e+00> : vector<8x384xf32>
    %100 = tpu.matmul %99, %20, %cst_38 {dimension_numbers = #tpu.dot_dimension_numbers<[1], [0], [0], [1], [0, 0, 1, 1], [], []>} : vector<8x128xbf16>, vector<128x384xbf16>, vector<8x384xf32> -> vector<8x384xf32>
    %101 = arith.addf %100, %16 : vector<8x384xf32>
    %102 = vector.extract_strided_slice %98 {offsets = [0, 0], sizes = [8, 128], strides = [1, 1]} : vector<8x384xf32> to vector<8x128xf32>
    %103 = vector.extract_strided_slice %101 {offsets = [0, 0], sizes = [8, 128], strides = [1, 1]} : vector<8x384xf32> to vector<8x128xf32>
    %104 = arith.addf %102, %103 : vector<8x128xf32>
    %105 = arith.negf %104 : vector<8x128xf32>
    %106 = math.exp %105 : vector<8x128xf32>
    %cst_39 = arith.constant 1.000000e+00 : f32
    %107 = vector.broadcast %cst_39 : f32 to vector<8x128xf32>
    %108 = arith.addf %107, %106 : vector<8x128xf32>
    %109 = arith.divf %107, %108 : vector<8x128xf32>
    %110 = vector.extract_strided_slice %98 {offsets = [0, 128], sizes = [8, 128], strides = [1, 1]} : vector<8x384xf32> to vector<8x128xf32>
    %111 = vector.extract_strided_slice %101 {offsets = [0, 128], sizes = [8, 128], strides = [1, 1]} : vector<8x384xf32> to vector<8x128xf32>
    %112 = arith.addf %110, %111 : vector<8x128xf32>
    %113 = arith.negf %112 : vector<8x128xf32>
    %114 = math.exp %113 : vector<8x128xf32>
    %cst_40 = arith.constant 1.000000e+00 : f32
    %115 = vector.broadcast %cst_40 : f32 to vector<8x128xf32>
    %116 = arith.addf %115, %114 : vector<8x128xf32>
    %117 = arith.divf %115, %116 : vector<8x128xf32>
    %118 = vector.extract_strided_slice %98 {offsets = [0, 256], sizes = [8, 128], strides = [1, 1]} : vector<8x384xf32> to vector<8x128xf32>
    %119 = vector.extract_strided_slice %101 {offsets = [0, 256], sizes = [8, 128], strides = [1, 1]} : vector<8x384xf32> to vector<8x128xf32>
    %120 = arith.mulf %109, %119 : vector<8x128xf32>
    %121 = arith.addf %118, %120 : vector<8x128xf32>
    %122 = math.tanh %121 : vector<8x128xf32>
    %cst_41 = arith.constant 1.000000e+00 : f32
    %123 = vector.broadcast %cst_41 : f32 to vector<8x128xf32>
    %124 = arith.subf %123, %117 : vector<8x128xf32>
    %125 = arith.mulf %124, %122 : vector<8x128xf32>
    %126 = arith.mulf %117, %54 : vector<8x128xf32>
    %127 = arith.addf %125, %126 : vector<8x128xf32>
    %128 = arith.index_cast %c1_i32 : i32 to index
    %c0_42 = arith.constant 0 : index
    %c0_43 = arith.constant 0 : index
    %129 = vector.load %arg8[%128, %c0_42, %c0_43] : memref<6x8x256xf32, #tpu.memory_space<vmem>>, vector<1x8x128xf32>
    %130 = vector.shape_cast %129 : vector<1x8x128xf32> to vector<8x128xf32>
    %131 = vector.shape_cast %127 : vector<8x128xf32> to vector<1x8x128xf32>
    tpu.vector_store %arg8[%128, %c0_42, %c0_43], %131 {strides = array<i32>} : memref<6x8x256xf32, #tpu.memory_space<vmem>>, vector<1x8x128xf32>,
    %c5_i32_44 = arith.constant 5 : i32
    %132 = arith.subi %c5_i32_44, %c1_i32 : i32
    %133 = arith.index_cast %132 : i32 to index
    %c0_45 = arith.constant 0 : index
    %c0_46 = arith.constant 0 : index
    %134 = vector.load %arg10[%133, %c0_45, %c0_46] : memref<6x8x384xf32, #tpu.memory_space<vmem>>, vector<1x8x384xf32>
    %135 = vector.shape_cast %134 : vector<1x8x384xf32> to vector<8x384xf32>
    %136 = arith.truncf %91 : vector<8x128xf32> to vector<8x128xbf16>
    %cst_47 = arith.constant dense<0.000000e+00> : vector<8x384xf32>
    %137 = tpu.matmul %136, %21, %cst_47 {dimension_numbers = #tpu.dot_dimension_numbers<[1], [0], [0], [1], [0, 0, 1, 1], [], []>} : vector<8x128xbf16>, vector<128x384xbf16>, vector<8x384xf32> -> vector<8x384xf32>
    %138 = arith.addf %137, %19 : vector<8x384xf32>
    %139 = vector.extract_strided_slice %135 {offsets = [0, 0], sizes = [8, 128], strides = [1, 1]} : vector<8x384xf32> to vector<8x128xf32>
    %140 = vector.extract_strided_slice %138 {offsets = [0, 0], sizes = [8, 128], strides = [1, 1]} : vector<8x384xf32> to vector<8x128xf32>
    %141 = arith.addf %139, %140 : vector<8x128xf32>
    %142 = arith.negf %141 : vector<8x128xf32>
    %143 = math.exp %142 : vector<8x128xf32>
    %cst_48 = arith.constant 1.000000e+00 : f32
    %144 = vector.broadcast %cst_48 : f32 to vector<8x128xf32>
    %145 = arith.addf %144, %143 : vector<8x128xf32>
    %146 = arith.divf %144, %145 : vector<8x128xf32>
    %147 = vector.extract_strided_slice %135 {offsets = [0, 128], sizes = [8, 128], strides = [1, 1]} : vector<8x384xf32> to vector<8x128xf32>
    %148 = vector.extract_strided_slice %138 {offsets = [0, 128], sizes = [8, 128], strides = [1, 1]} : vector<8x384xf32> to vector<8x128xf32>
    %149 = arith.addf %147, %148 : vector<8x128xf32>
    %150 = arith.negf %149 : vector<8x128xf32>
    %151 = math.exp %150 : vector<8x128xf32>
    %cst_49 = arith.constant 1.000000e+00 : f32
    %152 = vector.broadcast %cst_49 : f32 to vector<8x128xf32>
    %153 = arith.addf %152, %151 : vector<8x128xf32>
    %154 = arith.divf %152, %153 : vector<8x128xf32>
    %155 = vector.extract_strided_slice %135 {offsets = [0, 256], sizes = [8, 128], strides = [1, 1]} : vector<8x384xf32> to vector<8x128xf32>
    %156 = vector.extract_strided_slice %138 {offsets = [0, 256], sizes = [8, 128], strides = [1, 1]} : vector<8x384xf32> to vector<8x128xf32>
    %157 = arith.mulf %146, %156 : vector<8x128xf32>
    %158 = arith.addf %155, %157 : vector<8x128xf32>
    %159 = math.tanh %158 : vector<8x128xf32>
    %cst_50 = arith.constant 1.000000e+00 : f32
    %160 = vector.broadcast %cst_50 : f32 to vector<8x128xf32>
    %161 = arith.subf %160, %154 : vector<8x128xf32>
    %162 = arith.mulf %161, %159 : vector<8x128xf32>
    %163 = arith.mulf %154, %91 : vector<8x128xf32>
    %164 = arith.addf %162, %163 : vector<8x128xf32>
    %165 = arith.index_cast %132 : i32 to index
    %c0_51 = arith.constant 0 : index
    %c128_52 = arith.constant 128 : index
    %166 = vector.load %arg8[%165, %c0_51, %c128_52] : memref<6x8x256xf32, #tpu.memory_space<vmem>>, vector<1x8x128xf32>
    %167 = vector.shape_cast %166 : vector<1x8x128xf32> to vector<8x128xf32>
    %168 = vector.shape_cast %164 : vector<8x128xf32> to vector<1x8x128xf32>
    tpu.vector_store %arg8[%165, %c0_51, %c128_52], %168 {strides = array<i32>} : memref<6x8x256xf32, #tpu.memory_space<vmem>>, vector<1x8x128xf32>,
    %c2_i32 = arith.constant 2 : i32
    %169 = arith.index_cast %c2_i32 : i32 to index
    %c0_53 = arith.constant 0 : index
    %c0_54 = arith.constant 0 : index
    %170 = vector.load %arg9[%169, %c0_53, %c0_54] : memref<6x8x384xf32, #tpu.memory_space<vmem>>, vector<1x8x384xf32>
    %171 = vector.shape_cast %170 : vector<1x8x384xf32> to vector<8x384xf32>
    %172 = arith.truncf %127 : vector<8x128xf32> to vector<8x128xbf16>
    %cst_55 = arith.constant dense<0.000000e+00> : vector<8x384xf32>
    %173 = tpu.matmul %172, %20, %cst_55 {dimension_numbers = #tpu.dot_dimension_numbers<[1], [0], [0], [1], [0, 0, 1, 1], [], []>} : vector<8x128xbf16>, vector<128x384xbf16>, vector<8x384xf32> -> vector<8x384xf32>
    %174 = arith.addf %173, %16 : vector<8x384xf32>
    %175 = vector.extract_strided_slice %171 {offsets = [0, 0], sizes = [8, 128], strides = [1, 1]} : vector<8x384xf32> to vector<8x128xf32>
    %176 = vector.extract_strided_slice %174 {offsets = [0, 0], sizes = [8, 128], strides = [1, 1]} : vector<8x384xf32> to vector<8x128xf32>
    %177 = arith.addf %175, %176 : vector<8x128xf32>
    %178 = arith.negf %177 : vector<8x128xf32>
    %179 = math.exp %178 : vector<8x128xf32>
    %cst_56 = arith.constant 1.000000e+00 : f32
    %180 = vector.broadcast %cst_56 : f32 to vector<8x128xf32>
    %181 = arith.addf %180, %179 : vector<8x128xf32>
    %182 = arith.divf %180, %181 : vector<8x128xf32>
    %183 = vector.extract_strided_slice %171 {offsets = [0, 128], sizes = [8, 128], strides = [1, 1]} : vector<8x384xf32> to vector<8x128xf32>
    %184 = vector.extract_strided_slice %174 {offsets = [0, 128], sizes = [8, 128], strides = [1, 1]} : vector<8x384xf32> to vector<8x128xf32>
    %185 = arith.addf %183, %184 : vector<8x128xf32>
    %186 = arith.negf %185 : vector<8x128xf32>
    %187 = math.exp %186 : vector<8x128xf32>
    %cst_57 = arith.constant 1.000000e+00 : f32
    %188 = vector.broadcast %cst_57 : f32 to vector<8x128xf32>
    %189 = arith.addf %188, %187 : vector<8x128xf32>
    %190 = arith.divf %188, %189 : vector<8x128xf32>
    %191 = vector.extract_strided_slice %171 {offsets = [0, 256], sizes = [8, 128], strides = [1, 1]} : vector<8x384xf32> to vector<8x128xf32>
    %192 = vector.extract_strided_slice %174 {offsets = [0, 256], sizes = [8, 128], strides = [1, 1]} : vector<8x384xf32> to vector<8x128xf32>
    %193 = arith.mulf %182, %192 : vector<8x128xf32>
    %194 = arith.addf %191, %193 : vector<8x128xf32>
    %195 = math.tanh %194 : vector<8x128xf32>
    %cst_58 = arith.constant 1.000000e+00 : f32
    %196 = vector.broadcast %cst_58 : f32 to vector<8x128xf32>
    %197 = arith.subf %196, %190 : vector<8x128xf32>
    %198 = arith.mulf %197, %195 : vector<8x128xf32>
    %199 = arith.mulf %190, %127 : vector<8x128xf32>
    %200 = arith.addf %198, %199 : vector<8x128xf32>
    %201 = arith.index_cast %c2_i32 : i32 to index
    %c0_59 = arith.constant 0 : index
    %c0_60 = arith.constant 0 : index
    %202 = vector.load %arg8[%201, %c0_59, %c0_60] : memref<6x8x256xf32, #tpu.memory_space<vmem>>, vector<1x8x128xf32>
    %203 = vector.shape_cast %202 : vector<1x8x128xf32> to vector<8x128xf32>
    %204 = vector.shape_cast %200 : vector<8x128xf32> to vector<1x8x128xf32>
    tpu.vector_store %arg8[%201, %c0_59, %c0_60], %204 {strides = array<i32>} : memref<6x8x256xf32, #tpu.memory_space<vmem>>, vector<1x8x128xf32>,
    %c5_i32_61 = arith.constant 5 : i32
    %205 = arith.subi %c5_i32_61, %c2_i32 : i32
    %206 = arith.index_cast %205 : i32 to index
    %c0_62 = arith.constant 0 : index
    %c0_63 = arith.constant 0 : index
    %207 = vector.load %arg10[%206, %c0_62, %c0_63] : memref<6x8x384xf32, #tpu.memory_space<vmem>>, vector<1x8x384xf32>
    %208 = vector.shape_cast %207 : vector<1x8x384xf32> to vector<8x384xf32>
    %209 = arith.truncf %164 : vector<8x128xf32> to vector<8x128xbf16>
    %cst_64 = arith.constant dense<0.000000e+00> : vector<8x384xf32>
    %210 = tpu.matmul %209, %21, %cst_64 {dimension_numbers = #tpu.dot_dimension_numbers<[1], [0], [0], [1], [0, 0, 1, 1], [], []>} : vector<8x128xbf16>, vector<128x384xbf16>, vector<8x384xf32> -> vector<8x384xf32>
    %211 = arith.addf %210, %19 : vector<8x384xf32>
    %212 = vector.extract_strided_slice %208 {offsets = [0, 0], sizes = [8, 128], strides = [1, 1]} : vector<8x384xf32> to vector<8x128xf32>
    %213 = vector.extract_strided_slice %211 {offsets = [0, 0], sizes = [8, 128], strides = [1, 1]} : vector<8x384xf32> to vector<8x128xf32>
    %214 = arith.addf %212, %213 : vector<8x128xf32>
    %215 = arith.negf %214 : vector<8x128xf32>
    %216 = math.exp %215 : vector<8x128xf32>
    %cst_65 = arith.constant 1.000000e+00 : f32
    %217 = vector.broadcast %cst_65 : f32 to vector<8x128xf32>
    %218 = arith.addf %217, %216 : vector<8x128xf32>
    %219 = arith.divf %217, %218 : vector<8x128xf32>
    %220 = vector.extract_strided_slice %208 {offsets = [0, 128], sizes = [8, 128], strides = [1, 1]} : vector<8x384xf32> to vector<8x128xf32>
    %221 = vector.extract_strided_slice %211 {offsets = [0, 128], sizes = [8, 128], strides = [1, 1]} : vector<8x384xf32> to vector<8x128xf32>
    %222 = arith.addf %220, %221 : vector<8x128xf32>
    %223 = arith.negf %222 : vector<8x128xf32>
    %224 = math.exp %223 : vector<8x128xf32>
    %cst_66 = arith.constant 1.000000e+00 : f32
    %225 = vector.broadcast %cst_66 : f32 to vector<8x128xf32>
    %226 = arith.addf %225, %224 : vector<8x128xf32>
    %227 = arith.divf %225, %226 : vector<8x128xf32>
    %228 = vector.extract_strided_slice %208 {offsets = [0, 256], sizes = [8, 128], strides = [1, 1]} : vector<8x384xf32> to vector<8x128xf32>
    %229 = vector.extract_strided_slice %211 {offsets = [0, 256], sizes = [8, 128], strides = [1, 1]} : vector<8x384xf32> to vector<8x128xf32>
    %230 = arith.mulf %219, %229 : vector<8x128xf32>
    %231 = arith.addf %228, %230 : vector<8x128xf32>
    %232 = math.tanh %231 : vector<8x128xf32>
    %cst_67 = arith.constant 1.000000e+00 : f32
    %233 = vector.broadcast %cst_67 : f32 to vector<8x128xf32>
    %234 = arith.subf %233, %227 : vector<8x128xf32>
    %235 = arith.mulf %234, %232 : vector<8x128xf32>
    %236 = arith.mulf %227, %164 : vector<8x128xf32>
    %237 = arith.addf %235, %236 : vector<8x128xf32>
    %238 = arith.index_cast %205 : i32 to index
    %c0_68 = arith.constant 0 : index
    %c128_69 = arith.constant 128 : index
    %239 = vector.load %arg8[%238, %c0_68, %c128_69] : memref<6x8x256xf32, #tpu.memory_space<vmem>>, vector<1x8x128xf32>
    %240 = vector.shape_cast %239 : vector<1x8x128xf32> to vector<8x128xf32>
    %241 = vector.shape_cast %237 : vector<8x128xf32> to vector<1x8x128xf32>
    tpu.vector_store %arg8[%238, %c0_68, %c128_69], %241 {strides = array<i32>} : memref<6x8x256xf32, #tpu.memory_space<vmem>>, vector<1x8x128xf32>,
    %c3_i32 = arith.constant 3 : i32
    %242 = arith.index_cast %c3_i32 : i32 to index
    %c0_70 = arith.constant 0 : index
    %c0_71 = arith.constant 0 : index
    %243 = vector.load %arg9[%242, %c0_70, %c0_71] : memref<6x8x384xf32, #tpu.memory_space<vmem>>, vector<1x8x384xf32>
    %244 = vector.shape_cast %243 : vector<1x8x384xf32> to vector<8x384xf32>
    %245 = arith.truncf %200 : vector<8x128xf32> to vector<8x128xbf16>
    %cst_72 = arith.constant dense<0.000000e+00> : vector<8x384xf32>
    %246 = tpu.matmul %245, %20, %cst_72 {dimension_numbers = #tpu.dot_dimension_numbers<[1], [0], [0], [1], [0, 0, 1, 1], [], []>} : vector<8x128xbf16>, vector<128x384xbf16>, vector<8x384xf32> -> vector<8x384xf32>
    %247 = arith.addf %246, %16 : vector<8x384xf32>
    %248 = vector.extract_strided_slice %244 {offsets = [0, 0], sizes = [8, 128], strides = [1, 1]} : vector<8x384xf32> to vector<8x128xf32>
    %249 = vector.extract_strided_slice %247 {offsets = [0, 0], sizes = [8, 128], strides = [1, 1]} : vector<8x384xf32> to vector<8x128xf32>
    %250 = arith.addf %248, %249 : vector<8x128xf32>
    %251 = arith.negf %250 : vector<8x128xf32>
    %252 = math.exp %251 : vector<8x128xf32>
    %cst_73 = arith.constant 1.000000e+00 : f32
    %253 = vector.broadcast %cst_73 : f32 to vector<8x128xf32>
    %254 = arith.addf %253, %252 : vector<8x128xf32>
    %255 = arith.divf %253, %254 : vector<8x128xf32>
    %256 = vector.extract_strided_slice %244 {offsets = [0, 128], sizes = [8, 128], strides = [1, 1]} : vector<8x384xf32> to vector<8x128xf32>
    %257 = vector.extract_strided_slice %247 {offsets = [0, 128], sizes = [8, 128], strides = [1, 1]} : vector<8x384xf32> to vector<8x128xf32>
    %258 = arith.addf %256, %257 : vector<8x128xf32>
    %259 = arith.negf %258 : vector<8x128xf32>
    %260 = math.exp %259 : vector<8x128xf32>
    %cst_74 = arith.constant 1.000000e+00 : f32
    %261 = vector.broadcast %cst_74 : f32 to vector<8x128xf32>
    %262 = arith.addf %261, %260 : vector<8x128xf32>
    %263 = arith.divf %261, %262 : vector<8x128xf32>
    %264 = vector.extract_strided_slice %244 {offsets = [0, 256], sizes = [8, 128], strides = [1, 1]} : vector<8x384xf32> to vector<8x128xf32>
    %265 = vector.extract_strided_slice %247 {offsets = [0, 256], sizes = [8, 128], strides = [1, 1]} : vector<8x384xf32> to vector<8x128xf32>
    %266 = arith.mulf %255, %265 : vector<8x128xf32>
    %267 = arith.addf %264, %266 : vector<8x128xf32>
    %268 = math.tanh %267 : vector<8x128xf32>
    %cst_75 = arith.constant 1.000000e+00 : f32
    %269 = vector.broadcast %cst_75 : f32 to vector<8x128xf32>
    %270 = arith.subf %269, %263 : vector<8x128xf32>
    %271 = arith.mulf %270, %268 : vector<8x128xf32>
    %272 = arith.mulf %263, %200 : vector<8x128xf32>
    %273 = arith.addf %271, %272 : vector<8x128xf32>
    %274 = arith.index_cast %c3_i32 : i32 to index
    %c0_76 = arith.constant 0 : index
    %c0_77 = arith.constant 0 : index
    %275 = vector.load %arg8[%274, %c0_76, %c0_77] : memref<6x8x256xf32, #tpu.memory_space<vmem>>, vector<1x8x128xf32>
    %276 = vector.shape_cast %275 : vector<1x8x128xf32> to vector<8x128xf32>
    %277 = vector.shape_cast %273 : vector<8x128xf32> to vector<1x8x128xf32>
    tpu.vector_store %arg8[%274, %c0_76, %c0_77], %277 {strides = array<i32>} : memref<6x8x256xf32, #tpu.memory_space<vmem>>, vector<1x8x128xf32>,
    %c5_i32_78 = arith.constant 5 : i32
    %278 = arith.subi %c5_i32_78, %c3_i32 : i32
    %279 = arith.index_cast %278 : i32 to index
    %c0_79 = arith.constant 0 : index
    %c0_80 = arith.constant 0 : index
    %280 = vector.load %arg10[%279, %c0_79, %c0_80] : memref<6x8x384xf32, #tpu.memory_space<vmem>>, vector<1x8x384xf32>
    %281 = vector.shape_cast %280 : vector<1x8x384xf32> to vector<8x384xf32>
    %282 = arith.truncf %237 : vector<8x128xf32> to vector<8x128xbf16>
    %cst_81 = arith.constant dense<0.000000e+00> : vector<8x384xf32>
    %283 = tpu.matmul %282, %21, %cst_81 {dimension_numbers = #tpu.dot_dimension_numbers<[1], [0], [0], [1], [0, 0, 1, 1], [], []>} : vector<8x128xbf16>, vector<128x384xbf16>, vector<8x384xf32> -> vector<8x384xf32>
    %284 = arith.addf %283, %19 : vector<8x384xf32>
    %285 = vector.extract_strided_slice %281 {offsets = [0, 0], sizes = [8, 128], strides = [1, 1]} : vector<8x384xf32> to vector<8x128xf32>
    %286 = vector.extract_strided_slice %284 {offsets = [0, 0], sizes = [8, 128], strides = [1, 1]} : vector<8x384xf32> to vector<8x128xf32>
    %287 = arith.addf %285, %286 : vector<8x128xf32>
    %288 = arith.negf %287 : vector<8x128xf32>
    %289 = math.exp %288 : vector<8x128xf32>
    %cst_82 = arith.constant 1.000000e+00 : f32
    %290 = vector.broadcast %cst_82 : f32 to vector<8x128xf32>
    %291 = arith.addf %290, %289 : vector<8x128xf32>
    %292 = arith.divf %290, %291 : vector<8x128xf32>
    %293 = vector.extract_strided_slice %281 {offsets = [0, 128], sizes = [8, 128], strides = [1, 1]} : vector<8x384xf32> to vector<8x128xf32>
    %294 = vector.extract_strided_slice %284 {offsets = [0, 128], sizes = [8, 128], strides = [1, 1]} : vector<8x384xf32> to vector<8x128xf32>
    %295 = arith.addf %293, %294 : vector<8x128xf32>
    %296 = arith.negf %295 : vector<8x128xf32>
    %297 = math.exp %296 : vector<8x128xf32>
    %cst_83 = arith.constant 1.000000e+00 : f32
    %298 = vector.broadcast %cst_83 : f32 to vector<8x128xf32>
    %299 = arith.addf %298, %297 : vector<8x128xf32>
    %300 = arith.divf %298, %299 : vector<8x128xf32>
    %301 = vector.extract_strided_slice %281 {offsets = [0, 256], sizes = [8, 128], strides = [1, 1]} : vector<8x384xf32> to vector<8x128xf32>
    %302 = vector.extract_strided_slice %284 {offsets = [0, 256], sizes = [8, 128], strides = [1, 1]} : vector<8x384xf32> to vector<8x128xf32>
    %303 = arith.mulf %292, %302 : vector<8x128xf32>
    %304 = arith.addf %301, %303 : vector<8x128xf32>
    %305 = math.tanh %304 : vector<8x128xf32>
    %cst_84 = arith.constant 1.000000e+00 : f32
    %306 = vector.broadcast %cst_84 : f32 to vector<8x128xf32>
    %307 = arith.subf %306, %300 : vector<8x128xf32>
    %308 = arith.mulf %307, %305 : vector<8x128xf32>
    %309 = arith.mulf %300, %237 : vector<8x128xf32>
    %310 = arith.addf %308, %309 : vector<8x128xf32>
    %311 = arith.index_cast %278 : i32 to index
    %c0_85 = arith.constant 0 : index
    %c128_86 = arith.constant 128 : index
    %312 = vector.load %arg8[%311, %c0_85, %c128_86] : memref<6x8x256xf32, #tpu.memory_space<vmem>>, vector<1x8x128xf32>
    %313 = vector.shape_cast %312 : vector<1x8x128xf32> to vector<8x128xf32>
    %314 = vector.shape_cast %310 : vector<8x128xf32> to vector<1x8x128xf32>
    tpu.vector_store %arg8[%311, %c0_85, %c128_86], %314 {strides = array<i32>} : memref<6x8x256xf32, #tpu.memory_space<vmem>>, vector<1x8x128xf32>,
    %c4_i32 = arith.constant 4 : i32
    %315 = arith.index_cast %c4_i32 : i32 to index
    %c0_87 = arith.constant 0 : index
    %c0_88 = arith.constant 0 : index
    %316 = vector.load %arg9[%315, %c0_87, %c0_88] : memref<6x8x384xf32, #tpu.memory_space<vmem>>, vector<1x8x384xf32>
    %317 = vector.shape_cast %316 : vector<1x8x384xf32> to vector<8x384xf32>
    %318 = arith.truncf %273 : vector<8x128xf32> to vector<8x128xbf16>
    %cst_89 = arith.constant dense<0.000000e+00> : vector<8x384xf32>
    %319 = tpu.matmul %318, %20, %cst_89 {dimension_numbers = #tpu.dot_dimension_numbers<[1], [0], [0], [1], [0, 0, 1, 1], [], []>} : vector<8x128xbf16>, vector<128x384xbf16>, vector<8x384xf32> -> vector<8x384xf32>
    %320 = arith.addf %319, %16 : vector<8x384xf32>
    %321 = vector.extract_strided_slice %317 {offsets = [0, 0], sizes = [8, 128], strides = [1, 1]} : vector<8x384xf32> to vector<8x128xf32>
    %322 = vector.extract_strided_slice %320 {offsets = [0, 0], sizes = [8, 128], strides = [1, 1]} : vector<8x384xf32> to vector<8x128xf32>
    %323 = arith.addf %321, %322 : vector<8x128xf32>
    %324 = arith.negf %323 : vector<8x128xf32>
    %325 = math.exp %324 : vector<8x128xf32>
    %cst_90 = arith.constant 1.000000e+00 : f32
    %326 = vector.broadcast %cst_90 : f32 to vector<8x128xf32>
    %327 = arith.addf %326, %325 : vector<8x128xf32>
    %328 = arith.divf %326, %327 : vector<8x128xf32>
    %329 = vector.extract_strided_slice %317 {offsets = [0, 128], sizes = [8, 128], strides = [1, 1]} : vector<8x384xf32> to vector<8x128xf32>
    %330 = vector.extract_strided_slice %320 {offsets = [0, 128], sizes = [8, 128], strides = [1, 1]} : vector<8x384xf32> to vector<8x128xf32>
    %331 = arith.addf %329, %330 : vector<8x128xf32>
    %332 = arith.negf %331 : vector<8x128xf32>
    %333 = math.exp %332 : vector<8x128xf32>
    %cst_91 = arith.constant 1.000000e+00 : f32
    %334 = vector.broadcast %cst_91 : f32 to vector<8x128xf32>
    %335 = arith.addf %334, %333 : vector<8x128xf32>
    %336 = arith.divf %334, %335 : vector<8x128xf32>
    %337 = vector.extract_strided_slice %317 {offsets = [0, 256], sizes = [8, 128], strides = [1, 1]} : vector<8x384xf32> to vector<8x128xf32>
    %338 = vector.extract_strided_slice %320 {offsets = [0, 256], sizes = [8, 128], strides = [1, 1]} : vector<8x384xf32> to vector<8x128xf32>
    %339 = arith.mulf %328, %338 : vector<8x128xf32>
    %340 = arith.addf %337, %339 : vector<8x128xf32>
    %341 = math.tanh %340 : vector<8x128xf32>
    %cst_92 = arith.constant 1.000000e+00 : f32
    %342 = vector.broadcast %cst_92 : f32 to vector<8x128xf32>
    %343 = arith.subf %342, %336 : vector<8x128xf32>
    %344 = arith.mulf %343, %341 : vector<8x128xf32>
    %345 = arith.mulf %336, %273 : vector<8x128xf32>
    %346 = arith.addf %344, %345 : vector<8x128xf32>
    %347 = arith.index_cast %c4_i32 : i32 to index
    %c0_93 = arith.constant 0 : index
    %c0_94 = arith.constant 0 : index
    %348 = vector.load %arg8[%347, %c0_93, %c0_94] : memref<6x8x256xf32, #tpu.memory_space<vmem>>, vector<1x8x128xf32>
    %349 = vector.shape_cast %348 : vector<1x8x128xf32> to vector<8x128xf32>
    %350 = vector.shape_cast %346 : vector<8x128xf32> to vector<1x8x128xf32>
    tpu.vector_store %arg8[%347, %c0_93, %c0_94], %350 {strides = array<i32>} : memref<6x8x256xf32, #tpu.memory_space<vmem>>, vector<1x8x128xf32>,
    %c5_i32_95 = arith.constant 5 : i32
    %351 = arith.subi %c5_i32_95, %c4_i32 : i32
    %352 = arith.index_cast %351 : i32 to index
    %c0_96 = arith.constant 0 : index
    %c0_97 = arith.constant 0 : index
    %353 = vector.load %arg10[%352, %c0_96, %c0_97] : memref<6x8x384xf32, #tpu.memory_space<vmem>>, vector<1x8x384xf32>
    %354 = vector.shape_cast %353 : vector<1x8x384xf32> to vector<8x384xf32>
    %355 = arith.truncf %310 : vector<8x128xf32> to vector<8x128xbf16>
    %cst_98 = arith.constant dense<0.000000e+00> : vector<8x384xf32>
    %356 = tpu.matmul %355, %21, %cst_98 {dimension_numbers = #tpu.dot_dimension_numbers<[1], [0], [0], [1], [0, 0, 1, 1], [], []>} : vector<8x128xbf16>, vector<128x384xbf16>, vector<8x384xf32> -> vector<8x384xf32>
    %357 = arith.addf %356, %19 : vector<8x384xf32>
    %358 = vector.extract_strided_slice %354 {offsets = [0, 0], sizes = [8, 128], strides = [1, 1]} : vector<8x384xf32> to vector<8x128xf32>
    %359 = vector.extract_strided_slice %357 {offsets = [0, 0], sizes = [8, 128], strides = [1, 1]} : vector<8x384xf32> to vector<8x128xf32>
    %360 = arith.addf %358, %359 : vector<8x128xf32>
    %361 = arith.negf %360 : vector<8x128xf32>
    %362 = math.exp %361 : vector<8x128xf32>
    %cst_99 = arith.constant 1.000000e+00 : f32
    %363 = vector.broadcast %cst_99 : f32 to vector<8x128xf32>
    %364 = arith.addf %363, %362 : vector<8x128xf32>
    %365 = arith.divf %363, %364 : vector<8x128xf32>
    %366 = vector.extract_strided_slice %354 {offsets = [0, 128], sizes = [8, 128], strides = [1, 1]} : vector<8x384xf32> to vector<8x128xf32>
    %367 = vector.extract_strided_slice %357 {offsets = [0, 128], sizes = [8, 128], strides = [1, 1]} : vector<8x384xf32> to vector<8x128xf32>
    %368 = arith.addf %366, %367 : vector<8x128xf32>
    %369 = arith.negf %368 : vector<8x128xf32>
    %370 = math.exp %369 : vector<8x128xf32>
    %cst_100 = arith.constant 1.000000e+00 : f32
    %371 = vector.broadcast %cst_100 : f32 to vector<8x128xf32>
    %372 = arith.addf %371, %370 : vector<8x128xf32>
    %373 = arith.divf %371, %372 : vector<8x128xf32>
    %374 = vector.extract_strided_slice %354 {offsets = [0, 256], sizes = [8, 128], strides = [1, 1]} : vector<8x384xf32> to vector<8x128xf32>
    %375 = vector.extract_strided_slice %357 {offsets = [0, 256], sizes = [8, 128], strides = [1, 1]} : vector<8x384xf32> to vector<8x128xf32>
    %376 = arith.mulf %365, %375 : vector<8x128xf32>
    %377 = arith.addf %374, %376 : vector<8x128xf32>
    %378 = math.tanh %377 : vector<8x128xf32>
    %cst_101 = arith.constant 1.000000e+00 : f32
    %379 = vector.broadcast %cst_101 : f32 to vector<8x128xf32>
    %380 = arith.subf %379, %373 : vector<8x128xf32>
    %381 = arith.mulf %380, %378 : vector<8x128xf32>
    %382 = arith.mulf %373, %310 : vector<8x128xf32>
    %383 = arith.addf %381, %382 : vector<8x128xf32>
    %384 = arith.index_cast %351 : i32 to index
    %c0_102 = arith.constant 0 : index
    %c128_103 = arith.constant 128 : index
    %385 = vector.load %arg8[%384, %c0_102, %c128_103] : memref<6x8x256xf32, #tpu.memory_space<vmem>>, vector<1x8x128xf32>
    %386 = vector.shape_cast %385 : vector<1x8x128xf32> to vector<8x128xf32>
    %387 = vector.shape_cast %383 : vector<8x128xf32> to vector<1x8x128xf32>
    tpu.vector_store %arg8[%384, %c0_102, %c128_103], %387 {strides = array<i32>} : memref<6x8x256xf32, #tpu.memory_space<vmem>>, vector<1x8x128xf32>,
    %c5_i32_104 = arith.constant 5 : i32
    %388 = arith.index_cast %c5_i32_104 : i32 to index
    %c0_105 = arith.constant 0 : index
    %c0_106 = arith.constant 0 : index
    %389 = vector.load %arg9[%388, %c0_105, %c0_106] : memref<6x8x384xf32, #tpu.memory_space<vmem>>, vector<1x8x384xf32>
    %390 = vector.shape_cast %389 : vector<1x8x384xf32> to vector<8x384xf32>
    %391 = arith.truncf %346 : vector<8x128xf32> to vector<8x128xbf16>
    %cst_107 = arith.constant dense<0.000000e+00> : vector<8x384xf32>
    %392 = tpu.matmul %391, %20, %cst_107 {dimension_numbers = #tpu.dot_dimension_numbers<[1], [0], [0], [1], [0, 0, 1, 1], [], []>} : vector<8x128xbf16>, vector<128x384xbf16>, vector<8x384xf32> -> vector<8x384xf32>
    %393 = arith.addf %392, %16 : vector<8x384xf32>
    %394 = vector.extract_strided_slice %390 {offsets = [0, 0], sizes = [8, 128], strides = [1, 1]} : vector<8x384xf32> to vector<8x128xf32>
    %395 = vector.extract_strided_slice %393 {offsets = [0, 0], sizes = [8, 128], strides = [1, 1]} : vector<8x384xf32> to vector<8x128xf32>
    %396 = arith.addf %394, %395 : vector<8x128xf32>
    %397 = arith.negf %396 : vector<8x128xf32>
    %398 = math.exp %397 : vector<8x128xf32>
    %cst_108 = arith.constant 1.000000e+00 : f32
    %399 = vector.broadcast %cst_108 : f32 to vector<8x128xf32>
    %400 = arith.addf %399, %398 : vector<8x128xf32>
    %401 = arith.divf %399, %400 : vector<8x128xf32>
    %402 = vector.extract_strided_slice %390 {offsets = [0, 128], sizes = [8, 128], strides = [1, 1]} : vector<8x384xf32> to vector<8x128xf32>
    %403 = vector.extract_strided_slice %393 {offsets = [0, 128], sizes = [8, 128], strides = [1, 1]} : vector<8x384xf32> to vector<8x128xf32>
    %404 = arith.addf %402, %403 : vector<8x128xf32>
    %405 = arith.negf %404 : vector<8x128xf32>
    %406 = math.exp %405 : vector<8x128xf32>
    %cst_109 = arith.constant 1.000000e+00 : f32
    %407 = vector.broadcast %cst_109 : f32 to vector<8x128xf32>
    %408 = arith.addf %407, %406 : vector<8x128xf32>
    %409 = arith.divf %407, %408 : vector<8x128xf32>
    %410 = vector.extract_strided_slice %390 {offsets = [0, 256], sizes = [8, 128], strides = [1, 1]} : vector<8x384xf32> to vector<8x128xf32>
    %411 = vector.extract_strided_slice %393 {offsets = [0, 256], sizes = [8, 128], strides = [1, 1]} : vector<8x384xf32> to vector<8x128xf32>
    %412 = arith.mulf %401, %411 : vector<8x128xf32>
    %413 = arith.addf %410, %412 : vector<8x128xf32>
    %414 = math.tanh %413 : vector<8x128xf32>
    %cst_110 = arith.constant 1.000000e+00 : f32
    %415 = vector.broadcast %cst_110 : f32 to vector<8x128xf32>
    %416 = arith.subf %415, %409 : vector<8x128xf32>
    %417 = arith.mulf %416, %414 : vector<8x128xf32>
    %418 = arith.mulf %409, %346 : vector<8x128xf32>
    %419 = arith.addf %417, %418 : vector<8x128xf32>
    %420 = arith.index_cast %c5_i32_104 : i32 to index
    %c0_111 = arith.constant 0 : index
    %c0_112 = arith.constant 0 : index
    %421 = vector.load %arg8[%420, %c0_111, %c0_112] : memref<6x8x256xf32, #tpu.memory_space<vmem>>, vector<1x8x128xf32>
    %422 = vector.shape_cast %421 : vector<1x8x128xf32> to vector<8x128xf32>
    %423 = vector.shape_cast %419 : vector<8x128xf32> to vector<1x8x128xf32>
    tpu.vector_store %arg8[%420, %c0_111, %c0_112], %423 {strides = array<i32>} : memref<6x8x256xf32, #tpu.memory_space<vmem>>, vector<1x8x128xf32>,
    %c5_i32_113 = arith.constant 5 : i32
    %424 = arith.subi %c5_i32_113, %c5_i32_104 : i32
    %425 = arith.index_cast %424 : i32 to index
    %c0_114 = arith.constant 0 : index
    %c0_115 = arith.constant 0 : index
    %426 = vector.load %arg10[%425, %c0_114, %c0_115] : memref<6x8x384xf32, #tpu.memory_space<vmem>>, vector<1x8x384xf32>
    %427 = vector.shape_cast %426 : vector<1x8x384xf32> to vector<8x384xf32>
    %428 = arith.truncf %383 : vector<8x128xf32> to vector<8x128xbf16>
    %cst_116 = arith.constant dense<0.000000e+00> : vector<8x384xf32>
    %429 = tpu.matmul %428, %21, %cst_116 {dimension_numbers = #tpu.dot_dimension_numbers<[1], [0], [0], [1], [0, 0, 1, 1], [], []>} : vector<8x128xbf16>, vector<128x384xbf16>, vector<8x384xf32> -> vector<8x384xf32>
    %430 = arith.addf %429, %19 : vector<8x384xf32>
    %431 = vector.extract_strided_slice %427 {offsets = [0, 0], sizes = [8, 128], strides = [1, 1]} : vector<8x384xf32> to vector<8x128xf32>
    %432 = vector.extract_strided_slice %430 {offsets = [0, 0], sizes = [8, 128], strides = [1, 1]} : vector<8x384xf32> to vector<8x128xf32>
    %433 = arith.addf %431, %432 : vector<8x128xf32>
    %434 = arith.negf %433 : vector<8x128xf32>
    %435 = math.exp %434 : vector<8x128xf32>
    %cst_117 = arith.constant 1.000000e+00 : f32
    %436 = vector.broadcast %cst_117 : f32 to vector<8x128xf32>
    %437 = arith.addf %436, %435 : vector<8x128xf32>
    %438 = arith.divf %436, %437 : vector<8x128xf32>
    %439 = vector.extract_strided_slice %427 {offsets = [0, 128], sizes = [8, 128], strides = [1, 1]} : vector<8x384xf32> to vector<8x128xf32>
    %440 = vector.extract_strided_slice %430 {offsets = [0, 128], sizes = [8, 128], strides = [1, 1]} : vector<8x384xf32> to vector<8x128xf32>
    %441 = arith.addf %439, %440 : vector<8x128xf32>
    %442 = arith.negf %441 : vector<8x128xf32>
    %443 = math.exp %442 : vector<8x128xf32>
    %cst_118 = arith.constant 1.000000e+00 : f32
    %444 = vector.broadcast %cst_118 : f32 to vector<8x128xf32>
    %445 = arith.addf %444, %443 : vector<8x128xf32>
    %446 = arith.divf %444, %445 : vector<8x128xf32>
    %447 = vector.extract_strided_slice %427 {offsets = [0, 256], sizes = [8, 128], strides = [1, 1]} : vector<8x384xf32> to vector<8x128xf32>
    %448 = vector.extract_strided_slice %430 {offsets = [0, 256], sizes = [8, 128], strides = [1, 1]} : vector<8x384xf32> to vector<8x128xf32>
    %449 = arith.mulf %438, %448 : vector<8x128xf32>
    %450 = arith.addf %447, %449 : vector<8x128xf32>
    %451 = math.tanh %450 : vector<8x128xf32>
    %cst_119 = arith.constant 1.000000e+00 : f32
    %452 = vector.broadcast %cst_119 : f32 to vector<8x128xf32>
    %453 = arith.subf %452, %446 : vector<8x128xf32>
    %454 = arith.mulf %453, %451 : vector<8x128xf32>
    %455 = arith.mulf %446, %383 : vector<8x128xf32>
    %456 = arith.addf %454, %455 : vector<8x128xf32>
    %457 = arith.index_cast %424 : i32 to index
    %c0_120 = arith.constant 0 : index
    %c128_121 = arith.constant 128 : index
    %458 = vector.load %arg8[%457, %c0_120, %c128_121] : memref<6x8x256xf32, #tpu.memory_space<vmem>>, vector<1x8x128xf32>
    %459 = vector.shape_cast %458 : vector<1x8x128xf32> to vector<8x128xf32>
    %460 = vector.shape_cast %456 : vector<8x128xf32> to vector<1x8x128xf32>
    tpu.vector_store %arg8[%457, %c0_120, %c128_121], %460 {strides = array<i32>} : memref<6x8x256xf32, #tpu.memory_space<vmem>>, vector<1x8x128xf32>,
    %c6_i32 = arith.constant 6 : i32
    return
  }
  func.func @transform_0(%arg0: i32) -> (i32, i32, i32) {
    %c0_i32 = arith.constant 0 : i32
    %c0_i32_0 = arith.constant 0 : i32
    %c0_i32_1 = arith.constant 0 : i32
    return %c0_i32, %arg0, %c0_i32_0 : i32, i32, i32
  }
  func.func @transform_1(%arg0: i32) -> (i32, i32) {
    %c0_i32 = arith.constant 0 : i32
    %c0_i32_0 = arith.constant 0 : i32
    %c0_i32_1 = arith.constant 0 : i32
    return %c0_i32, %c0_i32_0 : i32, i32
  }
  func.func @transform_2(%arg0: i32) -> (i32, i32) {
    %c0_i32 = arith.constant 0 : i32
    %c0_i32_0 = arith.constant 0 : i32
    %c0_i32_1 = arith.constant 0 : i32
    return %c0_i32, %c0_i32_0 : i32, i32
  }
  func.func @transform_3(%arg0: i32) -> (i32, i32) {
    %c0_i32 = arith.constant 0 : i32
    %c0_i32_0 = arith.constant 0 : i32
    %c0_i32_1 = arith.constant 0 : i32
    return %c0_i32, %c0_i32_0 : i32, i32
  }
  func.func @transform_4(%arg0: i32) -> (i32, i32) {
    %c0_i32 = arith.constant 0 : i32
    %c0_i32_0 = arith.constant 0 : i32
    %c0_i32_1 = arith.constant 0 : i32
    return %c0_i32, %c0_i32_0 : i32, i32
  }
  func.func @transform_5(%arg0: i32) -> (i32, i32) {
    %c0_i32 = arith.constant 0 : i32
    %c0_i32_0 = arith.constant 0 : i32
    %c0_i32_1 = arith.constant 0 : i32
    return %c0_i32, %c0_i32_0 : i32, i32
  }
  func.func @transform_6(%arg0: i32) -> (i32, i32) {
    %c0_i32 = arith.constant 0 : i32
    %c0_i32_0 = arith.constant 0 : i32
    %c0_i32_1 = arith.constant 0 : i32
    return %c0_i32, %c0_i32_0 : i32, i32
  }
  func.func @transform_7(%arg0: i32) -> (i32, i32, i32) {
    %c0_i32 = arith.constant 0 : i32
    %c0_i32_0 = arith.constant 0 : i32
    %c0_i32_1 = arith.constant 0 : i32
    return %c0_i32, %arg0, %c0_i32_0 : i32, i32, i32
  }
}

module attributes {stable_mosaic.version = 11 : i64} {
  func.func @bigru_kernel(%arg0: i32, %arg1: memref<6x8x256xf32, #tpu.memory_space<vmem>>, %arg2: memref<256x768xbf16, #tpu.memory_space<vmem>>, %arg3: memref<1x768xf32, #tpu.memory_space<vmem>>, %arg4: memref<128x384xbf16, #tpu.memory_space<vmem>>, %arg5: memref<1x384xf32, #tpu.memory_space<vmem>>, %arg6: memref<128x384xbf16, #tpu.memory_space<vmem>>, %arg7: memref<1x384xf32, #tpu.memory_space<vmem>>, %arg8: memref<6x8x256xf32, #tpu.memory_space<vmem>>, %arg9: memref<6x8x384xf32, #tpu.memory_space<vmem>>, %arg10: memref<6x8x384xf32, #tpu.memory_space<vmem>>) attributes {dimension_semantics = [#tpu.dimension_semantics<parallel>], iteration_bounds = array<i64: 1>, scalar_prefetch = 0 : i64, scratch_operands = 2 : i64, tpu.core_type = #tpu.core_type<tc>, window_params = [{transform_indices = @transform_0, window_bounds = array<i64: 6, 8, 256>}, {pipeline_mode = #tpu.pipeline_mode<synchronous>, transform_indices = @transform_1, window_bounds = array<i64: 256, 768>}, {pipeline_mode = #tpu.pipeline_mode<synchronous>, transform_indices = @transform_2, window_bounds = array<i64: 1, 768>}, {pipeline_mode = #tpu.pipeline_mode<synchronous>, transform_indices = @transform_3, window_bounds = array<i64: 128, 384>}, {pipeline_mode = #tpu.pipeline_mode<synchronous>, transform_indices = @transform_4, window_bounds = array<i64: 1, 384>}, {pipeline_mode = #tpu.pipeline_mode<synchronous>, transform_indices = @transform_5, window_bounds = array<i64: 128, 384>}, {pipeline_mode = #tpu.pipeline_mode<synchronous>, transform_indices = @transform_6, window_bounds = array<i64: 1, 384>}, {transform_indices = @transform_7, window_bounds = array<i64: 6, 8, 256>}]} {
    %c0 = arith.constant 0 : index
    %c0_0 = arith.constant 0 : index
    %c0_1 = arith.constant 0 : index
    %0 = vector.load %arg1[%c0, %c0_0, %c0_1] : memref<6x8x256xf32, #tpu.memory_space<vmem>>, vector<6x8x256xf32>
    %1 = vector.shape_cast %0 : vector<6x8x256xf32> to vector<48x256xf32>
    %2 = arith.truncf %1 : vector<48x256xf32> to vector<48x256xbf16>
    %c0_2 = arith.constant 0 : index
    %c0_3 = arith.constant 0 : index
    %3 = vector.load %arg2[%c0_2, %c0_3] : memref<256x768xbf16, #tpu.memory_space<vmem>>, vector<256x768xbf16>
    %cst = arith.constant dense<0.000000e+00> : vector<48x768xf32>
    %4 = tpu.matmul %2, %3, %cst {dimension_numbers = #tpu.dot_dimension_numbers<[1], [0], [0], [1], [0, 0, 1, 1], [], []>} : vector<48x256xbf16>, vector<256x768xbf16>, vector<48x768xf32> -> vector<48x768xf32>
    %c0_4 = arith.constant 0 : index
    %c0_5 = arith.constant 0 : index
    %5 = vector.load %arg3[%c0_4, %c0_5] : memref<1x768xf32, #tpu.memory_space<vmem>>, vector<1x768xf32>
    %6 = vector.broadcast %5 : vector<1x768xf32> to vector<48x768xf32>
    %7 = arith.addf %4, %6 : vector<48x768xf32>
    %8 = vector.extract_strided_slice %7 {offsets = [0, 0], sizes = [48, 384], strides = [1, 1]} : vector<48x768xf32> to vector<48x384xf32>
    %9 = vector.shape_cast %8 : vector<48x384xf32> to vector<6x8x384xf32>
    %c0_6 = arith.constant 0 : index
    %c0_7 = arith.constant 0 : index
    %c0_8 = arith.constant 0 : index
    %10 = vector.load %arg9[%c0_6, %c0_7, %c0_8] : memref<6x8x384xf32, #tpu.memory_space<vmem>>, vector<6x8x384xf32>
    tpu.vector_store %arg9[%c0_6, %c0_7, %c0_8], %9 {strides = array<i32>} : memref<6x8x384xf32, #tpu.memory_space<vmem>>, vector<6x8x384xf32>,
    %11 = vector.extract_strided_slice %7 {offsets = [0, 384], sizes = [48, 384], strides = [1, 1]} : vector<48x768xf32> to vector<48x384xf32>
    %12 = vector.shape_cast %11 : vector<48x384xf32> to vector<6x8x384xf32>
    %c0_9 = arith.constant 0 : index
    %c0_10 = arith.constant 0 : index
    %c0_11 = arith.constant 0 : index
    %13 = vector.load %arg10[%c0_9, %c0_10, %c0_11] : memref<6x8x384xf32, #tpu.memory_space<vmem>>, vector<6x8x384xf32>
    tpu.vector_store %arg10[%c0_9, %c0_10, %c0_11], %12 {strides = array<i32>} : memref<6x8x384xf32, #tpu.memory_space<vmem>>, vector<6x8x384xf32>,
    %c0_12 = arith.constant 0 : index
    %c0_13 = arith.constant 0 : index
    %14 = vector.load %arg5[%c0_12, %c0_13] : memref<1x384xf32, #tpu.memory_space<vmem>>, vector<1x384xf32>
    %15 = vector.shape_cast %14 : vector<1x384xf32> to vector<1x384xf32>
    %16 = vector.broadcast %15 : vector<1x384xf32> to vector<8x384xf32>
    %c0_14 = arith.constant 0 : index
    %c0_15 = arith.constant 0 : index
    %17 = vector.load %arg7[%c0_14, %c0_15] : memref<1x384xf32, #tpu.memory_space<vmem>>, vector<1x384xf32>
    %18 = vector.shape_cast %17 : vector<1x384xf32> to vector<1x384xf32>
    %19 = vector.broadcast %18 : vector<1x384xf32> to vector<8x384xf32>
    %c0_16 = arith.constant 0 : index
    %c0_17 = arith.constant 0 : index
    %20 = vector.load %arg4[%c0_16, %c0_17] : memref<128x384xbf16, #tpu.memory_space<vmem>>, vector<128x384xbf16>
    %c0_18 = arith.constant 0 : index
    %c0_19 = arith.constant 0 : index
    %21 = vector.load %arg6[%c0_18, %c0_19] : memref<128x384xbf16, #tpu.memory_space<vmem>>, vector<128x384xbf16>
    %cst_20 = arith.constant 0.000000e+00 : f32
    %22 = vector.broadcast %cst_20 : f32 to vector<8x128xf32>
    %c0_i32 = arith.constant 0 : i32
    %23 = arith.index_cast %c0_i32 : i32 to index
    %c0_21 = arith.constant 0 : index
    %c0_22 = arith.constant 0 : index
    %24 = vector.load %arg9[%23, %c0_21, %c0_22] : memref<6x8x384xf32, #tpu.memory_space<vmem>>, vector<1x8x384xf32>
    %25 = vector.shape_cast %24 : vector<1x8x384xf32> to vector<8x384xf32>
    %26 = arith.truncf %22 : vector<8x128xf32> to vector<8x128xbf16>
    %cst_23 = arith.constant dense<0.000000e+00> : vector<8x384xf32>
    %27 = tpu.matmul %26, %20, %cst_23 {dimension_numbers = #tpu.dot_dimension_numbers<[1], [0], [0], [1], [0, 0, 1, 1], [], []>} : vector<8x128xbf16>, vector<128x384xbf16>, vector<8x384xf32> -> vector<8x384xf32>
    %28 = arith.addf %27, %16 : vector<8x384xf32>
    %29 = vector.extract_strided_slice %25 {offsets = [0, 0], sizes = [8, 128], strides = [1, 1]} : vector<8x384xf32> to vector<8x128xf32>
    %30 = vector.extract_strided_slice %28 {offsets = [0, 0], sizes = [8, 128], strides = [1, 1]} : vector<8x384xf32> to vector<8x128xf32>
    %31 = arith.addf %29, %30 : vector<8x128xf32>
    %32 = arith.negf %31 : vector<8x128xf32>
    %33 = math.exp %32 : vector<8x128xf32>
    %cst_24 = arith.constant 1.000000e+00 : f32
    %34 = vector.broadcast %cst_24 : f32 to vector<8x128xf32>
    %35 = arith.addf %34, %33 : vector<8x128xf32>
    %36 = arith.divf %34, %35 : vector<8x128xf32>
    %37 = vector.extract_strided_slice %25 {offsets = [0, 128], sizes = [8, 128], strides = [1, 1]} : vector<8x384xf32> to vector<8x128xf32>
    %38 = vector.extract_strided_slice %28 {offsets = [0, 128], sizes = [8, 128], strides = [1, 1]} : vector<8x384xf32> to vector<8x128xf32>
    %39 = arith.addf %37, %38 : vector<8x128xf32>
    %40 = arith.negf %39 : vector<8x128xf32>
    %41 = math.exp %40 : vector<8x128xf32>
    %cst_25 = arith.constant 1.000000e+00 : f32
    %42 = vector.broadcast %cst_25 : f32 to vector<8x128xf32>
    %43 = arith.addf %42, %41 : vector<8x128xf32>
    %44 = arith.divf %42, %43 : vector<8x128xf32>
    %45 = vector.extract_strided_slice %25 {offsets = [0, 256], sizes = [8, 128], strides = [1, 1]} : vector<8x384xf32> to vector<8x128xf32>
    %46 = vector.extract_strided_slice %28 {offsets = [0, 256], sizes = [8, 128], strides = [1, 1]} : vector<8x384xf32> to vector<8x128xf32>
    %47 = arith.mulf %36, %46 : vector<8x128xf32>
    %48 = arith.addf %45, %47 : vector<8x128xf32>
    %49 = math.tanh %48 : vector<8x128xf32>
    %cst_26 = arith.constant 1.000000e+00 : f32
    %50 = vector.broadcast %cst_26 : f32 to vector<8x128xf32>
    %51 = arith.subf %50, %44 : vector<8x128xf32>
    %52 = arith.mulf %51, %49 : vector<8x128xf32>
    %53 = arith.mulf %44, %22 : vector<8x128xf32>
    %54 = arith.addf %52, %53 : vector<8x128xf32>
    %55 = arith.index_cast %c0_i32 : i32 to index
    %c0_27 = arith.constant 0 : index
    %c0_28 = arith.constant 0 : index
    %56 = vector.load %arg8[%55, %c0_27, %c0_28] : memref<6x8x256xf32, #tpu.memory_space<vmem>>, vector<1x8x128xf32>
    %57 = vector.shape_cast %56 : vector<1x8x128xf32> to vector<8x128xf32>
    %58 = vector.shape_cast %54 : vector<8x128xf32> to vector<1x8x128xf32>
    tpu.vector_store %arg8[%55, %c0_27, %c0_28], %58 {strides = array<i32>} : memref<6x8x256xf32, #tpu.memory_space<vmem>>, vector<1x8x128xf32>,
    %c5_i32 = arith.constant 5 : i32
    %59 = arith.subi %c5_i32, %c0_i32 : i32
    %60 = arith.index_cast %59 : i32 to index
    %c0_29 = arith.constant 0 : index
    %c0_30 = arith.constant 0 : index
    %61 = vector.load %arg10[%60, %c0_29, %c0_30] : memref<6x8x384xf32, #tpu.memory_space<vmem>>, vector<1x8x384xf32>
    %62 = vector.shape_cast %61 : vector<1x8x384xf32> to vector<8x384xf32>
    %63 = arith.truncf %22 : vector<8x128xf32> to vector<8x128xbf16>
    %cst_31 = arith.constant dense<0.000000e+00> : vector<8x384xf32>
    %64 = tpu.matmul %63, %21, %cst_31 {dimension_numbers = #tpu.dot_dimension_numbers<[1], [0], [0], [1], [0, 0, 1, 1], [], []>} : vector<8x128xbf16>, vector<128x384xbf16>, vector<8x384xf32> -> vector<8x384xf32>
    %65 = arith.addf %64, %19 : vector<8x384xf32>
    %66 = vector.extract_strided_slice %62 {offsets = [0, 0], sizes = [8, 128], strides = [1, 1]} : vector<8x384xf32> to vector<8x128xf32>
    %67 = vector.extract_strided_slice %65 {offsets = [0, 0], sizes = [8, 128], strides = [1, 1]} : vector<8x384xf32> to vector<8x128xf32>
    %68 = arith.addf %66, %67 : vector<8x128xf32>
    %69 = arith.negf %68 : vector<8x128xf32>
    %70 = math.exp %69 : vector<8x128xf32>
    %cst_32 = arith.constant 1.000000e+00 : f32
    %71 = vector.broadcast %cst_32 : f32 to vector<8x128xf32>
    %72 = arith.addf %71, %70 : vector<8x128xf32>
    %73 = arith.divf %71, %72 : vector<8x128xf32>
    %74 = vector.extract_strided_slice %62 {offsets = [0, 128], sizes = [8, 128], strides = [1, 1]} : vector<8x384xf32> to vector<8x128xf32>
    %75 = vector.extract_strided_slice %65 {offsets = [0, 128], sizes = [8, 128], strides = [1, 1]} : vector<8x384xf32> to vector<8x128xf32>
    %76 = arith.addf %74, %75 : vector<8x128xf32>
    %77 = arith.negf %76 : vector<8x128xf32>
    %78 = math.exp %77 : vector<8x128xf32>
    %cst_33 = arith.constant 1.000000e+00 : f32
    %79 = vector.broadcast %cst_33 : f32 to vector<8x128xf32>
    %80 = arith.addf %79, %78 : vector<8x128xf32>
    %81 = arith.divf %79, %80 : vector<8x128xf32>
    %82 = vector.extract_strided_slice %62 {offsets = [0, 256], sizes = [8, 128], strides = [1, 1]} : vector<8x384xf32> to vector<8x128xf32>
    %83 = vector.extract_strided_slice %65 {offsets = [0, 256], sizes = [8, 128], strides = [1, 1]} : vector<8x384xf32> to vector<8x128xf32>
    %84 = arith.mulf %73, %83 : vector<8x128xf32>
    %85 = arith.addf %82, %84 : vector<8x128xf32>
    %86 = math.tanh %85 : vector<8x128xf32>
    %cst_34 = arith.constant 1.000000e+00 : f32
    %87 = vector.broadcast %cst_34 : f32 to vector<8x128xf32>
    %88 = arith.subf %87, %81 : vector<8x128xf32>
    %89 = arith.mulf %88, %86 : vector<8x128xf32>
    %90 = arith.mulf %81, %22 : vector<8x128xf32>
    %91 = arith.addf %89, %90 : vector<8x128xf32>
    %92 = arith.index_cast %59 : i32 to index
    %c0_35 = arith.constant 0 : index
    %c128 = arith.constant 128 : index
    %93 = vector.load %arg8[%92, %c0_35, %c128] : memref<6x8x256xf32, #tpu.memory_space<vmem>>, vector<1x8x128xf32>
    %94 = vector.shape_cast %93 : vector<1x8x128xf32> to vector<8x128xf32>
    %95 = vector.shape_cast %91 : vector<8x128xf32> to vector<1x8x128xf32>
    tpu.vector_store %arg8[%92, %c0_35, %c128], %95 {strides = array<i32>} : memref<6x8x256xf32, #tpu.memory_space<vmem>>, vector<1x8x128xf32>,
    %c1_i32 = arith.constant 1 : i32
    %96 = arith.index_cast %c1_i32 : i32 to index
    %c0_36 = arith.constant 0 : index
    %c0_37 = arith.constant 0 : index
    %97 = vector.load %arg9[%96, %c0_36, %c0_37] : memref<6x8x384xf32, #tpu.memory_space<vmem>>, vector<1x8x384xf32>
    %98 = vector.shape_cast %97 : vector<1x8x384xf32> to vector<8x384xf32>
    %99 = arith.truncf %54 : vector<8x128xf32> to vector<8x128xbf16>
    %cst_38 = arith.constant dense<0.000000e+00> : vector<8x384xf32>
    %100 = tpu.matmul %99, %20, %cst_38 {dimension_numbers = #tpu.dot_dimension_numbers<[1], [0], [0], [1], [0, 0, 1, 1], [], []>} : vector<8x128xbf16>, vector<128x384xbf16>, vector<8x384xf32> -> vector<8x384xf32>
    %101 = arith.addf %100, %16 : vector<8x384xf32>
    %102 = vector.extract_strided_slice %98 {offsets = [0, 0], sizes = [8, 128], strides = [1, 1]} : vector<8x384xf32> to vector<8x128xf32>
    %103 = vector.extract_strided_slice %101 {offsets = [0, 0], sizes = [8, 128], strides = [1, 1]} : vector<8x384xf32> to vector<8x128xf32>
    %104 = arith.addf %102, %103 : vector<8x128xf32>
    %105 = arith.negf %104 : vector<8x128xf32>
    %106 = math.exp %105 : vector<8x128xf32>
    %cst_39 = arith.constant 1.000000e+00 : f32
    %107 = vector.broadcast %cst_39 : f32 to vector<8x128xf32>
    %108 = arith.addf %107, %106 : vector<8x128xf32>
    %109 = arith.divf %107, %108 : vector<8x128xf32>
    %110 = vector.extract_strided_slice %98 {offsets = [0, 128], sizes = [8, 128], strides = [1, 1]} : vector<8x384xf32> to vector<8x128xf32>
    %111 = vector.extract_strided_slice %101 {offsets = [0, 128], sizes = [8, 128], strides = [1, 1]} : vector<8x384xf32> to vector<8x128xf32>
    %112 = arith.addf %110, %111 : vector<8x128xf32>
    %113 = arith.negf %112 : vector<8x128xf32>
    %114 = math.exp %113 : vector<8x128xf32>
    %cst_40 = arith.constant 1.000000e+00 : f32
    %115 = vector.broadcast %cst_40 : f32 to vector<8x128xf32>
    %116 = arith.addf %115, %114 : vector<8x128xf32>
    %117 = arith.divf %115, %116 : vector<8x128xf32>
    %118 = vector.extract_strided_slice %98 {offsets = [0, 256], sizes = [8, 128], strides = [1, 1]} : vector<8x384xf32> to vector<8x128xf32>
    %119 = vector.extract_strided_slice %101 {offsets = [0, 256], sizes = [8, 128], strides = [1, 1]} : vector<8x384xf32> to vector<8x128xf32>
    %120 = arith.mulf %109, %119 : vector<8x128xf32>
    %121 = arith.addf %118, %120 : vector<8x128xf32>
    %122 = math.tanh %121 : vector<8x128xf32>
    %cst_41 = arith.constant 1.000000e+00 : f32
    %123 = vector.broadcast %cst_41 : f32 to vector<8x128xf32>
    %124 = arith.subf %123, %117 : vector<8x128xf32>
    %125 = arith.mulf %124, %122 : vector<8x128xf32>
    %126 = arith.mulf %117, %54 : vector<8x128xf32>
    %127 = arith.addf %125, %126 : vector<8x128xf32>
    %128 = arith.index_cast %c1_i32 : i32 to index
    %c0_42 = arith.constant 0 : index
    %c0_43 = arith.constant 0 : index
    %129 = vector.load %arg8[%128, %c0_42, %c0_43] : memref<6x8x256xf32, #tpu.memory_space<vmem>>, vector<1x8x128xf32>
    %130 = vector.shape_cast %129 : vector<1x8x128xf32> to vector<8x128xf32>
    %131 = vector.shape_cast %127 : vector<8x128xf32> to vector<1x8x128xf32>
    tpu.vector_store %arg8[%128, %c0_42, %c0_43], %131 {strides = array<i32>} : memref<6x8x256xf32, #tpu.memory_space<vmem>>, vector<1x8x128xf32>,
    %c5_i32_44 = arith.constant 5 : i32
    %132 = arith.subi %c5_i32_44, %c1_i32 : i32
    %133 = arith.index_cast %132 : i32 to index
    %c0_45 = arith.constant 0 : index
    %c0_46 = arith.constant 0 : index
    %134 = vector.load %arg10[%133, %c0_45, %c0_46] : memref<6x8x384xf32, #tpu.memory_space<vmem>>, vector<1x8x384xf32>
    %135 = vector.shape_cast %134 : vector<1x8x384xf32> to vector<8x384xf32>
    %136 = arith.truncf %91 : vector<8x128xf32> to vector<8x128xbf16>
    %cst_47 = arith.constant dense<0.000000e+00> : vector<8x384xf32>
    %137 = tpu.matmul %136, %21, %cst_47 {dimension_numbers = #tpu.dot_dimension_numbers<[1], [0], [0], [1], [0, 0, 1, 1], [], []>} : vector<8x128xbf16>, vector<128x384xbf16>, vector<8x384xf32> -> vector<8x384xf32>
    %138 = arith.addf %137, %19 : vector<8x384xf32>
    %139 = vector.extract_strided_slice %135 {offsets = [0, 0], sizes = [8, 128], strides = [1, 1]} : vector<8x384xf32> to vector<8x128xf32>
    %140 = vector.extract_strided_slice %138 {offsets = [0, 0], sizes = [8, 128], strides = [1, 1]} : vector<8x384xf32> to vector<8x128xf32>
    %141 = arith.addf %139, %140 : vector<8x128xf32>
    %142 = arith.negf %141 : vector<8x128xf32>
    %143 = math.exp %142 : vector<8x128xf32>
    %cst_48 = arith.constant 1.000000e+00 : f32
    %144 = vector.broadcast %cst_48 : f32 to vector<8x128xf32>
    %145 = arith.addf %144, %143 : vector<8x128xf32>
    %146 = arith.divf %144, %145 : vector<8x128xf32>
    %147 = vector.extract_strided_slice %135 {offsets = [0, 128], sizes = [8, 128], strides = [1, 1]} : vector<8x384xf32> to vector<8x128xf32>
    %148 = vector.extract_strided_slice %138 {offsets = [0, 128], sizes = [8, 128], strides = [1, 1]} : vector<8x384xf32> to vector<8x128xf32>
    %149 = arith.addf %147, %148 : vector<8x128xf32>
    %150 = arith.negf %149 : vector<8x128xf32>
    %151 = math.exp %150 : vector<8x128xf32>
    %cst_49 = arith.constant 1.000000e+00 : f32
    %152 = vector.broadcast %cst_49 : f32 to vector<8x128xf32>
    %153 = arith.addf %152, %151 : vector<8x128xf32>
    %154 = arith.divf %152, %153 : vector<8x128xf32>
    %155 = vector.extract_strided_slice %135 {offsets = [0, 256], sizes = [8, 128], strides = [1, 1]} : vector<8x384xf32> to vector<8x128xf32>
    %156 = vector.extract_strided_slice %138 {offsets = [0, 256], sizes = [8, 128], strides = [1, 1]} : vector<8x384xf32> to vector<8x128xf32>
    %157 = arith.mulf %146, %156 : vector<8x128xf32>
    %158 = arith.addf %155, %157 : vector<8x128xf32>
    %159 = math.tanh %158 : vector<8x128xf32>
    %cst_50 = arith.constant 1.000000e+00 : f32
    %160 = vector.broadcast %cst_50 : f32 to vector<8x128xf32>
    %161 = arith.subf %160, %154 : vector<8x128xf32>
    %162 = arith.mulf %161, %159 : vector<8x128xf32>
    %163 = arith.mulf %154, %91 : vector<8x128xf32>
    %164 = arith.addf %162, %163 : vector<8x128xf32>
    %165 = arith.index_cast %132 : i32 to index
    %c0_51 = arith.constant 0 : index
    %c128_52 = arith.constant 128 : index
    %166 = vector.load %arg8[%165, %c0_51, %c128_52] : memref<6x8x256xf32, #tpu.memory_space<vmem>>, vector<1x8x128xf32>
    %167 = vector.shape_cast %166 : vector<1x8x128xf32> to vector<8x128xf32>
    %168 = vector.shape_cast %164 : vector<8x128xf32> to vector<1x8x128xf32>
    tpu.vector_store %arg8[%165, %c0_51, %c128_52], %168 {strides = array<i32>} : memref<6x8x256xf32, #tpu.memory_space<vmem>>, vector<1x8x128xf32>,
    %c2_i32 = arith.constant 2 : i32
    %169 = arith.index_cast %c2_i32 : i32 to index
    %c0_53 = arith.constant 0 : index
    %c0_54 = arith.constant 0 : index
    %170 = vector.load %arg9[%169, %c0_53, %c0_54] : memref<6x8x384xf32, #tpu.memory_space<vmem>>, vector<1x8x384xf32>
    %171 = vector.shape_cast %170 : vector<1x8x384xf32> to vector<8x384xf32>
    %172 = arith.truncf %127 : vector<8x128xf32> to vector<8x128xbf16>
    %cst_55 = arith.constant dense<0.000000e+00> : vector<8x384xf32>
    %173 = tpu.matmul %172, %20, %cst_55 {dimension_numbers = #tpu.dot_dimension_numbers<[1], [0], [0], [1], [0, 0, 1, 1], [], []>} : vector<8x128xbf16>, vector<128x384xbf16>, vector<8x384xf32> -> vector<8x384xf32>
    %174 = arith.addf %173, %16 : vector<8x384xf32>
    %175 = vector.extract_strided_slice %171 {offsets = [0, 0], sizes = [8, 128], strides = [1, 1]} : vector<8x384xf32> to vector<8x128xf32>
    %176 = vector.extract_strided_slice %174 {offsets = [0, 0], sizes = [8, 128], strides = [1, 1]} : vector<8x384xf32> to vector<8x128xf32>
    %177 = arith.addf %175, %176 : vector<8x128xf32>
    %178 = arith.negf %177 : vector<8x128xf32>
    %179 = math.exp %178 : vector<8x128xf32>
    %cst_56 = arith.constant 1.000000e+00 : f32
    %180 = vector.broadcast %cst_56 : f32 to vector<8x128xf32>
    %181 = arith.addf %180, %179 : vector<8x128xf32>
    %182 = arith.divf %180, %181 : vector<8x128xf32>
    %183 = vector.extract_strided_slice %171 {offsets = [0, 128], sizes = [8, 128], strides = [1, 1]} : vector<8x384xf32> to vector<8x128xf32>
    %184 = vector.extract_strided_slice %174 {offsets = [0, 128], sizes = [8, 128], strides = [1, 1]} : vector<8x384xf32> to vector<8x128xf32>
    %185 = arith.addf %183, %184 : vector<8x128xf32>
    %186 = arith.negf %185 : vector<8x128xf32>
    %187 = math.exp %186 : vector<8x128xf32>
    %cst_57 = arith.constant 1.000000e+00 : f32
    %188 = vector.broadcast %cst_57 : f32 to vector<8x128xf32>
    %189 = arith.addf %188, %187 : vector<8x128xf32>
    %190 = arith.divf %188, %189 : vector<8x128xf32>
    %191 = vector.extract_strided_slice %171 {offsets = [0, 256], sizes = [8, 128], strides = [1, 1]} : vector<8x384xf32> to vector<8x128xf32>
    %192 = vector.extract_strided_slice %174 {offsets = [0, 256], sizes = [8, 128], strides = [1, 1]} : vector<8x384xf32> to vector<8x128xf32>
    %193 = arith.mulf %182, %192 : vector<8x128xf32>
    %194 = arith.addf %191, %193 : vector<8x128xf32>
    %195 = math.tanh %194 : vector<8x128xf32>
    %cst_58 = arith.constant 1.000000e+00 : f32
    %196 = vector.broadcast %cst_58 : f32 to vector<8x128xf32>
    %197 = arith.subf %196, %190 : vector<8x128xf32>
    %198 = arith.mulf %197, %195 : vector<8x128xf32>
    %199 = arith.mulf %190, %127 : vector<8x128xf32>
    %200 = arith.addf %198, %199 : vector<8x128xf32>
    %201 = arith.index_cast %c2_i32 : i32 to index
    %c0_59 = arith.constant 0 : index
    %c0_60 = arith.constant 0 : index
    %202 = vector.load %arg8[%201, %c0_59, %c0_60] : memref<6x8x256xf32, #tpu.memory_space<vmem>>, vector<1x8x128xf32>
    %203 = vector.shape_cast %202 : vector<1x8x128xf32> to vector<8x128xf32>
    %204 = vector.shape_cast %200 : vector<8x128xf32> to vector<1x8x128xf32>
    tpu.vector_store %arg8[%201, %c0_59, %c0_60], %204 {strides = array<i32>} : memref<6x8x256xf32, #tpu.memory_space<vmem>>, vector<1x8x128xf32>,
    %c5_i32_61 = arith.constant 5 : i32
    %205 = arith.subi %c5_i32_61, %c2_i32 : i32
    %206 = arith.index_cast %205 : i32 to index
    %c0_62 = arith.constant 0 : index
    %c0_63 = arith.constant 0 : index
    %207 = vector.load %arg10[%206, %c0_62, %c0_63] : memref<6x8x384xf32, #tpu.memory_space<vmem>>, vector<1x8x384xf32>
    %208 = vector.shape_cast %207 : vector<1x8x384xf32> to vector<8x384xf32>
    %209 = arith.truncf %164 : vector<8x128xf32> to vector<8x128xbf16>
    %cst_64 = arith.constant dense<0.000000e+00> : vector<8x384xf32>
    %210 = tpu.matmul %209, %21, %cst_64 {dimension_numbers = #tpu.dot_dimension_numbers<[1], [0], [0], [1], [0, 0, 1, 1], [], []>} : vector<8x128xbf16>, vector<128x384xbf16>, vector<8x384xf32> -> vector<8x384xf32>
    %211 = arith.addf %210, %19 : vector<8x384xf32>
    %212 = vector.extract_strided_slice %208 {offsets = [0, 0], sizes = [8, 128], strides = [1, 1]} : vector<8x384xf32> to vector<8x128xf32>
    %213 = vector.extract_strided_slice %211 {offsets = [0, 0], sizes = [8, 128], strides = [1, 1]} : vector<8x384xf32> to vector<8x128xf32>
    %214 = arith.addf %212, %213 : vector<8x128xf32>
    %215 = arith.negf %214 : vector<8x128xf32>
    %216 = math.exp %215 : vector<8x128xf32>
    %cst_65 = arith.constant 1.000000e+00 : f32
    %217 = vector.broadcast %cst_65 : f32 to vector<8x128xf32>
    %218 = arith.addf %217, %216 : vector<8x128xf32>
    %219 = arith.divf %217, %218 : vector<8x128xf32>
    %220 = vector.extract_strided_slice %208 {offsets = [0, 128], sizes = [8, 128], strides = [1, 1]} : vector<8x384xf32> to vector<8x128xf32>
    %221 = vector.extract_strided_slice %211 {offsets = [0, 128], sizes = [8, 128], strides = [1, 1]} : vector<8x384xf32> to vector<8x128xf32>
    %222 = arith.addf %220, %221 : vector<8x128xf32>
    %223 = arith.negf %222 : vector<8x128xf32>
    %224 = math.exp %223 : vector<8x128xf32>
    %cst_66 = arith.constant 1.000000e+00 : f32
    %225 = vector.broadcast %cst_66 : f32 to vector<8x128xf32>
    %226 = arith.addf %225, %224 : vector<8x128xf32>
    %227 = arith.divf %225, %226 : vector<8x128xf32>
    %228 = vector.extract_strided_slice %208 {offsets = [0, 256], sizes = [8, 128], strides = [1, 1]} : vector<8x384xf32> to vector<8x128xf32>
    %229 = vector.extract_strided_slice %211 {offsets = [0, 256], sizes = [8, 128], strides = [1, 1]} : vector<8x384xf32> to vector<8x128xf32>
    %230 = arith.mulf %219, %229 : vector<8x128xf32>
    %231 = arith.addf %228, %230 : vector<8x128xf32>
    %232 = math.tanh %231 : vector<8x128xf32>
    %cst_67 = arith.constant 1.000000e+00 : f32
    %233 = vector.broadcast %cst_67 : f32 to vector<8x128xf32>
    %234 = arith.subf %233, %227 : vector<8x128xf32>
    %235 = arith.mulf %234, %232 : vector<8x128xf32>
    %236 = arith.mulf %227, %164 : vector<8x128xf32>
    %237 = arith.addf %235, %236 : vector<8x128xf32>
    %238 = arith.index_cast %205 : i32 to index
    %c0_68 = arith.constant 0 : index
    %c128_69 = arith.constant 128 : index
    %239 = vector.load %arg8[%238, %c0_68, %c128_69] : memref<6x8x256xf32, #tpu.memory_space<vmem>>, vector<1x8x128xf32>
    %240 = vector.shape_cast %239 : vector<1x8x128xf32> to vector<8x128xf32>
    %241 = vector.shape_cast %237 : vector<8x128xf32> to vector<1x8x128xf32>
    tpu.vector_store %arg8[%238, %c0_68, %c128_69], %241 {strides = array<i32>} : memref<6x8x256xf32, #tpu.memory_space<vmem>>, vector<1x8x128xf32>,
    %c3_i32 = arith.constant 3 : i32
    %242 = arith.index_cast %c3_i32 : i32 to index
    %c0_70 = arith.constant 0 : index
    %c0_71 = arith.constant 0 : index
    %243 = vector.load %arg9[%242, %c0_70, %c0_71] : memref<6x8x384xf32, #tpu.memory_space<vmem>>, vector<1x8x384xf32>
    %244 = vector.shape_cast %243 : vector<1x8x384xf32> to vector<8x384xf32>
    %245 = arith.truncf %200 : vector<8x128xf32> to vector<8x128xbf16>
    %cst_72 = arith.constant dense<0.000000e+00> : vector<8x384xf32>
    %246 = tpu.matmul %245, %20, %cst_72 {dimension_numbers = #tpu.dot_dimension_numbers<[1], [0], [0], [1], [0, 0, 1, 1], [], []>} : vector<8x128xbf16>, vector<128x384xbf16>, vector<8x384xf32> -> vector<8x384xf32>
    %247 = arith.addf %246, %16 : vector<8x384xf32>
    %248 = vector.extract_strided_slice %244 {offsets = [0, 0], sizes = [8, 128], strides = [1, 1]} : vector<8x384xf32> to vector<8x128xf32>
    %249 = vector.extract_strided_slice %247 {offsets = [0, 0], sizes = [8, 128], strides = [1, 1]} : vector<8x384xf32> to vector<8x128xf32>
    %250 = arith.addf %248, %249 : vector<8x128xf32>
    %251 = arith.negf %250 : vector<8x128xf32>
    %252 = math.exp %251 : vector<8x128xf32>
    %cst_73 = arith.constant 1.000000e+00 : f32
    %253 = vector.broadcast %cst_73 : f32 to vector<8x128xf32>
    %254 = arith.addf %253, %252 : vector<8x128xf32>
    %255 = arith.divf %253, %254 : vector<8x128xf32>
    %256 = vector.extract_strided_slice %244 {offsets = [0, 128], sizes = [8, 128], strides = [1, 1]} : vector<8x384xf32> to vector<8x128xf32>
    %257 = vector.extract_strided_slice %247 {offsets = [0, 128], sizes = [8, 128], strides = [1, 1]} : vector<8x384xf32> to vector<8x128xf32>
    %258 = arith.addf %256, %257 : vector<8x128xf32>
    %259 = arith.negf %258 : vector<8x128xf32>
    %260 = math.exp %259 : vector<8x128xf32>
    %cst_74 = arith.constant 1.000000e+00 : f32
    %261 = vector.broadcast %cst_74 : f32 to vector<8x128xf32>
    %262 = arith.addf %261, %260 : vector<8x128xf32>
    %263 = arith.divf %261, %262 : vector<8x128xf32>
    %264 = vector.extract_strided_slice %244 {offsets = [0, 256], sizes = [8, 128], strides = [1, 1]} : vector<8x384xf32> to vector<8x128xf32>
    %265 = vector.extract_strided_slice %247 {offsets = [0, 256], sizes = [8, 128], strides = [1, 1]} : vector<8x384xf32> to vector<8x128xf32>
    %266 = arith.mulf %255, %265 : vector<8x128xf32>
    %267 = arith.addf %264, %266 : vector<8x128xf32>
    %268 = math.tanh %267 : vector<8x128xf32>
    %cst_75 = arith.constant 1.000000e+00 : f32
    %269 = vector.broadcast %cst_75 : f32 to vector<8x128xf32>
    %270 = arith.subf %269, %263 : vector<8x128xf32>
    %271 = arith.mulf %270, %268 : vector<8x128xf32>
    %272 = arith.mulf %263, %200 : vector<8x128xf32>
    %273 = arith.addf %271, %272 : vector<8x128xf32>
    %274 = arith.index_cast %c3_i32 : i32 to index
    %c0_76 = arith.constant 0 : index
    %c0_77 = arith.constant 0 : index
    %275 = vector.load %arg8[%274, %c0_76, %c0_77] : memref<6x8x256xf32, #tpu.memory_space<vmem>>, vector<1x8x128xf32>
    %276 = vector.shape_cast %275 : vector<1x8x128xf32> to vector<8x128xf32>
    %277 = vector.shape_cast %273 : vector<8x128xf32> to vector<1x8x128xf32>
    tpu.vector_store %arg8[%274, %c0_76, %c0_77], %277 {strides = array<i32>} : memref<6x8x256xf32, #tpu.memory_space<vmem>>, vector<1x8x128xf32>,
    %c5_i32_78 = arith.constant 5 : i32
    %278 = arith.subi %c5_i32_78, %c3_i32 : i32
    %279 = arith.index_cast %278 : i32 to index
    %c0_79 = arith.constant 0 : index
    %c0_80 = arith.constant 0 : index
    %280 = vector.load %arg10[%279, %c0_79, %c0_80] : memref<6x8x384xf32, #tpu.memory_space<vmem>>, vector<1x8x384xf32>
    %281 = vector.shape_cast %280 : vector<1x8x384xf32> to vector<8x384xf32>
    %282 = arith.truncf %237 : vector<8x128xf32> to vector<8x128xbf16>
    %cst_81 = arith.constant dense<0.000000e+00> : vector<8x384xf32>
    %283 = tpu.matmul %282, %21, %cst_81 {dimension_numbers = #tpu.dot_dimension_numbers<[1], [0], [0], [1], [0, 0, 1, 1], [], []>} : vector<8x128xbf16>, vector<128x384xbf16>, vector<8x384xf32> -> vector<8x384xf32>
    %284 = arith.addf %283, %19 : vector<8x384xf32>
    %285 = vector.extract_strided_slice %281 {offsets = [0, 0], sizes = [8, 128], strides = [1, 1]} : vector<8x384xf32> to vector<8x128xf32>
    %286 = vector.extract_strided_slice %284 {offsets = [0, 0], sizes = [8, 128], strides = [1, 1]} : vector<8x384xf32> to vector<8x128xf32>
    %287 = arith.addf %285, %286 : vector<8x128xf32>
    %288 = arith.negf %287 : vector<8x128xf32>
    %289 = math.exp %288 : vector<8x128xf32>
    %cst_82 = arith.constant 1.000000e+00 : f32
    %290 = vector.broadcast %cst_82 : f32 to vector<8x128xf32>
    %291 = arith.addf %290, %289 : vector<8x128xf32>
    %292 = arith.divf %290, %291 : vector<8x128xf32>
    %293 = vector.extract_strided_slice %281 {offsets = [0, 128], sizes = [8, 128], strides = [1, 1]} : vector<8x384xf32> to vector<8x128xf32>
    %294 = vector.extract_strided_slice %284 {offsets = [0, 128], sizes = [8, 128], strides = [1, 1]} : vector<8x384xf32> to vector<8x128xf32>
    %295 = arith.addf %293, %294 : vector<8x128xf32>
    %296 = arith.negf %295 : vector<8x128xf32>
    %297 = math.exp %296 : vector<8x128xf32>
    %cst_83 = arith.constant 1.000000e+00 : f32
    %298 = vector.broadcast %cst_83 : f32 to vector<8x128xf32>
    %299 = arith.addf %298, %297 : vector<8x128xf32>
    %300 = arith.divf %298, %299 : vector<8x128xf32>
    %301 = vector.extract_strided_slice %281 {offsets = [0, 256], sizes = [8, 128], strides = [1, 1]} : vector<8x384xf32> to vector<8x128xf32>
    %302 = vector.extract_strided_slice %284 {offsets = [0, 256], sizes = [8, 128], strides = [1, 1]} : vector<8x384xf32> to vector<8x128xf32>
    %303 = arith.mulf %292, %302 : vector<8x128xf32>
    %304 = arith.addf %301, %303 : vector<8x128xf32>
    %305 = math.tanh %304 : vector<8x128xf32>
    %cst_84 = arith.constant 1.000000e+00 : f32
    %306 = vector.broadcast %cst_84 : f32 to vector<8x128xf32>
    %307 = arith.subf %306, %300 : vector<8x128xf32>
    %308 = arith.mulf %307, %305 : vector<8x128xf32>
    %309 = arith.mulf %300, %237 : vector<8x128xf32>
    %310 = arith.addf %308, %309 : vector<8x128xf32>
    %311 = arith.index_cast %278 : i32 to index
    %c0_85 = arith.constant 0 : index
    %c128_86 = arith.constant 128 : index
    %312 = vector.load %arg8[%311, %c0_85, %c128_86] : memref<6x8x256xf32, #tpu.memory_space<vmem>>, vector<1x8x128xf32>
    %313 = vector.shape_cast %312 : vector<1x8x128xf32> to vector<8x128xf32>
    %314 = vector.shape_cast %310 : vector<8x128xf32> to vector<1x8x128xf32>
    tpu.vector_store %arg8[%311, %c0_85, %c128_86], %314 {strides = array<i32>} : memref<6x8x256xf32, #tpu.memory_space<vmem>>, vector<1x8x128xf32>,
    %c4_i32 = arith.constant 4 : i32
    %315 = arith.index_cast %c4_i32 : i32 to index
    %c0_87 = arith.constant 0 : index
    %c0_88 = arith.constant 0 : index
    %316 = vector.load %arg9[%315, %c0_87, %c0_88] : memref<6x8x384xf32, #tpu.memory_space<vmem>>, vector<1x8x384xf32>
    %317 = vector.shape_cast %316 : vector<1x8x384xf32> to vector<8x384xf32>
    %318 = arith.truncf %273 : vector<8x128xf32> to vector<8x128xbf16>
    %cst_89 = arith.constant dense<0.000000e+00> : vector<8x384xf32>
    %319 = tpu.matmul %318, %20, %cst_89 {dimension_numbers = #tpu.dot_dimension_numbers<[1], [0], [0], [1], [0, 0, 1, 1], [], []>} : vector<8x128xbf16>, vector<128x384xbf16>, vector<8x384xf32> -> vector<8x384xf32>
    %320 = arith.addf %319, %16 : vector<8x384xf32>
    %321 = vector.extract_strided_slice %317 {offsets = [0, 0], sizes = [8, 128], strides = [1, 1]} : vector<8x384xf32> to vector<8x128xf32>
    %322 = vector.extract_strided_slice %320 {offsets = [0, 0], sizes = [8, 128], strides = [1, 1]} : vector<8x384xf32> to vector<8x128xf32>
    %323 = arith.addf %321, %322 : vector<8x128xf32>
    %324 = arith.negf %323 : vector<8x128xf32>
    %325 = math.exp %324 : vector<8x128xf32>
    %cst_90 = arith.constant 1.000000e+00 : f32
    %326 = vector.broadcast %cst_90 : f32 to vector<8x128xf32>
    %327 = arith.addf %326, %325 : vector<8x128xf32>
    %328 = arith.divf %326, %327 : vector<8x128xf32>
    %329 = vector.extract_strided_slice %317 {offsets = [0, 128], sizes = [8, 128], strides = [1, 1]} : vector<8x384xf32> to vector<8x128xf32>
    %330 = vector.extract_strided_slice %320 {offsets = [0, 128], sizes = [8, 128], strides = [1, 1]} : vector<8x384xf32> to vector<8x128xf32>
    %331 = arith.addf %329, %330 : vector<8x128xf32>
    %332 = arith.negf %331 : vector<8x128xf32>
    %333 = math.exp %332 : vector<8x128xf32>
    %cst_91 = arith.constant 1.000000e+00 : f32
    %334 = vector.broadcast %cst_91 : f32 to vector<8x128xf32>
    %335 = arith.addf %334, %333 : vector<8x128xf32>
    %336 = arith.divf %334, %335 : vector<8x128xf32>
    %337 = vector.extract_strided_slice %317 {offsets = [0, 256], sizes = [8, 128], strides = [1, 1]} : vector<8x384xf32> to vector<8x128xf32>
    %338 = vector.extract_strided_slice %320 {offsets = [0, 256], sizes = [8, 128], strides = [1, 1]} : vector<8x384xf32> to vector<8x128xf32>
    %339 = arith.mulf %328, %338 : vector<8x128xf32>
    %340 = arith.addf %337, %339 : vector<8x128xf32>
    %341 = math.tanh %340 : vector<8x128xf32>
    %cst_92 = arith.constant 1.000000e+00 : f32
    %342 = vector.broadcast %cst_92 : f32 to vector<8x128xf32>
    %343 = arith.subf %342, %336 : vector<8x128xf32>
    %344 = arith.mulf %343, %341 : vector<8x128xf32>
    %345 = arith.mulf %336, %273 : vector<8x128xf32>
    %346 = arith.addf %344, %345 : vector<8x128xf32>
    %347 = arith.index_cast %c4_i32 : i32 to index
    %c0_93 = arith.constant 0 : index
    %c0_94 = arith.constant 0 : index
    %348 = vector.load %arg8[%347, %c0_93, %c0_94] : memref<6x8x256xf32, #tpu.memory_space<vmem>>, vector<1x8x128xf32>
    %349 = vector.shape_cast %348 : vector<1x8x128xf32> to vector<8x128xf32>
    %350 = vector.shape_cast %346 : vector<8x128xf32> to vector<1x8x128xf32>
    tpu.vector_store %arg8[%347, %c0_93, %c0_94], %350 {strides = array<i32>} : memref<6x8x256xf32, #tpu.memory_space<vmem>>, vector<1x8x128xf32>,
    %c5_i32_95 = arith.constant 5 : i32
    %351 = arith.subi %c5_i32_95, %c4_i32 : i32
    %352 = arith.index_cast %351 : i32 to index
    %c0_96 = arith.constant 0 : index
    %c0_97 = arith.constant 0 : index
    %353 = vector.load %arg10[%352, %c0_96, %c0_97] : memref<6x8x384xf32, #tpu.memory_space<vmem>>, vector<1x8x384xf32>
    %354 = vector.shape_cast %353 : vector<1x8x384xf32> to vector<8x384xf32>
    %355 = arith.truncf %310 : vector<8x128xf32> to vector<8x128xbf16>
    %cst_98 = arith.constant dense<0.000000e+00> : vector<8x384xf32>
    %356 = tpu.matmul %355, %21, %cst_98 {dimension_numbers = #tpu.dot_dimension_numbers<[1], [0], [0], [1], [0, 0, 1, 1], [], []>} : vector<8x128xbf16>, vector<128x384xbf16>, vector<8x384xf32> -> vector<8x384xf32>
    %357 = arith.addf %356, %19 : vector<8x384xf32>
    %358 = vector.extract_strided_slice %354 {offsets = [0, 0], sizes = [8, 128], strides = [1, 1]} : vector<8x384xf32> to vector<8x128xf32>
    %359 = vector.extract_strided_slice %357 {offsets = [0, 0], sizes = [8, 128], strides = [1, 1]} : vector<8x384xf32> to vector<8x128xf32>
    %360 = arith.addf %358, %359 : vector<8x128xf32>
    %361 = arith.negf %360 : vector<8x128xf32>
    %362 = math.exp %361 : vector<8x128xf32>
    %cst_99 = arith.constant 1.000000e+00 : f32
    %363 = vector.broadcast %cst_99 : f32 to vector<8x128xf32>
    %364 = arith.addf %363, %362 : vector<8x128xf32>
    %365 = arith.divf %363, %364 : vector<8x128xf32>
    %366 = vector.extract_strided_slice %354 {offsets = [0, 128], sizes = [8, 128], strides = [1, 1]} : vector<8x384xf32> to vector<8x128xf32>
    %367 = vector.extract_strided_slice %357 {offsets = [0, 128], sizes = [8, 128], strides = [1, 1]} : vector<8x384xf32> to vector<8x128xf32>
    %368 = arith.addf %366, %367 : vector<8x128xf32>
    %369 = arith.negf %368 : vector<8x128xf32>
    %370 = math.exp %369 : vector<8x128xf32>
    %cst_100 = arith.constant 1.000000e+00 : f32
    %371 = vector.broadcast %cst_100 : f32 to vector<8x128xf32>
    %372 = arith.addf %371, %370 : vector<8x128xf32>
    %373 = arith.divf %371, %372 : vector<8x128xf32>
    %374 = vector.extract_strided_slice %354 {offsets = [0, 256], sizes = [8, 128], strides = [1, 1]} : vector<8x384xf32> to vector<8x128xf32>
    %375 = vector.extract_strided_slice %357 {offsets = [0, 256], sizes = [8, 128], strides = [1, 1]} : vector<8x384xf32> to vector<8x128xf32>
    %376 = arith.mulf %365, %375 : vector<8x128xf32>
    %377 = arith.addf %374, %376 : vector<8x128xf32>
    %378 = math.tanh %377 : vector<8x128xf32>
    %cst_101 = arith.constant 1.000000e+00 : f32
    %379 = vector.broadcast %cst_101 : f32 to vector<8x128xf32>
    %380 = arith.subf %379, %373 : vector<8x128xf32>
    %381 = arith.mulf %380, %378 : vector<8x128xf32>
    %382 = arith.mulf %373, %310 : vector<8x128xf32>
    %383 = arith.addf %381, %382 : vector<8x128xf32>
    %384 = arith.index_cast %351 : i32 to index
    %c0_102 = arith.constant 0 : index
    %c128_103 = arith.constant 128 : index
    %385 = vector.load %arg8[%384, %c0_102, %c128_103] : memref<6x8x256xf32, #tpu.memory_space<vmem>>, vector<1x8x128xf32>
    %386 = vector.shape_cast %385 : vector<1x8x128xf32> to vector<8x128xf32>
    %387 = vector.shape_cast %383 : vector<8x128xf32> to vector<1x8x128xf32>
    tpu.vector_store %arg8[%384, %c0_102, %c128_103], %387 {strides = array<i32>} : memref<6x8x256xf32, #tpu.memory_space<vmem>>, vector<1x8x128xf32>,
    %c5_i32_104 = arith.constant 5 : i32
    %388 = arith.index_cast %c5_i32_104 : i32 to index
    %c0_105 = arith.constant 0 : index
    %c0_106 = arith.constant 0 : index
    %389 = vector.load %arg9[%388, %c0_105, %c0_106] : memref<6x8x384xf32, #tpu.memory_space<vmem>>, vector<1x8x384xf32>
    %390 = vector.shape_cast %389 : vector<1x8x384xf32> to vector<8x384xf32>
    %391 = arith.truncf %346 : vector<8x128xf32> to vector<8x128xbf16>
    %cst_107 = arith.constant dense<0.000000e+00> : vector<8x384xf32>
    %392 = tpu.matmul %391, %20, %cst_107 {dimension_numbers = #tpu.dot_dimension_numbers<[1], [0], [0], [1], [0, 0, 1, 1], [], []>} : vector<8x128xbf16>, vector<128x384xbf16>, vector<8x384xf32> -> vector<8x384xf32>
    %393 = arith.addf %392, %16 : vector<8x384xf32>
    %394 = vector.extract_strided_slice %390 {offsets = [0, 0], sizes = [8, 128], strides = [1, 1]} : vector<8x384xf32> to vector<8x128xf32>
    %395 = vector.extract_strided_slice %393 {offsets = [0, 0], sizes = [8, 128], strides = [1, 1]} : vector<8x384xf32> to vector<8x128xf32>
    %396 = arith.addf %394, %395 : vector<8x128xf32>
    %397 = arith.negf %396 : vector<8x128xf32>
    %398 = math.exp %397 : vector<8x128xf32>
    %cst_108 = arith.constant 1.000000e+00 : f32
    %399 = vector.broadcast %cst_108 : f32 to vector<8x128xf32>
    %400 = arith.addf %399, %398 : vector<8x128xf32>
    %401 = arith.divf %399, %400 : vector<8x128xf32>
    %402 = vector.extract_strided_slice %390 {offsets = [0, 128], sizes = [8, 128], strides = [1, 1]} : vector<8x384xf32> to vector<8x128xf32>
    %403 = vector.extract_strided_slice %393 {offsets = [0, 128], sizes = [8, 128], strides = [1, 1]} : vector<8x384xf32> to vector<8x128xf32>
    %404 = arith.addf %402, %403 : vector<8x128xf32>
    %405 = arith.negf %404 : vector<8x128xf32>
    %406 = math.exp %405 : vector<8x128xf32>
    %cst_109 = arith.constant 1.000000e+00 : f32
    %407 = vector.broadcast %cst_109 : f32 to vector<8x128xf32>
    %408 = arith.addf %407, %406 : vector<8x128xf32>
    %409 = arith.divf %407, %408 : vector<8x128xf32>
    %410 = vector.extract_strided_slice %390 {offsets = [0, 256], sizes = [8, 128], strides = [1, 1]} : vector<8x384xf32> to vector<8x128xf32>
    %411 = vector.extract_strided_slice %393 {offsets = [0, 256], sizes = [8, 128], strides = [1, 1]} : vector<8x384xf32> to vector<8x128xf32>
    %412 = arith.mulf %401, %411 : vector<8x128xf32>
    %413 = arith.addf %410, %412 : vector<8x128xf32>
    %414 = math.tanh %413 : vector<8x128xf32>
    %cst_110 = arith.constant 1.000000e+00 : f32
    %415 = vector.broadcast %cst_110 : f32 to vector<8x128xf32>
    %416 = arith.subf %415, %409 : vector<8x128xf32>
    %417 = arith.mulf %416, %414 : vector<8x128xf32>
    %418 = arith.mulf %409, %346 : vector<8x128xf32>
    %419 = arith.addf %417, %418 : vector<8x128xf32>
    %420 = arith.index_cast %c5_i32_104 : i32 to index
    %c0_111 = arith.constant 0 : index
    %c0_112 = arith.constant 0 : index
    %421 = vector.load %arg8[%420, %c0_111, %c0_112] : memref<6x8x256xf32, #tpu.memory_space<vmem>>, vector<1x8x128xf32>
    %422 = vector.shape_cast %421 : vector<1x8x128xf32> to vector<8x128xf32>
    %423 = vector.shape_cast %419 : vector<8x128xf32> to vector<1x8x128xf32>
    tpu.vector_store %arg8[%420, %c0_111, %c0_112], %423 {strides = array<i32>} : memref<6x8x256xf32, #tpu.memory_space<vmem>>, vector<1x8x128xf32>,
    %c5_i32_113 = arith.constant 5 : i32
    %424 = arith.subi %c5_i32_113, %c5_i32_104 : i32
    %425 = arith.index_cast %424 : i32 to index
    %c0_114 = arith.constant 0 : index
    %c0_115 = arith.constant 0 : index
    %426 = vector.load %arg10[%425, %c0_114, %c0_115] : memref<6x8x384xf32, #tpu.memory_space<vmem>>, vector<1x8x384xf32>
    %427 = vector.shape_cast %426 : vector<1x8x384xf32> to vector<8x384xf32>
    %428 = arith.truncf %383 : vector<8x128xf32> to vector<8x128xbf16>
    %cst_116 = arith.constant dense<0.000000e+00> : vector<8x384xf32>
    %429 = tpu.matmul %428, %21, %cst_116 {dimension_numbers = #tpu.dot_dimension_numbers<[1], [0], [0], [1], [0, 0, 1, 1], [], []>} : vector<8x128xbf16>, vector<128x384xbf16>, vector<8x384xf32> -> vector<8x384xf32>
    %430 = arith.addf %429, %19 : vector<8x384xf32>
    %431 = vector.extract_strided_slice %427 {offsets = [0, 0], sizes = [8, 128], strides = [1, 1]} : vector<8x384xf32> to vector<8x128xf32>
    %432 = vector.extract_strided_slice %430 {offsets = [0, 0], sizes = [8, 128], strides = [1, 1]} : vector<8x384xf32> to vector<8x128xf32>
    %433 = arith.addf %431, %432 : vector<8x128xf32>
    %434 = arith.negf %433 : vector<8x128xf32>
    %435 = math.exp %434 : vector<8x128xf32>
    %cst_117 = arith.constant 1.000000e+00 : f32
    %436 = vector.broadcast %cst_117 : f32 to vector<8x128xf32>
    %437 = arith.addf %436, %435 : vector<8x128xf32>
    %438 = arith.divf %436, %437 : vector<8x128xf32>
    %439 = vector.extract_strided_slice %427 {offsets = [0, 128], sizes = [8, 128], strides = [1, 1]} : vector<8x384xf32> to vector<8x128xf32>
    %440 = vector.extract_strided_slice %430 {offsets = [0, 128], sizes = [8, 128], strides = [1, 1]} : vector<8x384xf32> to vector<8x128xf32>
    %441 = arith.addf %439, %440 : vector<8x128xf32>
    %442 = arith.negf %441 : vector<8x128xf32>
    %443 = math.exp %442 : vector<8x128xf32>
    %cst_118 = arith.constant 1.000000e+00 : f32
    %444 = vector.broadcast %cst_118 : f32 to vector<8x128xf32>
    %445 = arith.addf %444, %443 : vector<8x128xf32>
    %446 = arith.divf %444, %445 : vector<8x128xf32>
    %447 = vector.extract_strided_slice %427 {offsets = [0, 256], sizes = [8, 128], strides = [1, 1]} : vector<8x384xf32> to vector<8x128xf32>
    %448 = vector.extract_strided_slice %430 {offsets = [0, 256], sizes = [8, 128], strides = [1, 1]} : vector<8x384xf32> to vector<8x128xf32>
    %449 = arith.mulf %438, %448 : vector<8x128xf32>
    %450 = arith.addf %447, %449 : vector<8x128xf32>
    %451 = math.tanh %450 : vector<8x128xf32>
    %cst_119 = arith.constant 1.000000e+00 : f32
    %452 = vector.broadcast %cst_119 : f32 to vector<8x128xf32>
    %453 = arith.subf %452, %446 : vector<8x128xf32>
    %454 = arith.mulf %453, %451 : vector<8x128xf32>
    %455 = arith.mulf %446, %383 : vector<8x128xf32>
    %456 = arith.addf %454, %455 : vector<8x128xf32>
    %457 = arith.index_cast %424 : i32 to index
    %c0_120 = arith.constant 0 : index
    %c128_121 = arith.constant 128 : index
    %458 = vector.load %arg8[%457, %c0_120, %c128_121] : memref<6x8x256xf32, #tpu.memory_space<vmem>>, vector<1x8x128xf32>
    %459 = vector.shape_cast %458 : vector<1x8x128xf32> to vector<8x128xf32>
    %460 = vector.shape_cast %456 : vector<8x128xf32> to vector<1x8x128xf32>
    tpu.vector_store %arg8[%457, %c0_120, %c128_121], %460 {strides = array<i32>} : memref<6x8x256xf32, #tpu.memory_space<vmem>>, vector<1x8x128xf32>,
    %c6_i32 = arith.constant 6 : i32
    return
  }
  func.func @transform_0(%arg0: i32) -> (i32, i32, i32) {
    %c0_i32 = arith.constant 0 : i32
    %c0_i32_0 = arith.constant 0 : i32
    %c0_i32_1 = arith.constant 0 : i32
    return %c0_i32, %arg0, %c0_i32_0 : i32, i32, i32
  }
  func.func @transform_1(%arg0: i32) -> (i32, i32) {
    %c0_i32 = arith.constant 0 : i32
    %c0_i32_0 = arith.constant 0 : i32
    %c0_i32_1 = arith.constant 0 : i32
    return %c0_i32, %c0_i32_0 : i32, i32
  }
  func.func @transform_2(%arg0: i32) -> (i32, i32) {
    %c0_i32 = arith.constant 0 : i32
    %c0_i32_0 = arith.constant 0 : i32
    %c0_i32_1 = arith.constant 0 : i32
    return %c0_i32, %c0_i32_0 : i32, i32
  }
  func.func @transform_3(%arg0: i32) -> (i32, i32) {
    %c0_i32 = arith.constant 0 : i32
    %c0_i32_0 = arith.constant 0 : i32
    %c0_i32_1 = arith.constant 0 : i32
    return %c0_i32, %c0_i32_0 : i32, i32
  }
  func.func @transform_4(%arg0: i32) -> (i32, i32) {
    %c0_i32 = arith.constant 0 : i32
    %c0_i32_0 = arith.constant 0 : i32
    %c0_i32_1 = arith.constant 0 : i32
    return %c0_i32, %c0_i32_0 : i32, i32
  }
  func.func @transform_5(%arg0: i32) -> (i32, i32) {
    %c0_i32 = arith.constant 0 : i32
    %c0_i32_0 = arith.constant 0 : i32
    %c0_i32_1 = arith.constant 0 : i32
    return %c0_i32, %c0_i32_0 : i32, i32
  }
  func.func @transform_6(%arg0: i32) -> (i32, i32) {
    %c0_i32 = arith.constant 0 : i32
    %c0_i32_0 = arith.constant 0 : i32
    %c0_i32_1 = arith.constant 0 : i32
    return %c0_i32, %c0_i32_0 : i32, i32
  }
  func.func @transform_7(%arg0: i32) -> (i32, i32, i32) {
    %c0_i32 = arith.constant 0 : i32
    %c0_i32_0 = arith.constant 0 : i32
    %c0_i32_1 = arith.constant 0 : i32
    return %c0_i32, %arg0, %c0_i32_0 : i32, i32, i32
  }
}

module attributes {stable_mosaic.version = 11 : i64} {
  func.func @attention_kernel(%arg0: i32, %arg1: memref<8x6x256xf32, #tpu.memory_space<vmem>>, %arg2: memref<256x6xbf16, #tpu.memory_space<vmem>>, %arg3: memref<1x6xf32, #tpu.memory_space<vmem>>, %arg4: memref<1x6xf32, #tpu.memory_space<vmem>>, %arg5: memref<8x256xf32, #tpu.memory_space<vmem>>) attributes {dimension_semantics = [#tpu.dimension_semantics<parallel>], iteration_bounds = array<i64: 1>, scalar_prefetch = 0 : i64, scratch_operands = 0 : i64, tpu.core_type = #tpu.core_type<tc>, window_params = [{transform_indices = @transform_0, window_bounds = array<i64: 8, 6, 256>}, {pipeline_mode = #tpu.pipeline_mode<synchronous>, transform_indices = @transform_1, window_bounds = array<i64: 256, 6>}, {pipeline_mode = #tpu.pipeline_mode<synchronous>, transform_indices = @transform_2, window_bounds = array<i64: 1, 6>}, {pipeline_mode = #tpu.pipeline_mode<synchronous>, transform_indices = @transform_3, window_bounds = array<i64: 1, 6>}, {transform_indices = @transform_4, window_bounds = array<i64: 8, 256>}]} {
    %c0 = arith.constant 0 : index
    %c0_0 = arith.constant 0 : index
    %c0_1 = arith.constant 0 : index
    %0 = vector.load %arg1[%c0, %c0_0, %c0_1] : memref<8x6x256xf32, #tpu.memory_space<vmem>>, vector<8x6x256xf32>
    %1 = vector.shape_cast %0 : vector<8x6x256xf32> to vector<48x256xf32>
    %2 = arith.truncf %1 : vector<48x256xf32> to vector<48x256xbf16>
    %c0_2 = arith.constant 0 : index
    %c0_3 = arith.constant 0 : index
    %3 = vector.load %arg2[%c0_2, %c0_3] : memref<256x6xbf16, #tpu.memory_space<vmem>>, vector<256x6xbf16>
    %cst = arith.constant dense<0.000000e+00> : vector<48x6xf32>
    %4 = tpu.matmul %2, %3, %cst {dimension_numbers = #tpu.dot_dimension_numbers<[1], [0], [0], [1], [0, 0, 1, 1], [], []>} : vector<48x256xbf16>, vector<256x6xbf16>, vector<48x6xf32> -> vector<48x6xf32>
    %c0_4 = arith.constant 0 : index
    %c0_5 = arith.constant 0 : index
    %5 = vector.load %arg3[%c0_4, %c0_5] : memref<1x6xf32, #tpu.memory_space<vmem>>, vector<1x6xf32>
    %6 = vector.broadcast %5 : vector<1x6xf32> to vector<48x6xf32>
    %7 = arith.addf %4, %6 : vector<48x6xf32>
    %8 = math.tanh %7 : vector<48x6xf32>
    %9 = vector.shape_cast %8 : vector<48x6xf32> to vector<8x6x6xf32>
    %c0_6 = arith.constant 0 : index
    %c0_7 = arith.constant 0 : index
    %10 = vector.load %arg4[%c0_6, %c0_7] : memref<1x6xf32, #tpu.memory_space<vmem>>, vector<1x6xf32>
    %11 = vector.shape_cast %10 : vector<1x6xf32> to vector<1x1x6xf32>
    %12 = vector.broadcast %11 : vector<1x1x6xf32> to vector<8x6x6xf32>
    %13 = arith.mulf %9, %12 : vector<8x6x6xf32>
    %cst_8 = arith.constant dense<0.000000e+00> : vector<8x6xf32>
    %14 = vector.multi_reduction <add>, %13, %cst_8 [2] : vector<8x6x6xf32> to vector<8x6xf32>
    %cst_9 = arith.constant dense<0xFF800000> : vector<8xf32>
    %15 = vector.multi_reduction <maximumf>, %14, %cst_9 [1] : vector<8x6xf32> to vector<8xf32>
    %16 = vector.shape_cast %15 : vector<8xf32> to vector<8x1xf32>
    %17 = vector.broadcast %16 : vector<8x1xf32> to vector<8x6xf32>
    %18 = arith.subf %14, %17 : vector<8x6xf32>
    %19 = math.exp %18 : vector<8x6xf32>
    %cst_10 = arith.constant dense<0.000000e+00> : vector<8xf32>
    %20 = vector.multi_reduction <add>, %19, %cst_10 [1] : vector<8x6xf32> to vector<8xf32>
    %21 = vector.shape_cast %20 : vector<8xf32> to vector<8x1xf32>
    %22 = vector.broadcast %21 : vector<8x1xf32> to vector<8x6xf32>
    %23 = arith.divf %19, %22 : vector<8x6xf32>
    %24 = vector.shape_cast %23 : vector<8x6xf32> to vector<8x6x1xf32>
    %25 = vector.broadcast %24 : vector<8x6x1xf32> to vector<8x6x256xf32>
    %26 = arith.mulf %0, %25 : vector<8x6x256xf32>
    %cst_11 = arith.constant dense<0.000000e+00> : vector<8x256xf32>
    %27 = vector.multi_reduction <add>, %26, %cst_11 [1] : vector<8x6x256xf32> to vector<8x256xf32>
    %c0_12 = arith.constant 0 : index
    %c0_13 = arith.constant 0 : index
    %28 = vector.load %arg5[%c0_12, %c0_13] : memref<8x256xf32, #tpu.memory_space<vmem>>, vector<8x256xf32>
    tpu.vector_store %arg5[%c0_12, %c0_13], %27 {strides = array<i32>} : memref<8x256xf32, #tpu.memory_space<vmem>>, vector<8x256xf32>,
    return
  }
  func.func @transform_0(%arg0: i32) -> (i32, i32, i32) {
    %c0_i32 = arith.constant 0 : i32
    %c0_i32_0 = arith.constant 0 : i32
    %c0_i32_1 = arith.constant 0 : i32
    return %arg0, %c0_i32, %c0_i32_0 : i32, i32, i32
  }
  func.func @transform_1(%arg0: i32) -> (i32, i32) {
    %c0_i32 = arith.constant 0 : i32
    %c0_i32_0 = arith.constant 0 : i32
    %c0_i32_1 = arith.constant 0 : i32
    return %c0_i32, %c0_i32_0 : i32, i32
  }
  func.func @transform_2(%arg0: i32) -> (i32, i32) {
    %c0_i32 = arith.constant 0 : i32
    %c0_i32_0 = arith.constant 0 : i32
    %c0_i32_1 = arith.constant 0 : i32
    return %c0_i32, %c0_i32_0 : i32, i32
  }
  func.func @transform_3(%arg0: i32) -> (i32, i32) {
    %c0_i32 = arith.constant 0 : i32
    %c0_i32_0 = arith.constant 0 : i32
    %c0_i32_1 = arith.constant 0 : i32
    return %c0_i32, %c0_i32_0 : i32, i32
  }
  func.func @transform_4(%arg0: i32) -> (i32, i32) {
    %c0_i32 = arith.constant 0 : i32
    %c0_i32_0 = arith.constant 0 : i32
    return %arg0, %c0_i32 : i32, i32
  }
}

module attributes {stable_mosaic.version = 11 : i64} {
  func.func @bigru_kernel(%arg0: i32, %arg1: memref<4x2x256xf32, #tpu.memory_space<vmem>>, %arg2: memref<256x768xbf16, #tpu.memory_space<vmem>>, %arg3: memref<1x768xf32, #tpu.memory_space<vmem>>, %arg4: memref<128x384xbf16, #tpu.memory_space<vmem>>, %arg5: memref<1x384xf32, #tpu.memory_space<vmem>>, %arg6: memref<128x384xbf16, #tpu.memory_space<vmem>>, %arg7: memref<1x384xf32, #tpu.memory_space<vmem>>, %arg8: memref<4x2x256xf32, #tpu.memory_space<vmem>>, %arg9: memref<4x2x384xf32, #tpu.memory_space<vmem>>, %arg10: memref<4x2x384xf32, #tpu.memory_space<vmem>>) attributes {dimension_semantics = [#tpu.dimension_semantics<parallel>], iteration_bounds = array<i64: 1>, scalar_prefetch = 0 : i64, scratch_operands = 2 : i64, tpu.core_type = #tpu.core_type<tc>, window_params = [{transform_indices = @transform_0, window_bounds = array<i64: 4, 2, 256>}, {pipeline_mode = #tpu.pipeline_mode<synchronous>, transform_indices = @transform_1, window_bounds = array<i64: 256, 768>}, {pipeline_mode = #tpu.pipeline_mode<synchronous>, transform_indices = @transform_2, window_bounds = array<i64: 1, 768>}, {pipeline_mode = #tpu.pipeline_mode<synchronous>, transform_indices = @transform_3, window_bounds = array<i64: 128, 384>}, {pipeline_mode = #tpu.pipeline_mode<synchronous>, transform_indices = @transform_4, window_bounds = array<i64: 1, 384>}, {pipeline_mode = #tpu.pipeline_mode<synchronous>, transform_indices = @transform_5, window_bounds = array<i64: 128, 384>}, {pipeline_mode = #tpu.pipeline_mode<synchronous>, transform_indices = @transform_6, window_bounds = array<i64: 1, 384>}, {transform_indices = @transform_7, window_bounds = array<i64: 4, 2, 256>}]} {
    %c0 = arith.constant 0 : index
    %c0_0 = arith.constant 0 : index
    %c0_1 = arith.constant 0 : index
    %0 = vector.load %arg1[%c0, %c0_0, %c0_1] : memref<4x2x256xf32, #tpu.memory_space<vmem>>, vector<4x2x256xf32>
    %1 = vector.shape_cast %0 : vector<4x2x256xf32> to vector<8x256xf32>
    %2 = arith.truncf %1 : vector<8x256xf32> to vector<8x256xbf16>
    %c0_2 = arith.constant 0 : index
    %c0_3 = arith.constant 0 : index
    %3 = vector.load %arg2[%c0_2, %c0_3] : memref<256x768xbf16, #tpu.memory_space<vmem>>, vector<256x768xbf16>
    %cst = arith.constant dense<0.000000e+00> : vector<8x768xf32>
    %4 = tpu.matmul %2, %3, %cst {dimension_numbers = #tpu.dot_dimension_numbers<[1], [0], [0], [1], [0, 0, 1, 1], [], []>} : vector<8x256xbf16>, vector<256x768xbf16>, vector<8x768xf32> -> vector<8x768xf32>
    %c0_4 = arith.constant 0 : index
    %c0_5 = arith.constant 0 : index
    %5 = vector.load %arg3[%c0_4, %c0_5] : memref<1x768xf32, #tpu.memory_space<vmem>>, vector<1x768xf32>
    %6 = vector.broadcast %5 : vector<1x768xf32> to vector<8x768xf32>
    %7 = arith.addf %4, %6 : vector<8x768xf32>
    %8 = vector.extract_strided_slice %7 {offsets = [0, 0], sizes = [8, 384], strides = [1, 1]} : vector<8x768xf32> to vector<8x384xf32>
    %9 = vector.shape_cast %8 : vector<8x384xf32> to vector<4x2x384xf32>
    %c0_6 = arith.constant 0 : index
    %c0_7 = arith.constant 0 : index
    %c0_8 = arith.constant 0 : index
    %10 = vector.load %arg9[%c0_6, %c0_7, %c0_8] : memref<4x2x384xf32, #tpu.memory_space<vmem>>, vector<4x2x384xf32>
    tpu.vector_store %arg9[%c0_6, %c0_7, %c0_8], %9 {strides = array<i32>} : memref<4x2x384xf32, #tpu.memory_space<vmem>>, vector<4x2x384xf32>,
    %11 = vector.extract_strided_slice %7 {offsets = [0, 384], sizes = [8, 384], strides = [1, 1]} : vector<8x768xf32> to vector<8x384xf32>
    %12 = vector.shape_cast %11 : vector<8x384xf32> to vector<4x2x384xf32>
    %c0_9 = arith.constant 0 : index
    %c0_10 = arith.constant 0 : index
    %c0_11 = arith.constant 0 : index
    %13 = vector.load %arg10[%c0_9, %c0_10, %c0_11] : memref<4x2x384xf32, #tpu.memory_space<vmem>>, vector<4x2x384xf32>
    tpu.vector_store %arg10[%c0_9, %c0_10, %c0_11], %12 {strides = array<i32>} : memref<4x2x384xf32, #tpu.memory_space<vmem>>, vector<4x2x384xf32>,
    %c0_12 = arith.constant 0 : index
    %c0_13 = arith.constant 0 : index
    %14 = vector.load %arg5[%c0_12, %c0_13] : memref<1x384xf32, #tpu.memory_space<vmem>>, vector<1x384xf32>
    %15 = vector.shape_cast %14 : vector<1x384xf32> to vector<1x384xf32>
    %16 = vector.broadcast %15 : vector<1x384xf32> to vector<2x384xf32>
    %c0_14 = arith.constant 0 : index
    %c0_15 = arith.constant 0 : index
    %17 = vector.load %arg7[%c0_14, %c0_15] : memref<1x384xf32, #tpu.memory_space<vmem>>, vector<1x384xf32>
    %18 = vector.shape_cast %17 : vector<1x384xf32> to vector<1x384xf32>
    %19 = vector.broadcast %18 : vector<1x384xf32> to vector<2x384xf32>
    %c0_16 = arith.constant 0 : index
    %c0_17 = arith.constant 0 : index
    %20 = vector.load %arg4[%c0_16, %c0_17] : memref<128x384xbf16, #tpu.memory_space<vmem>>, vector<128x384xbf16>
    %c0_18 = arith.constant 0 : index
    %c0_19 = arith.constant 0 : index
    %21 = vector.load %arg6[%c0_18, %c0_19] : memref<128x384xbf16, #tpu.memory_space<vmem>>, vector<128x384xbf16>
    %cst_20 = arith.constant 0.000000e+00 : f32
    %22 = vector.broadcast %cst_20 : f32 to vector<2x128xf32>
    %c0_i32 = arith.constant 0 : i32
    %23 = arith.index_cast %c0_i32 : i32 to index
    %c0_21 = arith.constant 0 : index
    %c0_22 = arith.constant 0 : index
    %24 = vector.load %arg9[%23, %c0_21, %c0_22] : memref<4x2x384xf32, #tpu.memory_space<vmem>>, vector<1x2x384xf32>
    %25 = vector.shape_cast %24 : vector<1x2x384xf32> to vector<2x384xf32>
    %26 = arith.truncf %22 : vector<2x128xf32> to vector<2x128xbf16>
    %cst_23 = arith.constant dense<0.000000e+00> : vector<2x384xf32>
    %27 = tpu.matmul %26, %20, %cst_23 {dimension_numbers = #tpu.dot_dimension_numbers<[1], [0], [0], [1], [0, 0, 1, 1], [], []>} : vector<2x128xbf16>, vector<128x384xbf16>, vector<2x384xf32> -> vector<2x384xf32>
    %28 = arith.addf %27, %16 : vector<2x384xf32>
    %29 = vector.extract_strided_slice %25 {offsets = [0, 0], sizes = [2, 128], strides = [1, 1]} : vector<2x384xf32> to vector<2x128xf32>
    %30 = vector.extract_strided_slice %28 {offsets = [0, 0], sizes = [2, 128], strides = [1, 1]} : vector<2x384xf32> to vector<2x128xf32>
    %31 = arith.addf %29, %30 : vector<2x128xf32>
    %32 = arith.negf %31 : vector<2x128xf32>
    %33 = math.exp %32 : vector<2x128xf32>
    %cst_24 = arith.constant 1.000000e+00 : f32
    %34 = vector.broadcast %cst_24 : f32 to vector<2x128xf32>
    %35 = arith.addf %34, %33 : vector<2x128xf32>
    %36 = arith.divf %34, %35 : vector<2x128xf32>
    %37 = vector.extract_strided_slice %25 {offsets = [0, 128], sizes = [2, 128], strides = [1, 1]} : vector<2x384xf32> to vector<2x128xf32>
    %38 = vector.extract_strided_slice %28 {offsets = [0, 128], sizes = [2, 128], strides = [1, 1]} : vector<2x384xf32> to vector<2x128xf32>
    %39 = arith.addf %37, %38 : vector<2x128xf32>
    %40 = arith.negf %39 : vector<2x128xf32>
    %41 = math.exp %40 : vector<2x128xf32>
    %cst_25 = arith.constant 1.000000e+00 : f32
    %42 = vector.broadcast %cst_25 : f32 to vector<2x128xf32>
    %43 = arith.addf %42, %41 : vector<2x128xf32>
    %44 = arith.divf %42, %43 : vector<2x128xf32>
    %45 = vector.extract_strided_slice %25 {offsets = [0, 256], sizes = [2, 128], strides = [1, 1]} : vector<2x384xf32> to vector<2x128xf32>
    %46 = vector.extract_strided_slice %28 {offsets = [0, 256], sizes = [2, 128], strides = [1, 1]} : vector<2x384xf32> to vector<2x128xf32>
    %47 = arith.mulf %36, %46 : vector<2x128xf32>
    %48 = arith.addf %45, %47 : vector<2x128xf32>
    %49 = math.tanh %48 : vector<2x128xf32>
    %cst_26 = arith.constant 1.000000e+00 : f32
    %50 = vector.broadcast %cst_26 : f32 to vector<2x128xf32>
    %51 = arith.subf %50, %44 : vector<2x128xf32>
    %52 = arith.mulf %51, %49 : vector<2x128xf32>
    %53 = arith.mulf %44, %22 : vector<2x128xf32>
    %54 = arith.addf %52, %53 : vector<2x128xf32>
    %55 = arith.index_cast %c0_i32 : i32 to index
    %c0_27 = arith.constant 0 : index
    %c0_28 = arith.constant 0 : index
    %56 = vector.load %arg8[%55, %c0_27, %c0_28] : memref<4x2x256xf32, #tpu.memory_space<vmem>>, vector<1x2x128xf32>
    %57 = vector.shape_cast %56 : vector<1x2x128xf32> to vector<2x128xf32>
    %58 = vector.shape_cast %54 : vector<2x128xf32> to vector<1x2x128xf32>
    tpu.vector_store %arg8[%55, %c0_27, %c0_28], %58 {strides = array<i32>} : memref<4x2x256xf32, #tpu.memory_space<vmem>>, vector<1x2x128xf32>,
    %c3_i32 = arith.constant 3 : i32
    %59 = arith.subi %c3_i32, %c0_i32 : i32
    %60 = arith.index_cast %59 : i32 to index
    %c0_29 = arith.constant 0 : index
    %c0_30 = arith.constant 0 : index
    %61 = vector.load %arg10[%60, %c0_29, %c0_30] : memref<4x2x384xf32, #tpu.memory_space<vmem>>, vector<1x2x384xf32>
    %62 = vector.shape_cast %61 : vector<1x2x384xf32> to vector<2x384xf32>
    %63 = arith.truncf %22 : vector<2x128xf32> to vector<2x128xbf16>
    %cst_31 = arith.constant dense<0.000000e+00> : vector<2x384xf32>
    %64 = tpu.matmul %63, %21, %cst_31 {dimension_numbers = #tpu.dot_dimension_numbers<[1], [0], [0], [1], [0, 0, 1, 1], [], []>} : vector<2x128xbf16>, vector<128x384xbf16>, vector<2x384xf32> -> vector<2x384xf32>
    %65 = arith.addf %64, %19 : vector<2x384xf32>
    %66 = vector.extract_strided_slice %62 {offsets = [0, 0], sizes = [2, 128], strides = [1, 1]} : vector<2x384xf32> to vector<2x128xf32>
    %67 = vector.extract_strided_slice %65 {offsets = [0, 0], sizes = [2, 128], strides = [1, 1]} : vector<2x384xf32> to vector<2x128xf32>
    %68 = arith.addf %66, %67 : vector<2x128xf32>
    %69 = arith.negf %68 : vector<2x128xf32>
    %70 = math.exp %69 : vector<2x128xf32>
    %cst_32 = arith.constant 1.000000e+00 : f32
    %71 = vector.broadcast %cst_32 : f32 to vector<2x128xf32>
    %72 = arith.addf %71, %70 : vector<2x128xf32>
    %73 = arith.divf %71, %72 : vector<2x128xf32>
    %74 = vector.extract_strided_slice %62 {offsets = [0, 128], sizes = [2, 128], strides = [1, 1]} : vector<2x384xf32> to vector<2x128xf32>
    %75 = vector.extract_strided_slice %65 {offsets = [0, 128], sizes = [2, 128], strides = [1, 1]} : vector<2x384xf32> to vector<2x128xf32>
    %76 = arith.addf %74, %75 : vector<2x128xf32>
    %77 = arith.negf %76 : vector<2x128xf32>
    %78 = math.exp %77 : vector<2x128xf32>
    %cst_33 = arith.constant 1.000000e+00 : f32
    %79 = vector.broadcast %cst_33 : f32 to vector<2x128xf32>
    %80 = arith.addf %79, %78 : vector<2x128xf32>
    %81 = arith.divf %79, %80 : vector<2x128xf32>
    %82 = vector.extract_strided_slice %62 {offsets = [0, 256], sizes = [2, 128], strides = [1, 1]} : vector<2x384xf32> to vector<2x128xf32>
    %83 = vector.extract_strided_slice %65 {offsets = [0, 256], sizes = [2, 128], strides = [1, 1]} : vector<2x384xf32> to vector<2x128xf32>
    %84 = arith.mulf %73, %83 : vector<2x128xf32>
    %85 = arith.addf %82, %84 : vector<2x128xf32>
    %86 = math.tanh %85 : vector<2x128xf32>
    %cst_34 = arith.constant 1.000000e+00 : f32
    %87 = vector.broadcast %cst_34 : f32 to vector<2x128xf32>
    %88 = arith.subf %87, %81 : vector<2x128xf32>
    %89 = arith.mulf %88, %86 : vector<2x128xf32>
    %90 = arith.mulf %81, %22 : vector<2x128xf32>
    %91 = arith.addf %89, %90 : vector<2x128xf32>
    %92 = arith.index_cast %59 : i32 to index
    %c0_35 = arith.constant 0 : index
    %c128 = arith.constant 128 : index
    %93 = vector.load %arg8[%92, %c0_35, %c128] : memref<4x2x256xf32, #tpu.memory_space<vmem>>, vector<1x2x128xf32>
    %94 = vector.shape_cast %93 : vector<1x2x128xf32> to vector<2x128xf32>
    %95 = vector.shape_cast %91 : vector<2x128xf32> to vector<1x2x128xf32>
    tpu.vector_store %arg8[%92, %c0_35, %c128], %95 {strides = array<i32>} : memref<4x2x256xf32, #tpu.memory_space<vmem>>, vector<1x2x128xf32>,
    %c1_i32 = arith.constant 1 : i32
    %96 = arith.index_cast %c1_i32 : i32 to index
    %c0_36 = arith.constant 0 : index
    %c0_37 = arith.constant 0 : index
    %97 = vector.load %arg9[%96, %c0_36, %c0_37] : memref<4x2x384xf32, #tpu.memory_space<vmem>>, vector<1x2x384xf32>
    %98 = vector.shape_cast %97 : vector<1x2x384xf32> to vector<2x384xf32>
    %99 = arith.truncf %54 : vector<2x128xf32> to vector<2x128xbf16>
    %cst_38 = arith.constant dense<0.000000e+00> : vector<2x384xf32>
    %100 = tpu.matmul %99, %20, %cst_38 {dimension_numbers = #tpu.dot_dimension_numbers<[1], [0], [0], [1], [0, 0, 1, 1], [], []>} : vector<2x128xbf16>, vector<128x384xbf16>, vector<2x384xf32> -> vector<2x384xf32>
    %101 = arith.addf %100, %16 : vector<2x384xf32>
    %102 = vector.extract_strided_slice %98 {offsets = [0, 0], sizes = [2, 128], strides = [1, 1]} : vector<2x384xf32> to vector<2x128xf32>
    %103 = vector.extract_strided_slice %101 {offsets = [0, 0], sizes = [2, 128], strides = [1, 1]} : vector<2x384xf32> to vector<2x128xf32>
    %104 = arith.addf %102, %103 : vector<2x128xf32>
    %105 = arith.negf %104 : vector<2x128xf32>
    %106 = math.exp %105 : vector<2x128xf32>
    %cst_39 = arith.constant 1.000000e+00 : f32
    %107 = vector.broadcast %cst_39 : f32 to vector<2x128xf32>
    %108 = arith.addf %107, %106 : vector<2x128xf32>
    %109 = arith.divf %107, %108 : vector<2x128xf32>
    %110 = vector.extract_strided_slice %98 {offsets = [0, 128], sizes = [2, 128], strides = [1, 1]} : vector<2x384xf32> to vector<2x128xf32>
    %111 = vector.extract_strided_slice %101 {offsets = [0, 128], sizes = [2, 128], strides = [1, 1]} : vector<2x384xf32> to vector<2x128xf32>
    %112 = arith.addf %110, %111 : vector<2x128xf32>
    %113 = arith.negf %112 : vector<2x128xf32>
    %114 = math.exp %113 : vector<2x128xf32>
    %cst_40 = arith.constant 1.000000e+00 : f32
    %115 = vector.broadcast %cst_40 : f32 to vector<2x128xf32>
    %116 = arith.addf %115, %114 : vector<2x128xf32>
    %117 = arith.divf %115, %116 : vector<2x128xf32>
    %118 = vector.extract_strided_slice %98 {offsets = [0, 256], sizes = [2, 128], strides = [1, 1]} : vector<2x384xf32> to vector<2x128xf32>
    %119 = vector.extract_strided_slice %101 {offsets = [0, 256], sizes = [2, 128], strides = [1, 1]} : vector<2x384xf32> to vector<2x128xf32>
    %120 = arith.mulf %109, %119 : vector<2x128xf32>
    %121 = arith.addf %118, %120 : vector<2x128xf32>
    %122 = math.tanh %121 : vector<2x128xf32>
    %cst_41 = arith.constant 1.000000e+00 : f32
    %123 = vector.broadcast %cst_41 : f32 to vector<2x128xf32>
    %124 = arith.subf %123, %117 : vector<2x128xf32>
    %125 = arith.mulf %124, %122 : vector<2x128xf32>
    %126 = arith.mulf %117, %54 : vector<2x128xf32>
    %127 = arith.addf %125, %126 : vector<2x128xf32>
    %128 = arith.index_cast %c1_i32 : i32 to index
    %c0_42 = arith.constant 0 : index
    %c0_43 = arith.constant 0 : index
    %129 = vector.load %arg8[%128, %c0_42, %c0_43] : memref<4x2x256xf32, #tpu.memory_space<vmem>>, vector<1x2x128xf32>
    %130 = vector.shape_cast %129 : vector<1x2x128xf32> to vector<2x128xf32>
    %131 = vector.shape_cast %127 : vector<2x128xf32> to vector<1x2x128xf32>
    tpu.vector_store %arg8[%128, %c0_42, %c0_43], %131 {strides = array<i32>} : memref<4x2x256xf32, #tpu.memory_space<vmem>>, vector<1x2x128xf32>,
    %c3_i32_44 = arith.constant 3 : i32
    %132 = arith.subi %c3_i32_44, %c1_i32 : i32
    %133 = arith.index_cast %132 : i32 to index
    %c0_45 = arith.constant 0 : index
    %c0_46 = arith.constant 0 : index
    %134 = vector.load %arg10[%133, %c0_45, %c0_46] : memref<4x2x384xf32, #tpu.memory_space<vmem>>, vector<1x2x384xf32>
    %135 = vector.shape_cast %134 : vector<1x2x384xf32> to vector<2x384xf32>
    %136 = arith.truncf %91 : vector<2x128xf32> to vector<2x128xbf16>
    %cst_47 = arith.constant dense<0.000000e+00> : vector<2x384xf32>
    %137 = tpu.matmul %136, %21, %cst_47 {dimension_numbers = #tpu.dot_dimension_numbers<[1], [0], [0], [1], [0, 0, 1, 1], [], []>} : vector<2x128xbf16>, vector<128x384xbf16>, vector<2x384xf32> -> vector<2x384xf32>
    %138 = arith.addf %137, %19 : vector<2x384xf32>
    %139 = vector.extract_strided_slice %135 {offsets = [0, 0], sizes = [2, 128], strides = [1, 1]} : vector<2x384xf32> to vector<2x128xf32>
    %140 = vector.extract_strided_slice %138 {offsets = [0, 0], sizes = [2, 128], strides = [1, 1]} : vector<2x384xf32> to vector<2x128xf32>
    %141 = arith.addf %139, %140 : vector<2x128xf32>
    %142 = arith.negf %141 : vector<2x128xf32>
    %143 = math.exp %142 : vector<2x128xf32>
    %cst_48 = arith.constant 1.000000e+00 : f32
    %144 = vector.broadcast %cst_48 : f32 to vector<2x128xf32>
    %145 = arith.addf %144, %143 : vector<2x128xf32>
    %146 = arith.divf %144, %145 : vector<2x128xf32>
    %147 = vector.extract_strided_slice %135 {offsets = [0, 128], sizes = [2, 128], strides = [1, 1]} : vector<2x384xf32> to vector<2x128xf32>
    %148 = vector.extract_strided_slice %138 {offsets = [0, 128], sizes = [2, 128], strides = [1, 1]} : vector<2x384xf32> to vector<2x128xf32>
    %149 = arith.addf %147, %148 : vector<2x128xf32>
    %150 = arith.negf %149 : vector<2x128xf32>
    %151 = math.exp %150 : vector<2x128xf32>
    %cst_49 = arith.constant 1.000000e+00 : f32
    %152 = vector.broadcast %cst_49 : f32 to vector<2x128xf32>
    %153 = arith.addf %152, %151 : vector<2x128xf32>
    %154 = arith.divf %152, %153 : vector<2x128xf32>
    %155 = vector.extract_strided_slice %135 {offsets = [0, 256], sizes = [2, 128], strides = [1, 1]} : vector<2x384xf32> to vector<2x128xf32>
    %156 = vector.extract_strided_slice %138 {offsets = [0, 256], sizes = [2, 128], strides = [1, 1]} : vector<2x384xf32> to vector<2x128xf32>
    %157 = arith.mulf %146, %156 : vector<2x128xf32>
    %158 = arith.addf %155, %157 : vector<2x128xf32>
    %159 = math.tanh %158 : vector<2x128xf32>
    %cst_50 = arith.constant 1.000000e+00 : f32
    %160 = vector.broadcast %cst_50 : f32 to vector<2x128xf32>
    %161 = arith.subf %160, %154 : vector<2x128xf32>
    %162 = arith.mulf %161, %159 : vector<2x128xf32>
    %163 = arith.mulf %154, %91 : vector<2x128xf32>
    %164 = arith.addf %162, %163 : vector<2x128xf32>
    %165 = arith.index_cast %132 : i32 to index
    %c0_51 = arith.constant 0 : index
    %c128_52 = arith.constant 128 : index
    %166 = vector.load %arg8[%165, %c0_51, %c128_52] : memref<4x2x256xf32, #tpu.memory_space<vmem>>, vector<1x2x128xf32>
    %167 = vector.shape_cast %166 : vector<1x2x128xf32> to vector<2x128xf32>
    %168 = vector.shape_cast %164 : vector<2x128xf32> to vector<1x2x128xf32>
    tpu.vector_store %arg8[%165, %c0_51, %c128_52], %168 {strides = array<i32>} : memref<4x2x256xf32, #tpu.memory_space<vmem>>, vector<1x2x128xf32>,
    %c2_i32 = arith.constant 2 : i32
    %169 = arith.index_cast %c2_i32 : i32 to index
    %c0_53 = arith.constant 0 : index
    %c0_54 = arith.constant 0 : index
    %170 = vector.load %arg9[%169, %c0_53, %c0_54] : memref<4x2x384xf32, #tpu.memory_space<vmem>>, vector<1x2x384xf32>
    %171 = vector.shape_cast %170 : vector<1x2x384xf32> to vector<2x384xf32>
    %172 = arith.truncf %127 : vector<2x128xf32> to vector<2x128xbf16>
    %cst_55 = arith.constant dense<0.000000e+00> : vector<2x384xf32>
    %173 = tpu.matmul %172, %20, %cst_55 {dimension_numbers = #tpu.dot_dimension_numbers<[1], [0], [0], [1], [0, 0, 1, 1], [], []>} : vector<2x128xbf16>, vector<128x384xbf16>, vector<2x384xf32> -> vector<2x384xf32>
    %174 = arith.addf %173, %16 : vector<2x384xf32>
    %175 = vector.extract_strided_slice %171 {offsets = [0, 0], sizes = [2, 128], strides = [1, 1]} : vector<2x384xf32> to vector<2x128xf32>
    %176 = vector.extract_strided_slice %174 {offsets = [0, 0], sizes = [2, 128], strides = [1, 1]} : vector<2x384xf32> to vector<2x128xf32>
    %177 = arith.addf %175, %176 : vector<2x128xf32>
    %178 = arith.negf %177 : vector<2x128xf32>
    %179 = math.exp %178 : vector<2x128xf32>
    %cst_56 = arith.constant 1.000000e+00 : f32
    %180 = vector.broadcast %cst_56 : f32 to vector<2x128xf32>
    %181 = arith.addf %180, %179 : vector<2x128xf32>
    %182 = arith.divf %180, %181 : vector<2x128xf32>
    %183 = vector.extract_strided_slice %171 {offsets = [0, 128], sizes = [2, 128], strides = [1, 1]} : vector<2x384xf32> to vector<2x128xf32>
    %184 = vector.extract_strided_slice %174 {offsets = [0, 128], sizes = [2, 128], strides = [1, 1]} : vector<2x384xf32> to vector<2x128xf32>
    %185 = arith.addf %183, %184 : vector<2x128xf32>
    %186 = arith.negf %185 : vector<2x128xf32>
    %187 = math.exp %186 : vector<2x128xf32>
    %cst_57 = arith.constant 1.000000e+00 : f32
    %188 = vector.broadcast %cst_57 : f32 to vector<2x128xf32>
    %189 = arith.addf %188, %187 : vector<2x128xf32>
    %190 = arith.divf %188, %189 : vector<2x128xf32>
    %191 = vector.extract_strided_slice %171 {offsets = [0, 256], sizes = [2, 128], strides = [1, 1]} : vector<2x384xf32> to vector<2x128xf32>
    %192 = vector.extract_strided_slice %174 {offsets = [0, 256], sizes = [2, 128], strides = [1, 1]} : vector<2x384xf32> to vector<2x128xf32>
    %193 = arith.mulf %182, %192 : vector<2x128xf32>
    %194 = arith.addf %191, %193 : vector<2x128xf32>
    %195 = math.tanh %194 : vector<2x128xf32>
    %cst_58 = arith.constant 1.000000e+00 : f32
    %196 = vector.broadcast %cst_58 : f32 to vector<2x128xf32>
    %197 = arith.subf %196, %190 : vector<2x128xf32>
    %198 = arith.mulf %197, %195 : vector<2x128xf32>
    %199 = arith.mulf %190, %127 : vector<2x128xf32>
    %200 = arith.addf %198, %199 : vector<2x128xf32>
    %201 = arith.index_cast %c2_i32 : i32 to index
    %c0_59 = arith.constant 0 : index
    %c0_60 = arith.constant 0 : index
    %202 = vector.load %arg8[%201, %c0_59, %c0_60] : memref<4x2x256xf32, #tpu.memory_space<vmem>>, vector<1x2x128xf32>
    %203 = vector.shape_cast %202 : vector<1x2x128xf32> to vector<2x128xf32>
    %204 = vector.shape_cast %200 : vector<2x128xf32> to vector<1x2x128xf32>
    tpu.vector_store %arg8[%201, %c0_59, %c0_60], %204 {strides = array<i32>} : memref<4x2x256xf32, #tpu.memory_space<vmem>>, vector<1x2x128xf32>,
    %c3_i32_61 = arith.constant 3 : i32
    %205 = arith.subi %c3_i32_61, %c2_i32 : i32
    %206 = arith.index_cast %205 : i32 to index
    %c0_62 = arith.constant 0 : index
    %c0_63 = arith.constant 0 : index
    %207 = vector.load %arg10[%206, %c0_62, %c0_63] : memref<4x2x384xf32, #tpu.memory_space<vmem>>, vector<1x2x384xf32>
    %208 = vector.shape_cast %207 : vector<1x2x384xf32> to vector<2x384xf32>
    %209 = arith.truncf %164 : vector<2x128xf32> to vector<2x128xbf16>
    %cst_64 = arith.constant dense<0.000000e+00> : vector<2x384xf32>
    %210 = tpu.matmul %209, %21, %cst_64 {dimension_numbers = #tpu.dot_dimension_numbers<[1], [0], [0], [1], [0, 0, 1, 1], [], []>} : vector<2x128xbf16>, vector<128x384xbf16>, vector<2x384xf32> -> vector<2x384xf32>
    %211 = arith.addf %210, %19 : vector<2x384xf32>
    %212 = vector.extract_strided_slice %208 {offsets = [0, 0], sizes = [2, 128], strides = [1, 1]} : vector<2x384xf32> to vector<2x128xf32>
    %213 = vector.extract_strided_slice %211 {offsets = [0, 0], sizes = [2, 128], strides = [1, 1]} : vector<2x384xf32> to vector<2x128xf32>
    %214 = arith.addf %212, %213 : vector<2x128xf32>
    %215 = arith.negf %214 : vector<2x128xf32>
    %216 = math.exp %215 : vector<2x128xf32>
    %cst_65 = arith.constant 1.000000e+00 : f32
    %217 = vector.broadcast %cst_65 : f32 to vector<2x128xf32>
    %218 = arith.addf %217, %216 : vector<2x128xf32>
    %219 = arith.divf %217, %218 : vector<2x128xf32>
    %220 = vector.extract_strided_slice %208 {offsets = [0, 128], sizes = [2, 128], strides = [1, 1]} : vector<2x384xf32> to vector<2x128xf32>
    %221 = vector.extract_strided_slice %211 {offsets = [0, 128], sizes = [2, 128], strides = [1, 1]} : vector<2x384xf32> to vector<2x128xf32>
    %222 = arith.addf %220, %221 : vector<2x128xf32>
    %223 = arith.negf %222 : vector<2x128xf32>
    %224 = math.exp %223 : vector<2x128xf32>
    %cst_66 = arith.constant 1.000000e+00 : f32
    %225 = vector.broadcast %cst_66 : f32 to vector<2x128xf32>
    %226 = arith.addf %225, %224 : vector<2x128xf32>
    %227 = arith.divf %225, %226 : vector<2x128xf32>
    %228 = vector.extract_strided_slice %208 {offsets = [0, 256], sizes = [2, 128], strides = [1, 1]} : vector<2x384xf32> to vector<2x128xf32>
    %229 = vector.extract_strided_slice %211 {offsets = [0, 256], sizes = [2, 128], strides = [1, 1]} : vector<2x384xf32> to vector<2x128xf32>
    %230 = arith.mulf %219, %229 : vector<2x128xf32>
    %231 = arith.addf %228, %230 : vector<2x128xf32>
    %232 = math.tanh %231 : vector<2x128xf32>
    %cst_67 = arith.constant 1.000000e+00 : f32
    %233 = vector.broadcast %cst_67 : f32 to vector<2x128xf32>
    %234 = arith.subf %233, %227 : vector<2x128xf32>
    %235 = arith.mulf %234, %232 : vector<2x128xf32>
    %236 = arith.mulf %227, %164 : vector<2x128xf32>
    %237 = arith.addf %235, %236 : vector<2x128xf32>
    %238 = arith.index_cast %205 : i32 to index
    %c0_68 = arith.constant 0 : index
    %c128_69 = arith.constant 128 : index
    %239 = vector.load %arg8[%238, %c0_68, %c128_69] : memref<4x2x256xf32, #tpu.memory_space<vmem>>, vector<1x2x128xf32>
    %240 = vector.shape_cast %239 : vector<1x2x128xf32> to vector<2x128xf32>
    %241 = vector.shape_cast %237 : vector<2x128xf32> to vector<1x2x128xf32>
    tpu.vector_store %arg8[%238, %c0_68, %c128_69], %241 {strides = array<i32>} : memref<4x2x256xf32, #tpu.memory_space<vmem>>, vector<1x2x128xf32>,
    %c3_i32_70 = arith.constant 3 : i32
    %242 = arith.index_cast %c3_i32_70 : i32 to index
    %c0_71 = arith.constant 0 : index
    %c0_72 = arith.constant 0 : index
    %243 = vector.load %arg9[%242, %c0_71, %c0_72] : memref<4x2x384xf32, #tpu.memory_space<vmem>>, vector<1x2x384xf32>
    %244 = vector.shape_cast %243 : vector<1x2x384xf32> to vector<2x384xf32>
    %245 = arith.truncf %200 : vector<2x128xf32> to vector<2x128xbf16>
    %cst_73 = arith.constant dense<0.000000e+00> : vector<2x384xf32>
    %246 = tpu.matmul %245, %20, %cst_73 {dimension_numbers = #tpu.dot_dimension_numbers<[1], [0], [0], [1], [0, 0, 1, 1], [], []>} : vector<2x128xbf16>, vector<128x384xbf16>, vector<2x384xf32> -> vector<2x384xf32>
    %247 = arith.addf %246, %16 : vector<2x384xf32>
    %248 = vector.extract_strided_slice %244 {offsets = [0, 0], sizes = [2, 128], strides = [1, 1]} : vector<2x384xf32> to vector<2x128xf32>
    %249 = vector.extract_strided_slice %247 {offsets = [0, 0], sizes = [2, 128], strides = [1, 1]} : vector<2x384xf32> to vector<2x128xf32>
    %250 = arith.addf %248, %249 : vector<2x128xf32>
    %251 = arith.negf %250 : vector<2x128xf32>
    %252 = math.exp %251 : vector<2x128xf32>
    %cst_74 = arith.constant 1.000000e+00 : f32
    %253 = vector.broadcast %cst_74 : f32 to vector<2x128xf32>
    %254 = arith.addf %253, %252 : vector<2x128xf32>
    %255 = arith.divf %253, %254 : vector<2x128xf32>
    %256 = vector.extract_strided_slice %244 {offsets = [0, 128], sizes = [2, 128], strides = [1, 1]} : vector<2x384xf32> to vector<2x128xf32>
    %257 = vector.extract_strided_slice %247 {offsets = [0, 128], sizes = [2, 128], strides = [1, 1]} : vector<2x384xf32> to vector<2x128xf32>
    %258 = arith.addf %256, %257 : vector<2x128xf32>
    %259 = arith.negf %258 : vector<2x128xf32>
    %260 = math.exp %259 : vector<2x128xf32>
    %cst_75 = arith.constant 1.000000e+00 : f32
    %261 = vector.broadcast %cst_75 : f32 to vector<2x128xf32>
    %262 = arith.addf %261, %260 : vector<2x128xf32>
    %263 = arith.divf %261, %262 : vector<2x128xf32>
    %264 = vector.extract_strided_slice %244 {offsets = [0, 256], sizes = [2, 128], strides = [1, 1]} : vector<2x384xf32> to vector<2x128xf32>
    %265 = vector.extract_strided_slice %247 {offsets = [0, 256], sizes = [2, 128], strides = [1, 1]} : vector<2x384xf32> to vector<2x128xf32>
    %266 = arith.mulf %255, %265 : vector<2x128xf32>
    %267 = arith.addf %264, %266 : vector<2x128xf32>
    %268 = math.tanh %267 : vector<2x128xf32>
    %cst_76 = arith.constant 1.000000e+00 : f32
    %269 = vector.broadcast %cst_76 : f32 to vector<2x128xf32>
    %270 = arith.subf %269, %263 : vector<2x128xf32>
    %271 = arith.mulf %270, %268 : vector<2x128xf32>
    %272 = arith.mulf %263, %200 : vector<2x128xf32>
    %273 = arith.addf %271, %272 : vector<2x128xf32>
    %274 = arith.index_cast %c3_i32_70 : i32 to index
    %c0_77 = arith.constant 0 : index
    %c0_78 = arith.constant 0 : index
    %275 = vector.load %arg8[%274, %c0_77, %c0_78] : memref<4x2x256xf32, #tpu.memory_space<vmem>>, vector<1x2x128xf32>
    %276 = vector.shape_cast %275 : vector<1x2x128xf32> to vector<2x128xf32>
    %277 = vector.shape_cast %273 : vector<2x128xf32> to vector<1x2x128xf32>
    tpu.vector_store %arg8[%274, %c0_77, %c0_78], %277 {strides = array<i32>} : memref<4x2x256xf32, #tpu.memory_space<vmem>>, vector<1x2x128xf32>,
    %c3_i32_79 = arith.constant 3 : i32
    %278 = arith.subi %c3_i32_79, %c3_i32_70 : i32
    %279 = arith.index_cast %278 : i32 to index
    %c0_80 = arith.constant 0 : index
    %c0_81 = arith.constant 0 : index
    %280 = vector.load %arg10[%279, %c0_80, %c0_81] : memref<4x2x384xf32, #tpu.memory_space<vmem>>, vector<1x2x384xf32>
    %281 = vector.shape_cast %280 : vector<1x2x384xf32> to vector<2x384xf32>
    %282 = arith.truncf %237 : vector<2x128xf32> to vector<2x128xbf16>
    %cst_82 = arith.constant dense<0.000000e+00> : vector<2x384xf32>
    %283 = tpu.matmul %282, %21, %cst_82 {dimension_numbers = #tpu.dot_dimension_numbers<[1], [0], [0], [1], [0, 0, 1, 1], [], []>} : vector<2x128xbf16>, vector<128x384xbf16>, vector<2x384xf32> -> vector<2x384xf32>
    %284 = arith.addf %283, %19 : vector<2x384xf32>
    %285 = vector.extract_strided_slice %281 {offsets = [0, 0], sizes = [2, 128], strides = [1, 1]} : vector<2x384xf32> to vector<2x128xf32>
    %286 = vector.extract_strided_slice %284 {offsets = [0, 0], sizes = [2, 128], strides = [1, 1]} : vector<2x384xf32> to vector<2x128xf32>
    %287 = arith.addf %285, %286 : vector<2x128xf32>
    %288 = arith.negf %287 : vector<2x128xf32>
    %289 = math.exp %288 : vector<2x128xf32>
    %cst_83 = arith.constant 1.000000e+00 : f32
    %290 = vector.broadcast %cst_83 : f32 to vector<2x128xf32>
    %291 = arith.addf %290, %289 : vector<2x128xf32>
    %292 = arith.divf %290, %291 : vector<2x128xf32>
    %293 = vector.extract_strided_slice %281 {offsets = [0, 128], sizes = [2, 128], strides = [1, 1]} : vector<2x384xf32> to vector<2x128xf32>
    %294 = vector.extract_strided_slice %284 {offsets = [0, 128], sizes = [2, 128], strides = [1, 1]} : vector<2x384xf32> to vector<2x128xf32>
    %295 = arith.addf %293, %294 : vector<2x128xf32>
    %296 = arith.negf %295 : vector<2x128xf32>
    %297 = math.exp %296 : vector<2x128xf32>
    %cst_84 = arith.constant 1.000000e+00 : f32
    %298 = vector.broadcast %cst_84 : f32 to vector<2x128xf32>
    %299 = arith.addf %298, %297 : vector<2x128xf32>
    %300 = arith.divf %298, %299 : vector<2x128xf32>
    %301 = vector.extract_strided_slice %281 {offsets = [0, 256], sizes = [2, 128], strides = [1, 1]} : vector<2x384xf32> to vector<2x128xf32>
    %302 = vector.extract_strided_slice %284 {offsets = [0, 256], sizes = [2, 128], strides = [1, 1]} : vector<2x384xf32> to vector<2x128xf32>
    %303 = arith.mulf %292, %302 : vector<2x128xf32>
    %304 = arith.addf %301, %303 : vector<2x128xf32>
    %305 = math.tanh %304 : vector<2x128xf32>
    %cst_85 = arith.constant 1.000000e+00 : f32
    %306 = vector.broadcast %cst_85 : f32 to vector<2x128xf32>
    %307 = arith.subf %306, %300 : vector<2x128xf32>
    %308 = arith.mulf %307, %305 : vector<2x128xf32>
    %309 = arith.mulf %300, %237 : vector<2x128xf32>
    %310 = arith.addf %308, %309 : vector<2x128xf32>
    %311 = arith.index_cast %278 : i32 to index
    %c0_86 = arith.constant 0 : index
    %c128_87 = arith.constant 128 : index
    %312 = vector.load %arg8[%311, %c0_86, %c128_87] : memref<4x2x256xf32, #tpu.memory_space<vmem>>, vector<1x2x128xf32>
    %313 = vector.shape_cast %312 : vector<1x2x128xf32> to vector<2x128xf32>
    %314 = vector.shape_cast %310 : vector<2x128xf32> to vector<1x2x128xf32>
    tpu.vector_store %arg8[%311, %c0_86, %c128_87], %314 {strides = array<i32>} : memref<4x2x256xf32, #tpu.memory_space<vmem>>, vector<1x2x128xf32>,
    %c4_i32 = arith.constant 4 : i32
    return
  }
  func.func @transform_0(%arg0: i32) -> (i32, i32, i32) {
    %c0_i32 = arith.constant 0 : i32
    %c0_i32_0 = arith.constant 0 : i32
    %c0_i32_1 = arith.constant 0 : i32
    return %c0_i32, %arg0, %c0_i32_0 : i32, i32, i32
  }
  func.func @transform_1(%arg0: i32) -> (i32, i32) {
    %c0_i32 = arith.constant 0 : i32
    %c0_i32_0 = arith.constant 0 : i32
    %c0_i32_1 = arith.constant 0 : i32
    return %c0_i32, %c0_i32_0 : i32, i32
  }
  func.func @transform_2(%arg0: i32) -> (i32, i32) {
    %c0_i32 = arith.constant 0 : i32
    %c0_i32_0 = arith.constant 0 : i32
    %c0_i32_1 = arith.constant 0 : i32
    return %c0_i32, %c0_i32_0 : i32, i32
  }
  func.func @transform_3(%arg0: i32) -> (i32, i32) {
    %c0_i32 = arith.constant 0 : i32
    %c0_i32_0 = arith.constant 0 : i32
    %c0_i32_1 = arith.constant 0 : i32
    return %c0_i32, %c0_i32_0 : i32, i32
  }
  func.func @transform_4(%arg0: i32) -> (i32, i32) {
    %c0_i32 = arith.constant 0 : i32
    %c0_i32_0 = arith.constant 0 : i32
    %c0_i32_1 = arith.constant 0 : i32
    return %c0_i32, %c0_i32_0 : i32, i32
  }
  func.func @transform_5(%arg0: i32) -> (i32, i32) {
    %c0_i32 = arith.constant 0 : i32
    %c0_i32_0 = arith.constant 0 : i32
    %c0_i32_1 = arith.constant 0 : i32
    return %c0_i32, %c0_i32_0 : i32, i32
  }
  func.func @transform_6(%arg0: i32) -> (i32, i32) {
    %c0_i32 = arith.constant 0 : i32
    %c0_i32_0 = arith.constant 0 : i32
    %c0_i32_1 = arith.constant 0 : i32
    return %c0_i32, %c0_i32_0 : i32, i32
  }
  func.func @transform_7(%arg0: i32) -> (i32, i32, i32) {
    %c0_i32 = arith.constant 0 : i32
    %c0_i32_0 = arith.constant 0 : i32
    %c0_i32_1 = arith.constant 0 : i32
    return %c0_i32, %arg0, %c0_i32_0 : i32, i32, i32
  }
}

module attributes {stable_mosaic.version = 11 : i64} {
  func.func @att_head_kernel(%arg0: i32, %arg1: memref<2x4x256xf32, #tpu.memory_space<vmem>>, %arg2: memref<256x4xbf16, #tpu.memory_space<vmem>>, %arg3: memref<1x4xf32, #tpu.memory_space<vmem>>, %arg4: memref<1x4xf32, #tpu.memory_space<vmem>>, %arg5: memref<256x4xf32, #tpu.memory_space<vmem>>, %arg6: memref<1x4xf32, #tpu.memory_space<vmem>>, %arg7: memref<2x4xf32, #tpu.memory_space<vmem>>) attributes {dimension_semantics = [#tpu.dimension_semantics<parallel>], iteration_bounds = array<i64: 1>, scalar_prefetch = 0 : i64, scratch_operands = 0 : i64, tpu.core_type = #tpu.core_type<tc>, window_params = [{transform_indices = @transform_0, window_bounds = array<i64: 2, 4, 256>}, {pipeline_mode = #tpu.pipeline_mode<synchronous>, transform_indices = @transform_1, window_bounds = array<i64: 256, 4>}, {pipeline_mode = #tpu.pipeline_mode<synchronous>, transform_indices = @transform_2, window_bounds = array<i64: 1, 4>}, {pipeline_mode = #tpu.pipeline_mode<synchronous>, transform_indices = @transform_3, window_bounds = array<i64: 1, 4>}, {pipeline_mode = #tpu.pipeline_mode<synchronous>, transform_indices = @transform_4, window_bounds = array<i64: 256, 4>}, {pipeline_mode = #tpu.pipeline_mode<synchronous>, transform_indices = @transform_5, window_bounds = array<i64: 1, 4>}, {transform_indices = @transform_6, window_bounds = array<i64: 2, 4>}]} {
    %c0 = arith.constant 0 : index
    %c0_0 = arith.constant 0 : index
    %c0_1 = arith.constant 0 : index
    %0 = vector.load %arg1[%c0, %c0_0, %c0_1] : memref<2x4x256xf32, #tpu.memory_space<vmem>>, vector<2x4x256xf32>
    %1 = vector.shape_cast %0 : vector<2x4x256xf32> to vector<8x256xf32>
    %2 = arith.truncf %1 : vector<8x256xf32> to vector<8x256xbf16>
    %c0_2 = arith.constant 0 : index
    %c0_3 = arith.constant 0 : index
    %3 = vector.load %arg2[%c0_2, %c0_3] : memref<256x4xbf16, #tpu.memory_space<vmem>>, vector<256x4xbf16>
    %cst = arith.constant dense<0.000000e+00> : vector<8x4xf32>
    %4 = tpu.matmul %2, %3, %cst {dimension_numbers = #tpu.dot_dimension_numbers<[1], [0], [0], [1], [0, 0, 1, 1], [], []>} : vector<8x256xbf16>, vector<256x4xbf16>, vector<8x4xf32> -> vector<8x4xf32>
    %c0_4 = arith.constant 0 : index
    %c0_5 = arith.constant 0 : index
    %5 = vector.load %arg3[%c0_4, %c0_5] : memref<1x4xf32, #tpu.memory_space<vmem>>, vector<1x4xf32>
    %6 = vector.broadcast %5 : vector<1x4xf32> to vector<8x4xf32>
    %7 = arith.addf %4, %6 : vector<8x4xf32>
    %8 = math.tanh %7 : vector<8x4xf32>
    %9 = vector.shape_cast %8 : vector<8x4xf32> to vector<2x4x4xf32>
    %c0_6 = arith.constant 0 : index
    %c0_7 = arith.constant 0 : index
    %10 = vector.load %arg4[%c0_6, %c0_7] : memref<1x4xf32, #tpu.memory_space<vmem>>, vector<1x4xf32>
    %11 = vector.shape_cast %10 : vector<1x4xf32> to vector<1x1x4xf32>
    %12 = vector.broadcast %11 : vector<1x1x4xf32> to vector<2x4x4xf32>
    %13 = arith.mulf %9, %12 : vector<2x4x4xf32>
    %cst_8 = arith.constant dense<0.000000e+00> : vector<2x4xf32>
    %14 = vector.multi_reduction <add>, %13, %cst_8 [2] : vector<2x4x4xf32> to vector<2x4xf32>
    %cst_9 = arith.constant dense<0xFF800000> : vector<2xf32>
    %15 = vector.multi_reduction <maximumf>, %14, %cst_9 [1] : vector<2x4xf32> to vector<2xf32>
    %16 = vector.shape_cast %15 : vector<2xf32> to vector<2x1xf32>
    %17 = vector.broadcast %16 : vector<2x1xf32> to vector<2x4xf32>
    %18 = arith.subf %14, %17 : vector<2x4xf32>
    %19 = math.exp %18 : vector<2x4xf32>
    %cst_10 = arith.constant dense<0.000000e+00> : vector<2xf32>
    %20 = vector.multi_reduction <add>, %19, %cst_10 [1] : vector<2x4xf32> to vector<2xf32>
    %21 = vector.shape_cast %20 : vector<2xf32> to vector<2x1xf32>
    %22 = vector.broadcast %21 : vector<2x1xf32> to vector<2x4xf32>
    %23 = arith.divf %19, %22 : vector<2x4xf32>
    %24 = vector.shape_cast %23 : vector<2x4xf32> to vector<2x4x1xf32>
    %25 = vector.broadcast %24 : vector<2x4x1xf32> to vector<2x4x256xf32>
    %26 = arith.mulf %0, %25 : vector<2x4x256xf32>
    %cst_11 = arith.constant dense<0.000000e+00> : vector<2x256xf32>
    %27 = vector.multi_reduction <add>, %26, %cst_11 [1] : vector<2x4x256xf32> to vector<2x256xf32>
    %c0_12 = arith.constant 0 : index
    %c0_13 = arith.constant 0 : index
    %28 = vector.load %arg5[%c0_12, %c0_13] : memref<256x4xf32, #tpu.memory_space<vmem>>, vector<256x4xf32>
    %cst_14 = arith.constant dense<0.000000e+00> : vector<2x4xf32>
    %29 = tpu.matmul %27, %28, %cst_14 {dimension_numbers = #tpu.dot_dimension_numbers<[1], [0], [0], [1], [0, 0, 1, 1], [], []>} : vector<2x256xf32>, vector<256x4xf32>, vector<2x4xf32> -> vector<2x4xf32>
    %c0_15 = arith.constant 0 : index
    %c0_16 = arith.constant 0 : index
    %30 = vector.load %arg6[%c0_15, %c0_16] : memref<1x4xf32, #tpu.memory_space<vmem>>, vector<1x4xf32>
    %31 = vector.broadcast %30 : vector<1x4xf32> to vector<2x4xf32>
    %32 = arith.addf %29, %31 : vector<2x4xf32>
    %cst_17 = arith.constant dense<0xFF800000> : vector<2xf32>
    %33 = vector.multi_reduction <maximumf>, %32, %cst_17 [1] : vector<2x4xf32> to vector<2xf32>
    %34 = vector.shape_cast %33 : vector<2xf32> to vector<2x1xf32>
    %35 = vector.broadcast %34 : vector<2x1xf32> to vector<2x4xf32>
    %36 = arith.subf %32, %35 : vector<2x4xf32>
    %37 = math.exp %36 : vector<2x4xf32>
    %cst_18 = arith.constant dense<0.000000e+00> : vector<2xf32>
    %38 = vector.multi_reduction <add>, %37, %cst_18 [1] : vector<2x4xf32> to vector<2xf32>
    %39 = vector.shape_cast %38 : vector<2xf32> to vector<2x1xf32>
    %40 = math.log %39 : vector<2x1xf32>
    %41 = vector.broadcast %40 : vector<2x1xf32> to vector<2x4xf32>
    %42 = arith.subf %36, %41 : vector<2x4xf32>
    %c0_19 = arith.constant 0 : index
    %c0_20 = arith.constant 0 : index
    %43 = vector.load %arg7[%c0_19, %c0_20] : memref<2x4xf32, #tpu.memory_space<vmem>>, vector<2x4xf32>
    tpu.vector_store %arg7[%c0_19, %c0_20], %42 {strides = array<i32>} : memref<2x4xf32, #tpu.memory_space<vmem>>, vector<2x4xf32>,
    return
  }
  func.func @transform_0(%arg0: i32) -> (i32, i32, i32) {
    %c0_i32 = arith.constant 0 : i32
    %c0_i32_0 = arith.constant 0 : i32
    %c0_i32_1 = arith.constant 0 : i32
    return %arg0, %c0_i32, %c0_i32_0 : i32, i32, i32
  }
  func.func @transform_1(%arg0: i32) -> (i32, i32) {
    %c0_i32 = arith.constant 0 : i32
    %c0_i32_0 = arith.constant 0 : i32
    %c0_i32_1 = arith.constant 0 : i32
    return %c0_i32, %c0_i32_0 : i32, i32
  }
  func.func @transform_2(%arg0: i32) -> (i32, i32) {
    %c0_i32 = arith.constant 0 : i32
    %c0_i32_0 = arith.constant 0 : i32
    %c0_i32_1 = arith.constant 0 : i32
    return %c0_i32, %c0_i32_0 : i32, i32
  }
  func.func @transform_3(%arg0: i32) -> (i32, i32) {
    %c0_i32 = arith.constant 0 : i32
    %c0_i32_0 = arith.constant 0 : i32
    %c0_i32_1 = arith.constant 0 : i32
    return %c0_i32, %c0_i32_0 : i32, i32
  }
  func.func @transform_4(%arg0: i32) -> (i32, i32) {
    %c0_i32 = arith.constant 0 : i32
    %c0_i32_0 = arith.constant 0 : i32
    %c0_i32_1 = arith.constant 0 : i32
    return %c0_i32, %c0_i32_0 : i32, i32
  }
  func.func @transform_5(%arg0: i32) -> (i32, i32) {
    %c0_i32 = arith.constant 0 : i32
    %c0_i32_0 = arith.constant 0 : i32
    %c0_i32_1 = arith.constant 0 : i32
    return %c0_i32, %c0_i32_0 : i32, i32
  }
  func.func @transform_6(%arg0: i32) -> (i32, i32) {
    %c0_i32 = arith.constant 0 : i32
    %c0_i32_0 = arith.constant 0 : i32
    return %arg0, %c0_i32 : i32, i32
  }
}

</mosaic_0001>

<llo_original>
// kernel: han_forward.8
$region0: #{han_forward.8}
  #allocation0 [shape = 'u32[]', space=smem, size = 0x4, offset = 0x4, fixed_abs, tag = 'smem constant byte address 0x4 - core index']
  #allocation1 [shape = 'u32[144,128]{1,0:T(1,128)}', space=vmem, size = 0x12000, scoped, tag = 'internal scratch']
  %s0 = inlined_call_operand.vmem [shape: f32[8,6,256], index: 0, kind: input, shape index: {}]
  %s1 = inlined_call_operand.vmem [shape: bf16[256,6], index: 1, kind: input, shape index: {}]
  %s2 = inlined_call_operand.vmem [shape: f32[1,6], index: 2, kind: input, shape index: {}]
  %s3 = inlined_call_operand.vmem [shape: f32[1,6], index: 3, kind: input, shape index: {}]
  %s4 = inlined_call_operand.vmem [shape: f32[8,256], index: 4, kind: output, shape index: {}]
  %s5 = sld [smem:[#allocation0]]
  $region26: #{han_forward.8} parent=0
    _
  %s7 = ssub.s32 1, %s5
  %s8 = scalar_select 0, %s7, %s5
  // Predicated region
  $region2: #{han_forward.8} parent=0 // pred_check
    _
  $region3: #{han_forward.8} parent=0 // pred_check_branch
    %10 = sbr.rel (0) target = $region5
  $region4: #{han_forward.8} parent=0 // pred_region
    _
  $region5: #{han_forward.8} parent=0 // pred_fallthru
    _
  // Predicated region
  $region6: #{han_forward.8} parent=0 // pred_check
    _
  $region7: #{han_forward.8} parent=0 // pred_check_branch
    %12 = sbr.rel (0) target = $region9
  $region8: #{han_forward.8} parent=0 // pred_region
    _
  $region9: #{han_forward.8} parent=0 // pred_fallthru
    _
  // Predicated region
  $region10: #{han_forward.8} parent=0 // pred_check
    _
  $region11: #{han_forward.8} parent=0 // pred_check_branch
    %14 = sbr.rel (0) target = $region13
  $region12: #{han_forward.8} parent=0 // pred_region
    _
  $region13: #{han_forward.8} parent=0 // pred_fallthru
    _
  // Predicated region
  $region14: #{han_forward.8} parent=0 // pred_check
    _
  $region15: #{han_forward.8} parent=0 // pred_check_branch
    %16 = sbr.rel (0) target = $region17
  $region16: #{han_forward.8} parent=0 // pred_region
    _
  $region17: #{han_forward.8} parent=0 // pred_fallthru
    _
  %v18 = vld [vmem:[%s0] sm:$0x3f]
  %v19 = vld [vmem:[%s0 + $0x8] sm:$0x3f]
  %v20 = vld [vmem:[%s0 + $0x10] sm:$0x3f]
  %v21 = vld [vmem:[%s0 + $0x18] sm:$0x3f]
  %v22 = vld [vmem:[%s0 + $0x20] sm:$0x3f]
  %v23 = vld [vmem:[%s0 + $0x28] sm:$0x3f]
  %v24 = vld [vmem:[%s0 + $0x30] sm:$0x3f]
  %v25 = vld [vmem:[%s0 + $0x38] sm:$0x3f]
  %v26 = vld [vmem:[%s0 + $0x40] sm:$0x3f]
  %v27 = vld [vmem:[%s0 + $0x48] sm:$0x3f]
  %v28 = vld [vmem:[%s0 + $0x50] sm:$0x3f]
  %v29 = vld [vmem:[%s0 + $0x58] sm:$0x3f]
  %v30 = vld [vmem:[%s0 + $0x60] sm:$0x3f]
  %v31 = vld [vmem:[%s0 + $0x68] sm:$0x3f]
  %v32 = vld [vmem:[%s0 + $0x70] sm:$0x3f]
  %v33 = vld [vmem:[%s0 + $0x78] sm:$0x3f]
  %v50 = vcombine.low %v18, %v19
  %v51 = vcombine.high %v18, %v19
  %v53 = vunpack.c.l.s4 1983009808
  %v54 = vunpack.c.0.s8 %v53
  %v55 = vlaneseq
  %v56 = vshrl.u32 %v55, 7
  %v57 = vsub.s32 %v54, %v56
  %v58 = vrot.slane %v50, %v57
  %v60 = vunpack.c.l.s4 1983009808
  %v61 = vunpack.c.0.s8 %v60
  %v62 = vlaneseq
  %v63 = vshrl.u32 %v62, 7
  %v64 = vsub.s32 %v61, %v63
  %v65 = vrot.slane %v51, %v64
  %v66 = vcombine.high %v58, %v58
  %v67 = vcombine.low %v20, %v21
  %v68 = vcombine.high %v20, %v21
  %v70 = vunpack.c.l.s4 1983009808
  %v71 = vunpack.c.0.s8 %v70
  %v72 = vlaneseq
  %v73 = vshrl.u32 %v72, 7
  %v74 = vsub.s32 %v71, %v73
  %v75 = vrot.slane %v67, %v74
  %v77 = vunpack.c.l.s4 1983009808
  %v78 = vunpack.c.0.s8 %v77
  %v79 = vlaneseq
  %v80 = vshrl.u32 %v79, 7
  %v81 = vsub.s32 %v78, %v80
  %v82 = vrot.slane %v68, %v81
  %v83 = vcombine.high %v75, %v75
  %v84 = vcombine.low %v22, %v23
  %v85 = vcombine.high %v22, %v23
  %v87 = vunpack.c.l.s4 1983009808
  %v88 = vunpack.c.0.s8 %v87
  %v89 = vlaneseq
  %v90 = vshrl.u32 %v89, 7
  %v91 = vsub.s32 %v88, %v90
  %v92 = vrot.slane %v84, %v91
  %v94 = vunpack.c.l.s4 1983009808
  %v95 = vunpack.c.0.s8 %v94
  %v96 = vlaneseq
  %v97 = vshrl.u32 %v96, 7
  %v98 = vsub.s32 %v95, %v97
  %v99 = vrot.slane %v85, %v98
  %v100 = vcombine.high %v92, %v92
  %v101 = vcombine.low %v24, %v25
  %v102 = vcombine.high %v24, %v25
  %v104 = vunpack.c.l.s4 1983009808
  %v105 = vunpack.c.0.s8 %v104
  %v106 = vlaneseq
  %v107 = vshrl.u32 %v106, 7
  %v108 = vsub.s32 %v105, %v107
  %v109 = vrot.slane %v101, %v108
  %v111 = vunpack.c.l.s4 1983009808
  %v112 = vunpack.c.0.s8 %v111
  %v113 = vlaneseq
  %v114 = vshrl.u32 %v113, 7
  %v115 = vsub.s32 %v112, %v114
  %v116 = vrot.slane %v102, %v115
  %v117 = vcombine.high %v109, %v109
  %v118 = vcombine.low %v26, %v27
  %v119 = vcombine.high %v26, %v27
  %v121 = vunpack.c.l.s4 1983009808
  %v122 = vunpack.c.0.s8 %v121
  %v123 = vlaneseq
  %v124 = vshrl.u32 %v123, 7
  %v125 = vsub.s32 %v122, %v124
  %v126 = vrot.slane %v118, %v125
  %v128 = vunpack.c.l.s4 1983009808
  %v129 = vunpack.c.0.s8 %v128
  %v130 = vlaneseq
  %v131 = vshrl.u32 %v130, 7
  %v132 = vsub.s32 %v129, %v131
  %v133 = vrot.slane %v119, %v132
  %v134 = vcombine.high %v126, %v126
  %v135 = vcombine.low %v28, %v29
  %v136 = vcombine.high %v28, %v29
  %v138 = vunpack.c.l.s4 1983009808
  %v139 = vunpack.c.0.s8 %v138
  %v140 = vlaneseq
  %v141 = vshrl.u32 %v140, 7
  %v142 = vsub.s32 %v139, %v141
  %v143 = vrot.slane %v135, %v142
  %v145 = vunpack.c.l.s4 1983009808
  %v146 = vunpack.c.0.s8 %v145
  %v147 = vlaneseq
  %v148 = vshrl.u32 %v147, 7
  %v149 = vsub.s32 %v146, %v148
  %v150 = vrot.slane %v136, %v149
  %v151 = vcombine.high %v143, %v143
  %v152 = vcombine.low %v30, %v31
  %v153 = vcombine.high %v30, %v31
  %v155 = vunpack.c.l.s4 1983009808
  %v156 = vunpack.c.0.s8 %v155
  %v157 = vlaneseq
  %v158 = vshrl.u32 %v157, 7
  %v159 = vsub.s32 %v156, %v158
  %v160 = vrot.slane %v152, %v159
  %v162 = vunpack.c.l.s4 1983009808
  %v163 = vunpack.c.0.s8 %v162
  %v164 = vlaneseq
  %v165 = vshrl.u32 %v164, 7
  %v166 = vsub.s32 %v163, %v165
  %v167 = vrot.slane %v153, %v166
  %v168 = vcombine.high %v160, %v160
  %v169 = vcombine.low %v32, %v33
  %v170 = vcombine.high %v32, %v33
  %v172 = vunpack.c.l.s4 1983009808
  %v173 = vunpack.c.0.s8 %v172
  %v174 = vlaneseq
  %v175 = vshrl.u32 %v174, 7
  %v176 = vsub.s32 %v173, %v175
  %v177 = vrot.slane %v169, %v176
  %v179 = vunpack.c.l.s4 1983009808
  %v180 = vunpack.c.0.s8 %v179
  %v181 = vlaneseq
  %v182 = vshrl.u32 %v181, 7
  %v183 = vsub.s32 %v180, %v182
  %v184 = vrot.slane %v170, %v183
  %v185 = vcombine.high %v177, %v177
  %v186 = vcombine.low %v58, %v66
  %v187 = vcombine.low %v65, %v75
  %v189 = vunpack.c.l.s4 1983009808
  %v190 = vunpack.c.0.s8 %v189
  %v191 = vlaneseq
  %v192 = vshrl.u32 %v191, 7
  %v193 = vsub.s32 %v190, %v192
  %v194 = vrot.slane %v186, %v193
  %v196 = vunpack.c.l.s4 1983009808
  %v197 = vunpack.c.0.s8 %v196
  %v198 = vlaneseq
  %v199 = vshrl.u32 %v198, 7
  %v200 = vsub.s32 %v197, %v199
  %v201 = vrot.slane %v187, %v200
  %v202 = vcombine.low %v194, %v201
  %v203 = vcombine.high %v194, %v201
  %v204 = vcombine.low %v83, %v82
  %v205 = vcombine.low %v92, %v100
  %v207 = vunpack.c.l.s4 1983009808
  %v208 = vunpack.c.0.s8 %v207
  %v209 = vlaneseq
  %v210 = vshrl.u32 %v209, 7
  %v211 = vsub.s32 %v208, %v210
  %v212 = vrot.slane %v204, %v211
  %v214 = vunpack.c.l.s4 1983009808
  %v215 = vunpack.c.0.s8 %v214
  %v216 = vlaneseq
  %v217 = vshrl.u32 %v216, 7
  %v218 = vsub.s32 %v215, %v217
  %v219 = vrot.slane %v205, %v218
  %v220 = vcombine.low %v212, %v219
  %v221 = vcombine.high %v212, %v219
  %v222 = vcombine.low %v99, %v109
  %v223 = vcombine.low %v117, %v116
  %v225 = vunpack.c.l.s4 1983009808
  %v226 = vunpack.c.0.s8 %v225
  %v227 = vlaneseq
  %v228 = vshrl.u32 %v227, 7
  %v229 = vsub.s32 %v226, %v228
  %v230 = vrot.slane %v222, %v229
  %v232 = vunpack.c.l.s4 1983009808
  %v233 = vunpack.c.0.s8 %v232
  %v234 = vlaneseq
  %v235 = vshrl.u32 %v234, 7
  %v236 = vsub.s32 %v233, %v235
  %v237 = vrot.slane %v223, %v236
  %v238 = vcombine.low %v230, %v237
  %v239 = vcombine.high %v230, %v237
  %v240 = vcombine.low %v126, %v134
  %v241 = vcombine.low %v133, %v143
  %v243 = vunpack.c.l.s4 1983009808
  %v244 = vunpack.c.0.s8 %v243
  %v245 = vlaneseq
  %v246 = vshrl.u32 %v245, 7
  %v247 = vsub.s32 %v244, %v246
  %v248 = vrot.slane %v240, %v247
  %v250 = vunpack.c.l.s4 1983009808
  %v251 = vunpack.c.0.s8 %v250
  %v252 = vlaneseq
  %v253 = vshrl.u32 %v252, 7
  %v254 = vsub.s32 %v251, %v253
  %v255 = vrot.slane %v241, %v254
  %v256 = vcombine.low %v248, %v255
  %v257 = vcombine.high %v248, %v255
  %v258 = vcombine.low %v151, %v150
  %v259 = vcombine.low %v160, %v168
  %v261 = vunpack.c.l.s4 1983009808
  %v262 = vunpack.c.0.s8 %v261
  %v263 = vlaneseq
  %v264 = vshrl.u32 %v263, 7
  %v265 = vsub.s32 %v262, %v264
  %v266 = vrot.slane %v258, %v265
  %v268 = vunpack.c.l.s4 1983009808
  %v269 = vunpack.c.0.s8 %v268
  %v270 = vlaneseq
  %v271 = vshrl.u32 %v270, 7
  %v272 = vsub.s32 %v269, %v271
  %v273 = vrot.slane %v259, %v272
  %v274 = vcombine.low %v266, %v273
  %v275 = vcombine.high %v266, %v273
  %v276 = vcombine.low %v167, %v177
  %v277 = vcombine.low %v185, %v184
  %v279 = vunpack.c.l.s4 1983009808
  %v280 = vunpack.c.0.s8 %v279
  %v281 = vlaneseq
  %v282 = vshrl.u32 %v281, 7
  %v283 = vsub.s32 %v280, %v282
  %v284 = vrot.slane %v276, %v283
  %v286 = vunpack.c.l.s4 1983009808
  %v287 = vunpack.c.0.s8 %v286
  %v288 = vlaneseq
  %v289 = vshrl.u32 %v288, 7
  %v290 = vsub.s32 %v287, %v289
  %v291 = vrot.slane %v277, %v290
  %v292 = vcombine.low %v284, %v291
  %v293 = vcombine.high %v284, %v291
  %v306 = vpack.c.bf16 %v220, %v202
  %v307 = vpack.c.bf16 %v221, %v203
  %v308 = vpack.c.bf16 %v256, %v238
  %v309 = vpack.c.bf16 %v257, %v239
  %v310 = vpack.c.bf16 %v292, %v274
  %v311 = vpack.c.bf16 %v293, %v275
  %v312 = vld [vmem:[%s1] sm:$0xf]
  %v313 = vld [vmem:[%s1 + $0x4] sm:$0xf]
  %v314 = vld [vmem:[%s1 + $0x8] sm:$0xf]
  %v315 = vld [vmem:[%s1 + $0xc] sm:$0xf]
  %v316 = vld [vmem:[%s1 + $0x10] sm:$0xf]
  %v317 = vld [vmem:[%s1 + $0x14] sm:$0xf]
  %v318 = vld [vmem:[%s1 + $0x18] sm:$0xf]
  %v319 = vld [vmem:[%s1 + $0x1c] sm:$0xf]
  %v320 = vld [vmem:[%s1 + $0x20] sm:$0xf]
  %v321 = vld [vmem:[%s1 + $0x24] sm:$0xf]
  %v322 = vld [vmem:[%s1 + $0x28] sm:$0xf]
  %v323 = vld [vmem:[%s1 + $0x2c] sm:$0xf]
  %v324 = vld [vmem:[%s1 + $0x30] sm:$0xf]
  %v325 = vld [vmem:[%s1 + $0x34] sm:$0xf]
  %v326 = vld [vmem:[%s1 + $0x38] sm:$0xf]
  %v327 = vld [vmem:[%s1 + $0x3c] sm:$0xf]
  %v328 = vld [vmem:[%s1 + $0x40] sm:$0xf]
  %v329 = vld [vmem:[%s1 + $0x44] sm:$0xf]
  %v330 = vld [vmem:[%s1 + $0x48] sm:$0xf]
  %v331 = vld [vmem:[%s1 + $0x4c] sm:$0xf]
  %v332 = vld [vmem:[%s1 + $0x50] sm:$0xf]
  %v333 = vld [vmem:[%s1 + $0x54] sm:$0xf]
  %v334 = vld [vmem:[%s1 + $0x58] sm:$0xf]
  %v335 = vld [vmem:[%s1 + $0x5c] sm:$0xf]
  %v336 = vld [vmem:[%s1 + $0x60] sm:$0xf]
  %v337 = vld [vmem:[%s1 + $0x64] sm:$0xf]
  %v338 = vld [vmem:[%s1 + $0x68] sm:$0xf]
  %v339 = vld [vmem:[%s1 + $0x6c] sm:$0xf]
  %v340 = vld [vmem:[%s1 + $0x70] sm:$0xf]
  %v341 = vld [vmem:[%s1 + $0x74] sm:$0xf]
  %v342 = vld [vmem:[%s1 + $0x78] sm:$0xf]
  %v343 = vld [vmem:[%s1 + $0x7c] sm:$0xf]
  %v344 = vld [vmem:[%s2] sm:$0x1]
  %v346 = vlaneseq
  %v347 = vshrl.u32 %v346, 7
  %v348 = vsub.s32 0, %v347
  %v349 = vrot.slane %v344, %v348
  %v383 = vunpack.c.l.b16 %v312
  %v384 = vunpack.c.l.b16 %v313
  %v385 = vunpack.c.l.b16 %v314
  %v386 = vunpack.c.l.b16 %v315
  %v387 = vunpack.c.l.b16 %v316
  %v388 = vunpack.c.l.b16 %v317
  %v389 = vunpack.c.l.b16 %v318
  %v390 = vunpack.c.l.b16 %v319
  %v391 = vunpack.c.l.b16 %v320
  %v392 = vunpack.c.l.b16 %v321
  %v393 = vunpack.c.l.b16 %v322
  %v394 = vunpack.c.l.b16 %v323
  %v395 = vunpack.c.l.b16 %v324
  %v396 = vunpack.c.l.b16 %v325
  %v397 = vunpack.c.l.b16 %v326
  %v398 = vunpack.c.l.b16 %v327
  %v399 = vunpack.c.l.b16 %v328
  %v400 = vunpack.c.l.b16 %v329
  %v401 = vunpack.c.l.b16 %v330
  %v402 = vunpack.c.l.b16 %v331
  %v403 = vunpack.c.l.b16 %v332
  %v404 = vunpack.c.l.b16 %v333
  %v405 = vunpack.c.l.b16 %v334
  %v406 = vunpack.c.l.b16 %v335
  %v407 = vunpack.c.l.b16 %v336
  %v408 = vunpack.c.l.b16 %v337
  %v409 = vunpack.c.l.b16 %v338
  %v410 = vunpack.c.l.b16 %v339
  %v411 = vunpack.c.l.b16 %v340
  %v412 = vunpack.c.l.b16 %v341
  %v413 = vunpack.c.l.b16 %v342
  %v414 = vunpack.c.l.b16 %v343
  %v415 = vpack.c.b16 %v384, %v383
  %v416 = vpack.c.b16 %v386, %v385
  %v417 = vpack.c.b16 %v388, %v387
  %v418 = vpack.c.b16 %v390, %v389
  %v419 = vpack.c.b16 %v392, %v391
  %v420 = vpack.c.b16 %v394, %v393
  %v421 = vpack.c.b16 %v396, %v395
  %v422 = vpack.c.b16 %v398, %v397
  %v423 = vpack.c.b16 %v400, %v399
  %v424 = vpack.c.b16 %v402, %v401
  %v425 = vpack.c.b16 %v404, %v403
  %v426 = vpack.c.b16 %v406, %v405
  %v427 = vpack.c.b16 %v408, %v407
  %v428 = vpack.c.b16 %v410, %v409
  %v429 = vpack.c.b16 %v412, %v411
  %v430 = vpack.c.b16 %v414, %v413
  %447 = vmatprep.subr.bf16.mxu0 0
  %448 = vmatpush1.bf16.msra.mxu0 %v415
  %449 = vmatprep.subr.bf16.mxu0 0
  %450 = vmatpush1.bf16.msra.mxu0 %v416
  %451 = vmatprep.subr.bf16.mxu0 0
  %452 = vmatpush1.bf16.msra.mxu0 %v417
  %453 = vmatprep.subr.bf16.mxu0 0
  %454 = vmatpush1.bf16.msra.mxu0 %v418
  %455 = vmatprep.subr.bf16.mxu0 0
  %456 = vmatpush1.bf16.msra.mxu0 %v419
  %457 = vmatprep.subr.bf16.mxu0 0
  %458 = vmatpush1.bf16.msra.mxu0 %v420
  %459 = vmatprep.subr.bf16.mxu0 0
  %460 = vmatpush1.bf16.msra.mxu0 %v421
  %461 = vmatprep.subr.bf16.mxu0 0
  %462 = vmatpush1.bf16.msra.mxu0 %v422
  %463 = vmatprep.subr.bf16.mxu0 0
  %464 = vmatpush1.bf16.msra.mxu0 %v423
  %465 = vmatprep.subr.bf16.mxu0 0
  %466 = vmatpush1.bf16.msra.mxu0 %v424
  %467 = vmatprep.subr.bf16.mxu0 0
  %468 = vmatpush1.bf16.msra.mxu0 %v425
  %469 = vmatprep.subr.bf16.mxu0 0
  %470 = vmatpush1.bf16.msra.mxu0 %v426
  %471 = vmatprep.subr.bf16.mxu0 0
  %472 = vmatpush1.bf16.msra.mxu0 %v427
  %473 = vmatprep.subr.bf16.mxu0 0
  %474 = vmatpush1.bf16.msra.mxu0 %v428
  %475 = vmatprep.subr.bf16.mxu0 0
  %476 = vmatpush1.bf16.msra.mxu0 %v429
  %477 = vmatprep.subr.bf16.mxu0 0
  %478 = vmatpush1.bf16.msra.mxu0 %v430
  %479 = vmatprep.mubr.bf16.mxu0 %v307
  %480 = vmatmul.mubr.bf16.gmra.mrb[0].mxu0 %v306
  %v481 = vpop.f32.mrb[0].mxu0
  %v482 = vadd.f32 %v349, %v481
  %v483 = vpop.f32.mrb[0].mxu0
  %v484 = vpop.f32.mrb[0].mxu0
  %v485 = vadd.f32 %v349, %v484
  %v486 = vpop.f32.mrb[0].mxu0
  %487 = vmatprep.mubr.bf16.mxu0 %v309
  %488 = vmatmul.mubr.bf16.gmra.mrb[0].mxu0 %v308
  %v489 = vpop.f32.mrb[0].mxu0
  %v490 = vadd.f32 %v349, %v489
  %v491 = vpop.f32.mrb[0].mxu0
  %v492 = vpop.f32.mrb[0].mxu0
  %v493 = vadd.f32 %v349, %v492
  %v494 = vpop.f32.mrb[0].mxu0
  %495 = vmatprep.mubr.bf16.mxu0 %v311
  %496 = vmatmul.mubr.bf16.gmra.mrb[0].mxu0 %v310
  %v497 = vpop.f32.mrb[0].mxu0
  %v498 = vadd.f32 %v349, %v497
  %v499 = vpop.f32.mrb[0].mxu0
  %v500 = vpop.f32.mrb[0].mxu0
  %v501 = vadd.f32 %v349, %v500
  %v502 = vpop.f32.mrb[0].mxu0
  %503 = vdwg.mxu0
  %v504 = vtanh.pop %v482
  %v505 = vtanh.pop %v485
  %v506 = vtanh.pop %v490
  %v507 = vtanh.pop %v493
  %v508 = vtanh.pop %v498
  %v509 = vtanh.pop %v501
  %v516 = vcombine.high %v504, %v504
  %v518 = vunpack.c.l.s4 1983009808
  %v519 = vunpack.c.0.s8 %v518
  %v520 = vlaneseq
  %v521 = vshrl.u32 %v520, 7
  %v522 = vsub.s32 %v519, %v521
  %v523 = vrot.slane %v504, %v522
  %v525 = vunpack.c.l.s4 1983009808
  %v526 = vunpack.c.0.s8 %v525
  %v527 = vlaneseq
  %v528 = vshrl.u32 %v527, 7
  %v529 = vsub.s32 %v526, %v528
  %v530 = vrot.slane %v516, %v529
  %v531 = vcombine.high %v523, %v523
  %v532 = vcombine.high %v530, %v530
  %v533 = vcombine.high %v505, %v505
  %v535 = vunpack.c.l.s4 1983009808
  %v536 = vunpack.c.0.s8 %v535
  %v537 = vlaneseq
  %v538 = vshrl.u32 %v537, 7
  %v539 = vsub.s32 %v536, %v538
  %v540 = vrot.slane %v505, %v539
  %v542 = vunpack.c.l.s4 1983009808
  %v543 = vunpack.c.0.s8 %v542
  %v544 = vlaneseq
  %v545 = vshrl.u32 %v544, 7
  %v546 = vsub.s32 %v543, %v545
  %v547 = vrot.slane %v533, %v546
  %v548 = vcombine.high %v540, %v540
  %v549 = vcombine.high %v547, %v547
  %v550 = vcombine.high %v506, %v506
  %v552 = vunpack.c.l.s4 1983009808
  %v553 = vunpack.c.0.s8 %v552
  %v554 = vlaneseq
  %v555 = vshrl.u32 %v554, 7
  %v556 = vsub.s32 %v553, %v555
  %v557 = vrot.slane %v506, %v556
  %v559 = vunpack.c.l.s4 1983009808
  %v560 = vunpack.c.0.s8 %v559
  %v561 = vlaneseq
  %v562 = vshrl.u32 %v561, 7
  %v563 = vsub.s32 %v560, %v562
  %v564 = vrot.slane %v550, %v563
  %v565 = vcombine.high %v557, %v557
  %v566 = vcombine.high %v564, %v564
  %v567 = vcombine.high %v507, %v507
  %v569 = vunpack.c.l.s4 1983009808
  %v570 = vunpack.c.0.s8 %v569
  %v571 = vlaneseq
  %v572 = vshrl.u32 %v571, 7
  %v573 = vsub.s32 %v570, %v572
  %v574 = vrot.slane %v507, %v573
  %v576 = vunpack.c.l.s4 1983009808
  %v577 = vunpack.c.0.s8 %v576
  %v578 = vlaneseq
  %v579 = vshrl.u32 %v578, 7
  %v580 = vsub.s32 %v577, %v579
  %v581 = vrot.slane %v567, %v580
  %v582 = vcombine.high %v574, %v574
  %v583 = vcombine.high %v581, %v581
  %v584 = vcombine.high %v508, %v508
  %v586 = vunpack.c.l.s4 1983009808
  %v587 = vunpack.c.0.s8 %v586
  %v588 = vlaneseq
  %v589 = vshrl.u32 %v588, 7
  %v590 = vsub.s32 %v587, %v589
  %v591 = vrot.slane %v508, %v590
  %v593 = vunpack.c.l.s4 1983009808
  %v594 = vunpack.c.0.s8 %v593
  %v595 = vlaneseq
  %v596 = vshrl.u32 %v595, 7
  %v597 = vsub.s32 %v594, %v596
  %v598 = vrot.slane %v584, %v597
  %v599 = vcombine.high %v591, %v591
  %v600 = vcombine.high %v598, %v598
  %v601 = vcombine.high %v509, %v509
  %v603 = vunpack.c.l.s4 1983009808
  %v604 = vunpack.c.0.s8 %v603
  %v605 = vlaneseq
  %v606 = vshrl.u32 %v605, 7
  %v607 = vsub.s32 %v604, %v606
  %v608 = vrot.slane %v509, %v607
  %v610 = vunpack.c.l.s4 1983009808
  %v611 = vunpack.c.0.s8 %v610
  %v612 = vlaneseq
  %v613 = vshrl.u32 %v612, 7
  %v614 = vsub.s32 %v611, %v613
  %v615 = vrot.slane %v601, %v614
  %v616 = vcombine.high %v608, %v608
  %v617 = vcombine.high %v615, %v615
  %v642 = vld [vmem:[%s3] sm:$0x1]
  %v644 = vlaneseq
  %v645 = vshrl.u32 %v644, 7
  %v646 = vsub.s32 0, %v645
  %v647 = vrot.slane %v642, %v646
  %v648 = vcombine.high %v647, %v647
  %v650 = vunpack.c.l.s4 1983009808
  %v651 = vunpack.c.0.s8 %v650
  %v652 = vlaneseq
  %v653 = vshrl.u32 %v652, 7
  %v654 = vsub.s32 %v651, %v653
  %v655 = vrot.slane %v647, %v654
  %v657 = vunpack.c.l.s4 1983009808
  %v658 = vunpack.c.0.s8 %v657
  %v659 = vlaneseq
  %v660 = vshrl.u32 %v659, 7
  %v661 = vsub.s32 %v658, %v660
  %v662 = vrot.slane %v648, %v661
  %v663 = vcombine.high %v655, %v655
  %v667 = vmul.f32 %v523, %v655
  %v668 = vmul.f32 %v531, %v663
  %v669 = vmul.f32 %v530, %v662
  %v670 = vmul.f32 %v532, %v655
  %v671 = vmul.f32 %v540, %v663
  %v672 = vmul.f32 %v548, %v662
  %v673 = vmul.f32 %v547, %v655
  %v674 = vmul.f32 %v549, %v663
  %v675 = vmul.f32 %v557, %v662
  %v676 = vmul.f32 %v565, %v655
  %v677 = vmul.f32 %v564, %v663
  %v678 = vmul.f32 %v566, %v662
  %v679 = vmul.f32 %v574, %v655
  %v680 = vmul.f32 %v582, %v663
  %v681 = vmul.f32 %v581, %v662
  %v682 = vmul.f32 %v583, %v655
  %v683 = vmul.f32 %v591, %v663
  %v684 = vmul.f32 %v599, %v662
  %v685 = vmul.f32 %v598, %v655
  %v686 = vmul.f32 %v600, %v663
  %v687 = vmul.f32 %v608, %v662
  %v688 = vmul.f32 %v616, %v655
  %v689 = vmul.f32 %v615, %v663
  %v690 = vmul.f32 %v617, %v662
  %v715 = vcombine.low %v667, %v668
  %v717 = vunpack.c.l.s4 1983009808
  %v718 = vunpack.c.0.s8 %v717
  %v719 = vlaneseq
  %v720 = vshrl.u32 %v719, 7
  %v721 = vsub.s32 %v718, %v720
  %v722 = vrot.slane %v715, %v721
  %v724 = vunpack.c.l.s4 1983009808
  %v725 = vunpack.c.0.s8 %v724
  %v726 = vlaneseq
  %v727 = vshrl.u32 %v726, 7
  %v728 = vsub.s32 %v725, %v727
  %v729 = vrot.slane %v669, %v728
  %v730 = vcombine.low %v722, %v729
  %v731 = vcombine.low %v670, %v671
  %v733 = vunpack.c.l.s4 1983009808
  %v734 = vunpack.c.0.s8 %v733
  %v735 = vlaneseq
  %v736 = vshrl.u32 %v735, 7
  %v737 = vsub.s32 %v734, %v736
  %v738 = vrot.slane %v731, %v737
  %v740 = vunpack.c.l.s4 1983009808
  %v741 = vunpack.c.0.s8 %v740
  %v742 = vlaneseq
  %v743 = vshrl.u32 %v742, 7
  %v744 = vsub.s32 %v741, %v743
  %v745 = vrot.slane %v672, %v744
  %v746 = vcombine.low %v738, %v745
  %v747 = vcombine.low %v673, %v674
  %v749 = vunpack.c.l.s4 1983009808
  %v750 = vunpack.c.0.s8 %v749
  %v751 = vlaneseq
  %v752 = vshrl.u32 %v751, 7
  %v753 = vsub.s32 %v750, %v752
  %v754 = vrot.slane %v747, %v753
  %v756 = vunpack.c.l.s4 1983009808
  %v757 = vunpack.c.0.s8 %v756
  %v758 = vlaneseq
  %v759 = vshrl.u32 %v758, 7
  %v760 = vsub.s32 %v757, %v759
  %v761 = vrot.slane %v675, %v760
  %v762 = vcombine.low %v754, %v761
  %v763 = vcombine.low %v676, %v677
  %v765 = vunpack.c.l.s4 1983009808
  %v766 = vunpack.c.0.s8 %v765
  %v767 = vlaneseq
  %v768 = vshrl.u32 %v767, 7
  %v769 = vsub.s32 %v766, %v768
  %v770 = vrot.slane %v763, %v769
  %v772 = vunpack.c.l.s4 1983009808
  %v773 = vunpack.c.0.s8 %v772
  %v774 = vlaneseq
  %v775 = vshrl.u32 %v774, 7
  %v776 = vsub.s32 %v773, %v775
  %v777 = vrot.slane %v678, %v776
  %v778 = vcombine.low %v770, %v777
  %v779 = vcombine.low %v679, %v680
  %v781 = vunpack.c.l.s4 1983009808
  %v782 = vunpack.c.0.s8 %v781
  %v783 = vlaneseq
  %v784 = vshrl.u32 %v783, 7
  %v785 = vsub.s32 %v782, %v784
  %v786 = vrot.slane %v779, %v785
  %v788 = vunpack.c.l.s4 1983009808
  %v789 = vunpack.c.0.s8 %v788
  %v790 = vlaneseq
  %v791 = vshrl.u32 %v790, 7
  %v792 = vsub.s32 %v789, %v791
  %v793 = vrot.slane %v681, %v792
  %v794 = vcombine.low %v786, %v793
  %v795 = vcombine.low %v682, %v683
  %v797 = vunpack.c.l.s4 1983009808
  %v798 = vunpack.c.0.s8 %v797
  %v799 = vlaneseq
  %v800 = vshrl.u32 %v799, 7
  %v801 = vsub.s32 %v798, %v800
  %v802 = vrot.slane %v795, %v801
  %v804 = vunpack.c.l.s4 1983009808
  %v805 = vunpack.c.0.s8 %v804
  %v806 = vlaneseq
  %v807 = vshrl.u32 %v806, 7
  %v808 = vsub.s32 %v805, %v807
  %v809 = vrot.slane %v684, %v808
  %v810 = vcombine.low %v802, %v809
  %v811 = vcombine.low %v685, %v686
  %v813 = vunpack.c.l.s4 1983009808
  %v814 = vunpack.c.0.s8 %v813
  %v815 = vlaneseq
  %v816 = vshrl.u32 %v815, 7
  %v817 = vsub.s32 %v814, %v816
  %v818 = vrot.slane %v811, %v817
  %v820 = vunpack.c.l.s4 1983009808
  %v821 = vunpack.c.0.s8 %v820
  %v822 = vlaneseq
  %v823 = vshrl.u32 %v822, 7
  %v824 = vsub.s32 %v821, %v823
  %v825 = vrot.slane %v687, %v824
  %v826 = vcombine.low %v818, %v825
  %v827 = vcombine.low %v688, %v689
  %v829 = vunpack.c.l.s4 1983009808
  %v830 = vunpack.c.0.s8 %v829
  %v831 = vlaneseq
  %v832 = vshrl.u32 %v831, 7
  %v833 = vsub.s32 %v830, %v832
  %v834 = vrot.slane %v827, %v833
  %v836 = vunpack.c.l.s4 1983009808
  %v837 = vunpack.c.0.s8 %v836
  %v838 = vlaneseq
  %v839 = vshrl.u32 %v838, 7
  %v840 = vsub.s32 %v837, %v839
  %v841 = vrot.slane %v690, %v840
  %v842 = vcombine.low %v834, %v841
  %vm851 = vcmask 46080
  %v852 = vsel %vm851, %v730, 0.0
  %853 = vadd.xlane.f32.xlu0 %v852
  %v854 = vpop.xlane.xlu0 %853
  %v855 = vsel %vm851, %v746, 0.0
  %856 = vadd.xlane.f32.xlu0 %v855
  %v857 = vpop.xlane.xlu0 %856
  %v858 = vsel %vm851, %v762, 0.0
  %859 = vadd.xlane.f32.xlu0 %v858
  %v860 = vpop.xlane.xlu0 %859
  %v861 = vsel %vm851, %v778, 0.0
  %862 = vadd.xlane.f32.xlu0 %v861
  %v863 = vpop.xlane.xlu0 %862
  %v864 = vsel %vm851, %v794, 0.0
  %865 = vadd.xlane.f32.xlu0 %v864
  %v866 = vpop.xlane.xlu0 %865
  %v867 = vsel %vm851, %v810, 0.0
  %868 = vadd.xlane.f32.xlu0 %v867
  %v869 = vpop.xlane.xlu0 %868
  %v870 = vsel %vm851, %v826, 0.0
  %871 = vadd.xlane.f32.xlu0 %v870
  %v872 = vpop.xlane.xlu0 %871
  %v873 = vsel %vm851, %v842, 0.0
  %874 = vadd.xlane.f32.xlu0 %v873
  %v875 = vpop.xlane.xlu0 %874
  %v884 = vlaneseq
  %v885 = vand.u32 %v884, 127
  %v886 = vlaneseq
  %v887 = vshrl.u32 %v886, 7
  %v888 = vsub.s32 %v885, %v887
  %v889 = vrot.slane %v854, %v888
  %v890 = vlaneseq
  %v891 = vshrl.u32 %v890, 7
  %v892 = vsub.s32 %v885, %v891
  %v893 = vrot.slane %v857, %v892
  %v894 = vlaneseq
  %v895 = vshrl.u32 %v894, 7
  %v896 = vsub.s32 %v885, %v895
  %v897 = vrot.slane %v860, %v896
  %v898 = vlaneseq
  %v899 = vshrl.u32 %v898, 7
  %v900 = vsub.s32 %v885, %v899
  %v901 = vrot.slane %v863, %v900
  %v902 = vlaneseq
  %v903 = vshrl.u32 %v902, 7
  %v904 = vsub.s32 %v885, %v903
  %v905 = vrot.slane %v866, %v904
  %v906 = vlaneseq
  %v907 = vshrl.u32 %v906, 7
  %v908 = vsub.s32 %v885, %v907
  %v909 = vrot.slane %v869, %v908
  %v910 = vlaneseq
  %v911 = vshrl.u32 %v910, 7
  %v912 = vsub.s32 %v885, %v911
  %v913 = vrot.slane %v872, %v912
  %v914 = vlaneseq
  %v915 = vshrl.u32 %v914, 7
  %v916 = vsub.s32 %v885, %v915
  %v917 = vrot.slane %v875, %v916
  %vm918 = vcmask 1041409
  %v919 = vsel %vm918, %v893, %v889
  %vm920 = vcmask 1042434
  %v921 = vsel %vm920, %v897, %v919
  %vm922 = vcmask 1043459
  %v923 = vsel %vm922, %v901, %v921
  %vm924 = vcmask 1044484
  %v925 = vsel %vm924, %v905, %v923
  %vm926 = vcmask 1045509
  %v927 = vsel %vm926, %v909, %v925
  %vm928 = vcmask 1046534
  %v929 = vsel %vm928, %v913, %v927
  %vm930 = vcmask 1047559
  %v931 = vsel %vm930, %v917, %v929
  %vm933 = vcmask 48128
  %v934 = vsel %vm933, %v931, -inf
  %935 = vmax.xlane.f32.xlu0 %v934
  %v936 = vpop.xlane.xlu0 %935
  %v938 = vlaneseq
  %v939 = vshrl.u32 %v938, 7
  %v940 = vsub.s32 0, %v939
  %v941 = vrot.slane %v936, %v940
  %v942 = vlaneseq
  %v943 = vshrl.u32 %v942, 7
  %v944 = vsub.s32 1, %v943
  %v945 = vrot.slane %v936, %v944
  %v946 = vlaneseq
  %v947 = vshrl.u32 %v946, 7
  %v948 = vsub.s32 2, %v947
  %v949 = vrot.slane %v936, %v948
  %v950 = vlaneseq
  %v951 = vshrl.u32 %v950, 7
  %v952 = vsub.s32 3, %v951
  %v953 = vrot.slane %v936, %v952
  %v954 = vlaneseq
  %v955 = vshrl.u32 %v954, 7
  %v956 = vsub.s32 4, %v955
  %v957 = vrot.slane %v936, %v956
  %v958 = vlaneseq
  %v959 = vshrl.u32 %v958, 7
  %v960 = vsub.s32 5, %v959
  %v961 = vrot.slane %v936, %v960
  %v962 = vlaneseq
  %v963 = vshrl.u32 %v962, 7
  %v964 = vsub.s32 6, %v963
  %v965 = vrot.slane %v936, %v964
  %v966 = vlaneseq
  %v967 = vshrl.u32 %v966, 7
  %v968 = vsub.s32 7, %v967
  %v969 = vrot.slane %v936, %v968
  %v978 = vsub.f32 %v854, %v941
  %v979 = vsub.f32 %v857, %v945
  %v980 = vsub.f32 %v860, %v949
  %v981 = vsub.f32 %v863, %v953
  %v982 = vsub.f32 %v866, %v957
  %v983 = vsub.f32 %v869, %v961
  %v984 = vsub.f32 %v872, %v965
  %v985 = vsub.f32 %v875, %v969
  %v986 = vmul.f32 %v978, 1.442695
  %v987 = vpow.pop %v986
  %v988 = vmul.f32 %v979, 1.442695
  %v989 = vpow.pop %v988
  %v990 = vmul.f32 %v980, 1.442695
  %v991 = vpow.pop %v990
  %v992 = vmul.f32 %v981, 1.442695
  %v993 = vpow.pop %v992
  %v994 = vmul.f32 %v982, 1.442695
  %v995 = vpow.pop %v994
  %v996 = vmul.f32 %v983, 1.442695
  %v997 = vpow.pop %v996
  %v998 = vmul.f32 %v984, 1.442695
  %v999 = vpow.pop %v998
  %v1000 = vmul.f32 %v985, 1.442695
  %v1001 = vpow.pop %v1000
  %1010 = vset.pattern.permute.xlu0 0
  %1011 = vperm.xlu0 %1010, %v987
  %v1012 = vpop.permute.xlu0 %1011
  %1013 = vset.pattern.permute.xlu0 0
  %1014 = vperm.xlu0 %1013, %v989
  %v1015 = vpop.permute.xlu0 %1014
  %1016 = vset.pattern.permute.xlu0 0
  %1017 = vperm.xlu0 %1016, %v991
  %v1018 = vpop.permute.xlu0 %1017
  %1019 = vset.pattern.permute.xlu0 0
  %1020 = vperm.xlu0 %1019, %v993
  %v1021 = vpop.permute.xlu0 %1020
  %1022 = vset.pattern.permute.xlu0 0
  %1023 = vperm.xlu0 %1022, %v995
  %v1024 = vpop.permute.xlu0 %1023
  %1025 = vset.pattern.permute.xlu0 0
  %1026 = vperm.xlu0 %1025, %v997
  %v1027 = vpop.permute.xlu0 %1026
  %1028 = vset.pattern.permute.xlu0 0
  %1029 = vperm.xlu0 %1028, %v999
  %v1030 = vpop.permute.xlu0 %1029
  %1031 = vset.pattern.permute.xlu0 0
  %1032 = vperm.xlu0 %1031, %v1001
  %v1033 = vpop.permute.xlu0 %1032
  %v1034 = vlaneseq
  %v1035 = vshrl.u32 %v1034, 7
  %v1036 = vsub.s32 %v885, %v1035
  %v1037 = vrot.slane %v1012, %v1036
  %v1038 = vlaneseq
  %v1039 = vshrl.u32 %v1038, 7
  %v1040 = vsub.s32 %v885, %v1039
  %v1041 = vrot.slane %v1015, %v1040
  %v1042 = vlaneseq
  %v1043 = vshrl.u32 %v1042, 7
  %v1044 = vsub.s32 %v885, %v1043
  %v1045 = vrot.slane %v1018, %v1044
  %v1046 = vlaneseq
  %v1047 = vshrl.u32 %v1046, 7
  %v1048 = vsub.s32 %v885, %v1047
  %v1049 = vrot.slane %v1021, %v1048
  %v1050 = vlaneseq
  %v1051 = vshrl.u32 %v1050, 7
  %v1052 = vsub.s32 %v885, %v1051
  %v1053 = vrot.slane %v1024, %v1052
  %v1054 = vlaneseq
  %v1055 = vshrl.u32 %v1054, 7
  %v1056 = vsub.s32 %v885, %v1055
  %v1057 = vrot.slane %v1027, %v1056
  %v1058 = vlaneseq
  %v1059 = vshrl.u32 %v1058, 7
  %v1060 = vsub.s32 %v885, %v1059
  %v1061 = vrot.slane %v1030, %v1060
  %v1062 = vlaneseq
  %v1063 = vshrl.u32 %v1062, 7
  %v1064 = vsub.s32 %v885, %v1063
  %v1065 = vrot.slane %v1033, %v1064
  %v1066 = vsel %vm918, %v1041, %v1037
  %v1067 = vsel %vm920, %v1045, %v1066
  %v1068 = vsel %vm922, %v1049, %v1067
  %v1069 = vsel %vm924, %v1053, %v1068
  %v1070 = vsel %vm926, %v1057, %v1069
  %v1071 = vsel %vm928, %v1061, %v1070
  %v1072 = vsel %vm930, %v1065, %v1071
  %v1074 = vsel %vm933, %v1072, 0.0
  %1075 = vadd.xlane.f32.xlu0 %v1074
  %v1076 = vpop.xlane.xlu0 %1075
  %v1078 = vlaneseq
  %v1079 = vshrl.u32 %v1078, 7
  %v1080 = vsub.s32 0, %v1079
  %v1081 = vrot.slane %v1076, %v1080
  %v1082 = vlaneseq
  %v1083 = vshrl.u32 %v1082, 7
  %v1084 = vsub.s32 1, %v1083
  %v1085 = vrot.slane %v1076, %v1084
  %v1086 = vlaneseq
  %v1087 = vshrl.u32 %v1086, 7
  %v1088 = vsub.s32 2, %v1087
  %v1089 = vrot.slane %v1076, %v1088
  %v1090 = vlaneseq
  %v1091 = vshrl.u32 %v1090, 7
  %v1092 = vsub.s32 3, %v1091
  %v1093 = vrot.slane %v1076, %v1092
  %v1094 = vlaneseq
  %v1095 = vshrl.u32 %v1094, 7
  %v1096 = vsub.s32 4, %v1095
  %v1097 = vrot.slane %v1076, %v1096
  %v1098 = vlaneseq
  %v1099 = vshrl.u32 %v1098, 7
  %v1100 = vsub.s32 5, %v1099
  %v1101 = vrot.slane %v1076, %v1100
  %v1102 = vlaneseq
  %v1103 = vshrl.u32 %v1102, 7
  %v1104 = vsub.s32 6, %v1103
  %v1105 = vrot.slane %v1076, %v1104
  %v1106 = vlaneseq
  %v1107 = vshrl.u32 %v1106, 7
  %v1108 = vsub.s32 7, %v1107
  %v1109 = vrot.slane %v1076, %v1108
  %v1118 = vrcp.pop %v1081
  %v1119 = vmul.f32 %v987, %v1118
  %v1120 = vrcp.pop %v1085
  %v1121 = vmul.f32 %v989, %v1120
  %v1122 = vrcp.pop %v1089
  %v1123 = vmul.f32 %v991, %v1122
  %v1124 = vrcp.pop %v1093
  %v1125 = vmul.f32 %v993, %v1124
  %v1126 = vrcp.pop %v1097
  %v1127 = vmul.f32 %v995, %v1126
  %v1128 = vrcp.pop %v1101
  %v1129 = vmul.f32 %v997, %v1128
  %v1130 = vrcp.pop %v1105
  %v1131 = vmul.f32 %v999, %v1130
  %v1132 = vrcp.pop %v1109
  %v1133 = vmul.f32 %v1001, %v1132
  %1135 = vset.pattern.permute.xlu0 0
  %1136 = vperm.xlu0 %1135, %v1119
  %v1137 = vpop.permute.xlu0 %1136
  %1140 = vset.pattern.permute.xlu0 0
  %1141 = vperm.xlu0 %1140, %v1121
  %v1142 = vpop.permute.xlu0 %1141
  %1145 = vset.pattern.permute.xlu0 0
  %1146 = vperm.xlu0 %1145, %v1123
  %v1147 = vpop.permute.xlu0 %1146
  %1150 = vset.pattern.permute.xlu0 0
  %1151 = vperm.xlu0 %1150, %v1125
  %v1152 = vpop.permute.xlu0 %1151
  %1155 = vset.pattern.permute.xlu0 0
  %1156 = vperm.xlu0 %1155, %v1127
  %v1157 = vpop.permute.xlu0 %1156
  %1160 = vset.pattern.permute.xlu0 0
  %1161 = vperm.xlu0 %1160, %v1129
  %v1162 = vpop.permute.xlu0 %1161
  %1165 = vset.pattern.permute.xlu0 0
  %1166 = vperm.xlu0 %1165, %v1131
  %v1167 = vpop.permute.xlu0 %1166
  %1170 = vset.pattern.permute.xlu0 0
  %1171 = vperm.xlu0 %1170, %v1133
  %v1172 = vpop.permute.xlu0 %1171
  %v1174 = vmul.f32 %v18, %v1137
  %v1175 = vmul.f32 %v19, %v1137
  %v1176 = vmul.f32 %v20, %v1142
  %v1177 = vmul.f32 %v21, %v1142
  %v1178 = vmul.f32 %v22, %v1147
  %v1179 = vmul.f32 %v23, %v1147
  %v1180 = vmul.f32 %v24, %v1152
  %v1181 = vmul.f32 %v25, %v1152
  %v1182 = vmul.f32 %v26, %v1157
  %v1183 = vmul.f32 %v27, %v1157
  %v1184 = vmul.f32 %v28, %v1162
  %v1185 = vmul.f32 %v29, %v1162
  %v1186 = vmul.f32 %v30, %v1167
  %v1187 = vmul.f32 %v31, %v1167
  %v1188 = vmul.f32 %v32, %v1172
  %v1189 = vmul.f32 %v33, %v1172
  %vm1190 = vcmask 1045504
  %v1191 = vsel %vm1190, %v1174, 0.0
  %v1192 = vrot.slane %v1191, 4
  %v1193 = vadd.f32 %v1191, %v1192
  %v1194 = vrot.slane %v1193, 2
  %v1195 = vadd.f32 %v1193, %v1194
  %v1196 = vrot.slane %v1195, 1
  %v1197 = vadd.f32 %v1195, %v1196
  %v1198 = vsel %vm1190, %v1175, 0.0
  %v1199 = vrot.slane %v1198, 4
  %v1200 = vadd.f32 %v1198, %v1199
  %v1201 = vrot.slane %v1200, 2
  %v1202 = vadd.f32 %v1200, %v1201
  %v1203 = vrot.slane %v1202, 1
  %v1204 = vadd.f32 %v1202, %v1203
  %v1205 = vsel %vm1190, %v1176, 0.0
  %v1206 = vrot.slane %v1205, 4
  %v1207 = vadd.f32 %v1205, %v1206
  %v1208 = vrot.slane %v1207, 2
  %v1209 = vadd.f32 %v1207, %v1208
  %v1210 = vrot.slane %v1209, 1
  %v1211 = vadd.f32 %v1209, %v1210
  %v1212 = vsel %vm1190, %v1177, 0.0
  %v1213 = vrot.slane %v1212, 4
  %v1214 = vadd.f32 %v1212, %v1213
  %v1215 = vrot.slane %v1214, 2
  %v1216 = vadd.f32 %v1214, %v1215
  %v1217 = vrot.slane %v1216, 1
  %v1218 = vadd.f32 %v1216, %v1217
  %v1219 = vsel %vm1190, %v1178, 0.0
  %v1220 = vrot.slane %v1219, 4
  %v1221 = vadd.f32 %v1219, %v1220
  %v1222 = vrot.slane %v1221, 2
  %v1223 = vadd.f32 %v1221, %v1222
  %v1224 = vrot.slane %v1223, 1
  %v1225 = vadd.f32 %v1223, %v1224
  %v1226 = vsel %vm1190, %v1179, 0.0
  %v1227 = vrot.slane %v1226, 4
  %v1228 = vadd.f32 %v1226, %v1227
  %v1229 = vrot.slane %v1228, 2
  %v1230 = vadd.f32 %v1228, %v1229
  %v1231 = vrot.slane %v1230, 1
  %v1232 = vadd.f32 %v1230, %v1231
  %v1233 = vsel %vm1190, %v1180, 0.0
  %v1234 = vrot.slane %v1233, 4
  %v1235 = vadd.f32 %v1233, %v1234
  %v1236 = vrot.slane %v1235, 2
  %v1237 = vadd.f32 %v1235, %v1236
  %v1238 = vrot.slane %v1237, 1
  %v1239 = vadd.f32 %v1237, %v1238
  %v1240 = vsel %vm1190, %v1181, 0.0
  %v1241 = vrot.slane %v1240, 4
  %v1242 = vadd.f32 %v1240, %v1241
  %v1243 = vrot.slane %v1242, 2
  %v1244 = vadd.f32 %v1242, %v1243
  %v1245 = vrot.slane %v1244, 1
  %v1246 = vadd.f32 %v1244, %v1245
  %v1247 = vsel %vm1190, %v1182, 0.0
  %v1248 = vrot.slane %v1247, 4
  %v1249 = vadd.f32 %v1247, %v1248
  %v1250 = vrot.slane %v1249, 2
  %v1251 = vadd.f32 %v1249, %v1250
  %v1252 = vrot.slane %v1251, 1
  %v1253 = vadd.f32 %v1251, %v1252
  %v1254 = vsel %vm1190, %v1183, 0.0
  %v1255 = vrot.slane %v1254, 4
  %v1256 = vadd.f32 %v1254, %v1255
  %v1257 = vrot.slane %v1256, 2
  %v1258 = vadd.f32 %v1256, %v1257
  %v1259 = vrot.slane %v1258, 1
  %v1260 = vadd.f32 %v1258, %v1259
  %v1261 = vsel %vm1190, %v1184, 0.0
  %v1262 = vrot.slane %v1261, 4
  %v1263 = vadd.f32 %v1261, %v1262
  %v1264 = vrot.slane %v1263, 2
  %v1265 = vadd.f32 %v1263, %v1264
  %v1266 = vrot.slane %v1265, 1
  %v1267 = vadd.f32 %v1265, %v1266
  %v1268 = vsel %vm1190, %v1185, 0.0
  %v1269 = vrot.slane %v1268, 4
  %v1270 = vadd.f32 %v1268, %v1269
  %v1271 = vrot.slane %v1270, 2
  %v1272 = vadd.f32 %v1270, %v1271
  %v1273 = vrot.slane %v1272, 1
  %v1274 = vadd.f32 %v1272, %v1273
  %v1275 = vsel %vm1190, %v1186, 0.0
  %v1276 = vrot.slane %v1275, 4
  %v1277 = vadd.f32 %v1275, %v1276
  %v1278 = vrot.slane %v1277, 2
  %v1279 = vadd.f32 %v1277, %v1278
  %v1280 = vrot.slane %v1279, 1
  %v1281 = vadd.f32 %v1279, %v1280
  %v1282 = vsel %vm1190, %v1187, 0.0
  %v1283 = vrot.slane %v1282, 4
  %v1284 = vadd.f32 %v1282, %v1283
  %v1285 = vrot.slane %v1284, 2
  %v1286 = vadd.f32 %v1284, %v1285
  %v1287 = vrot.slane %v1286, 1
  %v1288 = vadd.f32 %v1286, %v1287
  %v1289 = vsel %vm1190, %v1188, 0.0
  %v1290 = vrot.slane %v1289, 4
  %v1291 = vadd.f32 %v1289, %v1290
  %v1292 = vrot.slane %v1291, 2
  %v1293 = vadd.f32 %v1291, %v1292
  %v1294 = vrot.slane %v1293, 1
  %v1295 = vadd.f32 %v1293, %v1294
  %v1296 = vsel %vm1190, %v1189, 0.0
  %v1297 = vrot.slane %v1296, 4
  %v1298 = vadd.f32 %v1296, %v1297
  %v1299 = vrot.slane %v1298, 2
  %v1300 = vadd.f32 %v1298, %v1299
  %v1301 = vrot.slane %v1300, 1
  %v1302 = vadd.f32 %v1300, %v1301
  %v1319 = vsel %vm918, %v1211, %v1197
  %v1320 = vsel %vm920, %v1225, %v1319
  %v1321 = vsel %vm922, %v1239, %v1320
  %v1322 = vsel %vm924, %v1253, %v1321
  %v1323 = vsel %vm926, %v1267, %v1322
  %v1324 = vsel %vm928, %v1281, %v1323
  %v1325 = vsel %vm930, %v1295, %v1324
  %v1326 = vsel %vm918, %v1218, %v1204
  %v1327 = vsel %vm920, %v1232, %v1326
  %v1328 = vsel %vm922, %v1246, %v1327
  %v1329 = vsel %vm924, %v1260, %v1328
  %v1330 = vsel %vm926, %v1274, %v1329
  %v1331 = vsel %vm928, %v1288, %v1330
  %v1332 = vsel %vm930, %v1302, %v1331
  %1335 = vst [vmem:[%s4] sm:$0xff] %v1325
  %1336 = vst [vmem:[%s4 + $0x8] sm:$0xff] %v1332
  // Predicated region
  $region18: #{han_forward.8} parent=0 // pred_check
    _
  $region19: #{han_forward.8} parent=0 // pred_check_branch
    %1338 = sbr.rel (0) target = $region21
  $region20: #{han_forward.8} parent=0 // pred_region
    _
  $region21: #{han_forward.8} parent=0 // pred_fallthru
    _
  // Predicated region
  $region22: #{han_forward.8} parent=0 // pred_check
    _
  $region23: #{han_forward.8} parent=0 // pred_check_branch
    %1340 = sbr.rel (0) target = $region25
  $region24: #{han_forward.8} parent=0 // pred_region
    _
  $region25: #{han_forward.8} parent=0 // pred_fallthru
    _

// kernel: han_forward.6
$region0: #{han_forward.6}
  #allocation0 [shape = 'u32[]', space=smem, size = 0x4, offset = 0x4, fixed_abs, tag = 'smem constant byte address 0x4 - core index']
  #allocation1 [shape = 'u32[144,128]{1,0:T(1,128)}', space=vmem, size = 0x12000, scoped, tag = 'internal scratch']
  #allocation2 [shape = 'f32[6,8,384]{2,1,0:T(8,128)}', space=vmem, size = 0x12000, scoped, tag = 'scratch operand']
  #allocation3 [shape = 'f32[6,8,384]{2,1,0:T(8,128)}', space=vmem, size = 0x12000, scoped, tag = 'scratch operand']
  %s0 = inlined_call_operand.vmem [shape: f32[6,8,16], index: 0, kind: input, shape index: {}]
  %s1 = inlined_call_operand.vmem [shape: bf16[16,768], index: 1, kind: input, shape index: {}]
  %s2 = inlined_call_operand.vmem [shape: f32[1,768], index: 2, kind: input, shape index: {}]
  %s3 = inlined_call_operand.vmem [shape: bf16[128,384], index: 3, kind: input, shape index: {}]
  %s4 = inlined_call_operand.hbm [shape: f32[1,384], index: 4, kind: input, shape index: {}]
  %s5 = inlined_call_operand.vmem [shape: bf16[128,384], index: 5, kind: input, shape index: {}]
  %s6 = inlined_call_operand.hbm [shape: f32[1,384], index: 6, kind: input, shape index: {}]
  %s7 = inlined_call_operand.vmem [shape: f32[6,8,256], index: 7, kind: output, shape index: {}]
  %s8 = sld [smem:[#allocation0]]
  $region46: #{han_forward.6} parent=0
    _
  %s10 = ssub.s32 1, %s8
  %s11 = scalar_select 0, %s10, %s8
  $region1: #{han_forward.6} parent=0
    #allocation4 [shape = 'u8[1536]{0}', space=vmem, size = 0x800, scoped, tag = 'input window, operand 4, single buffered']
    #allocation5 [shape = 's32[1]{0}', space=sflag, size = 0x4, scoped, tag = 'scoped memory for han_forward.6']
    #allocation6 [shape = 'u8[1536]{0}', space=vmem, size = 0x800, scoped, tag = 'input window, operand 6, single buffered']
    #allocation7 [shape = 's32[1]{0}', space=sflag, size = 0x4, scoped, tag = 'scoped memory for han_forward.6']
    %12 = vsyncpa [#allocation5], 0
    %13 = vsyncpa [#allocation7], 0
    // Predicated region
    $region2: #{han_forward.6} parent=1 // pred_check
      _
    $region3: #{han_forward.6} parent=1 // pred_check_branch
      %15 = sbr.rel (0) target = $region5
    $region4: #{han_forward.6} parent=1 // pred_region
      _
    $region5: #{han_forward.6} parent=1 // pred_fallthru
      _
    // Predicated region
    $region6: #{han_forward.6} parent=1 // pred_check
      _
    $region7: #{han_forward.6} parent=1 // pred_check_branch
      %17 = sbr.rel (0) target = $region9
    $region8: #{han_forward.6} parent=1 // pred_region
      _
    $region9: #{han_forward.6} parent=1 // pred_fallthru
      _
    // Predicated region
    $region10: #{han_forward.6} parent=1 // pred_check
      _
    $region11: #{han_forward.6} parent=1 // pred_check_branch
      %19 = sbr.rel (0) target = $region13
    $region12: #{han_forward.6} parent=1 // pred_region
      _
    $region13: #{han_forward.6} parent=1 // pred_fallthru
      _
    // Predicated region
    $region14: #{han_forward.6} parent=1 // pred_check
      _
    $region15: #{han_forward.6} parent=1 // pred_check_branch
      %21 = sbr.rel (0) target = $region17
    $region16: #{han_forward.6} parent=1 // pred_region
      _
    $region17: #{han_forward.6} parent=1 // pred_fallthru
      _
    // Predicated region
    $region18: #{han_forward.6} parent=1 // pred_check
      _
    $region19: #{han_forward.6} parent=1 // pred_check_branch
      %23 = sbr.rel (0) target = $region21
    $region20: #{han_forward.6} parent=1 // pred_region
      %s25 = ssub.s32 48, 48
      %26 = vsyncadd [#allocation5], %s25
      %s28 = sshll.u32 [#allocation4], 4
      %s29 = int_to_ptr.vmem [resolvable:$true] %s28
      %31 = dma.hbm_to_vmem [thread:$0]  %s4, 48, %s29, [#allocation5]
    $region21: #{han_forward.6} parent=1 // pred_fallthru
      _
    // Predicated region
    $region22: #{han_forward.6} parent=1 // pred_check
      _
    $region23: #{han_forward.6} parent=1 // pred_check_branch
      %33 = sbr.rel (0) target = $region25
    $region24: #{han_forward.6} parent=1 // pred_region
      _
    $region25: #{han_forward.6} parent=1 // pred_fallthru
      _
    // Predicated region
    $region26: #{han_forward.6} parent=1 // pred_check
      _
    $region27: #{han_forward.6} parent=1 // pred_check_branch
      %35 = sbr.rel (0) target = $region29
    $region28: #{han_forward.6} parent=1 // pred_region
      %s37 = ssub.s32 48, 48
      %38 = vsyncadd [#allocation7], %s37
      %s40 = sshll.u32 [#allocation6], 4
      %s41 = int_to_ptr.vmem [resolvable:$true] %s40
      %43 = dma.hbm_to_vmem [thread:$0]  %s6, 48, %s41, [#allocation7]
    $region29: #{han_forward.6} parent=1 // pred_fallthru
      _
    // Predicated region
    $region30: #{han_forward.6} parent=1 // pred_check
      _
    $region31: #{han_forward.6} parent=1 // pred_check_branch
      %45 = sbr.rel (0) target = $region33
    $region32: #{han_forward.6} parent=1 // pred_region
      %46 = dma.done [#allocation5], 48
    $region33: #{han_forward.6} parent=1 // pred_fallthru
      _
    // Predicated region
    $region34: #{han_forward.6} parent=1 // pred_check
      _
    $region35: #{han_forward.6} parent=1 // pred_check_branch
      %48 = sbr.rel (0) target = $region37
    $region36: #{han_forward.6} parent=1 // pred_region
      %49 = dma.done [#allocation7], 48
    $region37: #{han_forward.6} parent=1 // pred_fallthru
      _
    %v51 = vld [vmem:[%s0] sm:$0xff]
    %v52 = vld [vmem:[%s0 + $0x8] sm:$0xff]
    %v53 = vld [vmem:[%s0 + $0x10] sm:$0xff]
    %v54 = vld [vmem:[%s0 + $0x18] sm:$0xff]
    %v55 = vld [vmem:[%s0 + $0x20] sm:$0xff]
    %v56 = vld [vmem:[%s0 + $0x28] sm:$0xff]
    %v57 = vpack.c.bf16 %v52, %v51
    %v58 = vpack.c.bf16 %v54, %v53
    %v59 = vpack.c.bf16 %v56, %v55
    %v60 = vld [vmem:[%s1] sm:$0xff]
    %v61 = vld [vmem:[%s1 + $0x8] sm:$0xff]
    %v62 = vld [vmem:[%s1 + $0x10] sm:$0xff]
    %v63 = vld [vmem:[%s1 + $0x18] sm:$0xff]
    %v64 = vld [vmem:[%s1 + $0x20] sm:$0xff]
    %v65 = vld [vmem:[%s1 + $0x28] sm:$0xff]
    %v66 = vld [vmem:[%s2] sm:$0x3f]
    %v68 = vlaneseq
    %v69 = vshrl.u32 %v68, 7
    %v70 = vsub.s32 0, %v69
    %v71 = vrot.slane %v66, %v70
    %v72 = vlaneseq
    %v73 = vshrl.u32 %v72, 7
    %v74 = vsub.s32 1, %v73
    %v75 = vrot.slane %v66, %v74
    %v76 = vlaneseq
    %v77 = vshrl.u32 %v76, 7
    %v78 = vsub.s32 2, %v77
    %v79 = vrot.slane %v66, %v78
    %v80 = vlaneseq
    %v81 = vshrl.u32 %v80, 7
    %v82 = vsub.s32 3, %v81
    %v83 = vrot.slane %v66, %v82
    %v84 = vlaneseq
    %v85 = vshrl.u32 %v84, 7
    %v86 = vsub.s32 4, %v85
    %v87 = vrot.slane %v66, %v86
    %v88 = vlaneseq
    %v89 = vshrl.u32 %v88, 7
    %v90 = vsub.s32 5, %v89
    %v91 = vrot.slane %v66, %v90
    %v104 = vunpack.c.l.b16 %v60
    %v105 = vunpack.c.h.b16 %v60
    %v106 = vunpack.c.l.b16 %v61
    %v107 = vunpack.c.h.b16 %v61
    %v108 = vunpack.c.l.b16 %v62
    %v109 = vunpack.c.h.b16 %v62
    %v110 = vunpack.c.l.b16 %v63
    %v111 = vunpack.c.h.b16 %v63
    %v112 = vunpack.c.l.b16 %v64
    %v113 = vunpack.c.h.b16 %v64
    %v114 = vunpack.c.l.b16 %v65
    %v115 = vunpack.c.h.b16 %v65
    %v116 = vpack.c.b16 %v110, %v104
    %v117 = vpack.c.b16 %v111, %v105
    %v118 = vpack.c.b16 %v112, %v106
    %v119 = vpack.c.b16 %v113, %v107
    %v120 = vpack.c.b16 %v114, %v108
    %v121 = vpack.c.b16 %v115, %v109
    %vm128 = vcmask 130048
    %v130 = vsel %vm128, %v57, 0
    %v133 = vsel %vm128, %v58, 0
    %v136 = vsel %vm128, %v59, 0
    %138 = vmatprep.subr.bf16.mxu0 %v117
    %139 = vmatpush1.bf16.msra.mxu0 %v116
    %140 = vmatprep.subr.bf16.mxu0 0
    %141 = vmatpush1.bf16.msra.mxu0 0
    %142 = vmatprep.subr.bf16.mxu0 0
    %143 = vmatpush1.bf16.msra.mxu0 0
    %144 = vmatprep.subr.bf16.mxu0 0
    %145 = vmatpush1.bf16.msra.mxu0 0
    %146 = vmatprep.subr.bf16.mxu0 0
    %147 = vmatpush1.bf16.msra.mxu0 0
    %148 = vmatprep.subr.bf16.mxu0 0
    %149 = vmatpush1.bf16.msra.mxu0 0
    %150 = vmatprep.subr.bf16.mxu0 0
    %151 = vmatpush1.bf16.msra.mxu0 0
    %152 = vmatprep.subr.bf16.mxu0 0
    %153 = vmatpush1.bf16.msra.mxu0 0
    %154 = vmatprep.subr.bf16.mxu0 0
    %155 = vmatpush1.bf16.msra.mxu0 0
    %156 = vmatprep.subr.bf16.mxu0 0
    %157 = vmatpush1.bf16.msra.mxu0 0
    %158 = vmatprep.subr.bf16.mxu0 0
    %159 = vmatpush1.bf16.msra.mxu0 0
    %160 = vmatprep.subr.bf16.mxu0 0
    %161 = vmatpush1.bf16.msra.mxu0 0
    %162 = vmatprep.subr.bf16.mxu0 0
    %163 = vmatpush1.bf16.msra.mxu0 0
    %164 = vmatprep.subr.bf16.mxu0 0
    %165 = vmatpush1.bf16.msra.mxu0 0
    %166 = vmatprep.subr.bf16.mxu0 0
    %167 = vmatpush1.bf16.msra.mxu0 0
    %168 = vmatprep.subr.bf16.mxu0 0
    %169 = vmatpush1.bf16.msra.mxu0 0
    %170 = vmatprep.mubr.bf16.mxu0 0
    %171 = vmatmul.mubr.bf16.gmra.mrb[0].mxu0 %v130
    %v172 = vpop.f32.mrb[0].mxu0
    %v173 = vadd.f32 %v71, %v172
    %v174 = vpop.f32.mrb[0].mxu0
    %v175 = vadd.f32 %v75, %v174
    %v176 = vpop.f32.mrb[0].mxu0
    %v177 = vadd.f32 %v71, %v176
    %v178 = vpop.f32.mrb[0].mxu0
    %v179 = vadd.f32 %v75, %v178
    %180 = vmatprep.mubr.bf16.mxu0 0
    %181 = vmatmul.mubr.bf16.gmra.mrb[0].mxu0 %v133
    %v182 = vpop.f32.mrb[0].mxu0
    %v183 = vadd.f32 %v71, %v182
    %v184 = vpop.f32.mrb[0].mxu0
    %v185 = vadd.f32 %v75, %v184
    %v186 = vpop.f32.mrb[0].mxu0
    %v187 = vadd.f32 %v71, %v186
    %v188 = vpop.f32.mrb[0].mxu0
    %v189 = vadd.f32 %v75, %v188
    %190 = vmatprep.mubr.bf16.mxu0 0
    %191 = vmatmul.mubr.bf16.gmra.mrb[0].mxu0 %v136
    %v192 = vpop.f32.mrb[0].mxu0
    %v193 = vadd.f32 %v71, %v192
    %v194 = vpop.f32.mrb[0].mxu0
    %v195 = vadd.f32 %v75, %v194
    %v196 = vpop.f32.mrb[0].mxu0
    %v197 = vadd.f32 %v71, %v196
    %v198 = vpop.f32.mrb[0].mxu0
    %v199 = vadd.f32 %v75, %v198
    %200 = vdwg.mxu0
    %201 = vmatprep.subr.bf16.mxu0 %v119
    %202 = vmatpush1.bf16.msra.mxu0 %v118
    %203 = vmatprep.subr.bf16.mxu0 0
    %204 = vmatpush1.bf16.msra.mxu0 0
    %205 = vmatprep.subr.bf16.mxu0 0
    %206 = vmatpush1.bf16.msra.mxu0 0
    %207 = vmatprep.subr.bf16.mxu0 0
    %208 = vmatpush1.bf16.msra.mxu0 0
    %209 = vmatprep.subr.bf16.mxu0 0
    %210 = vmatpush1.bf16.msra.mxu0 0
    %211 = vmatprep.subr.bf16.mxu0 0
    %212 = vmatpush1.bf16.msra.mxu0 0
    %213 = vmatprep.subr.bf16.mxu0 0
    %214 = vmatpush1.bf16.msra.mxu0 0
    %215 = vmatprep.subr.bf16.mxu0 0
    %216 = vmatpush1.bf16.msra.mxu0 0
    %217 = vmatprep.subr.bf16.mxu0 0
    %218 = vmatpush1.bf16.msra.mxu0 0
    %219 = vmatprep.subr.bf16.mxu0 0
    %220 = vmatpush1.bf16.msra.mxu0 0
    %221 = vmatprep.subr.bf16.mxu0 0
    %222 = vmatpush1.bf16.msra.mxu0 0
    %223 = vmatprep.subr.bf16.mxu0 0
    %224 = vmatpush1.bf16.msra.mxu0 0
    %225 = vmatprep.subr.bf16.mxu0 0
    %226 = vmatpush1.bf16.msra.mxu0 0
    %227 = vmatprep.subr.bf16.mxu0 0
    %228 = vmatpush1.bf16.msra.mxu0 0
    %229 = vmatprep.subr.bf16.mxu0 0
    %230 = vmatpush1.bf16.msra.mxu0 0
    %231 = vmatprep.subr.bf16.mxu0 0
    %232 = vmatpush1.bf16.msra.mxu0 0
    %233 = vmatprep.mubr.bf16.mxu0 0
    %234 = vmatmul.mubr.bf16.gmra.mrb[0].mxu0 %v130
    %v235 = vpop.f32.mrb[0].mxu0
    %v236 = vadd.f32 %v79, %v235
    %v237 = vpop.f32.mrb[0].mxu0
    %v238 = vadd.f32 %v83, %v237
    %v239 = vpop.f32.mrb[0].mxu0
    %v240 = vadd.f32 %v79, %v239
    %v241 = vpop.f32.mrb[0].mxu0
    %v242 = vadd.f32 %v83, %v241
    %243 = vmatprep.mubr.bf16.mxu0 0
    %244 = vmatmul.mubr.bf16.gmra.mrb[0].mxu0 %v133
    %v245 = vpop.f32.mrb[0].mxu0
    %v246 = vadd.f32 %v79, %v245
    %v247 = vpop.f32.mrb[0].mxu0
    %v248 = vadd.f32 %v83, %v247
    %v249 = vpop.f32.mrb[0].mxu0
    %v250 = vadd.f32 %v79, %v249
    %v251 = vpop.f32.mrb[0].mxu0
    %v252 = vadd.f32 %v83, %v251
    %253 = vmatprep.mubr.bf16.mxu0 0
    %254 = vmatmul.mubr.bf16.gmra.mrb[0].mxu0 %v136
    %v255 = vpop.f32.mrb[0].mxu0
    %v256 = vadd.f32 %v79, %v255
    %v257 = vpop.f32.mrb[0].mxu0
    %v258 = vadd.f32 %v83, %v257
    %v259 = vpop.f32.mrb[0].mxu0
    %v260 = vadd.f32 %v79, %v259
    %v261 = vpop.f32.mrb[0].mxu0
    %v262 = vadd.f32 %v83, %v261
    %263 = vdwg.mxu0
    %264 = vmatprep.subr.bf16.mxu0 %v121
    %265 = vmatpush1.bf16.msra.mxu0 %v120
    %266 = vmatprep.subr.bf16.mxu0 0
    %267 = vmatpush1.bf16.msra.mxu0 0
    %268 = vmatprep.subr.bf16.mxu0 0
    %269 = vmatpush1.bf16.msra.mxu0 0
    %270 = vmatprep.subr.bf16.mxu0 0
    %271 = vmatpush1.bf16.msra.mxu0 0
    %272 = vmatprep.subr.bf16.mxu0 0
    %273 = vmatpush1.bf16.msra.mxu0 0
    %274 = vmatprep.subr.bf16.mxu0 0
    %275 = vmatpush1.bf16.msra.mxu0 0
    %276 = vmatprep.subr.bf16.mxu0 0
    %277 = vmatpush1.bf16.msra.mxu0 0
    %278 = vmatprep.subr.bf16.mxu0 0
    %279 = vmatpush1.bf16.msra.mxu0 0
    %280 = vmatprep.subr.bf16.mxu0 0
    %281 = vmatpush1.bf16.msra.mxu0 0
    %282 = vmatprep.subr.bf16.mxu0 0
    %283 = vmatpush1.bf16.msra.mxu0 0
    %284 = vmatprep.subr.bf16.mxu0 0
    %285 = vmatpush1.bf16.msra.mxu0 0
    %286 = vmatprep.subr.bf16.mxu0 0
    %287 = vmatpush1.bf16.msra.mxu0 0
    %288 = vmatprep.subr.bf16.mxu0 0
    %289 = vmatpush1.bf16.msra.mxu0 0
    %290 = vmatprep.subr.bf16.mxu0 0
    %291 = vmatpush1.bf16.msra.mxu0 0
    %292 = vmatprep.subr.bf16.mxu0 0
    %293 = vmatpush1.bf16.msra.mxu0 0
    %294 = vmatprep.subr.bf16.mxu0 0
    %295 = vmatpush1.bf16.msra.mxu0 0
    %296 = vmatprep.mubr.bf16.mxu0 0
    %297 = vmatmul.mubr.bf16.gmra.mrb[0].mxu0 %v130
    %v298 = vpop.f32.mrb[0].mxu0
    %v299 = vadd.f32 %v87, %v298
    %v300 = vpop.f32.mrb[0].mxu0
    %v301 = vadd.f32 %v91, %v300
    %v302 = vpop.f32.mrb[0].mxu0
    %v303 = vadd.f32 %v87, %v302
    %v304 = vpop.f32.mrb[0].mxu0
    %v305 = vadd.f32 %v91, %v304
    %306 = vmatprep.mubr.bf16.mxu0 0
    %307 = vmatmul.mubr.bf16.gmra.mrb[0].mxu0 %v133
    %v308 = vpop.f32.mrb[0].mxu0
    %v309 = vadd.f32 %v87, %v308
    %v310 = vpop.f32.mrb[0].mxu0
    %v311 = vadd.f32 %v91, %v310
    %v312 = vpop.f32.mrb[0].mxu0
    %v313 = vadd.f32 %v87, %v312
    %v314 = vpop.f32.mrb[0].mxu0
    %v315 = vadd.f32 %v91, %v314
    %316 = vmatprep.mubr.bf16.mxu0 0
    %317 = vmatmul.mubr.bf16.gmra.mrb[0].mxu0 %v136
    %v318 = vpop.f32.mrb[0].mxu0
    %v319 = vadd.f32 %v87, %v318
    %v320 = vpop.f32.mrb[0].mxu0
    %v321 = vadd.f32 %v91, %v320
    %v322 = vpop.f32.mrb[0].mxu0
    %v323 = vadd.f32 %v87, %v322
    %v324 = vpop.f32.mrb[0].mxu0
    %v325 = vadd.f32 %v91, %v324
    %326 = vdwg.mxu0
    %327 = vst [vmem:[#allocation2] sm:$0xff] %v173
    %328 = vst [vmem:[#allocation2 + $0x8] sm:$0xff] %v175
    %329 = vst [vmem:[#allocation2 + $0x10] sm:$0xff] %v236
    %330 = vst [vmem:[#allocation2 + $0x18] sm:$0xff] %v177
    %331 = vst [vmem:[#allocation2 + $0x20] sm:$0xff] %v179
    %332 = vst [vmem:[#allocation2 + $0x28] sm:$0xff] %v240
    %333 = vst [vmem:[#allocation2 + $0x30] sm:$0xff] %v183
    %334 = vst [vmem:[#allocation2 + $0x38] sm:$0xff] %v185
    %335 = vst [vmem:[#allocation2 + $0x40] sm:$0xff] %v246
    %336 = vst [vmem:[#allocation2 + $0x48] sm:$0xff] %v187
    %337 = vst [vmem:[#allocation2 + $0x50] sm:$0xff] %v189
    %338 = vst [vmem:[#allocation2 + $0x58] sm:$0xff] %v250
    %339 = vst [vmem:[#allocation2 + $0x60] sm:$0xff] %v193
    %340 = vst [vmem:[#allocation2 + $0x68] sm:$0xff] %v195
    %341 = vst [vmem:[#allocation2 + $0x70] sm:$0xff] %v256
    %342 = vst [vmem:[#allocation2 + $0x78] sm:$0xff] %v197
    %343 = vst [vmem:[#allocation2 + $0x80] sm:$0xff] %v199
    %344 = vst [vmem:[#allocation2 + $0x88] sm:$0xff] %v260
    %345 = vst [vmem:[#allocation3] sm:$0xff] %v238
    %346 = vst [vmem:[#allocation3 + $0x8] sm:$0xff] %v299
    %347 = vst [vmem:[#allocation3 + $0x10] sm:$0xff] %v301
    %348 = vst [vmem:[#allocation3 + $0x18] sm:$0xff] %v242
    %349 = vst [vmem:[#allocation3 + $0x20] sm:$0xff] %v303
    %350 = vst [vmem:[#allocation3 + $0x28] sm:$0xff] %v305
    %351 = vst [vmem:[#allocation3 + $0x30] sm:$0xff] %v248
    %352 = vst [vmem:[#allocation3 + $0x38] sm:$0xff] %v309
    %353 = vst [vmem:[#allocation3 + $0x40] sm:$0xff] %v311
    %354 = vst [vmem:[#allocation3 + $0x48] sm:$0xff] %v252
    %355 = vst [vmem:[#allocation3 + $0x50] sm:$0xff] %v313
    %356 = vst [vmem:[#allocation3 + $0x58] sm:$0xff] %v315
    %357 = vst [vmem:[#allocation3 + $0x60] sm:$0xff] %v258
    %358 = vst [vmem:[#allocation3 + $0x68] sm:$0xff] %v319
    %359 = vst [vmem:[#allocation3 + $0x70] sm:$0xff] %v321
    %360 = vst [vmem:[#allocation3 + $0x78] sm:$0xff] %v262
    %361 = vst [vmem:[#allocation3 + $0x80] sm:$0xff] %v323
    %362 = vst [vmem:[#allocation3 + $0x88] sm:$0xff] %v325
    %v363 = vld [vmem:[#allocation4] sm:$0x7]
    %v365 = vlaneseq
    %v366 = vshrl.u32 %v365, 7
    %v367 = vsub.s32 0, %v366
    %v368 = vrot.slane %v363, %v367
    %v369 = vlaneseq
    %v370 = vshrl.u32 %v369, 7
    %v371 = vsub.s32 1, %v370
    %v372 = vrot.slane %v363, %v371
    %v373 = vlaneseq
    %v374 = vshrl.u32 %v373, 7
    %v375 = vsub.s32 2, %v374
    %v376 = vrot.slane %v363, %v375
    %v380 = vld [vmem:[#allocation6] sm:$0x7]
    %v382 = vlaneseq
    %v383 = vshrl.u32 %v382, 7
    %v384 = vsub.s32 0, %v383
    %v385 = vrot.slane %v380, %v384
    %v386 = vlaneseq
    %v387 = vshrl.u32 %v386, 7
    %v388 = vsub.s32 1, %v387
    %v389 = vrot.slane %v380, %v388
    %v390 = vlaneseq
    %v391 = vshrl.u32 %v390, 7
    %v392 = vsub.s32 2, %v391
    %v393 = vrot.slane %v380, %v392
    %v397 = vld [vmem:[%s3] sm:$0xff]
    %v398 = vld [vmem:[%s3 + $0x8] sm:$0xf]
    %v399 = vld [vmem:[%s3 + $0xc] sm:$0xff]
    %v400 = vld [vmem:[%s3 + $0x14] sm:$0xf]
    %v401 = vld [vmem:[%s3 + $0x18] sm:$0xff]
    %v402 = vld [vmem:[%s3 + $0x20] sm:$0xf]
    %v403 = vld [vmem:[%s3 + $0x24] sm:$0xff]
    %v404 = vld [vmem:[%s3 + $0x2c] sm:$0xf]
    %v405 = vld [vmem:[%s3 + $0x30] sm:$0xff]
    %v406 = vld [vmem:[%s3 + $0x38] sm:$0xf]
    %v407 = vld [vmem:[%s3 + $0x3c] sm:$0xff]
    %v408 = vld [vmem:[%s3 + $0x44] sm:$0xf]
    %v409 = vld [vmem:[%s3 + $0x48] sm:$0xff]
    %v410 = vld [vmem:[%s3 + $0x50] sm:$0xf]
    %v411 = vld [vmem:[%s3 + $0x54] sm:$0xff]
    %v412 = vld [vmem:[%s3 + $0x5c] sm:$0xf]
    %v413 = vld [vmem:[%s3 + $0x60] sm:$0xff]
    %v414 = vld [vmem:[%s3 + $0x68] sm:$0xf]
    %v415 = vld [vmem:[%s3 + $0x6c] sm:$0xff]
    %v416 = vld [vmem:[%s3 + $0x74] sm:$0xf]
    %v417 = vld [vmem:[%s3 + $0x78] sm:$0xff]
    %v418 = vld [vmem:[%s3 + $0x80] sm:$0xf]
    %v419 = vld [vmem:[%s3 + $0x84] sm:$0xff]
    %v420 = vld [vmem:[%s3 + $0x8c] sm:$0xf]
    %v421 = vld [vmem:[%s3 + $0x90] sm:$0xff]
    %v422 = vld [vmem:[%s3 + $0x98] sm:$0xf]
    %v423 = vld [vmem:[%s3 + $0x9c] sm:$0xff]
    %v424 = vld [vmem:[%s3 + $0xa4] sm:$0xf]
    %v425 = vld [vmem:[%s3 + $0xa8] sm:$0xff]
    %v426 = vld [vmem:[%s3 + $0xb0] sm:$0xf]
    %v427 = vld [vmem:[%s3 + $0xb4] sm:$0xff]
    %v428 = vld [vmem:[%s3 + $0xbc] sm:$0xf]
    %v429 = vld [vmem:[%s5] sm:$0xff]
    %v430 = vld [vmem:[%s5 + $0x8] sm:$0xf]
    %v431 = vld [vmem:[%s5 + $0xc] sm:$0xff]
    %v432 = vld [vmem:[%s5 + $0x14] sm:$0xf]
    %v433 = vld [vmem:[%s5 + $0x18] sm:$0xff]
    %v434 = vld [vmem:[%s5 + $0x20] sm:$0xf]
    %v435 = vld [vmem:[%s5 + $0x24] sm:$0xff]
    %v436 = vld [vmem:[%s5 + $0x2c] sm:$0xf]
    %v437 = vld [vmem:[%s5 + $0x30] sm:$0xff]
    %v438 = vld [vmem:[%s5 + $0x38] sm:$0xf]
    %v439 = vld [vmem:[%s5 + $0x3c] sm:$0xff]
    %v440 = vld [vmem:[%s5 + $0x44] sm:$0xf]
    %v441 = vld [vmem:[%s5 + $0x48] sm:$0xff]
    %v442 = vld [vmem:[%s5 + $0x50] sm:$0xf]
    %v443 = vld [vmem:[%s5 + $0x54] sm:$0xff]
    %v444 = vld [vmem:[%s5 + $0x5c] sm:$0xf]
    %v445 = vld [vmem:[%s5 + $0x60] sm:$0xff]
    %v446 = vld [vmem:[%s5 + $0x68] sm:$0xf]
    %v447 = vld [vmem:[%s5 + $0x6c] sm:$0xff]
    %v448 = vld [vmem:[%s5 + $0x74] sm:$0xf]
    %v449 = vld [vmem:[%s5 + $0x78] sm:$0xff]
    %v450 = vld [vmem:[%s5 + $0x80] sm:$0xf]
    %v451 = vld [vmem:[%s5 + $0x84] sm:$0xff]
    %v452 = vld [vmem:[%s5 + $0x8c] sm:$0xf]
    %v453 = vld [vmem:[%s5 + $0x90] sm:$0xff]
    %v454 = vld [vmem:[%s5 + $0x98] sm:$0xf]
    %v455 = vld [vmem:[%s5 + $0x9c] sm:$0xff]
    %v456 = vld [vmem:[%s5 + $0xa4] sm:$0xf]
    %v457 = vld [vmem:[%s5 + $0xa8] sm:$0xff]
    %v458 = vld [vmem:[%s5 + $0xb0] sm:$0xf]
    %v459 = vld [vmem:[%s5 + $0xb4] sm:$0xff]
    %v460 = vld [vmem:[%s5 + $0xbc] sm:$0xf]
    %v461 = vld [vmem:[#allocation2] sm:$0xff]
    %v462 = vld [vmem:[#allocation2 + $0x8] sm:$0xff]
    %v463 = vld [vmem:[#allocation2 + $0x10] sm:$0xff]
    %v496 = vunpack.c.l.b16 %v397
    %v497 = vunpack.c.h.b16 %v397
    %v498 = vunpack.c.l.b16 %v398
    %v499 = vunpack.c.l.b16 %v399
    %v500 = vunpack.c.h.b16 %v399
    %v501 = vunpack.c.l.b16 %v400
    %v502 = vunpack.c.l.b16 %v401
    %v503 = vunpack.c.h.b16 %v401
    %v504 = vunpack.c.l.b16 %v402
    %v505 = vunpack.c.l.b16 %v403
    %v506 = vunpack.c.h.b16 %v403
    %v507 = vunpack.c.l.b16 %v404
    %v508 = vunpack.c.l.b16 %v405
    %v509 = vunpack.c.h.b16 %v405
    %v510 = vunpack.c.l.b16 %v406
    %v511 = vunpack.c.l.b16 %v407
    %v512 = vunpack.c.h.b16 %v407
    %v513 = vunpack.c.l.b16 %v408
    %v514 = vunpack.c.l.b16 %v409
    %v515 = vunpack.c.h.b16 %v409
    %v516 = vunpack.c.l.b16 %v410
    %v517 = vunpack.c.l.b16 %v411
    %v518 = vunpack.c.h.b16 %v411
    %v519 = vunpack.c.l.b16 %v412
    %v520 = vunpack.c.l.b16 %v413
    %v521 = vunpack.c.h.b16 %v413
    %v522 = vunpack.c.l.b16 %v414
    %v523 = vunpack.c.l.b16 %v415
    %v524 = vunpack.c.h.b16 %v415
    %v525 = vunpack.c.l.b16 %v416
    %v526 = vunpack.c.l.b16 %v417
    %v527 = vunpack.c.h.b16 %v417
    %v528 = vunpack.c.l.b16 %v418
    %v529 = vunpack.c.l.b16 %v419
    %v530 = vunpack.c.h.b16 %v419
    %v531 = vunpack.c.l.b16 %v420
    %v532 = vunpack.c.l.b16 %v421
    %v533 = vunpack.c.h.b16 %v421
    %v534 = vunpack.c.l.b16 %v422
    %v535 = vunpack.c.l.b16 %v423
    %v536 = vunpack.c.h.b16 %v423
    %v537 = vunpack.c.l.b16 %v424
    %v538 = vunpack.c.l.b16 %v425
    %v539 = vunpack.c.h.b16 %v425
    %v540 = vunpack.c.l.b16 %v426
    %v541 = vunpack.c.l.b16 %v427
    %v542 = vunpack.c.h.b16 %v427
    %v543 = vunpack.c.l.b16 %v428
    %v544 = vpack.c.b16 %v499, %v496
    %v545 = vpack.c.b16 %v500, %v497
    %v546 = vpack.c.b16 %v501, %v498
    %v547 = vpack.c.b16 %v505, %v502
    %v548 = vpack.c.b16 %v506, %v503
    %v549 = vpack.c.b16 %v507, %v504
    %v550 = vpack.c.b16 %v511, %v508
    %v551 = vpack.c.b16 %v512, %v509
    %v552 = vpack.c.b16 %v513, %v510
    %v553 = vpack.c.b16 %v517, %v514
    %v554 = vpack.c.b16 %v518, %v515
    %v555 = vpack.c.b16 %v519, %v516
    %v556 = vpack.c.b16 %v523, %v520
    %v557 = vpack.c.b16 %v524, %v521
    %v558 = vpack.c.b16 %v525, %v522
    %v559 = vpack.c.b16 %v529, %v526
    %v560 = vpack.c.b16 %v530, %v527
    %v561 = vpack.c.b16 %v531, %v528
    %v562 = vpack.c.b16 %v535, %v532
    %v563 = vpack.c.b16 %v536, %v533
    %v564 = vpack.c.b16 %v537, %v534
    %v565 = vpack.c.b16 %v541, %v538
    %v566 = vpack.c.b16 %v542, %v539
    %v567 = vpack.c.b16 %v543, %v540
    %592 = vmatprep.subr.bf16.mxu0 %v545
    %593 = vmatpush1.bf16.msra.mxu0 %v544
    %594 = vmatprep.subr.bf16.mxu0 %v548
    %595 = vmatpush1.bf16.msra.mxu0 %v547
    %596 = vmatprep.subr.bf16.mxu0 %v551
    %597 = vmatpush1.bf16.msra.mxu0 %v550
    %598 = vmatprep.subr.bf16.mxu0 %v554
    %599 = vmatpush1.bf16.msra.mxu0 %v553
    %600 = vmatprep.subr.bf16.mxu0 %v557
    %601 = vmatpush1.bf16.msra.mxu0 %v556
    %602 = vmatprep.subr.bf16.mxu0 %v560
    %603 = vmatpush1.bf16.msra.mxu0 %v559
    %604 = vmatprep.subr.bf16.mxu0 %v563
    %605 = vmatpush1.bf16.msra.mxu0 %v562
    %606 = vmatprep.subr.bf16.mxu0 %v566
    %607 = vmatpush1.bf16.msra.mxu0 %v565
    %608 = vmatprep.subr.bf16.mxu0 0
    %609 = vmatpush1.bf16.msra.mxu0 0
    %610 = vmatprep.subr.bf16.mxu0 0
    %611 = vmatpush1.bf16.msra.mxu0 0
    %612 = vmatprep.subr.bf16.mxu0 0
    %613 = vmatpush1.bf16.msra.mxu0 0
    %614 = vmatprep.subr.bf16.mxu0 0
    %615 = vmatpush1.bf16.msra.mxu0 0
    %616 = vmatprep.subr.bf16.mxu0 0
    %617 = vmatpush1.bf16.msra.mxu0 0
    %618 = vmatprep.subr.bf16.mxu0 0
    %619 = vmatpush1.bf16.msra.mxu0 0
    %620 = vmatprep.subr.bf16.mxu0 0
    %621 = vmatpush1.bf16.msra.mxu0 0
    %622 = vmatprep.subr.bf16.mxu0 0
    %623 = vmatpush1.bf16.msra.mxu0 0
    %624 = vmatprep.mubr.bf16.mxu0 0
    %625 = vmatmul.mubr.bf16.gmra.mrb[0].mxu0 0
    %v626 = vpop.f32.mrb[0].mxu0
    %v627 = vadd.f32 %v368, %v626
    %v628 = vpop.f32.mrb[0].mxu0
    %v629 = vadd.f32 %v372, %v628
    %v630 = vpop.f32.mrb[0].mxu0
    %v631 = vpop.f32.mrb[0].mxu0
    %632 = vdwg.mxu0
    %633 = vmatprep.subr.bf16.mxu0 0
    %634 = vmatpush1.bf16.msra.mxu0 %v546
    %635 = vmatprep.subr.bf16.mxu0 0
    %636 = vmatpush1.bf16.msra.mxu0 %v549
    %637 = vmatprep.subr.bf16.mxu0 0
    %638 = vmatpush1.bf16.msra.mxu0 %v552
    %639 = vmatprep.subr.bf16.mxu0 0
    %640 = vmatpush1.bf16.msra.mxu0 %v555
    %641 = vmatprep.subr.bf16.mxu0 0
    %642 = vmatpush1.bf16.msra.mxu0 %v558
    %643 = vmatprep.subr.bf16.mxu0 0
    %644 = vmatpush1.bf16.msra.mxu0 %v561
    %645 = vmatprep.subr.bf16.mxu0 0
    %646 = vmatpush1.bf16.msra.mxu0 %v564
    %647 = vmatprep.subr.bf16.mxu0 0
    %648 = vmatpush1.bf16.msra.mxu0 %v567
    %649 = vmatprep.subr.bf16.mxu0 0
    %650 = vmatpush1.bf16.msra.mxu0 0
    %651 = vmatprep.subr.bf16.mxu0 0
    %652 = vmatpush1.bf16.msra.mxu0 0
    %653 = vmatprep.subr.bf16.mxu0 0
    %654 = vmatpush1.bf16.msra.mxu0 0
    %655 = vmatprep.subr.bf16.mxu0 0
    %656 = vmatpush1.bf16.msra.mxu0 0
    %657 = vmatprep.subr.bf16.mxu0 0
    %658 = vmatpush1.bf16.msra.mxu0 0
    %659 = vmatprep.subr.bf16.mxu0 0
    %660 = vmatpush1.bf16.msra.mxu0 0
    %661 = vmatprep.subr.bf16.mxu0 0
    %662 = vmatpush1.bf16.msra.mxu0 0
    %663 = vmatprep.subr.bf16.mxu0 0
    %664 = vmatpush1.bf16.msra.mxu0 0
    %665 = vmatprep.mubr.bf16.mxu0 0
    %666 = vmatmul.mubr.bf16.gmra.mrb[0].mxu0 0
    %v667 = vpop.f32.mrb[0].mxu0
    %v668 = vadd.f32 %v376, %v667
    %v669 = vpop.f32.mrb[0].mxu0
    %v670 = vpop.f32.mrb[0].mxu0
    %v671 = vpop.f32.mrb[0].mxu0
    %672 = vdwg.mxu0
    %v673 = vadd.f32 %v461, %v627
    %v674 = vxor.u32 %v673, 2147483648
    %v675 = vmul.f32 %v674, 1.442695
    %v676 = vpow.pop %v675
    %v677 = vadd.f32 %v676, 1.0
    %v678 = vrcp.pop %v677
    %v679 = vmul.f32 1.0, %v678
    %v680 = vadd.f32 %v462, %v629
    %v681 = vxor.u32 %v680, 2147483648
    %v682 = vmul.f32 %v681, 1.442695
    %v683 = vpow.pop %v682
    %v684 = vadd.f32 %v683, 1.0
    %v685 = vrcp.pop %v684
    %v686 = vmul.f32 1.0, %v685
    %v687 = vmul.f32 %v679, %v668
    %v688 = vadd.f32 %v463, %v687
    %v689 = vtanh.pop %v688
    %v690 = vsub.f32 1.0, %v686
    %v691 = vmul.f32 %v690, %v689
    %v692 = vmul.f32 %v686, 0.0
    %v693 = vadd.f32 %v691, %v692
    %694 = vst [vmem:[%s7] sm:$0xff] %v693
    %s695 = scalar_lea.vmem [#allocation3], 120
    %v696 = vld [vmem:[%s695] sm:$0xff]
    %v697 = vld [vmem:[%s695 + $0x8] sm:$0xff]
    %v698 = vld [vmem:[%s695 + $0x10] sm:$0xff]
    %v731 = vunpack.c.l.b16 %v429
    %v732 = vunpack.c.h.b16 %v429
    %v733 = vunpack.c.l.b16 %v430
    %v734 = vunpack.c.l.b16 %v431
    %v735 = vunpack.c.h.b16 %v431
    %v736 = vunpack.c.l.b16 %v432
    %v737 = vunpack.c.l.b16 %v433
    %v738 = vunpack.c.h.b16 %v433
    %v739 = vunpack.c.l.b16 %v434
    %v740 = vunpack.c.l.b16 %v435
    %v741 = vunpack.c.h.b16 %v435
    %v742 = vunpack.c.l.b16 %v436
    %v743 = vunpack.c.l.b16 %v437
    %v744 = vunpack.c.h.b16 %v437
    %v745 = vunpack.c.l.b16 %v438
    %v746 = vunpack.c.l.b16 %v439
    %v747 = vunpack.c.h.b16 %v439
    %v748 = vunpack.c.l.b16 %v440
    %v749 = vunpack.c.l.b16 %v441
    %v750 = vunpack.c.h.b16 %v441
    %v751 = vunpack.c.l.b16 %v442
    %v752 = vunpack.c.l.b16 %v443
    %v753 = vunpack.c.h.b16 %v443
    %v754 = vunpack.c.l.b16 %v444
    %v755 = vunpack.c.l.b16 %v445
    %v756 = vunpack.c.h.b16 %v445
    %v757 = vunpack.c.l.b16 %v446
    %v758 = vunpack.c.l.b16 %v447
    %v759 = vunpack.c.h.b16 %v447
    %v760 = vunpack.c.l.b16 %v448
    %v761 = vunpack.c.l.b16 %v449
    %v762 = vunpack.c.h.b16 %v449
    %v763 = vunpack.c.l.b16 %v450
    %v764 = vunpack.c.l.b16 %v451
    %v765 = vunpack.c.h.b16 %v451
    %v766 = vunpack.c.l.b16 %v452
    %v767 = vunpack.c.l.b16 %v453
    %v768 = vunpack.c.h.b16 %v453
    %v769 = vunpack.c.l.b16 %v454
    %v770 = vunpack.c.l.b16 %v455
    %v771 = vunpack.c.h.b16 %v455
    %v772 = vunpack.c.l.b16 %v456
    %v773 = vunpack.c.l.b16 %v457
    %v774 = vunpack.c.h.b16 %v457
    %v775 = vunpack.c.l.b16 %v458
    %v776 = vunpack.c.l.b16 %v459
    %v777 = vunpack.c.h.b16 %v459
    %v778 = vunpack.c.l.b16 %v460
    %v779 = vpack.c.b16 %v734, %v731
    %v780 = vpack.c.b16 %v735, %v732
    %v781 = vpack.c.b16 %v736, %v733
    %v782 = vpack.c.b16 %v740, %v737
    %v783 = vpack.c.b16 %v741, %v738
    %v784 = vpack.c.b16 %v742, %v739
    %v785 = vpack.c.b16 %v746, %v743
    %v786 = vpack.c.b16 %v747, %v744
    %v787 = vpack.c.b16 %v748, %v745
    %v788 = vpack.c.b16 %v752, %v749
    %v789 = vpack.c.b16 %v753, %v750
    %v790 = vpack.c.b16 %v754, %v751
    %v791 = vpack.c.b16 %v758, %v755
    %v792 = vpack.c.b16 %v759, %v756
    %v793 = vpack.c.b16 %v760, %v757
    %v794 = vpack.c.b16 %v764, %v761
    %v795 = vpack.c.b16 %v765, %v762
    %v796 = vpack.c.b16 %v766, %v763
    %v797 = vpack.c.b16 %v770, %v767
    %v798 = vpack.c.b16 %v771, %v768
    %v799 = vpack.c.b16 %v772, %v769
    %v800 = vpack.c.b16 %v776, %v773
    %v801 = vpack.c.b16 %v777, %v774
    %v802 = vpack.c.b16 %v778, %v775
    %827 = vmatprep.subr.bf16.mxu0 %v780
    %828 = vmatpush1.bf16.msra.mxu0 %v779
    %829 = vmatprep.subr.bf16.mxu0 %v783
    %830 = vmatpush1.bf16.msra.mxu0 %v782
    %831 = vmatprep.subr.bf16.mxu0 %v786
    %832 = vmatpush1.bf16.msra.mxu0 %v785
    %833 = vmatprep.subr.bf16.mxu0 %v789
    %834 = vmatpush1.bf16.msra.mxu0 %v788
    %835 = vmatprep.subr.bf16.mxu0 %v792
    %836 = vmatpush1.bf16.msra.mxu0 %v791
    %837 = vmatprep.subr.bf16.mxu0 %v795
    %838 = vmatpush1.bf16.msra.mxu0 %v794
    %839 = vmatprep.subr.bf16.mxu0 %v798
    %840 = vmatpush1.bf16.msra.mxu0 %v797
    %841 = vmatprep.subr.bf16.mxu0 %v801
    %842 = vmatpush1.bf16.msra.mxu0 %v800
    %843 = vmatprep.subr.bf16.mxu0 0
    %844 = vmatpush1.bf16.msra.mxu0 0
    %845 = vmatprep.subr.bf16.mxu0 0
    %846 = vmatpush1.bf16.msra.mxu0 0
    %847 = vmatprep.subr.bf16.mxu0 0
    %848 = vmatpush1.bf16.msra.mxu0 0
    %849 = vmatprep.subr.bf16.mxu0 0
    %850 = vmatpush1.bf16.msra.mxu0 0
    %851 = vmatprep.subr.bf16.mxu0 0
    %852 = vmatpush1.bf16.msra.mxu0 0
    %853 = vmatprep.subr.bf16.mxu0 0
    %854 = vmatpush1.bf16.msra.mxu0 0
    %855 = vmatprep.subr.bf16.mxu0 0
    %856 = vmatpush1.bf16.msra.mxu0 0
    %857 = vmatprep.subr.bf16.mxu0 0
    %858 = vmatpush1.bf16.msra.mxu0 0
    %859 = vmatprep.mubr.bf16.mxu0 0
    %860 = vmatmul.mubr.bf16.gmra.mrb[0].mxu0 0
    %v861 = vpop.f32.mrb[0].mxu0
    %v862 = vadd.f32 %v385, %v861
    %v863 = vpop.f32.mrb[0].mxu0
    %v864 = vadd.f32 %v389, %v863
    %v865 = vpop.f32.mrb[0].mxu0
    %v866 = vpop.f32.mrb[0].mxu0
    %867 = vdwg.mxu0
    %868 = vmatprep.subr.bf16.mxu0 0
    %869 = vmatpush1.bf16.msra.mxu0 %v781
    %870 = vmatprep.subr.bf16.mxu0 0
    %871 = vmatpush1.bf16.msra.mxu0 %v784
    %872 = vmatprep.subr.bf16.mxu0 0
    %873 = vmatpush1.bf16.msra.mxu0 %v787
    %874 = vmatprep.subr.bf16.mxu0 0
    %875 = vmatpush1.bf16.msra.mxu0 %v790
    %876 = vmatprep.subr.bf16.mxu0 0
    %877 = vmatpush1.bf16.msra.mxu0 %v793
    %878 = vmatprep.subr.bf16.mxu0 0
    %879 = vmatpush1.bf16.msra.mxu0 %v796
    %880 = vmatprep.subr.bf16.mxu0 0
    %881 = vmatpush1.bf16.msra.mxu0 %v799
    %882 = vmatprep.subr.bf16.mxu0 0
    %883 = vmatpush1.bf16.msra.mxu0 %v802
    %884 = vmatprep.subr.bf16.mxu0 0
    %885 = vmatpush1.bf16.msra.mxu0 0
    %886 = vmatprep.subr.bf16.mxu0 0
    %887 = vmatpush1.bf16.msra.mxu0 0
    %888 = vmatprep.subr.bf16.mxu0 0
    %889 = vmatpush1.bf16.msra.mxu0 0
    %890 = vmatprep.subr.bf16.mxu0 0
    %891 = vmatpush1.bf16.msra.mxu0 0
    %892 = vmatprep.subr.bf16.mxu0 0
    %893 = vmatpush1.bf16.msra.mxu0 0
    %894 = vmatprep.subr.bf16.mxu0 0
    %895 = vmatpush1.bf16.msra.mxu0 0
    %896 = vmatprep.subr.bf16.mxu0 0
    %897 = vmatpush1.bf16.msra.mxu0 0
    %898 = vmatprep.subr.bf16.mxu0 0
    %899 = vmatpush1.bf16.msra.mxu0 0
    %900 = vmatprep.mubr.bf16.mxu0 0
    %901 = vmatmul.mubr.bf16.gmra.mrb[0].mxu0 0
    %v902 = vpop.f32.mrb[0].mxu0
    %v903 = vadd.f32 %v393, %v902
    %v904 = vpop.f32.mrb[0].mxu0
    %v905 = vpop.f32.mrb[0].mxu0
    %v906 = vpop.f32.mrb[0].mxu0
    %907 = vdwg.mxu0
    %v908 = vadd.f32 %v696, %v862
    %v909 = vxor.u32 %v908, 2147483648
    %v910 = vmul.f32 %v909, 1.442695
    %v911 = vpow.pop %v910
    %v912 = vadd.f32 %v911, 1.0
    %v913 = vrcp.pop %v912
    %v914 = vmul.f32 1.0, %v913
    %v915 = vadd.f32 %v697, %v864
    %v916 = vxor.u32 %v915, 2147483648
    %v917 = vmul.f32 %v916, 1.442695
    %v918 = vpow.pop %v917
    %v919 = vadd.f32 %v918, 1.0
    %v920 = vrcp.pop %v919
    %v921 = vmul.f32 1.0, %v920
    %v922 = vmul.f32 %v914, %v903
    %v923 = vadd.f32 %v698, %v922
    %v924 = vtanh.pop %v923
    %v925 = vsub.f32 1.0, %v921
    %v926 = vmul.f32 %v925, %v924
    %v927 = vmul.f32 %v921, 0.0
    %v928 = vadd.f32 %v926, %v927
    %s929 = scalar_lea.vmem %s7, 80
    %930 = vst [vmem:[%s929 + $0x8] sm:$0xff] %v928
    %s931 = scalar_lea.vmem [#allocation2], 24
    %v932 = vld [vmem:[%s931] sm:$0xff]
    %v933 = vld [vmem:[%s931 + $0x8] sm:$0xff]
    %v934 = vld [vmem:[%s931 + $0x10] sm:$0xff]
    %v935 = vpack.c.bf16 %v693, %v693
    %936 = vmatprep.subr.bf16.mxu0 %v545
    %937 = vmatpush1.bf16.msra.mxu0 %v544
    %938 = vmatprep.subr.bf16.mxu0 %v548
    %939 = vmatpush1.bf16.msra.mxu0 %v547
    %940 = vmatprep.subr.bf16.mxu0 %v551
    %941 = vmatpush1.bf16.msra.mxu0 %v550
    %942 = vmatprep.subr.bf16.mxu0 %v554
    %943 = vmatpush1.bf16.msra.mxu0 %v553
    %944 = vmatprep.subr.bf16.mxu0 %v557
    %945 = vmatpush1.bf16.msra.mxu0 %v556
    %946 = vmatprep.subr.bf16.mxu0 %v560
    %947 = vmatpush1.bf16.msra.mxu0 %v559
    %948 = vmatprep.subr.bf16.mxu0 %v563
    %949 = vmatpush1.bf16.msra.mxu0 %v562
    %950 = vmatprep.subr.bf16.mxu0 %v566
    %951 = vmatpush1.bf16.msra.mxu0 %v565
    %952 = vmatprep.subr.bf16.mxu0 0
    %953 = vmatpush1.bf16.msra.mxu0 0
    %954 = vmatprep.subr.bf16.mxu0 0
    %955 = vmatpush1.bf16.msra.mxu0 0
    %956 = vmatprep.subr.bf16.mxu0 0
    %957 = vmatpush1.bf16.msra.mxu0 0
    %958 = vmatprep.subr.bf16.mxu0 0
    %959 = vmatpush1.bf16.msra.mxu0 0
    %960 = vmatprep.subr.bf16.mxu0 0
    %961 = vmatpush1.bf16.msra.mxu0 0
    %962 = vmatprep.subr.bf16.mxu0 0
    %963 = vmatpush1.bf16.msra.mxu0 0
    %964 = vmatprep.subr.bf16.mxu0 0
    %965 = vmatpush1.bf16.msra.mxu0 0
    %966 = vmatprep.subr.bf16.mxu0 0
    %967 = vmatpush1.bf16.msra.mxu0 0
    %968 = vmatprep.mubr.bf16.mxu0 0
    %969 = vmatmul.mubr.bf16.gmra.mrb[0].mxu0 %v935
    %v970 = vpop.f32.mrb[0].mxu0
    %v971 = vadd.f32 %v368, %v970
    %v972 = vpop.f32.mrb[0].mxu0
    %v973 = vadd.f32 %v372, %v972
    %v974 = vpop.f32.mrb[0].mxu0
    %v975 = vpop.f32.mrb[0].mxu0
    %976 = vdwg.mxu0
    %977 = vmatprep.subr.bf16.mxu0 0
    %978 = vmatpush1.bf16.msra.mxu0 %v546
    %979 = vmatprep.subr.bf16.mxu0 0
    %980 = vmatpush1.bf16.msra.mxu0 %v549
    %981 = vmatprep.subr.bf16.mxu0 0
    %982 = vmatpush1.bf16.msra.mxu0 %v552
    %983 = vmatprep.subr.bf16.mxu0 0
    %984 = vmatpush1.bf16.msra.mxu0 %v555
    %985 = vmatprep.subr.bf16.mxu0 0
    %986 = vmatpush1.bf16.msra.mxu0 %v558
    %987 = vmatprep.subr.bf16.mxu0 0
    %988 = vmatpush1.bf16.msra.mxu0 %v561
    %989 = vmatprep.subr.bf16.mxu0 0
    %990 = vmatpush1.bf16.msra.mxu0 %v564
    %991 = vmatprep.subr.bf16.mxu0 0
    %992 = vmatpush1.bf16.msra.mxu0 %v567
    %993 = vmatprep.subr.bf16.mxu0 0
    %994 = vmatpush1.bf16.msra.mxu0 0
    %995 = vmatprep.subr.bf16.mxu0 0
    %996 = vmatpush1.bf16.msra.mxu0 0
    %997 = vmatprep.subr.bf16.mxu0 0
    %998 = vmatpush1.bf16.msra.mxu0 0
    %999 = vmatprep.subr.bf16.mxu0 0
    %1000 = vmatpush1.bf16.msra.mxu0 0
    %1001 = vmatprep.subr.bf16.mxu0 0
    %1002 = vmatpush1.bf16.msra.mxu0 0
    %1003 = vmatprep.subr.bf16.mxu0 0
    %1004 = vmatpush1.bf16.msra.mxu0 0
    %1005 = vmatprep.subr.bf16.mxu0 0
    %1006 = vmatpush1.bf16.msra.mxu0 0
    %1007 = vmatprep.subr.bf16.mxu0 0
    %1008 = vmatpush1.bf16.msra.mxu0 0
    %1009 = vmatprep.mubr.bf16.mxu0 0
    %1010 = vmatmul.mubr.bf16.gmra.mrb[0].mxu0 %v935
    %v1011 = vpop.f32.mrb[0].mxu0
    %v1012 = vadd.f32 %v376, %v1011
    %v1013 = vpop.f32.mrb[0].mxu0
    %v1014 = vpop.f32.mrb[0].mxu0
    %v1015 = vpop.f32.mrb[0].mxu0
    %1016 = vdwg.mxu0
    %v1017 = vadd.f32 %v932, %v971
    %v1018 = vxor.u32 %v1017, 2147483648
    %v1019 = vmul.f32 %v1018, 1.442695
    %v1020 = vpow.pop %v1019
    %v1021 = vadd.f32 %v1020, 1.0
    %v1022 = vrcp.pop %v1021
    %v1023 = vmul.f32 1.0, %v1022
    %v1024 = vadd.f32 %v933, %v973
    %v1025 = vxor.u32 %v1024, 2147483648
    %v1026 = vmul.f32 %v1025, 1.442695
    %v1027 = vpow.pop %v1026
    %v1028 = vadd.f32 %v1027, 1.0
    %v1029 = vrcp.pop %v1028
    %v1030 = vmul.f32 1.0, %v1029
    %v1031 = vmul.f32 %v1023, %v1012
    %v1032 = vadd.f32 %v934, %v1031
    %v1033 = vtanh.pop %v1032
    %v1034 = vsub.f32 1.0, %v1030
    %v1035 = vmul.f32 %v1034, %v1033
    %v1036 = vmul.f32 %v1030, %v693
    %v1037 = vadd.f32 %v1035, %v1036
    %s1038 = scalar_lea.vmem %s7, 16
    %1039 = vst [vmem:[%s1038] sm:$0xff] %v1037
    %s1040 = scalar_lea.vmem [#allocation3], 96
    %v1041 = vld [vmem:[%s1040] sm:$0xff]
    %v1042 = vld [vmem:[%s1040 + $0x8] sm:$0xff]
    %v1043 = vld [vmem:[%s1040 + $0x10] sm:$0xff]
    %v1044 = vpack.c.bf16 %v928, %v928
    %1045 = vmatprep.subr.bf16.mxu0 %v780
    %1046 = vmatpush1.bf16.msra.mxu0 %v779
    %1047 = vmatprep.subr.bf16.mxu0 %v783
    %1048 = vmatpush1.bf16.msra.mxu0 %v782
    %1049 = vmatprep.subr.bf16.mxu0 %v786
    %1050 = vmatpush1.bf16.msra.mxu0 %v785
    %1051 = vmatprep.subr.bf16.mxu0 %v789
    %1052 = vmatpush1.bf16.msra.mxu0 %v788
    %1053 = vmatprep.subr.bf16.mxu0 %v792
    %1054 = vmatpush1.bf16.msra.mxu0 %v791
    %1055 = vmatprep.subr.bf16.mxu0 %v795
    %1056 = vmatpush1.bf16.msra.mxu0 %v794
    %1057 = vmatprep.subr.bf16.mxu0 %v798
    %1058 = vmatpush1.bf16.msra.mxu0 %v797
    %1059 = vmatprep.subr.bf16.mxu0 %v801
    %1060 = vmatpush1.bf16.msra.mxu0 %v800
    %1061 = vmatprep.subr.bf16.mxu0 0
    %1062 = vmatpush1.bf16.msra.mxu0 0
    %1063 = vmatprep.subr.bf16.mxu0 0
    %1064 = vmatpush1.bf16.msra.mxu0 0
    %1065 = vmatprep.subr.bf16.mxu0 0
    %1066 = vmatpush1.bf16.msra.mxu0 0
    %1067 = vmatprep.subr.bf16.mxu0 0
    %1068 = vmatpush1.bf16.msra.mxu0 0
    %1069 = vmatprep.subr.bf16.mxu0 0
    %1070 = vmatpush1.bf16.msra.mxu0 0
    %1071 = vmatprep.subr.bf16.mxu0 0
    %1072 = vmatpush1.bf16.msra.mxu0 0
    %1073 = vmatprep.subr.bf16.mxu0 0
    %1074 = vmatpush1.bf16.msra.mxu0 0
    %1075 = vmatprep.subr.bf16.mxu0 0
    %1076 = vmatpush1.bf16.msra.mxu0 0
    %1077 = vmatprep.mubr.bf16.mxu0 0
    %1078 = vmatmul.mubr.bf16.gmra.mrb[0].mxu0 %v1044
    %v1079 = vpop.f32.mrb[0].mxu0
    %v1080 = vadd.f32 %v385, %v1079
    %v1081 = vpop.f32.mrb[0].mxu0
    %v1082 = vadd.f32 %v389, %v1081
    %v1083 = vpop.f32.mrb[0].mxu0
    %v1084 = vpop.f32.mrb[0].mxu0
    %1085 = vdwg.mxu0
    %1086 = vmatprep.subr.bf16.mxu0 0
    %1087 = vmatpush1.bf16.msra.mxu0 %v781
    %1088 = vmatprep.subr.bf16.mxu0 0
    %1089 = vmatpush1.bf16.msra.mxu0 %v784
    %1090 = vmatprep.subr.bf16.mxu0 0
    %1091 = vmatpush1.bf16.msra.mxu0 %v787
    %1092 = vmatprep.subr.bf16.mxu0 0
    %1093 = vmatpush1.bf16.msra.mxu0 %v790
    %1094 = vmatprep.subr.bf16.mxu0 0
    %1095 = vmatpush1.bf16.msra.mxu0 %v793
    %1096 = vmatprep.subr.bf16.mxu0 0
    %1097 = vmatpush1.bf16.msra.mxu0 %v796
    %1098 = vmatprep.subr.bf16.mxu0 0
    %1099 = vmatpush1.bf16.msra.mxu0 %v799
    %1100 = vmatprep.subr.bf16.mxu0 0
    %1101 = vmatpush1.bf16.msra.mxu0 %v802
    %1102 = vmatprep.subr.bf16.mxu0 0
    %1103 = vmatpush1.bf16.msra.mxu0 0
    %1104 = vmatprep.subr.bf16.mxu0 0
    %1105 = vmatpush1.bf16.msra.mxu0 0
    %1106 = vmatprep.subr.bf16.mxu0 0
    %1107 = vmatpush1.bf16.msra.mxu0 0
    %1108 = vmatprep.subr.bf16.mxu0 0
    %1109 = vmatpush1.bf16.msra.mxu0 0
    %1110 = vmatprep.subr.bf16.mxu0 0
    %1111 = vmatpush1.bf16.msra.mxu0 0
    %1112 = vmatprep.subr.bf16.mxu0 0
    %1113 = vmatpush1.bf16.msra.mxu0 0
    %1114 = vmatprep.subr.bf16.mxu0 0
    %1115 = vmatpush1.bf16.msra.mxu0 0
    %1116 = vmatprep.subr.bf16.mxu0 0
    %1117 = vmatpush1.bf16.msra.mxu0 0
    %1118 = vmatprep.mubr.bf16.mxu0 0
    %1119 = vmatmul.mubr.bf16.gmra.mrb[0].mxu0 %v1044
    %v1120 = vpop.f32.mrb[0].mxu0
    %v1121 = vadd.f32 %v393, %v1120
    %v1122 = vpop.f32.mrb[0].mxu0
    %v1123 = vpop.f32.mrb[0].mxu0
    %v1124 = vpop.f32.mrb[0].mxu0
    %1125 = vdwg.mxu0
    %v1126 = vadd.f32 %v1041, %v1080
    %v1127 = vxor.u32 %v1126, 2147483648
    %v1128 = vmul.f32 %v1127, 1.442695
    %v1129 = vpow.pop %v1128
    %v1130 = vadd.f32 %v1129, 1.0
    %v1131 = vrcp.pop %v1130
    %v1132 = vmul.f32 1.0, %v1131
    %v1133 = vadd.f32 %v1042, %v1082
    %v1134 = vxor.u32 %v1133, 2147483648
    %v1135 = vmul.f32 %v1134, 1.442695
    %v1136 = vpow.pop %v1135
    %v1137 = vadd.f32 %v1136, 1.0
    %v1138 = vrcp.pop %v1137
    %v1139 = vmul.f32 1.0, %v1138
    %v1140 = vmul.f32 %v1132, %v1121
    %v1141 = vadd.f32 %v1043, %v1140
    %v1142 = vtanh.pop %v1141
    %v1143 = vsub.f32 1.0, %v1139
    %v1144 = vmul.f32 %v1143, %v1142
    %v1145 = vmul.f32 %v1139, %v928
    %v1146 = vadd.f32 %v1144, %v1145
    %s1147 = scalar_lea.vmem %s7, 64
    %1148 = vst [vmem:[%s1147 + $0x8] sm:$0xff] %v1146
    %s1149 = scalar_lea.vmem [#allocation2], 48
    %v1150 = vld [vmem:[%s1149] sm:$0xff]
    %v1151 = vld [vmem:[%s1149 + $0x8] sm:$0xff]
    %v1152 = vld [vmem:[%s1149 + $0x10] sm:$0xff]
    %v1153 = vpack.c.bf16 %v1037, %v1037
    %1154 = vmatprep.subr.bf16.mxu0 %v545
    %1155 = vmatpush1.bf16.msra.mxu0 %v544
    %1156 = vmatprep.subr.bf16.mxu0 %v548
    %1157 = vmatpush1.bf16.msra.mxu0 %v547
    %1158 = vmatprep.subr.bf16.mxu0 %v551
    %1159 = vmatpush1.bf16.msra.mxu0 %v550
    %1160 = vmatprep.subr.bf16.mxu0 %v554
    %1161 = vmatpush1.bf16.msra.mxu0 %v553
    %1162 = vmatprep.subr.bf16.mxu0 %v557
    %1163 = vmatpush1.bf16.msra.mxu0 %v556
    %1164 = vmatprep.subr.bf16.mxu0 %v560
    %1165 = vmatpush1.bf16.msra.mxu0 %v559
    %1166 = vmatprep.subr.bf16.mxu0 %v563
    %1167 = vmatpush1.bf16.msra.mxu0 %v562
    %1168 = vmatprep.subr.bf16.mxu0 %v566
    %1169 = vmatpush1.bf16.msra.mxu0 %v565
    %1170 = vmatprep.subr.bf16.mxu0 0
    %1171 = vmatpush1.bf16.msra.mxu0 0
    %1172 = vmatprep.subr.bf16.mxu0 0
    %1173 = vmatpush1.bf16.msra.mxu0 0
    %1174 = vmatprep.subr.bf16.mxu0 0
    %1175 = vmatpush1.bf16.msra.mxu0 0
    %1176 = vmatprep.subr.bf16.mxu0 0
    %1177 = vmatpush1.bf16.msra.mxu0 0
    %1178 = vmatprep.subr.bf16.mxu0 0
    %1179 = vmatpush1.bf16.msra.mxu0 0
    %1180 = vmatprep.subr.bf16.mxu0 0
    %1181 = vmatpush1.bf16.msra.mxu0 0
    %1182 = vmatprep.subr.bf16.mxu0 0
    %1183 = vmatpush1.bf16.msra.mxu0 0
    %1184 = vmatprep.subr.bf16.mxu0 0
    %1185 = vmatpush1.bf16.msra.mxu0 0
    %1186 = vmatprep.mubr.bf16.mxu0 0
    %1187 = vmatmul.mubr.bf16.gmra.mrb[0].mxu0 %v1153
    %v1188 = vpop.f32.mrb[0].mxu0
    %v1189 = vadd.f32 %v368, %v1188
    %v1190 = vpop.f32.mrb[0].mxu0
    %v1191 = vadd.f32 %v372, %v1190
    %v1192 = vpop.f32.mrb[0].mxu0
    %v1193 = vpop.f32.mrb[0].mxu0
    %1194 = vdwg.mxu0
    %1195 = vmatprep.subr.bf16.mxu0 0
    %1196 = vmatpush1.bf16.msra.mxu0 %v546
    %1197 = vmatprep.subr.bf16.mxu0 0
    %1198 = vmatpush1.bf16.msra.mxu0 %v549
    %1199 = vmatprep.subr.bf16.mxu0 0
    %1200 = vmatpush1.bf16.msra.mxu0 %v552
    %1201 = vmatprep.subr.bf16.mxu0 0
    %1202 = vmatpush1.bf16.msra.mxu0 %v555
    %1203 = vmatprep.subr.bf16.mxu0 0
    %1204 = vmatpush1.bf16.msra.mxu0 %v558
    %1205 = vmatprep.subr.bf16.mxu0 0
    %1206 = vmatpush1.bf16.msra.mxu0 %v561
    %1207 = vmatprep.subr.bf16.mxu0 0
    %1208 = vmatpush1.bf16.msra.mxu0 %v564
    %1209 = vmatprep.subr.bf16.mxu0 0
    %1210 = vmatpush1.bf16.msra.mxu0 %v567
    %1211 = vmatprep.subr.bf16.mxu0 0
    %1212 = vmatpush1.bf16.msra.mxu0 0
    %1213 = vmatprep.subr.bf16.mxu0 0
    %1214 = vmatpush1.bf16.msra.mxu0 0
    %1215 = vmatprep.subr.bf16.mxu0 0
    %1216 = vmatpush1.bf16.msra.mxu0 0
    %1217 = vmatprep.subr.bf16.mxu0 0
    %1218 = vmatpush1.bf16.msra.mxu0 0
    %1219 = vmatprep.subr.bf16.mxu0 0
    %1220 = vmatpush1.bf16.msra.mxu0 0
    %1221 = vmatprep.subr.bf16.mxu0 0
    %1222 = vmatpush1.bf16.msra.mxu0 0
    %1223 = vmatprep.subr.bf16.mxu0 0
    %1224 = vmatpush1.bf16.msra.mxu0 0
    %1225 = vmatprep.subr.bf16.mxu0 0
    %1226 = vmatpush1.bf16.msra.mxu0 0
    %1227 = vmatprep.mubr.bf16.mxu0 0
    %1228 = vmatmul.mubr.bf16.gmra.mrb[0].mxu0 %v1153
    %v1229 = vpop.f32.mrb[0].mxu0
    %v1230 = vadd.f32 %v376, %v1229
    %v1231 = vpop.f32.mrb[0].mxu0
    %v1232 = vpop.f32.mrb[0].mxu0
    %v1233 = vpop.f32.mrb[0].mxu0
    %1234 = vdwg.mxu0
    %v1235 = vadd.f32 %v1150, %v1189
    %v1236 = vxor.u32 %v1235, 2147483648
    %v1237 = vmul.f32 %v1236, 1.442695
    %v1238 = vpow.pop %v1237
    %v1239 = vadd.f32 %v1238, 1.0
    %v1240 = vrcp.pop %v1239
    %v1241 = vmul.f32 1.0, %v1240
    %v1242 = vadd.f32 %v1151, %v1191
    %v1243 = vxor.u32 %v1242, 2147483648
    %v1244 = vmul.f32 %v1243, 1.442695
    %v1245 = vpow.pop %v1244
    %v1246 = vadd.f32 %v1245, 1.0
    %v1247 = vrcp.pop %v1246
    %v1248 = vmul.f32 1.0, %v1247
    %v1249 = vmul.f32 %v1241, %v1230
    %v1250 = vadd.f32 %v1152, %v1249
    %v1251 = vtanh.pop %v1250
    %v1252 = vsub.f32 1.0, %v1248
    %v1253 = vmul.f32 %v1252, %v1251
    %v1254 = vmul.f32 %v1248, %v1037
    %v1255 = vadd.f32 %v1253, %v1254
    %s1256 = scalar_lea.vmem %s7, 32
    %1257 = vst [vmem:[%s1256] sm:$0xff] %v1255
    %s1258 = scalar_lea.vmem [#allocation3], 72
    %v1259 = vld [vmem:[%s1258] sm:$0xff]
    %v1260 = vld [vmem:[%s1258 + $0x8] sm:$0xff]
    %v1261 = vld [vmem:[%s1258 + $0x10] sm:$0xff]
    %v1262 = vpack.c.bf16 %v1146, %v1146
    %1263 = vmatprep.subr.bf16.mxu0 %v780
    %1264 = vmatpush1.bf16.msra.mxu0 %v779
    %1265 = vmatprep.subr.bf16.mxu0 %v783
    %1266 = vmatpush1.bf16.msra.mxu0 %v782
    %1267 = vmatprep.subr.bf16.mxu0 %v786
    %1268 = vmatpush1.bf16.msra.mxu0 %v785
    %1269 = vmatprep.subr.bf16.mxu0 %v789
    %1270 = vmatpush1.bf16.msra.mxu0 %v788
    %1271 = vmatprep.subr.bf16.mxu0 %v792
    %1272 = vmatpush1.bf16.msra.mxu0 %v791
    %1273 = vmatprep.subr.bf16.mxu0 %v795
    %1274 = vmatpush1.bf16.msra.mxu0 %v794
    %1275 = vmatprep.subr.bf16.mxu0 %v798
    %1276 = vmatpush1.bf16.msra.mxu0 %v797
    %1277 = vmatprep.subr.bf16.mxu0 %v801
    %1278 = vmatpush1.bf16.msra.mxu0 %v800
    %1279 = vmatprep.subr.bf16.mxu0 0
    %1280 = vmatpush1.bf16.msra.mxu0 0
    %1281 = vmatprep.subr.bf16.mxu0 0
    %1282 = vmatpush1.bf16.msra.mxu0 0
    %1283 = vmatprep.subr.bf16.mxu0 0
    %1284 = vmatpush1.bf16.msra.mxu0 0
    %1285 = vmatprep.subr.bf16.mxu0 0
    %1286 = vmatpush1.bf16.msra.mxu0 0
    %1287 = vmatprep.subr.bf16.mxu0 0
    %1288 = vmatpush1.bf16.msra.mxu0 0
    %1289 = vmatprep.subr.bf16.mxu0 0
    %1290 = vmatpush1.bf16.msra.mxu0 0
    %1291 = vmatprep.subr.bf16.mxu0 0
    %1292 = vmatpush1.bf16.msra.mxu0 0
    %1293 = vmatprep.subr.bf16.mxu0 0
    %1294 = vmatpush1.bf16.msra.mxu0 0
    %1295 = vmatprep.mubr.bf16.mxu0 0
    %1296 = vmatmul.mubr.bf16.gmra.mrb[0].mxu0 %v1262
    %v1297 = vpop.f32.mrb[0].mxu0
    %v1298 = vadd.f32 %v385, %v1297
    %v1299 = vpop.f32.mrb[0].mxu0
    %v1300 = vadd.f32 %v389, %v1299
    %v1301 = vpop.f32.mrb[0].mxu0
    %v1302 = vpop.f32.mrb[0].mxu0
    %1303 = vdwg.mxu0
    %1304 = vmatprep.subr.bf16.mxu0 0
    %1305 = vmatpush1.bf16.msra.mxu0 %v781
    %1306 = vmatprep.subr.bf16.mxu0 0
    %1307 = vmatpush1.bf16.msra.mxu0 %v784
    %1308 = vmatprep.subr.bf16.mxu0 0
    %1309 = vmatpush1.bf16.msra.mxu0 %v787
    %1310 = vmatprep.subr.bf16.mxu0 0
    %1311 = vmatpush1.bf16.msra.mxu0 %v790
    %1312 = vmatprep.subr.bf16.mxu0 0
    %1313 = vmatpush1.bf16.msra.mxu0 %v793
    %1314 = vmatprep.subr.bf16.mxu0 0
    %1315 = vmatpush1.bf16.msra.mxu0 %v796
    %1316 = vmatprep.subr.bf16.mxu0 0
    %1317 = vmatpush1.bf16.msra.mxu0 %v799
    %1318 = vmatprep.subr.bf16.mxu0 0
    %1319 = vmatpush1.bf16.msra.mxu0 %v802
    %1320 = vmatprep.subr.bf16.mxu0 0
    %1321 = vmatpush1.bf16.msra.mxu0 0
    %1322 = vmatprep.subr.bf16.mxu0 0
    %1323 = vmatpush1.bf16.msra.mxu0 0
    %1324 = vmatprep.subr.bf16.mxu0 0
    %1325 = vmatpush1.bf16.msra.mxu0 0
    %1326 = vmatprep.subr.bf16.mxu0 0
    %1327 = vmatpush1.bf16.msra.mxu0 0
    %1328 = vmatprep.subr.bf16.mxu0 0
    %1329 = vmatpush1.bf16.msra.mxu0 0
    %1330 = vmatprep.subr.bf16.mxu0 0
    %1331 = vmatpush1.bf16.msra.mxu0 0
    %1332 = vmatprep.subr.bf16.mxu0 0
    %1333 = vmatpush1.bf16.msra.mxu0 0
    %1334 = vmatprep.subr.bf16.mxu0 0
    %1335 = vmatpush1.bf16.msra.mxu0 0
    %1336 = vmatprep.mubr.bf16.mxu0 0
    %1337 = vmatmul.mubr.bf16.gmra.mrb[0].mxu0 %v1262
    %v1338 = vpop.f32.mrb[0].mxu0
    %v1339 = vadd.f32 %v393, %v1338
    %v1340 = vpop.f32.mrb[0].mxu0
    %v1341 = vpop.f32.mrb[0].mxu0
    %v1342 = vpop.f32.mrb[0].mxu0
    %1343 = vdwg.mxu0
    %v1344 = vadd.f32 %v1259, %v1298
    %v1345 = vxor.u32 %v1344, 2147483648
    %v1346 = vmul.f32 %v1345, 1.442695
    %v1347 = vpow.pop %v1346
    %v1348 = vadd.f32 %v1347, 1.0
    %v1349 = vrcp.pop %v1348
    %v1350 = vmul.f32 1.0, %v1349
    %v1351 = vadd.f32 %v1260, %v1300
    %v1352 = vxor.u32 %v1351, 2147483648
    %v1353 = vmul.f32 %v1352, 1.442695
    %v1354 = vpow.pop %v1353
    %v1355 = vadd.f32 %v1354, 1.0
    %v1356 = vrcp.pop %v1355
    %v1357 = vmul.f32 1.0, %v1356
    %v1358 = vmul.f32 %v1350, %v1339
    %v1359 = vadd.f32 %v1261, %v1358
    %v1360 = vtanh.pop %v1359
    %v1361 = vsub.f32 1.0, %v1357
    %v1362 = vmul.f32 %v1361, %v1360
    %v1363 = vmul.f32 %v1357, %v1146
    %v1364 = vadd.f32 %v1362, %v1363
    %s1365 = scalar_lea.vmem %s7, 48
    %1366 = vst [vmem:[%s1365 + $0x8] sm:$0xff] %v1364
    %s1367 = scalar_lea.vmem [#allocation2], 72
    %v1368 = vld [vmem:[%s1367] sm:$0xff]
    %v1369 = vld [vmem:[%s1367 + $0x8] sm:$0xff]
    %v1370 = vld [vmem:[%s1367 + $0x10] sm:$0xff]
    %v1371 = vpack.c.bf16 %v1255, %v1255
    %1372 = vmatprep.subr.bf16.mxu0 %v545
    %1373 = vmatpush1.bf16.msra.mxu0 %v544
    %1374 = vmatprep.subr.bf16.mxu0 %v548
    %1375 = vmatpush1.bf16.msra.mxu0 %v547
    %1376 = vmatprep.subr.bf16.mxu0 %v551
    %1377 = vmatpush1.bf16.msra.mxu0 %v550
    %1378 = vmatprep.subr.bf16.mxu0 %v554
    %1379 = vmatpush1.bf16.msra.mxu0 %v553
    %1380 = vmatprep.subr.bf16.mxu0 %v557
    %1381 = vmatpush1.bf16.msra.mxu0 %v556
    %1382 = vmatprep.subr.bf16.mxu0 %v560
    %1383 = vmatpush1.bf16.msra.mxu0 %v559
    %1384 = vmatprep.subr.bf16.mxu0 %v563
    %1385 = vmatpush1.bf16.msra.mxu0 %v562
    %1386 = vmatprep.subr.bf16.mxu0 %v566
    %1387 = vmatpush1.bf16.msra.mxu0 %v565
    %1388 = vmatprep.subr.bf16.mxu0 0
    %1389 = vmatpush1.bf16.msra.mxu0 0
    %1390 = vmatprep.subr.bf16.mxu0 0
    %1391 = vmatpush1.bf16.msra.mxu0 0
    %1392 = vmatprep.subr.bf16.mxu0 0
    %1393 = vmatpush1.bf16.msra.mxu0 0
    %1394 = vmatprep.subr.bf16.mxu0 0
    %1395 = vmatpush1.bf16.msra.mxu0 0
    %1396 = vmatprep.subr.bf16.mxu0 0
    %1397 = vmatpush1.bf16.msra.mxu0 0
    %1398 = vmatprep.subr.bf16.mxu0 0
    %1399 = vmatpush1.bf16.msra.mxu0 0
    %1400 = vmatprep.subr.bf16.mxu0 0
    %1401 = vmatpush1.bf16.msra.mxu0 0
    %1402 = vmatprep.subr.bf16.mxu0 0
    %1403 = vmatpush1.bf16.msra.mxu0 0
    %1404 = vmatprep.mubr.bf16.mxu0 0
    %1405 = vmatmul.mubr.bf16.gmra.mrb[0].mxu0 %v1371
    %v1406 = vpop.f32.mrb[0].mxu0
    %v1407 = vadd.f32 %v368, %v1406
    %v1408 = vpop.f32.mrb[0].mxu0
    %v1409 = vadd.f32 %v372, %v1408
    %v1410 = vpop.f32.mrb[0].mxu0
    %v1411 = vpop.f32.mrb[0].mxu0
    %1412 = vdwg.mxu0
    %1413 = vmatprep.subr.bf16.mxu0 0
    %1414 = vmatpush1.bf16.msra.mxu0 %v546
    %1415 = vmatprep.subr.bf16.mxu0 0
    %1416 = vmatpush1.bf16.msra.mxu0 %v549
    %1417 = vmatprep.subr.bf16.mxu0 0
    %1418 = vmatpush1.bf16.msra.mxu0 %v552
    %1419 = vmatprep.subr.bf16.mxu0 0
    %1420 = vmatpush1.bf16.msra.mxu0 %v555
    %1421 = vmatprep.subr.bf16.mxu0 0
    %1422 = vmatpush1.bf16.msra.mxu0 %v558
    %1423 = vmatprep.subr.bf16.mxu0 0
    %1424 = vmatpush1.bf16.msra.mxu0 %v561
    %1425 = vmatprep.subr.bf16.mxu0 0
    %1426 = vmatpush1.bf16.msra.mxu0 %v564
    %1427 = vmatprep.subr.bf16.mxu0 0
    %1428 = vmatpush1.bf16.msra.mxu0 %v567
    %1429 = vmatprep.subr.bf16.mxu0 0
    %1430 = vmatpush1.bf16.msra.mxu0 0
    %1431 = vmatprep.subr.bf16.mxu0 0
    %1432 = vmatpush1.bf16.msra.mxu0 0
    %1433 = vmatprep.subr.bf16.mxu0 0
    %1434 = vmatpush1.bf16.msra.mxu0 0
    %1435 = vmatprep.subr.bf16.mxu0 0
    %1436 = vmatpush1.bf16.msra.mxu0 0
    %1437 = vmatprep.subr.bf16.mxu0 0
    %1438 = vmatpush1.bf16.msra.mxu0 0
    %1439 = vmatprep.subr.bf16.mxu0 0
    %1440 = vmatpush1.bf16.msra.mxu0 0
    %1441 = vmatprep.subr.bf16.mxu0 0
    %1442 = vmatpush1.bf16.msra.mxu0 0
    %1443 = vmatprep.subr.bf16.mxu0 0
    %1444 = vmatpush1.bf16.msra.mxu0 0
    %1445 = vmatprep.mubr.bf16.mxu0 0
    %1446 = vmatmul.mubr.bf16.gmra.mrb[0].mxu0 %v1371
    %v1447 = vpop.f32.mrb[0].mxu0
    %v1448 = vadd.f32 %v376, %v1447
    %v1449 = vpop.f32.mrb[0].mxu0
    %v1450 = vpop.f32.mrb[0].mxu0
    %v1451 = vpop.f32.mrb[0].mxu0
    %1452 = vdwg.mxu0
    %v1453 = vadd.f32 %v1368, %v1407
    %v1454 = vxor.u32 %v1453, 2147483648
    %v1455 = vmul.f32 %v1454, 1.442695
    %v1456 = vpow.pop %v1455
    %v1457 = vadd.f32 %v1456, 1.0
    %v1458 = vrcp.pop %v1457
    %v1459 = vmul.f32 1.0, %v1458
    %v1460 = vadd.f32 %v1369, %v1409
    %v1461 = vxor.u32 %v1460, 2147483648
    %v1462 = vmul.f32 %v1461, 1.442695
    %v1463 = vpow.pop %v1462
    %v1464 = vadd.f32 %v1463, 1.0
    %v1465 = vrcp.pop %v1464
    %v1466 = vmul.f32 1.0, %v1465
    %v1467 = vmul.f32 %v1459, %v1448
    %v1468 = vadd.f32 %v1370, %v1467
    %v1469 = vtanh.pop %v1468
    %v1470 = vsub.f32 1.0, %v1466
    %v1471 = vmul.f32 %v1470, %v1469
    %v1472 = vmul.f32 %v1466, %v1255
    %v1473 = vadd.f32 %v1471, %v1472
    %1474 = vst [vmem:[%s1365] sm:$0xff] %v1473
    %s1475 = scalar_lea.vmem [#allocation3], 48
    %v1476 = vld [vmem:[%s1475] sm:$0xff]
    %v1477 = vld [vmem:[%s1475 + $0x8] sm:$0xff]
    %v1478 = vld [vmem:[%s1475 + $0x10] sm:$0xff]
    %v1479 = vpack.c.bf16 %v1364, %v1364
    %1480 = vmatprep.subr.bf16.mxu0 %v780
    %1481 = vmatpush1.bf16.msra.mxu0 %v779
    %1482 = vmatprep.subr.bf16.mxu0 %v783
    %1483 = vmatpush1.bf16.msra.mxu0 %v782
    %1484 = vmatprep.subr.bf16.mxu0 %v786
    %1485 = vmatpush1.bf16.msra.mxu0 %v785
    %1486 = vmatprep.subr.bf16.mxu0 %v789
    %1487 = vmatpush1.bf16.msra.mxu0 %v788
    %1488 = vmatprep.subr.bf16.mxu0 %v792
    %1489 = vmatpush1.bf16.msra.mxu0 %v791
    %1490 = vmatprep.subr.bf16.mxu0 %v795
    %1491 = vmatpush1.bf16.msra.mxu0 %v794
    %1492 = vmatprep.subr.bf16.mxu0 %v798
    %1493 = vmatpush1.bf16.msra.mxu0 %v797
    %1494 = vmatprep.subr.bf16.mxu0 %v801
    %1495 = vmatpush1.bf16.msra.mxu0 %v800
    %1496 = vmatprep.subr.bf16.mxu0 0
    %1497 = vmatpush1.bf16.msra.mxu0 0
    %1498 = vmatprep.subr.bf16.mxu0 0
    %1499 = vmatpush1.bf16.msra.mxu0 0
    %1500 = vmatprep.subr.bf16.mxu0 0
    %1501 = vmatpush1.bf16.msra.mxu0 0
    %1502 = vmatprep.subr.bf16.mxu0 0
    %1503 = vmatpush1.bf16.msra.mxu0 0
    %1504 = vmatprep.subr.bf16.mxu0 0
    %1505 = vmatpush1.bf16.msra.mxu0 0
    %1506 = vmatprep.subr.bf16.mxu0 0
    %1507 = vmatpush1.bf16.msra.mxu0 0
    %1508 = vmatprep.subr.bf16.mxu0 0
    %1509 = vmatpush1.bf16.msra.mxu0 0
    %1510 = vmatprep.subr.bf16.mxu0 0
    %1511 = vmatpush1.bf16.msra.mxu0 0
    %1512 = vmatprep.mubr.bf16.mxu0 0
    %1513 = vmatmul.mubr.bf16.gmra.mrb[0].mxu0 %v1479
    %v1514 = vpop.f32.mrb[0].mxu0
    %v1515 = vadd.f32 %v385, %v1514
    %v1516 = vpop.f32.mrb[0].mxu0
    %v1517 = vadd.f32 %v389, %v1516
    %v1518 = vpop.f32.mrb[0].mxu0
    %v1519 = vpop.f32.mrb[0].mxu0
    %1520 = vdwg.mxu0
    %1521 = vmatprep.subr.bf16.mxu0 0
    %1522 = vmatpush1.bf16.msra.mxu0 %v781
    %1523 = vmatprep.subr.bf16.mxu0 0
    %1524 = vmatpush1.bf16.msra.mxu0 %v784
    %1525 = vmatprep.subr.bf16.mxu0 0
    %1526 = vmatpush1.bf16.msra.mxu0 %v787
    %1527 = vmatprep.subr.bf16.mxu0 0
    %1528 = vmatpush1.bf16.msra.mxu0 %v790
    %1529 = vmatprep.subr.bf16.mxu0 0
    %1530 = vmatpush1.bf16.msra.mxu0 %v793
    %1531 = vmatprep.subr.bf16.mxu0 0
    %1532 = vmatpush1.bf16.msra.mxu0 %v796
    %1533 = vmatprep.subr.bf16.mxu0 0
    %1534 = vmatpush1.bf16.msra.mxu0 %v799
    %1535 = vmatprep.subr.bf16.mxu0 0
    %1536 = vmatpush1.bf16.msra.mxu0 %v802
    %1537 = vmatprep.subr.bf16.mxu0 0
    %1538 = vmatpush1.bf16.msra.mxu0 0
    %1539 = vmatprep.subr.bf16.mxu0 0
    %1540 = vmatpush1.bf16.msra.mxu0 0
    %1541 = vmatprep.subr.bf16.mxu0 0
    %1542 = vmatpush1.bf16.msra.mxu0 0
    %1543 = vmatprep.subr.bf16.mxu0 0
    %1544 = vmatpush1.bf16.msra.mxu0 0
    %1545 = vmatprep.subr.bf16.mxu0 0
    %1546 = vmatpush1.bf16.msra.mxu0 0
    %1547 = vmatprep.subr.bf16.mxu0 0
    %1548 = vmatpush1.bf16.msra.mxu0 0
    %1549 = vmatprep.subr.bf16.mxu0 0
    %1550 = vmatpush1.bf16.msra.mxu0 0
    %1551 = vmatprep.subr.bf16.mxu0 0
    %1552 = vmatpush1.bf16.msra.mxu0 0
    %1553 = vmatprep.mubr.bf16.mxu0 0
    %1554 = vmatmul.mubr.bf16.gmra.mrb[0].mxu0 %v1479
    %v1555 = vpop.f32.mrb[0].mxu0
    %v1556 = vadd.f32 %v393, %v1555
    %v1557 = vpop.f32.mrb[0].mxu0
    %v1558 = vpop.f32.mrb[0].mxu0
    %v1559 = vpop.f32.mrb[0].mxu0
    %1560 = vdwg.mxu0
    %v1561 = vadd.f32 %v1476, %v1515
    %v1562 = vxor.u32 %v1561, 2147483648
    %v1563 = vmul.f32 %v1562, 1.442695
    %v1564 = vpow.pop %v1563
    %v1565 = vadd.f32 %v1564, 1.0
    %v1566 = vrcp.pop %v1565
    %v1567 = vmul.f32 1.0, %v1566
    %v1568 = vadd.f32 %v1477, %v1517
    %v1569 = vxor.u32 %v1568, 2147483648
    %v1570 = vmul.f32 %v1569, 1.442695
    %v1571 = vpow.pop %v1570
    %v1572 = vadd.f32 %v1571, 1.0
    %v1573 = vrcp.pop %v1572
    %v1574 = vmul.f32 1.0, %v1573
    %v1575 = vmul.f32 %v1567, %v1556
    %v1576 = vadd.f32 %v1478, %v1575
    %v1577 = vtanh.pop %v1576
    %v1578 = vsub.f32 1.0, %v1574
    %v1579 = vmul.f32 %v1578, %v1577
    %v1580 = vmul.f32 %v1574, %v1364
    %v1581 = vadd.f32 %v1579, %v1580
    %1582 = vst [vmem:[%s1256 + $0x8] sm:$0xff] %v1581
    %s1583 = scalar_lea.vmem [#allocation2], 96
    %v1584 = vld [vmem:[%s1583] sm:$0xff]
    %v1585 = vld [vmem:[%s1583 + $0x8] sm:$0xff]
    %v1586 = vld [vmem:[%s1583 + $0x10] sm:$0xff]
    %v1587 = vpack.c.bf16 %v1473, %v1473
    %1588 = vmatprep.subr.bf16.mxu0 %v545
    %1589 = vmatpush1.bf16.msra.mxu0 %v544
    %1590 = vmatprep.subr.bf16.mxu0 %v548
    %1591 = vmatpush1.bf16.msra.mxu0 %v547
    %1592 = vmatprep.subr.bf16.mxu0 %v551
    %1593 = vmatpush1.bf16.msra.mxu0 %v550
    %1594 = vmatprep.subr.bf16.mxu0 %v554
    %1595 = vmatpush1.bf16.msra.mxu0 %v553
    %1596 = vmatprep.subr.bf16.mxu0 %v557
    %1597 = vmatpush1.bf16.msra.mxu0 %v556
    %1598 = vmatprep.subr.bf16.mxu0 %v560
    %1599 = vmatpush1.bf16.msra.mxu0 %v559
    %1600 = vmatprep.subr.bf16.mxu0 %v563
    %1601 = vmatpush1.bf16.msra.mxu0 %v562
    %1602 = vmatprep.subr.bf16.mxu0 %v566
    %1603 = vmatpush1.bf16.msra.mxu0 %v565
    %1604 = vmatprep.subr.bf16.mxu0 0
    %1605 = vmatpush1.bf16.msra.mxu0 0
    %1606 = vmatprep.subr.bf16.mxu0 0
    %1607 = vmatpush1.bf16.msra.mxu0 0
    %1608 = vmatprep.subr.bf16.mxu0 0
    %1609 = vmatpush1.bf16.msra.mxu0 0
    %1610 = vmatprep.subr.bf16.mxu0 0
    %1611 = vmatpush1.bf16.msra.mxu0 0
    %1612 = vmatprep.subr.bf16.mxu0 0
    %1613 = vmatpush1.bf16.msra.mxu0 0
    %1614 = vmatprep.subr.bf16.mxu0 0
    %1615 = vmatpush1.bf16.msra.mxu0 0
    %1616 = vmatprep.subr.bf16.mxu0 0
    %1617 = vmatpush1.bf16.msra.mxu0 0
    %1618 = vmatprep.subr.bf16.mxu0 0
    %1619 = vmatpush1.bf16.msra.mxu0 0
    %1620 = vmatprep.mubr.bf16.mxu0 0
    %1621 = vmatmul.mubr.bf16.gmra.mrb[0].mxu0 %v1587
    %v1622 = vpop.f32.mrb[0].mxu0
    %v1623 = vadd.f32 %v368, %v1622
    %v1624 = vpop.f32.mrb[0].mxu0
    %v1625 = vadd.f32 %v372, %v1624
    %v1626 = vpop.f32.mrb[0].mxu0
    %v1627 = vpop.f32.mrb[0].mxu0
    %1628 = vdwg.mxu0
    %1629 = vmatprep.subr.bf16.mxu0 0
    %1630 = vmatpush1.bf16.msra.mxu0 %v546
    %1631 = vmatprep.subr.bf16.mxu0 0
    %1632 = vmatpush1.bf16.msra.mxu0 %v549
    %1633 = vmatprep.subr.bf16.mxu0 0
    %1634 = vmatpush1.bf16.msra.mxu0 %v552
    %1635 = vmatprep.subr.bf16.mxu0 0
    %1636 = vmatpush1.bf16.msra.mxu0 %v555
    %1637 = vmatprep.subr.bf16.mxu0 0
    %1638 = vmatpush1.bf16.msra.mxu0 %v558
    %1639 = vmatprep.subr.bf16.mxu0 0
    %1640 = vmatpush1.bf16.msra.mxu0 %v561
    %1641 = vmatprep.subr.bf16.mxu0 0
    %1642 = vmatpush1.bf16.msra.mxu0 %v564
    %1643 = vmatprep.subr.bf16.mxu0 0
    %1644 = vmatpush1.bf16.msra.mxu0 %v567
    %1645 = vmatprep.subr.bf16.mxu0 0
    %1646 = vmatpush1.bf16.msra.mxu0 0
    %1647 = vmatprep.subr.bf16.mxu0 0
    %1648 = vmatpush1.bf16.msra.mxu0 0
    %1649 = vmatprep.subr.bf16.mxu0 0
    %1650 = vmatpush1.bf16.msra.mxu0 0
    %1651 = vmatprep.subr.bf16.mxu0 0
    %1652 = vmatpush1.bf16.msra.mxu0 0
    %1653 = vmatprep.subr.bf16.mxu0 0
    %1654 = vmatpush1.bf16.msra.mxu0 0
    %1655 = vmatprep.subr.bf16.mxu0 0
    %1656 = vmatpush1.bf16.msra.mxu0 0
    %1657 = vmatprep.subr.bf16.mxu0 0
    %1658 = vmatpush1.bf16.msra.mxu0 0
    %1659 = vmatprep.subr.bf16.mxu0 0
    %1660 = vmatpush1.bf16.msra.mxu0 0
    %1661 = vmatprep.mubr.bf16.mxu0 0
    %1662 = vmatmul.mubr.bf16.gmra.mrb[0].mxu0 %v1587
    %v1663 = vpop.f32.mrb[0].mxu0
    %v1664 = vadd.f32 %v376, %v1663
    %v1665 = vpop.f32.mrb[0].mxu0
    %v1666 = vpop.f32.mrb[0].mxu0
    %v1667 = vpop.f32.mrb[0].mxu0
    %1668 = vdwg.mxu0
    %v1669 = vadd.f32 %v1584, %v1623
    %v1670 = vxor.u32 %v1669, 2147483648
    %v1671 = vmul.f32 %v1670, 1.442695
    %v1672 = vpow.pop %v1671
    %v1673 = vadd.f32 %v1672, 1.0
    %v1674 = vrcp.pop %v1673
    %v1675 = vmul.f32 1.0, %v1674
    %v1676 = vadd.f32 %v1585, %v1625
    %v1677 = vxor.u32 %v1676, 2147483648
    %v1678 = vmul.f32 %v1677, 1.442695
    %v1679 = vpow.pop %v1678
    %v1680 = vadd.f32 %v1679, 1.0
    %v1681 = vrcp.pop %v1680
    %v1682 = vmul.f32 1.0, %v1681
    %v1683 = vmul.f32 %v1675, %v1664
    %v1684 = vadd.f32 %v1586, %v1683
    %v1685 = vtanh.pop %v1684
    %v1686 = vsub.f32 1.0, %v1682
    %v1687 = vmul.f32 %v1686, %v1685
    %v1688 = vmul.f32 %v1682, %v1473
    %v1689 = vadd.f32 %v1687, %v1688
    %1690 = vst [vmem:[%s1147] sm:$0xff] %v1689
    %s1691 = scalar_lea.vmem [#allocation3], 24
    %v1692 = vld [vmem:[%s1691] sm:$0xff]
    %v1693 = vld [vmem:[%s1691 + $0x8] sm:$0xff]
    %v1694 = vld [vmem:[%s1691 + $0x10] sm:$0xff]
    %v1695 = vpack.c.bf16 %v1581, %v1581
    %1696 = vmatprep.subr.bf16.mxu0 %v780
    %1697 = vmatpush1.bf16.msra.mxu0 %v779
    %1698 = vmatprep.subr.bf16.mxu0 %v783
    %1699 = vmatpush1.bf16.msra.mxu0 %v782
    %1700 = vmatprep.subr.bf16.mxu0 %v786
    %1701 = vmatpush1.bf16.msra.mxu0 %v785
    %1702 = vmatprep.subr.bf16.mxu0 %v789
    %1703 = vmatpush1.bf16.msra.mxu0 %v788
    %1704 = vmatprep.subr.bf16.mxu0 %v792
    %1705 = vmatpush1.bf16.msra.mxu0 %v791
    %1706 = vmatprep.subr.bf16.mxu0 %v795
    %1707 = vmatpush1.bf16.msra.mxu0 %v794
    %1708 = vmatprep.subr.bf16.mxu0 %v798
    %1709 = vmatpush1.bf16.msra.mxu0 %v797
    %1710 = vmatprep.subr.bf16.mxu0 %v801
    %1711 = vmatpush1.bf16.msra.mxu0 %v800
    %1712 = vmatprep.subr.bf16.mxu0 0
    %1713 = vmatpush1.bf16.msra.mxu0 0
    %1714 = vmatprep.subr.bf16.mxu0 0
    %1715 = vmatpush1.bf16.msra.mxu0 0
    %1716 = vmatprep.subr.bf16.mxu0 0
    %1717 = vmatpush1.bf16.msra.mxu0 0
    %1718 = vmatprep.subr.bf16.mxu0 0
    %1719 = vmatpush1.bf16.msra.mxu0 0
    %1720 = vmatprep.subr.bf16.mxu0 0
    %1721 = vmatpush1.bf16.msra.mxu0 0
    %1722 = vmatprep.subr.bf16.mxu0 0
    %1723 = vmatpush1.bf16.msra.mxu0 0
    %1724 = vmatprep.subr.bf16.mxu0 0
    %1725 = vmatpush1.bf16.msra.mxu0 0
    %1726 = vmatprep.subr.bf16.mxu0 0
    %1727 = vmatpush1.bf16.msra.mxu0 0
    %1728 = vmatprep.mubr.bf16.mxu0 0
    %1729 = vmatmul.mubr.bf16.gmra.mrb[0].mxu0 %v1695
    %v1730 = vpop.f32.mrb[0].mxu0
    %v1731 = vadd.f32 %v385, %v1730
    %v1732 = vpop.f32.mrb[0].mxu0
    %v1733 = vadd.f32 %v389, %v1732
    %v1734 = vpop.f32.mrb[0].mxu0
    %v1735 = vpop.f32.mrb[0].mxu0
    %1736 = vdwg.mxu0
    %1737 = vmatprep.subr.bf16.mxu0 0
    %1738 = vmatpush1.bf16.msra.mxu0 %v781
    %1739 = vmatprep.subr.bf16.mxu0 0
    %1740 = vmatpush1.bf16.msra.mxu0 %v784
    %1741 = vmatprep.subr.bf16.mxu0 0
    %1742 = vmatpush1.bf16.msra.mxu0 %v787
    %1743 = vmatprep.subr.bf16.mxu0 0
    %1744 = vmatpush1.bf16.msra.mxu0 %v790
    %1745 = vmatprep.subr.bf16.mxu0 0
    %1746 = vmatpush1.bf16.msra.mxu0 %v793
    %1747 = vmatprep.subr.bf16.mxu0 0
    %1748 = vmatpush1.bf16.msra.mxu0 %v796
    %1749 = vmatprep.subr.bf16.mxu0 0
    %1750 = vmatpush1.bf16.msra.mxu0 %v799
    %1751 = vmatprep.subr.bf16.mxu0 0
    %1752 = vmatpush1.bf16.msra.mxu0 %v802
    %1753 = vmatprep.subr.bf16.mxu0 0
    %1754 = vmatpush1.bf16.msra.mxu0 0
    %1755 = vmatprep.subr.bf16.mxu0 0
    %1756 = vmatpush1.bf16.msra.mxu0 0
    %1757 = vmatprep.subr.bf16.mxu0 0
    %1758 = vmatpush1.bf16.msra.mxu0 0
    %1759 = vmatprep.subr.bf16.mxu0 0
    %1760 = vmatpush1.bf16.msra.mxu0 0
    %1761 = vmatprep.subr.bf16.mxu0 0
    %1762 = vmatpush1.bf16.msra.mxu0 0
    %1763 = vmatprep.subr.bf16.mxu0 0
    %1764 = vmatpush1.bf16.msra.mxu0 0
    %1765 = vmatprep.subr.bf16.mxu0 0
    %1766 = vmatpush1.bf16.msra.mxu0 0
    %1767 = vmatprep.subr.bf16.mxu0 0
    %1768 = vmatpush1.bf16.msra.mxu0 0
    %1769 = vmatprep.mubr.bf16.mxu0 0
    %1770 = vmatmul.mubr.bf16.gmra.mrb[0].mxu0 %v1695
    %v1771 = vpop.f32.mrb[0].mxu0
    %v1772 = vadd.f32 %v393, %v1771
    %v1773 = vpop.f32.mrb[0].mxu0
    %v1774 = vpop.f32.mrb[0].mxu0
    %v1775 = vpop.f32.mrb[0].mxu0
    %1776 = vdwg.mxu0
    %v1777 = vadd.f32 %v1692, %v1731
    %v1778 = vxor.u32 %v1777, 2147483648
    %v1779 = vmul.f32 %v1778, 1.442695
    %v1780 = vpow.pop %v1779
    %v1781 = vadd.f32 %v1780, 1.0
    %v1782 = vrcp.pop %v1781
    %v1783 = vmul.f32 1.0, %v1782
    %v1784 = vadd.f32 %v1693, %v1733
    %v1785 = vxor.u32 %v1784, 2147483648
    %v1786 = vmul.f32 %v1785, 1.442695
    %v1787 = vpow.pop %v1786
    %v1788 = vadd.f32 %v1787, 1.0
    %v1789 = vrcp.pop %v1788
    %v1790 = vmul.f32 1.0, %v1789
    %v1791 = vmul.f32 %v1783, %v1772
    %v1792 = vadd.f32 %v1694, %v1791
    %v1793 = vtanh.pop %v1792
    %v1794 = vsub.f32 1.0, %v1790
    %v1795 = vmul.f32 %v1794, %v1793
    %v1796 = vmul.f32 %v1790, %v1581
    %v1797 = vadd.f32 %v1795, %v1796
    %1798 = vst [vmem:[%s1038 + $0x8] sm:$0xff] %v1797
    %s1799 = scalar_lea.vmem [#allocation2], 120
    %v1800 = vld [vmem:[%s1799] sm:$0xff]
    %v1801 = vld [vmem:[%s1799 + $0x8] sm:$0xff]
    %v1802 = vld [vmem:[%s1799 + $0x10] sm:$0xff]
    %v1803 = vpack.c.bf16 %v1689, %v1689
    %1804 = vmatprep.subr.bf16.mxu0 %v545
    %1805 = vmatpush1.bf16.msra.mxu0 %v544
    %1806 = vmatprep.subr.bf16.mxu0 %v548
    %1807 = vmatpush1.bf16.msra.mxu0 %v547
    %1808 = vmatprep.subr.bf16.mxu0 %v551
    %1809 = vmatpush1.bf16.msra.mxu0 %v550
    %1810 = vmatprep.subr.bf16.mxu0 %v554
    %1811 = vmatpush1.bf16.msra.mxu0 %v553
    %1812 = vmatprep.subr.bf16.mxu0 %v557
    %1813 = vmatpush1.bf16.msra.mxu0 %v556
    %1814 = vmatprep.subr.bf16.mxu0 %v560
    %1815 = vmatpush1.bf16.msra.mxu0 %v559
    %1816 = vmatprep.subr.bf16.mxu0 %v563
    %1817 = vmatpush1.bf16.msra.mxu0 %v562
    %1818 = vmatprep.subr.bf16.mxu0 %v566
    %1819 = vmatpush1.bf16.msra.mxu0 %v565
    %1820 = vmatprep.subr.bf16.mxu0 0
    %1821 = vmatpush1.bf16.msra.mxu0 0
    %1822 = vmatprep.subr.bf16.mxu0 0
    %1823 = vmatpush1.bf16.msra.mxu0 0
    %1824 = vmatprep.subr.bf16.mxu0 0
    %1825 = vmatpush1.bf16.msra.mxu0 0
    %1826 = vmatprep.subr.bf16.mxu0 0
    %1827 = vmatpush1.bf16.msra.mxu0 0
    %1828 = vmatprep.subr.bf16.mxu0 0
    %1829 = vmatpush1.bf16.msra.mxu0 0
    %1830 = vmatprep.subr.bf16.mxu0 0
    %1831 = vmatpush1.bf16.msra.mxu0 0
    %1832 = vmatprep.subr.bf16.mxu0 0
    %1833 = vmatpush1.bf16.msra.mxu0 0
    %1834 = vmatprep.subr.bf16.mxu0 0
    %1835 = vmatpush1.bf16.msra.mxu0 0
    %1836 = vmatprep.mubr.bf16.mxu0 0
    %1837 = vmatmul.mubr.bf16.gmra.mrb[0].mxu0 %v1803
    %v1838 = vpop.f32.mrb[0].mxu0
    %v1839 = vadd.f32 %v368, %v1838
    %v1840 = vpop.f32.mrb[0].mxu0
    %v1841 = vadd.f32 %v372, %v1840
    %v1842 = vpop.f32.mrb[0].mxu0
    %v1843 = vpop.f32.mrb[0].mxu0
    %1844 = vdwg.mxu0
    %1845 = vmatprep.subr.bf16.mxu0 0
    %1846 = vmatpush1.bf16.msra.mxu0 %v546
    %1847 = vmatprep.subr.bf16.mxu0 0
    %1848 = vmatpush1.bf16.msra.mxu0 %v549
    %1849 = vmatprep.subr.bf16.mxu0 0
    %1850 = vmatpush1.bf16.msra.mxu0 %v552
    %1851 = vmatprep.subr.bf16.mxu0 0
    %1852 = vmatpush1.bf16.msra.mxu0 %v555
    %1853 = vmatprep.subr.bf16.mxu0 0
    %1854 = vmatpush1.bf16.msra.mxu0 %v558
    %1855 = vmatprep.subr.bf16.mxu0 0
    %1856 = vmatpush1.bf16.msra.mxu0 %v561
    %1857 = vmatprep.subr.bf16.mxu0 0
    %1858 = vmatpush1.bf16.msra.mxu0 %v564
    %1859 = vmatprep.subr.bf16.mxu0 0
    %1860 = vmatpush1.bf16.msra.mxu0 %v567
    %1861 = vmatprep.subr.bf16.mxu0 0
    %1862 = vmatpush1.bf16.msra.mxu0 0
    %1863 = vmatprep.subr.bf16.mxu0 0
    %1864 = vmatpush1.bf16.msra.mxu0 0
    %1865 = vmatprep.subr.bf16.mxu0 0
    %1866 = vmatpush1.bf16.msra.mxu0 0
    %1867 = vmatprep.subr.bf16.mxu0 0
    %1868 = vmatpush1.bf16.msra.mxu0 0
    %1869 = vmatprep.subr.bf16.mxu0 0
    %1870 = vmatpush1.bf16.msra.mxu0 0
    %1871 = vmatprep.subr.bf16.mxu0 0
    %1872 = vmatpush1.bf16.msra.mxu0 0
    %1873 = vmatprep.subr.bf16.mxu0 0
    %1874 = vmatpush1.bf16.msra.mxu0 0
    %1875 = vmatprep.subr.bf16.mxu0 0
    %1876 = vmatpush1.bf16.msra.mxu0 0
    %1877 = vmatprep.mubr.bf16.mxu0 0
    %1878 = vmatmul.mubr.bf16.gmra.mrb[0].mxu0 %v1803
    %v1879 = vpop.f32.mrb[0].mxu0
    %v1880 = vadd.f32 %v376, %v1879
    %v1881 = vpop.f32.mrb[0].mxu0
    %v1882 = vpop.f32.mrb[0].mxu0
    %v1883 = vpop.f32.mrb[0].mxu0
    %1884 = vdwg.mxu0
    %v1885 = vadd.f32 %v1800, %v1839
    %v1886 = vxor.u32 %v1885, 2147483648
    %v1887 = vmul.f32 %v1886, 1.442695
    %v1888 = vpow.pop %v1887
    %v1889 = vadd.f32 %v1888, 1.0
    %v1890 = vrcp.pop %v1889
    %v1891 = vmul.f32 1.0, %v1890
    %v1892 = vadd.f32 %v1801, %v1841
    %v1893 = vxor.u32 %v1892, 2147483648
    %v1894 = vmul.f32 %v1893, 1.442695
    %v1895 = vpow.pop %v1894
    %v1896 = vadd.f32 %v1895, 1.0
    %v1897 = vrcp.pop %v1896
    %v1898 = vmul.f32 1.0, %v1897
    %v1899 = vmul.f32 %v1891, %v1880
    %v1900 = vadd.f32 %v1802, %v1899
    %v1901 = vtanh.pop %v1900
    %v1902 = vsub.f32 1.0, %v1898
    %v1903 = vmul.f32 %v1902, %v1901
    %v1904 = vmul.f32 %v1898, %v1689
    %v1905 = vadd.f32 %v1903, %v1904
    %1906 = vst [vmem:[%s929] sm:$0xff] %v1905
    %v1907 = vld [vmem:[#allocation3] sm:$0xff]
    %v1908 = vld [vmem:[#allocation3 + $0x8] sm:$0xff]
    %v1909 = vld [vmem:[#allocation3 + $0x10] sm:$0xff]
    %v1910 = vpack.c.bf16 %v1797, %v1797
    %1911 = vmatprep.subr.bf16.mxu0 %v780
    %1912 = vmatpush1.bf16.msra.mxu0 %v779
    %1913 = vmatprep.subr.bf16.mxu0 %v783
    %1914 = vmatpush1.bf16.msra.mxu0 %v782
    %1915 = vmatprep.subr.bf16.mxu0 %v786
    %1916 = vmatpush1.bf16.msra.mxu0 %v785
    %1917 = vmatprep.subr.bf16.mxu0 %v789
    %1918 = vmatpush1.bf16.msra.mxu0 %v788
    %1919 = vmatprep.subr.bf16.mxu0 %v792
    %1920 = vmatpush1.bf16.msra.mxu0 %v791
    %1921 = vmatprep.subr.bf16.mxu0 %v795
    %1922 = vmatpush1.bf16.msra.mxu0 %v794
    %1923 = vmatprep.subr.bf16.mxu0 %v798
    %1924 = vmatpush1.bf16.msra.mxu0 %v797
    %1925 = vmatprep.subr.bf16.mxu0 %v801
    %1926 = vmatpush1.bf16.msra.mxu0 %v800
    %1927 = vmatprep.subr.bf16.mxu0 0
    %1928 = vmatpush1.bf16.msra.mxu0 0
    %1929 = vmatprep.subr.bf16.mxu0 0
    %1930 = vmatpush1.bf16.msra.mxu0 0
    %1931 = vmatprep.subr.bf16.mxu0 0
    %1932 = vmatpush1.bf16.msra.mxu0 0
    %1933 = vmatprep.subr.bf16.mxu0 0
    %1934 = vmatpush1.bf16.msra.mxu0 0
    %1935 = vmatprep.subr.bf16.mxu0 0
    %1936 = vmatpush1.bf16.msra.mxu0 0
    %1937 = vmatprep.subr.bf16.mxu0 0
    %1938 = vmatpush1.bf16.msra.mxu0 0
    %1939 = vmatprep.subr.bf16.mxu0 0
    %1940 = vmatpush1.bf16.msra.mxu0 0
    %1941 = vmatprep.subr.bf16.mxu0 0
    %1942 = vmatpush1.bf16.msra.mxu0 0
    %1943 = vmatprep.mubr.bf16.mxu0 0
    %1944 = vmatmul.mubr.bf16.gmra.mrb[0].mxu0 %v1910
    %v1945 = vpop.f32.mrb[0].mxu0
    %v1946 = vadd.f32 %v385, %v1945
    %v1947 = vpop.f32.mrb[0].mxu0
    %v1948 = vadd.f32 %v389, %v1947
    %v1949 = vpop.f32.mrb[0].mxu0
    %v1950 = vpop.f32.mrb[0].mxu0
    %1951 = vdwg.mxu0
    %1952 = vmatprep.subr.bf16.mxu0 0
    %1953 = vmatpush1.bf16.msra.mxu0 %v781
    %1954 = vmatprep.subr.bf16.mxu0 0
    %1955 = vmatpush1.bf16.msra.mxu0 %v784
    %1956 = vmatprep.subr.bf16.mxu0 0
    %1957 = vmatpush1.bf16.msra.mxu0 %v787
    %1958 = vmatprep.subr.bf16.mxu0 0
    %1959 = vmatpush1.bf16.msra.mxu0 %v790
    %1960 = vmatprep.subr.bf16.mxu0 0
    %1961 = vmatpush1.bf16.msra.mxu0 %v793
    %1962 = vmatprep.subr.bf16.mxu0 0
    %1963 = vmatpush1.bf16.msra.mxu0 %v796
    %1964 = vmatprep.subr.bf16.mxu0 0
    %1965 = vmatpush1.bf16.msra.mxu0 %v799
    %1966 = vmatprep.subr.bf16.mxu0 0
    %1967 = vmatpush1.bf16.msra.mxu0 %v802
    %1968 = vmatprep.subr.bf16.mxu0 0
    %1969 = vmatpush1.bf16.msra.mxu0 0
    %1970 = vmatprep.subr.bf16.mxu0 0
    %1971 = vmatpush1.bf16.msra.mxu0 0
    %1972 = vmatprep.subr.bf16.mxu0 0
    %1973 = vmatpush1.bf16.msra.mxu0 0
    %1974 = vmatprep.subr.bf16.mxu0 0
    %1975 = vmatpush1.bf16.msra.mxu0 0
    %1976 = vmatprep.subr.bf16.mxu0 0
    %1977 = vmatpush1.bf16.msra.mxu0 0
    %1978 = vmatprep.subr.bf16.mxu0 0
    %1979 = vmatpush1.bf16.msra.mxu0 0
    %1980 = vmatprep.subr.bf16.mxu0 0
    %1981 = vmatpush1.bf16.msra.mxu0 0
    %1982 = vmatprep.subr.bf16.mxu0 0
    %1983 = vmatpush1.bf16.msra.mxu0 0
    %1984 = vmatprep.mubr.bf16.mxu0 0
    %1985 = vmatmul.mubr.bf16.gmra.mrb[0].mxu0 %v1910
    %v1986 = vpop.f32.mrb[0].mxu0
    %v1987 = vadd.f32 %v393, %v1986
    %v1988 = vpop.f32.mrb[0].mxu0
    %v1989 = vpop.f32.mrb[0].mxu0
    %v1990 = vpop.f32.mrb[0].mxu0
    %1991 = vdwg.mxu0
    %v1992 = vadd.f32 %v1907, %v1946
    %v1993 = vxor.u32 %v1992, 2147483648
    %v1994 = vmul.f32 %v1993, 1.442695
    %v1995 = vpow.pop %v1994
    %v1996 = vadd.f32 %v1995, 1.0
    %v1997 = vrcp.pop %v1996
    %v1998 = vmul.f32 1.0, %v1997
    %v1999 = vadd.f32 %v1908, %v1948
    %v2000 = vxor.u32 %v1999, 2147483648
    %v2001 = vmul.f32 %v2000, 1.442695
    %v2002 = vpow.pop %v2001
    %v2003 = vadd.f32 %v2002, 1.0
    %v2004 = vrcp.pop %v2003
    %v2005 = vmul.f32 1.0, %v2004
    %v2006 = vmul.f32 %v1998, %v1987
    %v2007 = vadd.f32 %v1909, %v2006
    %v2008 = vtanh.pop %v2007
    %v2009 = vsub.f32 1.0, %v2005
    %v2010 = vmul.f32 %v2009, %v2008
    %v2011 = vmul.f32 %v2005, %v1797
    %v2012 = vadd.f32 %v2010, %v2011
    %2013 = vst [vmem:[%s7 + $0x8] sm:$0xff] %v2012
    // Predicated region
    $region38: #{han_forward.6} parent=1 // pred_check
      _
    $region39: #{han_forward.6} parent=1 // pred_check_branch
      %2015 = sbr.rel (0) target = $region41
    $region40: #{han_forward.6} parent=1 // pred_region
      _
    $region41: #{han_forward.6} parent=1 // pred_fallthru
      _
    // Predicated region
    $region42: #{han_forward.6} parent=1 // pred_check
      _
    $region43: #{han_forward.6} parent=1 // pred_check_branch
      %2017 = sbr.rel (0) target = $region45
    $region44: #{han_forward.6} parent=1 // pred_region
      _
    $region45: #{han_forward.6} parent=1 // pred_fallthru
      _
    %2018 = vsyncpa [#allocation5], 1
    %2019 = vsyncpa [#allocation7], 1

// kernel: han_forward.7
$region0: #{han_forward.7}
  #allocation0 [shape = 'u32[]', space=smem, size = 0x4, offset = 0x4, fixed_abs, tag = 'smem constant byte address 0x4 - core index']
  #allocation1 [shape = 'u32[144,128]{1,0:T(1,128)}', space=vmem, size = 0x12000, scoped, tag = 'internal scratch']
  #allocation2 [shape = 'f32[6,8,384]{2,1,0:T(8,128)}', space=vmem, size = 0x12000, scoped, tag = 'scratch operand']
  #allocation3 [shape = 'f32[6,8,384]{2,1,0:T(8,128)}', space=vmem, size = 0x12000, scoped, tag = 'scratch operand']
  %s0 = inlined_call_operand.vmem [shape: f32[6,8,256], index: 0, kind: input, shape index: {}]
  %s1 = inlined_call_operand.vmem [shape: bf16[256,768], index: 1, kind: input, shape index: {}]
  %s2 = inlined_call_operand.vmem [shape: f32[1,768], index: 2, kind: input, shape index: {}]
  %s3 = inlined_call_operand.vmem [shape: bf16[128,384], index: 3, kind: input, shape index: {}]
  %s4 = inlined_call_operand.vmem [shape: f32[1,384], index: 4, kind: input, shape index: {}]
  %s5 = inlined_call_operand.vmem [shape: bf16[128,384], index: 5, kind: input, shape index: {}]
  %s6 = inlined_call_operand.hbm [shape: f32[1,384], index: 6, kind: input, shape index: {}]
  %s7 = inlined_call_operand.vmem [shape: f32[6,8,256], index: 7, kind: output, shape index: {}]
  %s8 = sld [smem:[#allocation0]]
  $region42: #{han_forward.7} parent=0
    _
  %s10 = ssub.s32 1, %s8
  %s11 = scalar_select 0, %s10, %s8
  $region1: #{han_forward.7} parent=0
    #allocation4 [shape = 'u8[1536]{0}', space=vmem, size = 0x800, scoped, tag = 'input window, operand 6, single buffered']
    #allocation5 [shape = 's32[1]{0}', space=sflag, size = 0x4, scoped, tag = 'scoped memory for han_forward.7']
    %12 = vsyncpa [#allocation5], 0
    // Predicated region
    $region2: #{han_forward.7} parent=1 // pred_check
      _
    $region3: #{han_forward.7} parent=1 // pred_check_branch
      %14 = sbr.rel (0) target = $region5
    $region4: #{han_forward.7} parent=1 // pred_region
      _
    $region5: #{han_forward.7} parent=1 // pred_fallthru
      _
    // Predicated region
    $region6: #{han_forward.7} parent=1 // pred_check
      _
    $region7: #{han_forward.7} parent=1 // pred_check_branch
      %16 = sbr.rel (0) target = $region9
    $region8: #{han_forward.7} parent=1 // pred_region
      _
    $region9: #{han_forward.7} parent=1 // pred_fallthru
      _
    // Predicated region
    $region10: #{han_forward.7} parent=1 // pred_check
      _
    $region11: #{han_forward.7} parent=1 // pred_check_branch
      %18 = sbr.rel (0) target = $region13
    $region12: #{han_forward.7} parent=1 // pred_region
      _
    $region13: #{han_forward.7} parent=1 // pred_fallthru
      _
    // Predicated region
    $region14: #{han_forward.7} parent=1 // pred_check
      _
    $region15: #{han_forward.7} parent=1 // pred_check_branch
      %20 = sbr.rel (0) target = $region17
    $region16: #{han_forward.7} parent=1 // pred_region
      _
    $region17: #{han_forward.7} parent=1 // pred_fallthru
      _
    // Predicated region
    $region18: #{han_forward.7} parent=1 // pred_check
      _
    $region19: #{han_forward.7} parent=1 // pred_check_branch
      %22 = sbr.rel (0) target = $region21
    $region20: #{han_forward.7} parent=1 // pred_region
      _
    $region21: #{han_forward.7} parent=1 // pred_fallthru
      _
    // Predicated region
    $region22: #{han_forward.7} parent=1 // pred_check
      _
    $region23: #{han_forward.7} parent=1 // pred_check_branch
      %24 = sbr.rel (0) target = $region25
    $region24: #{han_forward.7} parent=1 // pred_region
      _
    $region25: #{han_forward.7} parent=1 // pred_fallthru
      _
    // Predicated region
    $region26: #{han_forward.7} parent=1 // pred_check
      _
    $region27: #{han_forward.7} parent=1 // pred_check_branch
      %26 = sbr.rel (0) target = $region29
    $region28: #{han_forward.7} parent=1 // pred_region
      %s28 = ssub.s32 48, 48
      %29 = vsyncadd [#allocation5], %s28
      %s31 = sshll.u32 [#allocation4], 4
      %s32 = int_to_ptr.vmem [resolvable:$true] %s31
      %34 = dma.hbm_to_vmem [thread:$0]  %s6, 48, %s32, [#allocation5]
    $region29: #{han_forward.7} parent=1 // pred_fallthru
      _
    // Predicated region
    $region30: #{han_forward.7} parent=1 // pred_check
      _
    $region31: #{han_forward.7} parent=1 // pred_check_branch
      %36 = sbr.rel (0) target = $region33
    $region32: #{han_forward.7} parent=1 // pred_region
      %37 = dma.done [#allocation5], 48
    $region33: #{han_forward.7} parent=1 // pred_fallthru
      _
    %v39 = vld [vmem:[%s0] sm:$0xff]
    %v40 = vld [vmem:[%s0 + $0x8] sm:$0xff]
    %v41 = vld [vmem:[%s0 + $0x10] sm:$0xff]
    %v42 = vld [vmem:[%s0 + $0x18] sm:$0xff]
    %v43 = vld [vmem:[%s0 + $0x20] sm:$0xff]
    %v44 = vld [vmem:[%s0 + $0x28] sm:$0xff]
    %v45 = vld [vmem:[%s0 + $0x30] sm:$0xff]
    %v46 = vld [vmem:[%s0 + $0x38] sm:$0xff]
    %v47 = vld [vmem:[%s0 + $0x40] sm:$0xff]
    %v48 = vld [vmem:[%s0 + $0x48] sm:$0xff]
    %v49 = vld [vmem:[%s0 + $0x50] sm:$0xff]
    %v50 = vld [vmem:[%s0 + $0x58] sm:$0xff]
    %v51 = vpack.c.bf16 %v41, %v39
    %v52 = vpack.c.bf16 %v42, %v40
    %v53 = vpack.c.bf16 %v45, %v43
    %v54 = vpack.c.bf16 %v46, %v44
    %v55 = vpack.c.bf16 %v49, %v47
    %v56 = vpack.c.bf16 %v50, %v48
    %v57 = vld [vmem:[%s1] sm:$0xff]
    %v58 = vld [vmem:[%s1 + $0x8] sm:$0xff]
    %v59 = vld [vmem:[%s1 + $0x10] sm:$0xff]
    %v60 = vld [vmem:[%s1 + $0x18] sm:$0xff]
    %v61 = vld [vmem:[%s1 + $0x20] sm:$0xff]
    %v62 = vld [vmem:[%s1 + $0x28] sm:$0xff]
    %v63 = vld [vmem:[%s1 + $0x30] sm:$0xff]
    %v64 = vld [vmem:[%s1 + $0x38] sm:$0xff]
    %v65 = vld [vmem:[%s1 + $0x40] sm:$0xff]
    %v66 = vld [vmem:[%s1 + $0x48] sm:$0xff]
    %v67 = vld [vmem:[%s1 + $0x50] sm:$0xff]
    %v68 = vld [vmem:[%s1 + $0x58] sm:$0xff]
    %v69 = vld [vmem:[%s1 + $0x60] sm:$0xff]
    %v70 = vld [vmem:[%s1 + $0x68] sm:$0xff]
    %v71 = vld [vmem:[%s1 + $0x70] sm:$0xff]
    %v72 = vld [vmem:[%s1 + $0x78] sm:$0xff]
    %v73 = vld [vmem:[%s1 + $0x80] sm:$0xff]
    %v74 = vld [vmem:[%s1 + $0x88] sm:$0xff]
    %v75 = vld [vmem:[%s1 + $0x90] sm:$0xff]
    %v76 = vld [vmem:[%s1 + $0x98] sm:$0xff]
    %v77 = vld [vmem:[%s1 + $0xa0] sm:$0xff]
    %v78 = vld [vmem:[%s1 + $0xa8] sm:$0xff]
    %v79 = vld [vmem:[%s1 + $0xb0] sm:$0xff]
    %v80 = vld [vmem:[%s1 + $0xb8] sm:$0xff]
    %v81 = vld [vmem:[%s1 + $0xc0] sm:$0xff]
    %v82 = vld [vmem:[%s1 + $0xc8] sm:$0xff]
    %v83 = vld [vmem:[%s1 + $0xd0] sm:$0xff]
    %v84 = vld [vmem:[%s1 + $0xd8] sm:$0xff]
    %v85 = vld [vmem:[%s1 + $0xe0] sm:$0xff]
    %v86 = vld [vmem:[%s1 + $0xe8] sm:$0xff]
    %v87 = vld [vmem:[%s1 + $0xf0] sm:$0xff]
    %v88 = vld [vmem:[%s1 + $0xf8] sm:$0xff]
    %v89 = vld [vmem:[%s1 + $0x100] sm:$0xff]
    %v90 = vld [vmem:[%s1 + $0x108] sm:$0xff]
    %v91 = vld [vmem:[%s1 + $0x110] sm:$0xff]
    %v92 = vld [vmem:[%s1 + $0x118] sm:$0xff]
    %v93 = vld [vmem:[%s1 + $0x120] sm:$0xff]
    %v94 = vld [vmem:[%s1 + $0x128] sm:$0xff]
    %v95 = vld [vmem:[%s1 + $0x130] sm:$0xff]
    %v96 = vld [vmem:[%s1 + $0x138] sm:$0xff]
    %v97 = vld [vmem:[%s1 + $0x140] sm:$0xff]
    %v98 = vld [vmem:[%s1 + $0x148] sm:$0xff]
    %v99 = vld [vmem:[%s1 + $0x150] sm:$0xff]
    %v100 = vld [vmem:[%s1 + $0x158] sm:$0xff]
    %v101 = vld [vmem:[%s1 + $0x160] sm:$0xff]
    %v102 = vld [vmem:[%s1 + $0x168] sm:$0xff]
    %v103 = vld [vmem:[%s1 + $0x170] sm:$0xff]
    %v104 = vld [vmem:[%s1 + $0x178] sm:$0xff]
    %v105 = vld [vmem:[%s1 + $0x180] sm:$0xff]
    %v106 = vld [vmem:[%s1 + $0x188] sm:$0xff]
    %v107 = vld [vmem:[%s1 + $0x190] sm:$0xff]
    %v108 = vld [vmem:[%s1 + $0x198] sm:$0xff]
    %v109 = vld [vmem:[%s1 + $0x1a0] sm:$0xff]
    %v110 = vld [vmem:[%s1 + $0x1a8] sm:$0xff]
    %v111 = vld [vmem:[%s1 + $0x1b0] sm:$0xff]
    %v112 = vld [vmem:[%s1 + $0x1b8] sm:$0xff]
    %v113 = vld [vmem:[%s1 + $0x1c0] sm:$0xff]
    %v114 = vld [vmem:[%s1 + $0x1c8] sm:$0xff]
    %v115 = vld [vmem:[%s1 + $0x1d0] sm:$0xff]
    %v116 = vld [vmem:[%s1 + $0x1d8] sm:$0xff]
    %v117 = vld [vmem:[%s1 + $0x1e0] sm:$0xff]
    %v118 = vld [vmem:[%s1 + $0x1e8] sm:$0xff]
    %v119 = vld [vmem:[%s1 + $0x1f0] sm:$0xff]
    %v120 = vld [vmem:[%s1 + $0x1f8] sm:$0xff]
    %v121 = vld [vmem:[%s1 + $0x200] sm:$0xff]
    %v122 = vld [vmem:[%s1 + $0x208] sm:$0xff]
    %v123 = vld [vmem:[%s1 + $0x210] sm:$0xff]
    %v124 = vld [vmem:[%s1 + $0x218] sm:$0xff]
    %v125 = vld [vmem:[%s1 + $0x220] sm:$0xff]
    %v126 = vld [vmem:[%s1 + $0x228] sm:$0xff]
    %v127 = vld [vmem:[%s1 + $0x230] sm:$0xff]
    %v128 = vld [vmem:[%s1 + $0x238] sm:$0xff]
    %v129 = vld [vmem:[%s1 + $0x240] sm:$0xff]
    %v130 = vld [vmem:[%s1 + $0x248] sm:$0xff]
    %v131 = vld [vmem:[%s1 + $0x250] sm:$0xff]
    %v132 = vld [vmem:[%s1 + $0x258] sm:$0xff]
    %v133 = vld [vmem:[%s1 + $0x260] sm:$0xff]
    %v134 = vld [vmem:[%s1 + $0x268] sm:$0xff]
    %v135 = vld [vmem:[%s1 + $0x270] sm:$0xff]
    %v136 = vld [vmem:[%s1 + $0x278] sm:$0xff]
    %v137 = vld [vmem:[%s1 + $0x280] sm:$0xff]
    %v138 = vld [vmem:[%s1 + $0x288] sm:$0xff]
    %v139 = vld [vmem:[%s1 + $0x290] sm:$0xff]
    %v140 = vld [vmem:[%s1 + $0x298] sm:$0xff]
    %v141 = vld [vmem:[%s1 + $0x2a0] sm:$0xff]
    %v142 = vld [vmem:[%s1 + $0x2a8] sm:$0xff]
    %v143 = vld [vmem:[%s1 + $0x2b0] sm:$0xff]
    %v144 = vld [vmem:[%s1 + $0x2b8] sm:$0xff]
    %v145 = vld [vmem:[%s1 + $0x2c0] sm:$0xff]
    %v146 = vld [vmem:[%s1 + $0x2c8] sm:$0xff]
    %v147 = vld [vmem:[%s1 + $0x2d0] sm:$0xff]
    %v148 = vld [vmem:[%s1 + $0x2d8] sm:$0xff]
    %v149 = vld [vmem:[%s1 + $0x2e0] sm:$0xff]
    %v150 = vld [vmem:[%s1 + $0x2e8] sm:$0xff]
    %v151 = vld [vmem:[%s1 + $0x2f0] sm:$0xff]
    %v152 = vld [vmem:[%s1 + $0x2f8] sm:$0xff]
    %v153 = vld [vmem:[%s2] sm:$0x3f]
    %v155 = vlaneseq
    %v156 = vshrl.u32 %v155, 7
    %v157 = vsub.s32 0, %v156
    %v158 = vrot.slane %v153, %v157
    %v159 = vlaneseq
    %v160 = vshrl.u32 %v159, 7
    %v161 = vsub.s32 1, %v160
    %v162 = vrot.slane %v153, %v161
    %v163 = vlaneseq
    %v164 = vshrl.u32 %v163, 7
    %v165 = vsub.s32 2, %v164
    %v166 = vrot.slane %v153, %v165
    %v167 = vlaneseq
    %v168 = vshrl.u32 %v167, 7
    %v169 = vsub.s32 3, %v168
    %v170 = vrot.slane %v153, %v169
    %v171 = vlaneseq
    %v172 = vshrl.u32 %v171, 7
    %v173 = vsub.s32 4, %v172
    %v174 = vrot.slane %v153, %v173
    %v175 = vlaneseq
    %v176 = vshrl.u32 %v175, 7
    %v177 = vsub.s32 5, %v176
    %v178 = vrot.slane %v153, %v177
    %v281 = vunpack.c.l.b16 %v57
    %v282 = vunpack.c.h.b16 %v57
    %v283 = vunpack.c.l.b16 %v58
    %v284 = vunpack.c.h.b16 %v58
    %v285 = vunpack.c.l.b16 %v59
    %v286 = vunpack.c.h.b16 %v59
    %v287 = vunpack.c.l.b16 %v60
    %v288 = vunpack.c.h.b16 %v60
    %v289 = vunpack.c.l.b16 %v61
    %v290 = vunpack.c.h.b16 %v61
    %v291 = vunpack.c.l.b16 %v62
    %v292 = vunpack.c.h.b16 %v62
    %v293 = vunpack.c.l.b16 %v63
    %v294 = vunpack.c.h.b16 %v63
    %v295 = vunpack.c.l.b16 %v64
    %v296 = vunpack.c.h.b16 %v64
    %v297 = vunpack.c.l.b16 %v65
    %v298 = vunpack.c.h.b16 %v65
    %v299 = vunpack.c.l.b16 %v66
    %v300 = vunpack.c.h.b16 %v66
    %v301 = vunpack.c.l.b16 %v67
    %v302 = vunpack.c.h.b16 %v67
    %v303 = vunpack.c.l.b16 %v68
    %v304 = vunpack.c.h.b16 %v68
    %v305 = vunpack.c.l.b16 %v69
    %v306 = vunpack.c.h.b16 %v69
    %v307 = vunpack.c.l.b16 %v70
    %v308 = vunpack.c.h.b16 %v70
    %v309 = vunpack.c.l.b16 %v71
    %v310 = vunpack.c.h.b16 %v71
    %v311 = vunpack.c.l.b16 %v72
    %v312 = vunpack.c.h.b16 %v72
    %v313 = vunpack.c.l.b16 %v73
    %v314 = vunpack.c.h.b16 %v73
    %v315 = vunpack.c.l.b16 %v74
    %v316 = vunpack.c.h.b16 %v74
    %v317 = vunpack.c.l.b16 %v75
    %v318 = vunpack.c.h.b16 %v75
    %v319 = vunpack.c.l.b16 %v76
    %v320 = vunpack.c.h.b16 %v76
    %v321 = vunpack.c.l.b16 %v77
    %v322 = vunpack.c.h.b16 %v77
    %v323 = vunpack.c.l.b16 %v78
    %v324 = vunpack.c.h.b16 %v78
    %v325 = vunpack.c.l.b16 %v79
    %v326 = vunpack.c.h.b16 %v79
    %v327 = vunpack.c.l.b16 %v80
    %v328 = vunpack.c.h.b16 %v80
    %v329 = vunpack.c.l.b16 %v81
    %v330 = vunpack.c.h.b16 %v81
    %v331 = vunpack.c.l.b16 %v82
    %v332 = vunpack.c.h.b16 %v82
    %v333 = vunpack.c.l.b16 %v83
    %v334 = vunpack.c.h.b16 %v83
    %v335 = vunpack.c.l.b16 %v84
    %v336 = vunpack.c.h.b16 %v84
    %v337 = vunpack.c.l.b16 %v85
    %v338 = vunpack.c.h.b16 %v85
    %v339 = vunpack.c.l.b16 %v86
    %v340 = vunpack.c.h.b16 %v86
    %v341 = vunpack.c.l.b16 %v87
    %v342 = vunpack.c.h.b16 %v87
    %v343 = vunpack.c.l.b16 %v88
    %v344 = vunpack.c.h.b16 %v88
    %v345 = vunpack.c.l.b16 %v89
    %v346 = vunpack.c.h.b16 %v89
    %v347 = vunpack.c.l.b16 %v90
    %v348 = vunpack.c.h.b16 %v90
    %v349 = vunpack.c.l.b16 %v91
    %v350 = vunpack.c.h.b16 %v91
    %v351 = vunpack.c.l.b16 %v92
    %v352 = vunpack.c.h.b16 %v92
    %v353 = vunpack.c.l.b16 %v93
    %v354 = vunpack.c.h.b16 %v93
    %v355 = vunpack.c.l.b16 %v94
    %v356 = vunpack.c.h.b16 %v94
    %v357 = vunpack.c.l.b16 %v95
    %v358 = vunpack.c.h.b16 %v95
    %v359 = vunpack.c.l.b16 %v96
    %v360 = vunpack.c.h.b16 %v96
    %v361 = vunpack.c.l.b16 %v97
    %v362 = vunpack.c.h.b16 %v97
    %v363 = vunpack.c.l.b16 %v98
    %v364 = vunpack.c.h.b16 %v98
    %v365 = vunpack.c.l.b16 %v99
    %v366 = vunpack.c.h.b16 %v99
    %v367 = vunpack.c.l.b16 %v100
    %v368 = vunpack.c.h.b16 %v100
    %v369 = vunpack.c.l.b16 %v101
    %v370 = vunpack.c.h.b16 %v101
    %v371 = vunpack.c.l.b16 %v102
    %v372 = vunpack.c.h.b16 %v102
    %v373 = vunpack.c.l.b16 %v103
    %v374 = vunpack.c.h.b16 %v103
    %v375 = vunpack.c.l.b16 %v104
    %v376 = vunpack.c.h.b16 %v104
    %v377 = vunpack.c.l.b16 %v105
    %v378 = vunpack.c.h.b16 %v105
    %v379 = vunpack.c.l.b16 %v106
    %v380 = vunpack.c.h.b16 %v106
    %v381 = vunpack.c.l.b16 %v107
    %v382 = vunpack.c.h.b16 %v107
    %v383 = vunpack.c.l.b16 %v108
    %v384 = vunpack.c.h.b16 %v108
    %v385 = vunpack.c.l.b16 %v109
    %v386 = vunpack.c.h.b16 %v109
    %v387 = vunpack.c.l.b16 %v110
    %v388 = vunpack.c.h.b16 %v110
    %v389 = vunpack.c.l.b16 %v111
    %v390 = vunpack.c.h.b16 %v111
    %v391 = vunpack.c.l.b16 %v112
    %v392 = vunpack.c.h.b16 %v112
    %v393 = vunpack.c.l.b16 %v113
    %v394 = vunpack.c.h.b16 %v113
    %v395 = vunpack.c.l.b16 %v114
    %v396 = vunpack.c.h.b16 %v114
    %v397 = vunpack.c.l.b16 %v115
    %v398 = vunpack.c.h.b16 %v115
    %v399 = vunpack.c.l.b16 %v116
    %v400 = vunpack.c.h.b16 %v116
    %v401 = vunpack.c.l.b16 %v117
    %v402 = vunpack.c.h.b16 %v117
    %v403 = vunpack.c.l.b16 %v118
    %v404 = vunpack.c.h.b16 %v118
    %v405 = vunpack.c.l.b16 %v119
    %v406 = vunpack.c.h.b16 %v119
    %v407 = vunpack.c.l.b16 %v120
    %v408 = vunpack.c.h.b16 %v120
    %v409 = vunpack.c.l.b16 %v121
    %v410 = vunpack.c.h.b16 %v121
    %v411 = vunpack.c.l.b16 %v122
    %v412 = vunpack.c.h.b16 %v122
    %v413 = vunpack.c.l.b16 %v123
    %v414 = vunpack.c.h.b16 %v123
    %v415 = vunpack.c.l.b16 %v124
    %v416 = vunpack.c.h.b16 %v124
    %v417 = vunpack.c.l.b16 %v125
    %v418 = vunpack.c.h.b16 %v125
    %v419 = vunpack.c.l.b16 %v126
    %v420 = vunpack.c.h.b16 %v126
    %v421 = vunpack.c.l.b16 %v127
    %v422 = vunpack.c.h.b16 %v127
    %v423 = vunpack.c.l.b16 %v128
    %v424 = vunpack.c.h.b16 %v128
    %v425 = vunpack.c.l.b16 %v129
    %v426 = vunpack.c.h.b16 %v129
    %v427 = vunpack.c.l.b16 %v130
    %v428 = vunpack.c.h.b16 %v130
    %v429 = vunpack.c.l.b16 %v131
    %v430 = vunpack.c.h.b16 %v131
    %v431 = vunpack.c.l.b16 %v132
    %v432 = vunpack.c.h.b16 %v132
    %v433 = vunpack.c.l.b16 %v133
    %v434 = vunpack.c.h.b16 %v133
    %v435 = vunpack.c.l.b16 %v134
    %v436 = vunpack.c.h.b16 %v134
    %v437 = vunpack.c.l.b16 %v135
    %v438 = vunpack.c.h.b16 %v135
    %v439 = vunpack.c.l.b16 %v136
    %v440 = vunpack.c.h.b16 %v136
    %v441 = vunpack.c.l.b16 %v137
    %v442 = vunpack.c.h.b16 %v137
    %v443 = vunpack.c.l.b16 %v138
    %v444 = vunpack.c.h.b16 %v138
    %v445 = vunpack.c.l.b16 %v139
    %v446 = vunpack.c.h.b16 %v139
    %v447 = vunpack.c.l.b16 %v140
    %v448 = vunpack.c.h.b16 %v140
    %v449 = vunpack.c.l.b16 %v141
    %v450 = vunpack.c.h.b16 %v141
    %v451 = vunpack.c.l.b16 %v142
    %v452 = vunpack.c.h.b16 %v142
    %v453 = vunpack.c.l.b16 %v143
    %v454 = vunpack.c.h.b16 %v143
    %v455 = vunpack.c.l.b16 %v144
    %v456 = vunpack.c.h.b16 %v144
    %v457 = vunpack.c.l.b16 %v145
    %v458 = vunpack.c.h.b16 %v145
    %v459 = vunpack.c.l.b16 %v146
    %v460 = vunpack.c.h.b16 %v146
    %v461 = vunpack.c.l.b16 %v147
    %v462 = vunpack.c.h.b16 %v147
    %v463 = vunpack.c.l.b16 %v148
    %v464 = vunpack.c.h.b16 %v148
    %v465 = vunpack.c.l.b16 %v149
    %v466 = vunpack.c.h.b16 %v149
    %v467 = vunpack.c.l.b16 %v150
    %v468 = vunpack.c.h.b16 %v150
    %v469 = vunpack.c.l.b16 %v151
    %v470 = vunpack.c.h.b16 %v151
    %v471 = vunpack.c.l.b16 %v152
    %v472 = vunpack.c.h.b16 %v152
    %v473 = vpack.c.b16 %v287, %v281
    %v474 = vpack.c.b16 %v288, %v282
    %v475 = vpack.c.b16 %v289, %v283
    %v476 = vpack.c.b16 %v290, %v284
    %v477 = vpack.c.b16 %v291, %v285
    %v478 = vpack.c.b16 %v292, %v286
    %v479 = vpack.c.b16 %v299, %v293
    %v480 = vpack.c.b16 %v300, %v294
    %v481 = vpack.c.b16 %v301, %v295
    %v482 = vpack.c.b16 %v302, %v296
    %v483 = vpack.c.b16 %v303, %v297
    %v484 = vpack.c.b16 %v304, %v298
    %v485 = vpack.c.b16 %v311, %v305
    %v486 = vpack.c.b16 %v312, %v306
    %v487 = vpack.c.b16 %v313, %v307
    %v488 = vpack.c.b16 %v314, %v308
    %v489 = vpack.c.b16 %v315, %v309
    %v490 = vpack.c.b16 %v316, %v310
    %v491 = vpack.c.b16 %v323, %v317
    %v492 = vpack.c.b16 %v324, %v318
    %v493 = vpack.c.b16 %v325, %v319
    %v494 = vpack.c.b16 %v326, %v320
    %v495 = vpack.c.b16 %v327, %v321
    %v496 = vpack.c.b16 %v328, %v322
    %v497 = vpack.c.b16 %v335, %v329
    %v498 = vpack.c.b16 %v336, %v330
    %v499 = vpack.c.b16 %v337, %v331
    %v500 = vpack.c.b16 %v338, %v332
    %v501 = vpack.c.b16 %v339, %v333
    %v502 = vpack.c.b16 %v340, %v334
    %v503 = vpack.c.b16 %v347, %v341
    %v504 = vpack.c.b16 %v348, %v342
    %v505 = vpack.c.b16 %v349, %v343
    %v506 = vpack.c.b16 %v350, %v344
    %v507 = vpack.c.b16 %v351, %v345
    %v508 = vpack.c.b16 %v352, %v346
    %v509 = vpack.c.b16 %v359, %v353
    %v510 = vpack.c.b16 %v360, %v354
    %v511 = vpack.c.b16 %v361, %v355
    %v512 = vpack.c.b16 %v362, %v356
    %v513 = vpack.c.b16 %v363, %v357
    %v514 = vpack.c.b16 %v364, %v358
    %v515 = vpack.c.b16 %v371, %v365
    %v516 = vpack.c.b16 %v372, %v366
    %v517 = vpack.c.b16 %v373, %v367
    %v518 = vpack.c.b16 %v374, %v368
    %v519 = vpack.c.b16 %v375, %v369
    %v520 = vpack.c.b16 %v376, %v370
    %v521 = vpack.c.b16 %v383, %v377
    %v522 = vpack.c.b16 %v384, %v378
    %v523 = vpack.c.b16 %v385, %v379
    %v524 = vpack.c.b16 %v386, %v380
    %v525 = vpack.c.b16 %v387, %v381
    %v526 = vpack.c.b16 %v388, %v382
    %v527 = vpack.c.b16 %v395, %v389
    %v528 = vpack.c.b16 %v396, %v390
    %v529 = vpack.c.b16 %v397, %v391
    %v530 = vpack.c.b16 %v398, %v392
    %v531 = vpack.c.b16 %v399, %v393
    %v532 = vpack.c.b16 %v400, %v394
    %v533 = vpack.c.b16 %v407, %v401
    %v534 = vpack.c.b16 %v408, %v402
    %v535 = vpack.c.b16 %v409, %v403
    %v536 = vpack.c.b16 %v410, %v404
    %v537 = vpack.c.b16 %v411, %v405
    %v538 = vpack.c.b16 %v412, %v406
    %v539 = vpack.c.b16 %v419, %v413
    %v540 = vpack.c.b16 %v420, %v414
    %v541 = vpack.c.b16 %v421, %v415
    %v542 = vpack.c.b16 %v422, %v416
    %v543 = vpack.c.b16 %v423, %v417
    %v544 = vpack.c.b16 %v424, %v418
    %v545 = vpack.c.b16 %v431, %v425
    %v546 = vpack.c.b16 %v432, %v426
    %v547 = vpack.c.b16 %v433, %v427
    %v548 = vpack.c.b16 %v434, %v428
    %v549 = vpack.c.b16 %v435, %v429
    %v550 = vpack.c.b16 %v436, %v430
    %v551 = vpack.c.b16 %v443, %v437
    %v552 = vpack.c.b16 %v444, %v438
    %v553 = vpack.c.b16 %v445, %v439
    %v554 = vpack.c.b16 %v446, %v440
    %v555 = vpack.c.b16 %v447, %v441
    %v556 = vpack.c.b16 %v448, %v442
    %v557 = vpack.c.b16 %v455, %v449
    %v558 = vpack.c.b16 %v456, %v450
    %v559 = vpack.c.b16 %v457, %v451
    %v560 = vpack.c.b16 %v458, %v452
    %v561 = vpack.c.b16 %v459, %v453
    %v562 = vpack.c.b16 %v460, %v454
    %v563 = vpack.c.b16 %v467, %v461
    %v564 = vpack.c.b16 %v468, %v462
    %v565 = vpack.c.b16 %v469, %v463
    %v566 = vpack.c.b16 %v470, %v464
    %v567 = vpack.c.b16 %v471, %v465
    %v568 = vpack.c.b16 %v472, %v466
    %665 = vmatprep.subr.bf16.mxu0 %v474
    %666 = vmatpush1.bf16.msra.mxu0 %v473
    %667 = vmatprep.subr.bf16.mxu0 %v480
    %668 = vmatpush1.bf16.msra.mxu0 %v479
    %669 = vmatprep.subr.bf16.mxu0 %v486
    %670 = vmatpush1.bf16.msra.mxu0 %v485
    %671 = vmatprep.subr.bf16.mxu0 %v492
    %672 = vmatpush1.bf16.msra.mxu0 %v491
    %673 = vmatprep.subr.bf16.mxu0 %v498
    %674 = vmatpush1.bf16.msra.mxu0 %v497
    %675 = vmatprep.subr.bf16.mxu0 %v504
    %676 = vmatpush1.bf16.msra.mxu0 %v503
    %677 = vmatprep.subr.bf16.mxu0 %v510
    %678 = vmatpush1.bf16.msra.mxu0 %v509
    %679 = vmatprep.subr.bf16.mxu0 %v516
    %680 = vmatpush1.bf16.msra.mxu0 %v515
    %681 = vmatprep.subr.bf16.mxu0 %v522
    %682 = vmatpush1.bf16.msra.mxu0 %v521
    %683 = vmatprep.subr.bf16.mxu0 %v528
    %684 = vmatpush1.bf16.msra.mxu0 %v527
    %685 = vmatprep.subr.bf16.mxu0 %v534
    %686 = vmatpush1.bf16.msra.mxu0 %v533
    %687 = vmatprep.subr.bf16.mxu0 %v540
    %688 = vmatpush1.bf16.msra.mxu0 %v539
    %689 = vmatprep.subr.bf16.mxu0 %v546
    %690 = vmatpush1.bf16.msra.mxu0 %v545
    %691 = vmatprep.subr.bf16.mxu0 %v552
    %692 = vmatpush1.bf16.msra.mxu0 %v551
    %693 = vmatprep.subr.bf16.mxu0 %v558
    %694 = vmatpush1.bf16.msra.mxu0 %v557
    %695 = vmatprep.subr.bf16.mxu0 %v564
    %696 = vmatpush1.bf16.msra.mxu0 %v563
    %697 = vmatprep.mubr.bf16.mxu0 %v52
    %698 = vmatmul.mubr.bf16.gmra.mrb[0].mxu0 %v51
    %v699 = vpop.f32.mrb[0].mxu0
    %v700 = vadd.f32 %v158, %v699
    %v701 = vpop.f32.mrb[0].mxu0
    %v702 = vadd.f32 %v162, %v701
    %v703 = vpop.f32.mrb[0].mxu0
    %v704 = vadd.f32 %v158, %v703
    %v705 = vpop.f32.mrb[0].mxu0
    %v706 = vadd.f32 %v162, %v705
    %707 = vmatprep.mubr.bf16.mxu0 %v54
    %708 = vmatmul.mubr.bf16.gmra.mrb[0].mxu0 %v53
    %v709 = vpop.f32.mrb[0].mxu0
    %v710 = vadd.f32 %v158, %v709
    %v711 = vpop.f32.mrb[0].mxu0
    %v712 = vadd.f32 %v162, %v711
    %v713 = vpop.f32.mrb[0].mxu0
    %v714 = vadd.f32 %v158, %v713
    %v715 = vpop.f32.mrb[0].mxu0
    %v716 = vadd.f32 %v162, %v715
    %717 = vmatprep.mubr.bf16.mxu0 %v56
    %718 = vmatmul.mubr.bf16.gmra.mrb[0].mxu0 %v55
    %v719 = vpop.f32.mrb[0].mxu0
    %v720 = vadd.f32 %v158, %v719
    %v721 = vpop.f32.mrb[0].mxu0
    %v722 = vadd.f32 %v162, %v721
    %v723 = vpop.f32.mrb[0].mxu0
    %v724 = vadd.f32 %v158, %v723
    %v725 = vpop.f32.mrb[0].mxu0
    %v726 = vadd.f32 %v162, %v725
    %727 = vdwg.mxu0
    %728 = vmatprep.subr.bf16.mxu0 %v476
    %729 = vmatpush1.bf16.msra.mxu0 %v475
    %730 = vmatprep.subr.bf16.mxu0 %v482
    %731 = vmatpush1.bf16.msra.mxu0 %v481
    %732 = vmatprep.subr.bf16.mxu0 %v488
    %733 = vmatpush1.bf16.msra.mxu0 %v487
    %734 = vmatprep.subr.bf16.mxu0 %v494
    %735 = vmatpush1.bf16.msra.mxu0 %v493
    %736 = vmatprep.subr.bf16.mxu0 %v500
    %737 = vmatpush1.bf16.msra.mxu0 %v499
    %738 = vmatprep.subr.bf16.mxu0 %v506
    %739 = vmatpush1.bf16.msra.mxu0 %v505
    %740 = vmatprep.subr.bf16.mxu0 %v512
    %741 = vmatpush1.bf16.msra.mxu0 %v511
    %742 = vmatprep.subr.bf16.mxu0 %v518
    %743 = vmatpush1.bf16.msra.mxu0 %v517
    %744 = vmatprep.subr.bf16.mxu0 %v524
    %745 = vmatpush1.bf16.msra.mxu0 %v523
    %746 = vmatprep.subr.bf16.mxu0 %v530
    %747 = vmatpush1.bf16.msra.mxu0 %v529
    %748 = vmatprep.subr.bf16.mxu0 %v536
    %749 = vmatpush1.bf16.msra.mxu0 %v535
    %750 = vmatprep.subr.bf16.mxu0 %v542
    %751 = vmatpush1.bf16.msra.mxu0 %v541
    %752 = vmatprep.subr.bf16.mxu0 %v548
    %753 = vmatpush1.bf16.msra.mxu0 %v547
    %754 = vmatprep.subr.bf16.mxu0 %v554
    %755 = vmatpush1.bf16.msra.mxu0 %v553
    %756 = vmatprep.subr.bf16.mxu0 %v560
    %757 = vmatpush1.bf16.msra.mxu0 %v559
    %758 = vmatprep.subr.bf16.mxu0 %v566
    %759 = vmatpush1.bf16.msra.mxu0 %v565
    %760 = vmatprep.mubr.bf16.mxu0 %v52
    %761 = vmatmul.mubr.bf16.gmra.mrb[0].mxu0 %v51
    %v762 = vpop.f32.mrb[0].mxu0
    %v763 = vadd.f32 %v166, %v762
    %v764 = vpop.f32.mrb[0].mxu0
    %v765 = vadd.f32 %v170, %v764
    %v766 = vpop.f32.mrb[0].mxu0
    %v767 = vadd.f32 %v166, %v766
    %v768 = vpop.f32.mrb[0].mxu0
    %v769 = vadd.f32 %v170, %v768
    %770 = vmatprep.mubr.bf16.mxu0 %v54
    %771 = vmatmul.mubr.bf16.gmra.mrb[0].mxu0 %v53
    %v772 = vpop.f32.mrb[0].mxu0
    %v773 = vadd.f32 %v166, %v772
    %v774 = vpop.f32.mrb[0].mxu0
    %v775 = vadd.f32 %v170, %v774
    %v776 = vpop.f32.mrb[0].mxu0
    %v777 = vadd.f32 %v166, %v776
    %v778 = vpop.f32.mrb[0].mxu0
    %v779 = vadd.f32 %v170, %v778
    %780 = vmatprep.mubr.bf16.mxu0 %v56
    %781 = vmatmul.mubr.bf16.gmra.mrb[0].mxu0 %v55
    %v782 = vpop.f32.mrb[0].mxu0
    %v783 = vadd.f32 %v166, %v782
    %v784 = vpop.f32.mrb[0].mxu0
    %v785 = vadd.f32 %v170, %v784
    %v786 = vpop.f32.mrb[0].mxu0
    %v787 = vadd.f32 %v166, %v786
    %v788 = vpop.f32.mrb[0].mxu0
    %v789 = vadd.f32 %v170, %v788
    %790 = vdwg.mxu0
    %791 = vmatprep.subr.bf16.mxu0 %v478
    %792 = vmatpush1.bf16.msra.mxu0 %v477
    %793 = vmatprep.subr.bf16.mxu0 %v484
    %794 = vmatpush1.bf16.msra.mxu0 %v483
    %795 = vmatprep.subr.bf16.mxu0 %v490
    %796 = vmatpush1.bf16.msra.mxu0 %v489
    %797 = vmatprep.subr.bf16.mxu0 %v496
    %798 = vmatpush1.bf16.msra.mxu0 %v495
    %799 = vmatprep.subr.bf16.mxu0 %v502
    %800 = vmatpush1.bf16.msra.mxu0 %v501
    %801 = vmatprep.subr.bf16.mxu0 %v508
    %802 = vmatpush1.bf16.msra.mxu0 %v507
    %803 = vmatprep.subr.bf16.mxu0 %v514
    %804 = vmatpush1.bf16.msra.mxu0 %v513
    %805 = vmatprep.subr.bf16.mxu0 %v520
    %806 = vmatpush1.bf16.msra.mxu0 %v519
    %807 = vmatprep.subr.bf16.mxu0 %v526
    %808 = vmatpush1.bf16.msra.mxu0 %v525
    %809 = vmatprep.subr.bf16.mxu0 %v532
    %810 = vmatpush1.bf16.msra.mxu0 %v531
    %811 = vmatprep.subr.bf16.mxu0 %v538
    %812 = vmatpush1.bf16.msra.mxu0 %v537
    %813 = vmatprep.subr.bf16.mxu0 %v544
    %814 = vmatpush1.bf16.msra.mxu0 %v543
    %815 = vmatprep.subr.bf16.mxu0 %v550
    %816 = vmatpush1.bf16.msra.mxu0 %v549
    %817 = vmatprep.subr.bf16.mxu0 %v556
    %818 = vmatpush1.bf16.msra.mxu0 %v555
    %819 = vmatprep.subr.bf16.mxu0 %v562
    %820 = vmatpush1.bf16.msra.mxu0 %v561
    %821 = vmatprep.subr.bf16.mxu0 %v568
    %822 = vmatpush1.bf16.msra.mxu0 %v567
    %823 = vmatprep.mubr.bf16.mxu0 %v52
    %824 = vmatmul.mubr.bf16.gmra.mrb[0].mxu0 %v51
    %v825 = vpop.f32.mrb[0].mxu0
    %v826 = vadd.f32 %v174, %v825
    %v827 = vpop.f32.mrb[0].mxu0
    %v828 = vadd.f32 %v178, %v827
    %v829 = vpop.f32.mrb[0].mxu0
    %v830 = vadd.f32 %v174, %v829
    %v831 = vpop.f32.mrb[0].mxu0
    %v832 = vadd.f32 %v178, %v831
    %833 = vmatprep.mubr.bf16.mxu0 %v54
    %834 = vmatmul.mubr.bf16.gmra.mrb[0].mxu0 %v53
    %v835 = vpop.f32.mrb[0].mxu0
    %v836 = vadd.f32 %v174, %v835
    %v837 = vpop.f32.mrb[0].mxu0
    %v838 = vadd.f32 %v178, %v837
    %v839 = vpop.f32.mrb[0].mxu0
    %v840 = vadd.f32 %v174, %v839
    %v841 = vpop.f32.mrb[0].mxu0
    %v842 = vadd.f32 %v178, %v841
    %843 = vmatprep.mubr.bf16.mxu0 %v56
    %844 = vmatmul.mubr.bf16.gmra.mrb[0].mxu0 %v55
    %v845 = vpop.f32.mrb[0].mxu0
    %v846 = vadd.f32 %v174, %v845
    %v847 = vpop.f32.mrb[0].mxu0
    %v848 = vadd.f32 %v178, %v847
    %v849 = vpop.f32.mrb[0].mxu0
    %v850 = vadd.f32 %v174, %v849
    %v851 = vpop.f32.mrb[0].mxu0
    %v852 = vadd.f32 %v178, %v851
    %853 = vdwg.mxu0
    %854 = vst [vmem:[#allocation2] sm:$0xff] %v700
    %855 = vst [vmem:[#allocation2 + $0x8] sm:$0xff] %v702
    %856 = vst [vmem:[#allocation2 + $0x10] sm:$0xff] %v763
    %857 = vst [vmem:[#allocation2 + $0x18] sm:$0xff] %v704
    %858 = vst [vmem:[#allocation2 + $0x20] sm:$0xff] %v706
    %859 = vst [vmem:[#allocation2 + $0x28] sm:$0xff] %v767
    %860 = vst [vmem:[#allocation2 + $0x30] sm:$0xff] %v710
    %861 = vst [vmem:[#allocation2 + $0x38] sm:$0xff] %v712
    %862 = vst [vmem:[#allocation2 + $0x40] sm:$0xff] %v773
    %863 = vst [vmem:[#allocation2 + $0x48] sm:$0xff] %v714
    %864 = vst [vmem:[#allocation2 + $0x50] sm:$0xff] %v716
    %865 = vst [vmem:[#allocation2 + $0x58] sm:$0xff] %v777
    %866 = vst [vmem:[#allocation2 + $0x60] sm:$0xff] %v720
    %867 = vst [vmem:[#allocation2 + $0x68] sm:$0xff] %v722
    %868 = vst [vmem:[#allocation2 + $0x70] sm:$0xff] %v783
    %869 = vst [vmem:[#allocation2 + $0x78] sm:$0xff] %v724
    %870 = vst [vmem:[#allocation2 + $0x80] sm:$0xff] %v726
    %871 = vst [vmem:[#allocation2 + $0x88] sm:$0xff] %v787
    %872 = vst [vmem:[#allocation3] sm:$0xff] %v765
    %873 = vst [vmem:[#allocation3 + $0x8] sm:$0xff] %v826
    %874 = vst [vmem:[#allocation3 + $0x10] sm:$0xff] %v828
    %875 = vst [vmem:[#allocation3 + $0x18] sm:$0xff] %v769
    %876 = vst [vmem:[#allocation3 + $0x20] sm:$0xff] %v830
    %877 = vst [vmem:[#allocation3 + $0x28] sm:$0xff] %v832
    %878 = vst [vmem:[#allocation3 + $0x30] sm:$0xff] %v775
    %879 = vst [vmem:[#allocation3 + $0x38] sm:$0xff] %v836
    %880 = vst [vmem:[#allocation3 + $0x40] sm:$0xff] %v838
    %881 = vst [vmem:[#allocation3 + $0x48] sm:$0xff] %v779
    %882 = vst [vmem:[#allocation3 + $0x50] sm:$0xff] %v840
    %883 = vst [vmem:[#allocation3 + $0x58] sm:$0xff] %v842
    %884 = vst [vmem:[#allocation3 + $0x60] sm:$0xff] %v785
    %885 = vst [vmem:[#allocation3 + $0x68] sm:$0xff] %v846
    %886 = vst [vmem:[#allocation3 + $0x70] sm:$0xff] %v848
    %887 = vst [vmem:[#allocation3 + $0x78] sm:$0xff] %v789
    %888 = vst [vmem:[#allocation3 + $0x80] sm:$0xff] %v850
    %889 = vst [vmem:[#allocation3 + $0x88] sm:$0xff] %v852
    %v890 = vld [vmem:[%s4] sm:$0x7]
    %v892 = vlaneseq
    %v893 = vshrl.u32 %v892, 7
    %v894 = vsub.s32 0, %v893
    %v895 = vrot.slane %v890, %v894
    %v896 = vlaneseq
    %v897 = vshrl.u32 %v896, 7
    %v898 = vsub.s32 1, %v897
    %v899 = vrot.slane %v890, %v898
    %v900 = vlaneseq
    %v901 = vshrl.u32 %v900, 7
    %v902 = vsub.s32 2, %v901
    %v903 = vrot.slane %v890, %v902
    %v907 = vld [vmem:[#allocation4] sm:$0x7]
    %v909 = vlaneseq
    %v910 = vshrl.u32 %v909, 7
    %v911 = vsub.s32 0, %v910
    %v912 = vrot.slane %v907, %v911
    %v913 = vlaneseq
    %v914 = vshrl.u32 %v913, 7
    %v915 = vsub.s32 1, %v914
    %v916 = vrot.slane %v907, %v915
    %v917 = vlaneseq
    %v918 = vshrl.u32 %v917, 7
    %v919 = vsub.s32 2, %v918
    %v920 = vrot.slane %v907, %v919
    %v924 = vld [vmem:[%s3] sm:$0xff]
    %v925 = vld [vmem:[%s3 + $0x8] sm:$0xf]
    %v926 = vld [vmem:[%s3 + $0xc] sm:$0xff]
    %v927 = vld [vmem:[%s3 + $0x14] sm:$0xf]
    %v928 = vld [vmem:[%s3 + $0x18] sm:$0xff]
    %v929 = vld [vmem:[%s3 + $0x20] sm:$0xf]
    %v930 = vld [vmem:[%s3 + $0x24] sm:$0xff]
    %v931 = vld [vmem:[%s3 + $0x2c] sm:$0xf]
    %v932 = vld [vmem:[%s3 + $0x30] sm:$0xff]
    %v933 = vld [vmem:[%s3 + $0x38] sm:$0xf]
    %v934 = vld [vmem:[%s3 + $0x3c] sm:$0xff]
    %v935 = vld [vmem:[%s3 + $0x44] sm:$0xf]
    %v936 = vld [vmem:[%s3 + $0x48] sm:$0xff]
    %v937 = vld [vmem:[%s3 + $0x50] sm:$0xf]
    %v938 = vld [vmem:[%s3 + $0x54] sm:$0xff]
    %v939 = vld [vmem:[%s3 + $0x5c] sm:$0xf]
    %v940 = vld [vmem:[%s3 + $0x60] sm:$0xff]
    %v941 = vld [vmem:[%s3 + $0x68] sm:$0xf]
    %v942 = vld [vmem:[%s3 + $0x6c] sm:$0xff]
    %v943 = vld [vmem:[%s3 + $0x74] sm:$0xf]
    %v944 = vld [vmem:[%s3 + $0x78] sm:$0xff]
    %v945 = vld [vmem:[%s3 + $0x80] sm:$0xf]
    %v946 = vld [vmem:[%s3 + $0x84] sm:$0xff]
    %v947 = vld [vmem:[%s3 + $0x8c] sm:$0xf]
    %v948 = vld [vmem:[%s3 + $0x90] sm:$0xff]
    %v949 = vld [vmem:[%s3 + $0x98] sm:$0xf]
    %v950 = vld [vmem:[%s3 + $0x9c] sm:$0xff]
    %v951 = vld [vmem:[%s3 + $0xa4] sm:$0xf]
    %v952 = vld [vmem:[%s3 + $0xa8] sm:$0xff]
    %v953 = vld [vmem:[%s3 + $0xb0] sm:$0xf]
    %v954 = vld [vmem:[%s3 + $0xb4] sm:$0xff]
    %v955 = vld [vmem:[%s3 + $0xbc] sm:$0xf]
    %v956 = vld [vmem:[%s5] sm:$0xff]
    %v957 = vld [vmem:[%s5 + $0x8] sm:$0xf]
    %v958 = vld [vmem:[%s5 + $0xc] sm:$0xff]
    %v959 = vld [vmem:[%s5 + $0x14] sm:$0xf]
    %v960 = vld [vmem:[%s5 + $0x18] sm:$0xff]
    %v961 = vld [vmem:[%s5 + $0x20] sm:$0xf]
    %v962 = vld [vmem:[%s5 + $0x24] sm:$0xff]
    %v963 = vld [vmem:[%s5 + $0x2c] sm:$0xf]
    %v964 = vld [vmem:[%s5 + $0x30] sm:$0xff]
    %v965 = vld [vmem:[%s5 + $0x38] sm:$0xf]
    %v966 = vld [vmem:[%s5 + $0x3c] sm:$0xff]
    %v967 = vld [vmem:[%s5 + $0x44] sm:$0xf]
    %v968 = vld [vmem:[%s5 + $0x48] sm:$0xff]
    %v969 = vld [vmem:[%s5 + $0x50] sm:$0xf]
    %v970 = vld [vmem:[%s5 + $0x54] sm:$0xff]
    %v971 = vld [vmem:[%s5 + $0x5c] sm:$0xf]
    %v972 = vld [vmem:[%s5 + $0x60] sm:$0xff]
    %v973 = vld [vmem:[%s5 + $0x68] sm:$0xf]
    %v974 = vld [vmem:[%s5 + $0x6c] sm:$0xff]
    %v975 = vld [vmem:[%s5 + $0x74] sm:$0xf]
    %v976 = vld [vmem:[%s5 + $0x78] sm:$0xff]
    %v977 = vld [vmem:[%s5 + $0x80] sm:$0xf]
    %v978 = vld [vmem:[%s5 + $0x84] sm:$0xff]
    %v979 = vld [vmem:[%s5 + $0x8c] sm:$0xf]
    %v980 = vld [vmem:[%s5 + $0x90] sm:$0xff]
    %v981 = vld [vmem:[%s5 + $0x98] sm:$0xf]
    %v982 = vld [vmem:[%s5 + $0x9c] sm:$0xff]
    %v983 = vld [vmem:[%s5 + $0xa4] sm:$0xf]
    %v984 = vld [vmem:[%s5 + $0xa8] sm:$0xff]
    %v985 = vld [vmem:[%s5 + $0xb0] sm:$0xf]
    %v986 = vld [vmem:[%s5 + $0xb4] sm:$0xff]
    %v987 = vld [vmem:[%s5 + $0xbc] sm:$0xf]
    %v988 = vld [vmem:[#allocation2] sm:$0xff]
    %v989 = vld [vmem:[#allocation2 + $0x8] sm:$0xff]
    %v990 = vld [vmem:[#allocation2 + $0x10] sm:$0xff]
    %v1023 = vunpack.c.l.b16 %v924
    %v1024 = vunpack.c.h.b16 %v924
    %v1025 = vunpack.c.l.b16 %v925
    %v1026 = vunpack.c.l.b16 %v926
    %v1027 = vunpack.c.h.b16 %v926
    %v1028 = vunpack.c.l.b16 %v927
    %v1029 = vunpack.c.l.b16 %v928
    %v1030 = vunpack.c.h.b16 %v928
    %v1031 = vunpack.c.l.b16 %v929
    %v1032 = vunpack.c.l.b16 %v930
    %v1033 = vunpack.c.h.b16 %v930
    %v1034 = vunpack.c.l.b16 %v931
    %v1035 = vunpack.c.l.b16 %v932
    %v1036 = vunpack.c.h.b16 %v932
    %v1037 = vunpack.c.l.b16 %v933
    %v1038 = vunpack.c.l.b16 %v934
    %v1039 = vunpack.c.h.b16 %v934
    %v1040 = vunpack.c.l.b16 %v935
    %v1041 = vunpack.c.l.b16 %v936
    %v1042 = vunpack.c.h.b16 %v936
    %v1043 = vunpack.c.l.b16 %v937
    %v1044 = vunpack.c.l.b16 %v938
    %v1045 = vunpack.c.h.b16 %v938
    %v1046 = vunpack.c.l.b16 %v939
    %v1047 = vunpack.c.l.b16 %v940
    %v1048 = vunpack.c.h.b16 %v940
    %v1049 = vunpack.c.l.b16 %v941
    %v1050 = vunpack.c.l.b16 %v942
    %v1051 = vunpack.c.h.b16 %v942
    %v1052 = vunpack.c.l.b16 %v943
    %v1053 = vunpack.c.l.b16 %v944
    %v1054 = vunpack.c.h.b16 %v944
    %v1055 = vunpack.c.l.b16 %v945
    %v1056 = vunpack.c.l.b16 %v946
    %v1057 = vunpack.c.h.b16 %v946
    %v1058 = vunpack.c.l.b16 %v947
    %v1059 = vunpack.c.l.b16 %v948
    %v1060 = vunpack.c.h.b16 %v948
    %v1061 = vunpack.c.l.b16 %v949
    %v1062 = vunpack.c.l.b16 %v950
    %v1063 = vunpack.c.h.b16 %v950
    %v1064 = vunpack.c.l.b16 %v951
    %v1065 = vunpack.c.l.b16 %v952
    %v1066 = vunpack.c.h.b16 %v952
    %v1067 = vunpack.c.l.b16 %v953
    %v1068 = vunpack.c.l.b16 %v954
    %v1069 = vunpack.c.h.b16 %v954
    %v1070 = vunpack.c.l.b16 %v955
    %v1071 = vpack.c.b16 %v1026, %v1023
    %v1072 = vpack.c.b16 %v1027, %v1024
    %v1073 = vpack.c.b16 %v1028, %v1025
    %v1074 = vpack.c.b16 %v1032, %v1029
    %v1075 = vpack.c.b16 %v1033, %v1030
    %v1076 = vpack.c.b16 %v1034, %v1031
    %v1077 = vpack.c.b16 %v1038, %v1035
    %v1078 = vpack.c.b16 %v1039, %v1036
    %v1079 = vpack.c.b16 %v1040, %v1037
    %v1080 = vpack.c.b16 %v1044, %v1041
    %v1081 = vpack.c.b16 %v1045, %v1042
    %v1082 = vpack.c.b16 %v1046, %v1043
    %v1083 = vpack.c.b16 %v1050, %v1047
    %v1084 = vpack.c.b16 %v1051, %v1048
    %v1085 = vpack.c.b16 %v1052, %v1049
    %v1086 = vpack.c.b16 %v1056, %v1053
    %v1087 = vpack.c.b16 %v1057, %v1054
    %v1088 = vpack.c.b16 %v1058, %v1055
    %v1089 = vpack.c.b16 %v1062, %v1059
    %v1090 = vpack.c.b16 %v1063, %v1060
    %v1091 = vpack.c.b16 %v1064, %v1061
    %v1092 = vpack.c.b16 %v1068, %v1065
    %v1093 = vpack.c.b16 %v1069, %v1066
    %v1094 = vpack.c.b16 %v1070, %v1067
    %1119 = vmatprep.subr.bf16.mxu0 %v1072
    %1120 = vmatpush1.bf16.msra.mxu0 %v1071
    %1121 = vmatprep.subr.bf16.mxu0 %v1075
    %1122 = vmatpush1.bf16.msra.mxu0 %v1074
    %1123 = vmatprep.subr.bf16.mxu0 %v1078
    %1124 = vmatpush1.bf16.msra.mxu0 %v1077
    %1125 = vmatprep.subr.bf16.mxu0 %v1081
    %1126 = vmatpush1.bf16.msra.mxu0 %v1080
    %1127 = vmatprep.subr.bf16.mxu0 %v1084
    %1128 = vmatpush1.bf16.msra.mxu0 %v1083
    %1129 = vmatprep.subr.bf16.mxu0 %v1087
    %1130 = vmatpush1.bf16.msra.mxu0 %v1086
    %1131 = vmatprep.subr.bf16.mxu0 %v1090
    %1132 = vmatpush1.bf16.msra.mxu0 %v1089
    %1133 = vmatprep.subr.bf16.mxu0 %v1093
    %1134 = vmatpush1.bf16.msra.mxu0 %v1092
    %1135 = vmatprep.subr.bf16.mxu0 0
    %1136 = vmatpush1.bf16.msra.mxu0 0
    %1137 = vmatprep.subr.bf16.mxu0 0
    %1138 = vmatpush1.bf16.msra.mxu0 0
    %1139 = vmatprep.subr.bf16.mxu0 0
    %1140 = vmatpush1.bf16.msra.mxu0 0
    %1141 = vmatprep.subr.bf16.mxu0 0
    %1142 = vmatpush1.bf16.msra.mxu0 0
    %1143 = vmatprep.subr.bf16.mxu0 0
    %1144 = vmatpush1.bf16.msra.mxu0 0
    %1145 = vmatprep.subr.bf16.mxu0 0
    %1146 = vmatpush1.bf16.msra.mxu0 0
    %1147 = vmatprep.subr.bf16.mxu0 0
    %1148 = vmatpush1.bf16.msra.mxu0 0
    %1149 = vmatprep.subr.bf16.mxu0 0
    %1150 = vmatpush1.bf16.msra.mxu0 0
    %1151 = vmatprep.mubr.bf16.mxu0 0
    %1152 = vmatmul.mubr.bf16.gmra.mrb[0].mxu0 0
    %v1153 = vpop.f32.mrb[0].mxu0
    %v1154 = vadd.f32 %v895, %v1153
    %v1155 = vpop.f32.mrb[0].mxu0
    %v1156 = vadd.f32 %v899, %v1155
    %v1157 = vpop.f32.mrb[0].mxu0
    %v1158 = vpop.f32.mrb[0].mxu0
    %1159 = vdwg.mxu0
    %1160 = vmatprep.subr.bf16.mxu0 0
    %1161 = vmatpush1.bf16.msra.mxu0 %v1073
    %1162 = vmatprep.subr.bf16.mxu0 0
    %1163 = vmatpush1.bf16.msra.mxu0 %v1076
    %1164 = vmatprep.subr.bf16.mxu0 0
    %1165 = vmatpush1.bf16.msra.mxu0 %v1079
    %1166 = vmatprep.subr.bf16.mxu0 0
    %1167 = vmatpush1.bf16.msra.mxu0 %v1082
    %1168 = vmatprep.subr.bf16.mxu0 0
    %1169 = vmatpush1.bf16.msra.mxu0 %v1085
    %1170 = vmatprep.subr.bf16.mxu0 0
    %1171 = vmatpush1.bf16.msra.mxu0 %v1088
    %1172 = vmatprep.subr.bf16.mxu0 0
    %1173 = vmatpush1.bf16.msra.mxu0 %v1091
    %1174 = vmatprep.subr.bf16.mxu0 0
    %1175 = vmatpush1.bf16.msra.mxu0 %v1094
    %1176 = vmatprep.subr.bf16.mxu0 0
    %1177 = vmatpush1.bf16.msra.mxu0 0
    %1178 = vmatprep.subr.bf16.mxu0 0
    %1179 = vmatpush1.bf16.msra.mxu0 0
    %1180 = vmatprep.subr.bf16.mxu0 0
    %1181 = vmatpush1.bf16.msra.mxu0 0
    %1182 = vmatprep.subr.bf16.mxu0 0
    %1183 = vmatpush1.bf16.msra.mxu0 0
    %1184 = vmatprep.subr.bf16.mxu0 0
    %1185 = vmatpush1.bf16.msra.mxu0 0
    %1186 = vmatprep.subr.bf16.mxu0 0
    %1187 = vmatpush1.bf16.msra.mxu0 0
    %1188 = vmatprep.subr.bf16.mxu0 0
    %1189 = vmatpush1.bf16.msra.mxu0 0
    %1190 = vmatprep.subr.bf16.mxu0 0
    %1191 = vmatpush1.bf16.msra.mxu0 0
    %1192 = vmatprep.mubr.bf16.mxu0 0
    %1193 = vmatmul.mubr.bf16.gmra.mrb[0].mxu0 0
    %v1194 = vpop.f32.mrb[0].mxu0
    %v1195 = vadd.f32 %v903, %v1194
    %v1196 = vpop.f32.mrb[0].mxu0
    %v1197 = vpop.f32.mrb[0].mxu0
    %v1198 = vpop.f32.mrb[0].mxu0
    %1199 = vdwg.mxu0
    %v1200 = vadd.f32 %v988, %v1154
    %v1201 = vxor.u32 %v1200, 2147483648
    %v1202 = vmul.f32 %v1201, 1.442695
    %v1203 = vpow.pop %v1202
    %v1204 = vadd.f32 %v1203, 1.0
    %v1205 = vrcp.pop %v1204
    %v1206 = vmul.f32 1.0, %v1205
    %v1207 = vadd.f32 %v989, %v1156
    %v1208 = vxor.u32 %v1207, 2147483648
    %v1209 = vmul.f32 %v1208, 1.442695
    %v1210 = vpow.pop %v1209
    %v1211 = vadd.f32 %v1210, 1.0
    %v1212 = vrcp.pop %v1211
    %v1213 = vmul.f32 1.0, %v1212
    %v1214 = vmul.f32 %v1206, %v1195
    %v1215 = vadd.f32 %v990, %v1214
    %v1216 = vtanh.pop %v1215
    %v1217 = vsub.f32 1.0, %v1213
    %v1218 = vmul.f32 %v1217, %v1216
    %v1219 = vmul.f32 %v1213, 0.0
    %v1220 = vadd.f32 %v1218, %v1219
    %1221 = vst [vmem:[%s7] sm:$0xff] %v1220
    %s1222 = scalar_lea.vmem [#allocation3], 120
    %v1223 = vld [vmem:[%s1222] sm:$0xff]
    %v1224 = vld [vmem:[%s1222 + $0x8] sm:$0xff]
    %v1225 = vld [vmem:[%s1222 + $0x10] sm:$0xff]
    %v1258 = vunpack.c.l.b16 %v956
    %v1259 = vunpack.c.h.b16 %v956
    %v1260 = vunpack.c.l.b16 %v957
    %v1261 = vunpack.c.l.b16 %v958
    %v1262 = vunpack.c.h.b16 %v958
    %v1263 = vunpack.c.l.b16 %v959
    %v1264 = vunpack.c.l.b16 %v960
    %v1265 = vunpack.c.h.b16 %v960
    %v1266 = vunpack.c.l.b16 %v961
    %v1267 = vunpack.c.l.b16 %v962
    %v1268 = vunpack.c.h.b16 %v962
    %v1269 = vunpack.c.l.b16 %v963
    %v1270 = vunpack.c.l.b16 %v964
    %v1271 = vunpack.c.h.b16 %v964
    %v1272 = vunpack.c.l.b16 %v965
    %v1273 = vunpack.c.l.b16 %v966
    %v1274 = vunpack.c.h.b16 %v966
    %v1275 = vunpack.c.l.b16 %v967
    %v1276 = vunpack.c.l.b16 %v968
    %v1277 = vunpack.c.h.b16 %v968
    %v1278 = vunpack.c.l.b16 %v969
    %v1279 = vunpack.c.l.b16 %v970
    %v1280 = vunpack.c.h.b16 %v970
    %v1281 = vunpack.c.l.b16 %v971
    %v1282 = vunpack.c.l.b16 %v972
    %v1283 = vunpack.c.h.b16 %v972
    %v1284 = vunpack.c.l.b16 %v973
    %v1285 = vunpack.c.l.b16 %v974
    %v1286 = vunpack.c.h.b16 %v974
    %v1287 = vunpack.c.l.b16 %v975
    %v1288 = vunpack.c.l.b16 %v976
    %v1289 = vunpack.c.h.b16 %v976
    %v1290 = vunpack.c.l.b16 %v977
    %v1291 = vunpack.c.l.b16 %v978
    %v1292 = vunpack.c.h.b16 %v978
    %v1293 = vunpack.c.l.b16 %v979
    %v1294 = vunpack.c.l.b16 %v980
    %v1295 = vunpack.c.h.b16 %v980
    %v1296 = vunpack.c.l.b16 %v981
    %v1297 = vunpack.c.l.b16 %v982
    %v1298 = vunpack.c.h.b16 %v982
    %v1299 = vunpack.c.l.b16 %v983
    %v1300 = vunpack.c.l.b16 %v984
    %v1301 = vunpack.c.h.b16 %v984
    %v1302 = vunpack.c.l.b16 %v985
    %v1303 = vunpack.c.l.b16 %v986
    %v1304 = vunpack.c.h.b16 %v986
    %v1305 = vunpack.c.l.b16 %v987
    %v1306 = vpack.c.b16 %v1261, %v1258
    %v1307 = vpack.c.b16 %v1262, %v1259
    %v1308 = vpack.c.b16 %v1263, %v1260
    %v1309 = vpack.c.b16 %v1267, %v1264
    %v1310 = vpack.c.b16 %v1268, %v1265
    %v1311 = vpack.c.b16 %v1269, %v1266
    %v1312 = vpack.c.b16 %v1273, %v1270
    %v1313 = vpack.c.b16 %v1274, %v1271
    %v1314 = vpack.c.b16 %v1275, %v1272
    %v1315 = vpack.c.b16 %v1279, %v1276
    %v1316 = vpack.c.b16 %v1280, %v1277
    %v1317 = vpack.c.b16 %v1281, %v1278
    %v1318 = vpack.c.b16 %v1285, %v1282
    %v1319 = vpack.c.b16 %v1286, %v1283
    %v1320 = vpack.c.b16 %v1287, %v1284
    %v1321 = vpack.c.b16 %v1291, %v1288
    %v1322 = vpack.c.b16 %v1292, %v1289
    %v1323 = vpack.c.b16 %v1293, %v1290
    %v1324 = vpack.c.b16 %v1297, %v1294
    %v1325 = vpack.c.b16 %v1298, %v1295
    %v1326 = vpack.c.b16 %v1299, %v1296
    %v1327 = vpack.c.b16 %v1303, %v1300
    %v1328 = vpack.c.b16 %v1304, %v1301
    %v1329 = vpack.c.b16 %v1305, %v1302
    %1354 = vmatprep.subr.bf16.mxu0 %v1307
    %1355 = vmatpush1.bf16.msra.mxu0 %v1306
    %1356 = vmatprep.subr.bf16.mxu0 %v1310
    %1357 = vmatpush1.bf16.msra.mxu0 %v1309
    %1358 = vmatprep.subr.bf16.mxu0 %v1313
    %1359 = vmatpush1.bf16.msra.mxu0 %v1312
    %1360 = vmatprep.subr.bf16.mxu0 %v1316
    %1361 = vmatpush1.bf16.msra.mxu0 %v1315
    %1362 = vmatprep.subr.bf16.mxu0 %v1319
    %1363 = vmatpush1.bf16.msra.mxu0 %v1318
    %1364 = vmatprep.subr.bf16.mxu0 %v1322
    %1365 = vmatpush1.bf16.msra.mxu0 %v1321
    %1366 = vmatprep.subr.bf16.mxu0 %v1325
    %1367 = vmatpush1.bf16.msra.mxu0 %v1324
    %1368 = vmatprep.subr.bf16.mxu0 %v1328
    %1369 = vmatpush1.bf16.msra.mxu0 %v1327
    %1370 = vmatprep.subr.bf16.mxu0 0
    %1371 = vmatpush1.bf16.msra.mxu0 0
    %1372 = vmatprep.subr.bf16.mxu0 0
    %1373 = vmatpush1.bf16.msra.mxu0 0
    %1374 = vmatprep.subr.bf16.mxu0 0
    %1375 = vmatpush1.bf16.msra.mxu0 0
    %1376 = vmatprep.subr.bf16.mxu0 0
    %1377 = vmatpush1.bf16.msra.mxu0 0
    %1378 = vmatprep.subr.bf16.mxu0 0
    %1379 = vmatpush1.bf16.msra.mxu0 0
    %1380 = vmatprep.subr.bf16.mxu0 0
    %1381 = vmatpush1.bf16.msra.mxu0 0
    %1382 = vmatprep.subr.bf16.mxu0 0
    %1383 = vmatpush1.bf16.msra.mxu0 0
    %1384 = vmatprep.subr.bf16.mxu0 0
    %1385 = vmatpush1.bf16.msra.mxu0 0
    %1386 = vmatprep.mubr.bf16.mxu0 0
    %1387 = vmatmul.mubr.bf16.gmra.mrb[0].mxu0 0
    %v1388 = vpop.f32.mrb[0].mxu0
    %v1389 = vadd.f32 %v912, %v1388
    %v1390 = vpop.f32.mrb[0].mxu0
    %v1391 = vadd.f32 %v916, %v1390
    %v1392 = vpop.f32.mrb[0].mxu0
    %v1393 = vpop.f32.mrb[0].mxu0
    %1394 = vdwg.mxu0
    %1395 = vmatprep.subr.bf16.mxu0 0
    %1396 = vmatpush1.bf16.msra.mxu0 %v1308
    %1397 = vmatprep.subr.bf16.mxu0 0
    %1398 = vmatpush1.bf16.msra.mxu0 %v1311
    %1399 = vmatprep.subr.bf16.mxu0 0
    %1400 = vmatpush1.bf16.msra.mxu0 %v1314
    %1401 = vmatprep.subr.bf16.mxu0 0
    %1402 = vmatpush1.bf16.msra.mxu0 %v1317
    %1403 = vmatprep.subr.bf16.mxu0 0
    %1404 = vmatpush1.bf16.msra.mxu0 %v1320
    %1405 = vmatprep.subr.bf16.mxu0 0
    %1406 = vmatpush1.bf16.msra.mxu0 %v1323
    %1407 = vmatprep.subr.bf16.mxu0 0
    %1408 = vmatpush1.bf16.msra.mxu0 %v1326
    %1409 = vmatprep.subr.bf16.mxu0 0
    %1410 = vmatpush1.bf16.msra.mxu0 %v1329
    %1411 = vmatprep.subr.bf16.mxu0 0
    %1412 = vmatpush1.bf16.msra.mxu0 0
    %1413 = vmatprep.subr.bf16.mxu0 0
    %1414 = vmatpush1.bf16.msra.mxu0 0
    %1415 = vmatprep.subr.bf16.mxu0 0
    %1416 = vmatpush1.bf16.msra.mxu0 0
    %1417 = vmatprep.subr.bf16.mxu0 0
    %1418 = vmatpush1.bf16.msra.mxu0 0
    %1419 = vmatprep.subr.bf16.mxu0 0
    %1420 = vmatpush1.bf16.msra.mxu0 0
    %1421 = vmatprep.subr.bf16.mxu0 0
    %1422 = vmatpush1.bf16.msra.mxu0 0
    %1423 = vmatprep.subr.bf16.mxu0 0
    %1424 = vmatpush1.bf16.msra.mxu0 0
    %1425 = vmatprep.subr.bf16.mxu0 0
    %1426 = vmatpush1.bf16.msra.mxu0 0
    %1427 = vmatprep.mubr.bf16.mxu0 0
    %1428 = vmatmul.mubr.bf16.gmra.mrb[0].mxu0 0
    %v1429 = vpop.f32.mrb[0].mxu0
    %v1430 = vadd.f32 %v920, %v1429
    %v1431 = vpop.f32.mrb[0].mxu0
    %v1432 = vpop.f32.mrb[0].mxu0
    %v1433 = vpop.f32.mrb[0].mxu0
    %1434 = vdwg.mxu0
    %v1435 = vadd.f32 %v1223, %v1389
    %v1436 = vxor.u32 %v1435, 2147483648
    %v1437 = vmul.f32 %v1436, 1.442695
    %v1438 = vpow.pop %v1437
    %v1439 = vadd.f32 %v1438, 1.0
    %v1440 = vrcp.pop %v1439
    %v1441 = vmul.f32 1.0, %v1440
    %v1442 = vadd.f32 %v1224, %v1391
    %v1443 = vxor.u32 %v1442, 2147483648
    %v1444 = vmul.f32 %v1443, 1.442695
    %v1445 = vpow.pop %v1444
    %v1446 = vadd.f32 %v1445, 1.0
    %v1447 = vrcp.pop %v1446
    %v1448 = vmul.f32 1.0, %v1447
    %v1449 = vmul.f32 %v1441, %v1430
    %v1450 = vadd.f32 %v1225, %v1449
    %v1451 = vtanh.pop %v1450
    %v1452 = vsub.f32 1.0, %v1448
    %v1453 = vmul.f32 %v1452, %v1451
    %v1454 = vmul.f32 %v1448, 0.0
    %v1455 = vadd.f32 %v1453, %v1454
    %s1456 = scalar_lea.vmem %s7, 80
    %1457 = vst [vmem:[%s1456 + $0x8] sm:$0xff] %v1455
    %s1458 = scalar_lea.vmem [#allocation2], 24
    %v1459 = vld [vmem:[%s1458] sm:$0xff]
    %v1460 = vld [vmem:[%s1458 + $0x8] sm:$0xff]
    %v1461 = vld [vmem:[%s1458 + $0x10] sm:$0xff]
    %v1462 = vpack.c.bf16 %v1220, %v1220
    %1463 = vmatprep.subr.bf16.mxu0 %v1072
    %1464 = vmatpush1.bf16.msra.mxu0 %v1071
    %1465 = vmatprep.subr.bf16.mxu0 %v1075
    %1466 = vmatpush1.bf16.msra.mxu0 %v1074
    %1467 = vmatprep.subr.bf16.mxu0 %v1078
    %1468 = vmatpush1.bf16.msra.mxu0 %v1077
    %1469 = vmatprep.subr.bf16.mxu0 %v1081
    %1470 = vmatpush1.bf16.msra.mxu0 %v1080
    %1471 = vmatprep.subr.bf16.mxu0 %v1084
    %1472 = vmatpush1.bf16.msra.mxu0 %v1083
    %1473 = vmatprep.subr.bf16.mxu0 %v1087
    %1474 = vmatpush1.bf16.msra.mxu0 %v1086
    %1475 = vmatprep.subr.bf16.mxu0 %v1090
    %1476 = vmatpush1.bf16.msra.mxu0 %v1089
    %1477 = vmatprep.subr.bf16.mxu0 %v1093
    %1478 = vmatpush1.bf16.msra.mxu0 %v1092
    %1479 = vmatprep.subr.bf16.mxu0 0
    %1480 = vmatpush1.bf16.msra.mxu0 0
    %1481 = vmatprep.subr.bf16.mxu0 0
    %1482 = vmatpush1.bf16.msra.mxu0 0
    %1483 = vmatprep.subr.bf16.mxu0 0
    %1484 = vmatpush1.bf16.msra.mxu0 0
    %1485 = vmatprep.subr.bf16.mxu0 0
    %1486 = vmatpush1.bf16.msra.mxu0 0
    %1487 = vmatprep.subr.bf16.mxu0 0
    %1488 = vmatpush1.bf16.msra.mxu0 0
    %1489 = vmatprep.subr.bf16.mxu0 0
    %1490 = vmatpush1.bf16.msra.mxu0 0
    %1491 = vmatprep.subr.bf16.mxu0 0
    %1492 = vmatpush1.bf16.msra.mxu0 0
    %1493 = vmatprep.subr.bf16.mxu0 0
    %1494 = vmatpush1.bf16.msra.mxu0 0
    %1495 = vmatprep.mubr.bf16.mxu0 0
    %1496 = vmatmul.mubr.bf16.gmra.mrb[0].mxu0 %v1462
    %v1497 = vpop.f32.mrb[0].mxu0
    %v1498 = vadd.f32 %v895, %v1497
    %v1499 = vpop.f32.mrb[0].mxu0
    %v1500 = vadd.f32 %v899, %v1499
    %v1501 = vpop.f32.mrb[0].mxu0
    %v1502 = vpop.f32.mrb[0].mxu0
    %1503 = vdwg.mxu0
    %1504 = vmatprep.subr.bf16.mxu0 0
    %1505 = vmatpush1.bf16.msra.mxu0 %v1073
    %1506 = vmatprep.subr.bf16.mxu0 0
    %1507 = vmatpush1.bf16.msra.mxu0 %v1076
    %1508 = vmatprep.subr.bf16.mxu0 0
    %1509 = vmatpush1.bf16.msra.mxu0 %v1079
    %1510 = vmatprep.subr.bf16.mxu0 0
    %1511 = vmatpush1.bf16.msra.mxu0 %v1082
    %1512 = vmatprep.subr.bf16.mxu0 0
    %1513 = vmatpush1.bf16.msra.mxu0 %v1085
    %1514 = vmatprep.subr.bf16.mxu0 0
    %1515 = vmatpush1.bf16.msra.mxu0 %v1088
    %1516 = vmatprep.subr.bf16.mxu0 0
    %1517 = vmatpush1.bf16.msra.mxu0 %v1091
    %1518 = vmatprep.subr.bf16.mxu0 0
    %1519 = vmatpush1.bf16.msra.mxu0 %v1094
    %1520 = vmatprep.subr.bf16.mxu0 0
    %1521 = vmatpush1.bf16.msra.mxu0 0
    %1522 = vmatprep.subr.bf16.mxu0 0
    %1523 = vmatpush1.bf16.msra.mxu0 0
    %1524 = vmatprep.subr.bf16.mxu0 0
    %1525 = vmatpush1.bf16.msra.mxu0 0
    %1526 = vmatprep.subr.bf16.mxu0 0
    %1527 = vmatpush1.bf16.msra.mxu0 0
    %1528 = vmatprep.subr.bf16.mxu0 0
    %1529 = vmatpush1.bf16.msra.mxu0 0
    %1530 = vmatprep.subr.bf16.mxu0 0
    %1531 = vmatpush1.bf16.msra.mxu0 0
    %1532 = vmatprep.subr.bf16.mxu0 0
    %1533 = vmatpush1.bf16.msra.mxu0 0
    %1534 = vmatprep.subr.bf16.mxu0 0
    %1535 = vmatpush1.bf16.msra.mxu0 0
    %1536 = vmatprep.mubr.bf16.mxu0 0
    %1537 = vmatmul.mubr.bf16.gmra.mrb[0].mxu0 %v1462
    %v1538 = vpop.f32.mrb[0].mxu0
    %v1539 = vadd.f32 %v903, %v1538
    %v1540 = vpop.f32.mrb[0].mxu0
    %v1541 = vpop.f32.mrb[0].mxu0
    %v1542 = vpop.f32.mrb[0].mxu0
    %1543 = vdwg.mxu0
    %v1544 = vadd.f32 %v1459, %v1498
    %v1545 = vxor.u32 %v1544, 2147483648
    %v1546 = vmul.f32 %v1545, 1.442695
    %v1547 = vpow.pop %v1546
    %v1548 = vadd.f32 %v1547, 1.0
    %v1549 = vrcp.pop %v1548
    %v1550 = vmul.f32 1.0, %v1549
    %v1551 = vadd.f32 %v1460, %v1500
    %v1552 = vxor.u32 %v1551, 2147483648
    %v1553 = vmul.f32 %v1552, 1.442695
    %v1554 = vpow.pop %v1553
    %v1555 = vadd.f32 %v1554, 1.0
    %v1556 = vrcp.pop %v1555
    %v1557 = vmul.f32 1.0, %v1556
    %v1558 = vmul.f32 %v1550, %v1539
    %v1559 = vadd.f32 %v1461, %v1558
    %v1560 = vtanh.pop %v1559
    %v1561 = vsub.f32 1.0, %v1557
    %v1562 = vmul.f32 %v1561, %v1560
    %v1563 = vmul.f32 %v1557, %v1220
    %v1564 = vadd.f32 %v1562, %v1563
    %s1565 = scalar_lea.vmem %s7, 16
    %1566 = vst [vmem:[%s1565] sm:$0xff] %v1564
    %s1567 = scalar_lea.vmem [#allocation3], 96
    %v1568 = vld [vmem:[%s1567] sm:$0xff]
    %v1569 = vld [vmem:[%s1567 + $0x8] sm:$0xff]
    %v1570 = vld [vmem:[%s1567 + $0x10] sm:$0xff]
    %v1571 = vpack.c.bf16 %v1455, %v1455
    %1572 = vmatprep.subr.bf16.mxu0 %v1307
    %1573 = vmatpush1.bf16.msra.mxu0 %v1306
    %1574 = vmatprep.subr.bf16.mxu0 %v1310
    %1575 = vmatpush1.bf16.msra.mxu0 %v1309
    %1576 = vmatprep.subr.bf16.mxu0 %v1313
    %1577 = vmatpush1.bf16.msra.mxu0 %v1312
    %1578 = vmatprep.subr.bf16.mxu0 %v1316
    %1579 = vmatpush1.bf16.msra.mxu0 %v1315
    %1580 = vmatprep.subr.bf16.mxu0 %v1319
    %1581 = vmatpush1.bf16.msra.mxu0 %v1318
    %1582 = vmatprep.subr.bf16.mxu0 %v1322
    %1583 = vmatpush1.bf16.msra.mxu0 %v1321
    %1584 = vmatprep.subr.bf16.mxu0 %v1325
    %1585 = vmatpush1.bf16.msra.mxu0 %v1324
    %1586 = vmatprep.subr.bf16.mxu0 %v1328
    %1587 = vmatpush1.bf16.msra.mxu0 %v1327
    %1588 = vmatprep.subr.bf16.mxu0 0
    %1589 = vmatpush1.bf16.msra.mxu0 0
    %1590 = vmatprep.subr.bf16.mxu0 0
    %1591 = vmatpush1.bf16.msra.mxu0 0
    %1592 = vmatprep.subr.bf16.mxu0 0
    %1593 = vmatpush1.bf16.msra.mxu0 0
    %1594 = vmatprep.subr.bf16.mxu0 0
    %1595 = vmatpush1.bf16.msra.mxu0 0
    %1596 = vmatprep.subr.bf16.mxu0 0
    %1597 = vmatpush1.bf16.msra.mxu0 0
    %1598 = vmatprep.subr.bf16.mxu0 0
    %1599 = vmatpush1.bf16.msra.mxu0 0
    %1600 = vmatprep.subr.bf16.mxu0 0
    %1601 = vmatpush1.bf16.msra.mxu0 0
    %1602 = vmatprep.subr.bf16.mxu0 0
    %1603 = vmatpush1.bf16.msra.mxu0 0
    %1604 = vmatprep.mubr.bf16.mxu0 0
    %1605 = vmatmul.mubr.bf16.gmra.mrb[0].mxu0 %v1571
    %v1606 = vpop.f32.mrb[0].mxu0
    %v1607 = vadd.f32 %v912, %v1606
    %v1608 = vpop.f32.mrb[0].mxu0
    %v1609 = vadd.f32 %v916, %v1608
    %v1610 = vpop.f32.mrb[0].mxu0
    %v1611 = vpop.f32.mrb[0].mxu0
    %1612 = vdwg.mxu0
    %1613 = vmatprep.subr.bf16.mxu0 0
    %1614 = vmatpush1.bf16.msra.mxu0 %v1308
    %1615 = vmatprep.subr.bf16.mxu0 0
    %1616 = vmatpush1.bf16.msra.mxu0 %v1311
    %1617 = vmatprep.subr.bf16.mxu0 0
    %1618 = vmatpush1.bf16.msra.mxu0 %v1314
    %1619 = vmatprep.subr.bf16.mxu0 0
    %1620 = vmatpush1.bf16.msra.mxu0 %v1317
    %1621 = vmatprep.subr.bf16.mxu0 0
    %1622 = vmatpush1.bf16.msra.mxu0 %v1320
    %1623 = vmatprep.subr.bf16.mxu0 0
    %1624 = vmatpush1.bf16.msra.mxu0 %v1323
    %1625 = vmatprep.subr.bf16.mxu0 0
    %1626 = vmatpush1.bf16.msra.mxu0 %v1326
    %1627 = vmatprep.subr.bf16.mxu0 0
    %1628 = vmatpush1.bf16.msra.mxu0 %v1329
    %1629 = vmatprep.subr.bf16.mxu0 0
    %1630 = vmatpush1.bf16.msra.mxu0 0
    %1631 = vmatprep.subr.bf16.mxu0 0
    %1632 = vmatpush1.bf16.msra.mxu0 0
    %1633 = vmatprep.subr.bf16.mxu0 0
    %1634 = vmatpush1.bf16.msra.mxu0 0
    %1635 = vmatprep.subr.bf16.mxu0 0
    %1636 = vmatpush1.bf16.msra.mxu0 0
    %1637 = vmatprep.subr.bf16.mxu0 0
    %1638 = vmatpush1.bf16.msra.mxu0 0
    %1639 = vmatprep.subr.bf16.mxu0 0
    %1640 = vmatpush1.bf16.msra.mxu0 0
    %1641 = vmatprep.subr.bf16.mxu0 0
    %1642 = vmatpush1.bf16.msra.mxu0 0
    %1643 = vmatprep.subr.bf16.mxu0 0
    %1644 = vmatpush1.bf16.msra.mxu0 0
    %1645 = vmatprep.mubr.bf16.mxu0 0
    %1646 = vmatmul.mubr.bf16.gmra.mrb[0].mxu0 %v1571
    %v1647 = vpop.f32.mrb[0].mxu0
    %v1648 = vadd.f32 %v920, %v1647
    %v1649 = vpop.f32.mrb[0].mxu0
    %v1650 = vpop.f32.mrb[0].mxu0
    %v1651 = vpop.f32.mrb[0].mxu0
    %1652 = vdwg.mxu0
    %v1653 = vadd.f32 %v1568, %v1607
    %v1654 = vxor.u32 %v1653, 2147483648
    %v1655 = vmul.f32 %v1654, 1.442695
    %v1656 = vpow.pop %v1655
    %v1657 = vadd.f32 %v1656, 1.0
    %v1658 = vrcp.pop %v1657
    %v1659 = vmul.f32 1.0, %v1658
    %v1660 = vadd.f32 %v1569, %v1609
    %v1661 = vxor.u32 %v1660, 2147483648
    %v1662 = vmul.f32 %v1661, 1.442695
    %v1663 = vpow.pop %v1662
    %v1664 = vadd.f32 %v1663, 1.0
    %v1665 = vrcp.pop %v1664
    %v1666 = vmul.f32 1.0, %v1665
    %v1667 = vmul.f32 %v1659, %v1648
    %v1668 = vadd.f32 %v1570, %v1667
    %v1669 = vtanh.pop %v1668
    %v1670 = vsub.f32 1.0, %v1666
    %v1671 = vmul.f32 %v1670, %v1669
    %v1672 = vmul.f32 %v1666, %v1455
    %v1673 = vadd.f32 %v1671, %v1672
    %s1674 = scalar_lea.vmem %s7, 64
    %1675 = vst [vmem:[%s1674 + $0x8] sm:$0xff] %v1673
    %s1676 = scalar_lea.vmem [#allocation2], 48
    %v1677 = vld [vmem:[%s1676] sm:$0xff]
    %v1678 = vld [vmem:[%s1676 + $0x8] sm:$0xff]
    %v1679 = vld [vmem:[%s1676 + $0x10] sm:$0xff]
    %v1680 = vpack.c.bf16 %v1564, %v1564
    %1681 = vmatprep.subr.bf16.mxu0 %v1072
    %1682 = vmatpush1.bf16.msra.mxu0 %v1071
    %1683 = vmatprep.subr.bf16.mxu0 %v1075
    %1684 = vmatpush1.bf16.msra.mxu0 %v1074
    %1685 = vmatprep.subr.bf16.mxu0 %v1078
    %1686 = vmatpush1.bf16.msra.mxu0 %v1077
    %1687 = vmatprep.subr.bf16.mxu0 %v1081
    %1688 = vmatpush1.bf16.msra.mxu0 %v1080
    %1689 = vmatprep.subr.bf16.mxu0 %v1084
    %1690 = vmatpush1.bf16.msra.mxu0 %v1083
    %1691 = vmatprep.subr.bf16.mxu0 %v1087
    %1692 = vmatpush1.bf16.msra.mxu0 %v1086
    %1693 = vmatprep.subr.bf16.mxu0 %v1090
    %1694 = vmatpush1.bf16.msra.mxu0 %v1089
    %1695 = vmatprep.subr.bf16.mxu0 %v1093
    %1696 = vmatpush1.bf16.msra.mxu0 %v1092
    %1697 = vmatprep.subr.bf16.mxu0 0
    %1698 = vmatpush1.bf16.msra.mxu0 0
    %1699 = vmatprep.subr.bf16.mxu0 0
    %1700 = vmatpush1.bf16.msra.mxu0 0
    %1701 = vmatprep.subr.bf16.mxu0 0
    %1702 = vmatpush1.bf16.msra.mxu0 0
    %1703 = vmatprep.subr.bf16.mxu0 0
    %1704 = vmatpush1.bf16.msra.mxu0 0
    %1705 = vmatprep.subr.bf16.mxu0 0
    %1706 = vmatpush1.bf16.msra.mxu0 0
    %1707 = vmatprep.subr.bf16.mxu0 0
    %1708 = vmatpush1.bf16.msra.mxu0 0
    %1709 = vmatprep.subr.bf16.mxu0 0
    %1710 = vmatpush1.bf16.msra.mxu0 0
    %1711 = vmatprep.subr.bf16.mxu0 0
    %1712 = vmatpush1.bf16.msra.mxu0 0
    %1713 = vmatprep.mubr.bf16.mxu0 0
    %1714 = vmatmul.mubr.bf16.gmra.mrb[0].mxu0 %v1680
    %v1715 = vpop.f32.mrb[0].mxu0
    %v1716 = vadd.f32 %v895, %v1715
    %v1717 = vpop.f32.mrb[0].mxu0
    %v1718 = vadd.f32 %v899, %v1717
    %v1719 = vpop.f32.mrb[0].mxu0
    %v1720 = vpop.f32.mrb[0].mxu0
    %1721 = vdwg.mxu0
    %1722 = vmatprep.subr.bf16.mxu0 0
    %1723 = vmatpush1.bf16.msra.mxu0 %v1073
    %1724 = vmatprep.subr.bf16.mxu0 0
    %1725 = vmatpush1.bf16.msra.mxu0 %v1076
    %1726 = vmatprep.subr.bf16.mxu0 0
    %1727 = vmatpush1.bf16.msra.mxu0 %v1079
    %1728 = vmatprep.subr.bf16.mxu0 0
    %1729 = vmatpush1.bf16.msra.mxu0 %v1082
    %1730 = vmatprep.subr.bf16.mxu0 0
    %1731 = vmatpush1.bf16.msra.mxu0 %v1085
    %1732 = vmatprep.subr.bf16.mxu0 0
    %1733 = vmatpush1.bf16.msra.mxu0 %v1088
    %1734 = vmatprep.subr.bf16.mxu0 0
    %1735 = vmatpush1.bf16.msra.mxu0 %v1091
    %1736 = vmatprep.subr.bf16.mxu0 0
    %1737 = vmatpush1.bf16.msra.mxu0 %v1094
    %1738 = vmatprep.subr.bf16.mxu0 0
    %1739 = vmatpush1.bf16.msra.mxu0 0
    %1740 = vmatprep.subr.bf16.mxu0 0
    %1741 = vmatpush1.bf16.msra.mxu0 0
    %1742 = vmatprep.subr.bf16.mxu0 0
    %1743 = vmatpush1.bf16.msra.mxu0 0
    %1744 = vmatprep.subr.bf16.mxu0 0
    %1745 = vmatpush1.bf16.msra.mxu0 0
    %1746 = vmatprep.subr.bf16.mxu0 0
    %1747 = vmatpush1.bf16.msra.mxu0 0
    %1748 = vmatprep.subr.bf16.mxu0 0
    %1749 = vmatpush1.bf16.msra.mxu0 0
    %1750 = vmatprep.subr.bf16.mxu0 0
    %1751 = vmatpush1.bf16.msra.mxu0 0
    %1752 = vmatprep.subr.bf16.mxu0 0
    %1753 = vmatpush1.bf16.msra.mxu0 0
    %1754 = vmatprep.mubr.bf16.mxu0 0
    %1755 = vmatmul.mubr.bf16.gmra.mrb[0].mxu0 %v1680
    %v1756 = vpop.f32.mrb[0].mxu0
    %v1757 = vadd.f32 %v903, %v1756
    %v1758 = vpop.f32.mrb[0].mxu0
    %v1759 = vpop.f32.mrb[0].mxu0
    %v1760 = vpop.f32.mrb[0].mxu0
    %1761 = vdwg.mxu0
    %v1762 = vadd.f32 %v1677, %v1716
    %v1763 = vxor.u32 %v1762, 2147483648
    %v1764 = vmul.f32 %v1763, 1.442695
    %v1765 = vpow.pop %v1764
    %v1766 = vadd.f32 %v1765, 1.0
    %v1767 = vrcp.pop %v1766
    %v1768 = vmul.f32 1.0, %v1767
    %v1769 = vadd.f32 %v1678, %v1718
    %v1770 = vxor.u32 %v1769, 2147483648
    %v1771 = vmul.f32 %v1770, 1.442695
    %v1772 = vpow.pop %v1771
    %v1773 = vadd.f32 %v1772, 1.0
    %v1774 = vrcp.pop %v1773
    %v1775 = vmul.f32 1.0, %v1774
    %v1776 = vmul.f32 %v1768, %v1757
    %v1777 = vadd.f32 %v1679, %v1776
    %v1778 = vtanh.pop %v1777
    %v1779 = vsub.f32 1.0, %v1775
    %v1780 = vmul.f32 %v1779, %v1778
    %v1781 = vmul.f32 %v1775, %v1564
    %v1782 = vadd.f32 %v1780, %v1781
    %s1783 = scalar_lea.vmem %s7, 32
    %1784 = vst [vmem:[%s1783] sm:$0xff] %v1782
    %s1785 = scalar_lea.vmem [#allocation3], 72
    %v1786 = vld [vmem:[%s1785] sm:$0xff]
    %v1787 = vld [vmem:[%s1785 + $0x8] sm:$0xff]
    %v1788 = vld [vmem:[%s1785 + $0x10] sm:$0xff]
    %v1789 = vpack.c.bf16 %v1673, %v1673
    %1790 = vmatprep.subr.bf16.mxu0 %v1307
    %1791 = vmatpush1.bf16.msra.mxu0 %v1306
    %1792 = vmatprep.subr.bf16.mxu0 %v1310
    %1793 = vmatpush1.bf16.msra.mxu0 %v1309
    %1794 = vmatprep.subr.bf16.mxu0 %v1313
    %1795 = vmatpush1.bf16.msra.mxu0 %v1312
    %1796 = vmatprep.subr.bf16.mxu0 %v1316
    %1797 = vmatpush1.bf16.msra.mxu0 %v1315
    %1798 = vmatprep.subr.bf16.mxu0 %v1319
    %1799 = vmatpush1.bf16.msra.mxu0 %v1318
    %1800 = vmatprep.subr.bf16.mxu0 %v1322
    %1801 = vmatpush1.bf16.msra.mxu0 %v1321
    %1802 = vmatprep.subr.bf16.mxu0 %v1325
    %1803 = vmatpush1.bf16.msra.mxu0 %v1324
    %1804 = vmatprep.subr.bf16.mxu0 %v1328
    %1805 = vmatpush1.bf16.msra.mxu0 %v1327
    %1806 = vmatprep.subr.bf16.mxu0 0
    %1807 = vmatpush1.bf16.msra.mxu0 0
    %1808 = vmatprep.subr.bf16.mxu0 0
    %1809 = vmatpush1.bf16.msra.mxu0 0
    %1810 = vmatprep.subr.bf16.mxu0 0
    %1811 = vmatpush1.bf16.msra.mxu0 0
    %1812 = vmatprep.subr.bf16.mxu0 0
    %1813 = vmatpush1.bf16.msra.mxu0 0
    %1814 = vmatprep.subr.bf16.mxu0 0
    %1815 = vmatpush1.bf16.msra.mxu0 0
    %1816 = vmatprep.subr.bf16.mxu0 0
    %1817 = vmatpush1.bf16.msra.mxu0 0
    %1818 = vmatprep.subr.bf16.mxu0 0
    %1819 = vmatpush1.bf16.msra.mxu0 0
    %1820 = vmatprep.subr.bf16.mxu0 0
    %1821 = vmatpush1.bf16.msra.mxu0 0
    %1822 = vmatprep.mubr.bf16.mxu0 0
    %1823 = vmatmul.mubr.bf16.gmra.mrb[0].mxu0 %v1789
    %v1824 = vpop.f32.mrb[0].mxu0
    %v1825 = vadd.f32 %v912, %v1824
    %v1826 = vpop.f32.mrb[0].mxu0
    %v1827 = vadd.f32 %v916, %v1826
    %v1828 = vpop.f32.mrb[0].mxu0
    %v1829 = vpop.f32.mrb[0].mxu0
    %1830 = vdwg.mxu0
    %1831 = vmatprep.subr.bf16.mxu0 0
    %1832 = vmatpush1.bf16.msra.mxu0 %v1308
    %1833 = vmatprep.subr.bf16.mxu0 0
    %1834 = vmatpush1.bf16.msra.mxu0 %v1311
    %1835 = vmatprep.subr.bf16.mxu0 0
    %1836 = vmatpush1.bf16.msra.mxu0 %v1314
    %1837 = vmatprep.subr.bf16.mxu0 0
    %1838 = vmatpush1.bf16.msra.mxu0 %v1317
    %1839 = vmatprep.subr.bf16.mxu0 0
    %1840 = vmatpush1.bf16.msra.mxu0 %v1320
    %1841 = vmatprep.subr.bf16.mxu0 0
    %1842 = vmatpush1.bf16.msra.mxu0 %v1323
    %1843 = vmatprep.subr.bf16.mxu0 0
    %1844 = vmatpush1.bf16.msra.mxu0 %v1326
    %1845 = vmatprep.subr.bf16.mxu0 0
    %1846 = vmatpush1.bf16.msra.mxu0 %v1329
    %1847 = vmatprep.subr.bf16.mxu0 0
    %1848 = vmatpush1.bf16.msra.mxu0 0
    %1849 = vmatprep.subr.bf16.mxu0 0
    %1850 = vmatpush1.bf16.msra.mxu0 0
    %1851 = vmatprep.subr.bf16.mxu0 0
    %1852 = vmatpush1.bf16.msra.mxu0 0
    %1853 = vmatprep.subr.bf16.mxu0 0
    %1854 = vmatpush1.bf16.msra.mxu0 0
    %1855 = vmatprep.subr.bf16.mxu0 0
    %1856 = vmatpush1.bf16.msra.mxu0 0
    %1857 = vmatprep.subr.bf16.mxu0 0
    %1858 = vmatpush1.bf16.msra.mxu0 0
    %1859 = vmatprep.subr.bf16.mxu0 0
    %1860 = vmatpush1.bf16.msra.mxu0 0
    %1861 = vmatprep.subr.bf16.mxu0 0
    %1862 = vmatpush1.bf16.msra.mxu0 0
    %1863 = vmatprep.mubr.bf16.mxu0 0
    %1864 = vmatmul.mubr.bf16.gmra.mrb[0].mxu0 %v1789
    %v1865 = vpop.f32.mrb[0].mxu0
    %v1866 = vadd.f32 %v920, %v1865
    %v1867 = vpop.f32.mrb[0].mxu0
    %v1868 = vpop.f32.mrb[0].mxu0
    %v1869 = vpop.f32.mrb[0].mxu0
    %1870 = vdwg.mxu0
    %v1871 = vadd.f32 %v1786, %v1825
    %v1872 = vxor.u32 %v1871, 2147483648
    %v1873 = vmul.f32 %v1872, 1.442695
    %v1874 = vpow.pop %v1873
    %v1875 = vadd.f32 %v1874, 1.0
    %v1876 = vrcp.pop %v1875
    %v1877 = vmul.f32 1.0, %v1876
    %v1878 = vadd.f32 %v1787, %v1827
    %v1879 = vxor.u32 %v1878, 2147483648
    %v1880 = vmul.f32 %v1879, 1.442695
    %v1881 = vpow.pop %v1880
    %v1882 = vadd.f32 %v1881, 1.0
    %v1883 = vrcp.pop %v1882
    %v1884 = vmul.f32 1.0, %v1883
    %v1885 = vmul.f32 %v1877, %v1866
    %v1886 = vadd.f32 %v1788, %v1885
    %v1887 = vtanh.pop %v1886
    %v1888 = vsub.f32 1.0, %v1884
    %v1889 = vmul.f32 %v1888, %v1887
    %v1890 = vmul.f32 %v1884, %v1673
    %v1891 = vadd.f32 %v1889, %v1890
    %s1892 = scalar_lea.vmem %s7, 48
    %1893 = vst [vmem:[%s1892 + $0x8] sm:$0xff] %v1891
    %s1894 = scalar_lea.vmem [#allocation2], 72
    %v1895 = vld [vmem:[%s1894] sm:$0xff]
    %v1896 = vld [vmem:[%s1894 + $0x8] sm:$0xff]
    %v1897 = vld [vmem:[%s1894 + $0x10] sm:$0xff]
    %v1898 = vpack.c.bf16 %v1782, %v1782
    %1899 = vmatprep.subr.bf16.mxu0 %v1072
    %1900 = vmatpush1.bf16.msra.mxu0 %v1071
    %1901 = vmatprep.subr.bf16.mxu0 %v1075
    %1902 = vmatpush1.bf16.msra.mxu0 %v1074
    %1903 = vmatprep.subr.bf16.mxu0 %v1078
    %1904 = vmatpush1.bf16.msra.mxu0 %v1077
    %1905 = vmatprep.subr.bf16.mxu0 %v1081
    %1906 = vmatpush1.bf16.msra.mxu0 %v1080
    %1907 = vmatprep.subr.bf16.mxu0 %v1084
    %1908 = vmatpush1.bf16.msra.mxu0 %v1083
    %1909 = vmatprep.subr.bf16.mxu0 %v1087
    %1910 = vmatpush1.bf16.msra.mxu0 %v1086
    %1911 = vmatprep.subr.bf16.mxu0 %v1090
    %1912 = vmatpush1.bf16.msra.mxu0 %v1089
    %1913 = vmatprep.subr.bf16.mxu0 %v1093
    %1914 = vmatpush1.bf16.msra.mxu0 %v1092
    %1915 = vmatprep.subr.bf16.mxu0 0
    %1916 = vmatpush1.bf16.msra.mxu0 0
    %1917 = vmatprep.subr.bf16.mxu0 0
    %1918 = vmatpush1.bf16.msra.mxu0 0
    %1919 = vmatprep.subr.bf16.mxu0 0
    %1920 = vmatpush1.bf16.msra.mxu0 0
    %1921 = vmatprep.subr.bf16.mxu0 0
    %1922 = vmatpush1.bf16.msra.mxu0 0
    %1923 = vmatprep.subr.bf16.mxu0 0
    %1924 = vmatpush1.bf16.msra.mxu0 0
    %1925 = vmatprep.subr.bf16.mxu0 0
    %1926 = vmatpush1.bf16.msra.mxu0 0
    %1927 = vmatprep.subr.bf16.mxu0 0
    %1928 = vmatpush1.bf16.msra.mxu0 0
    %1929 = vmatprep.subr.bf16.mxu0 0
    %1930 = vmatpush1.bf16.msra.mxu0 0
    %1931 = vmatprep.mubr.bf16.mxu0 0
    %1932 = vmatmul.mubr.bf16.gmra.mrb[0].mxu0 %v1898
    %v1933 = vpop.f32.mrb[0].mxu0
    %v1934 = vadd.f32 %v895, %v1933
    %v1935 = vpop.f32.mrb[0].mxu0
    %v1936 = vadd.f32 %v899, %v1935
    %v1937 = vpop.f32.mrb[0].mxu0
    %v1938 = vpop.f32.mrb[0].mxu0
    %1939 = vdwg.mxu0
    %1940 = vmatprep.subr.bf16.mxu0 0
    %1941 = vmatpush1.bf16.msra.mxu0 %v1073
    %1942 = vmatprep.subr.bf16.mxu0 0
    %1943 = vmatpush1.bf16.msra.mxu0 %v1076
    %1944 = vmatprep.subr.bf16.mxu0 0
    %1945 = vmatpush1.bf16.msra.mxu0 %v1079
    %1946 = vmatprep.subr.bf16.mxu0 0
    %1947 = vmatpush1.bf16.msra.mxu0 %v1082
    %1948 = vmatprep.subr.bf16.mxu0 0
    %1949 = vmatpush1.bf16.msra.mxu0 %v1085
    %1950 = vmatprep.subr.bf16.mxu0 0
    %1951 = vmatpush1.bf16.msra.mxu0 %v1088
    %1952 = vmatprep.subr.bf16.mxu0 0
    %1953 = vmatpush1.bf16.msra.mxu0 %v1091
    %1954 = vmatprep.subr.bf16.mxu0 0
    %1955 = vmatpush1.bf16.msra.mxu0 %v1094
    %1956 = vmatprep.subr.bf16.mxu0 0
    %1957 = vmatpush1.bf16.msra.mxu0 0
    %1958 = vmatprep.subr.bf16.mxu0 0
    %1959 = vmatpush1.bf16.msra.mxu0 0
    %1960 = vmatprep.subr.bf16.mxu0 0
    %1961 = vmatpush1.bf16.msra.mxu0 0
    %1962 = vmatprep.subr.bf16.mxu0 0
    %1963 = vmatpush1.bf16.msra.mxu0 0
    %1964 = vmatprep.subr.bf16.mxu0 0
    %1965 = vmatpush1.bf16.msra.mxu0 0
    %1966 = vmatprep.subr.bf16.mxu0 0
    %1967 = vmatpush1.bf16.msra.mxu0 0
    %1968 = vmatprep.subr.bf16.mxu0 0
    %1969 = vmatpush1.bf16.msra.mxu0 0
    %1970 = vmatprep.subr.bf16.mxu0 0
    %1971 = vmatpush1.bf16.msra.mxu0 0
    %1972 = vmatprep.mubr.bf16.mxu0 0
    %1973 = vmatmul.mubr.bf16.gmra.mrb[0].mxu0 %v1898
    %v1974 = vpop.f32.mrb[0].mxu0
    %v1975 = vadd.f32 %v903, %v1974
    %v1976 = vpop.f32.mrb[0].mxu0
    %v1977 = vpop.f32.mrb[0].mxu0
    %v1978 = vpop.f32.mrb[0].mxu0
    %1979 = vdwg.mxu0
    %v1980 = vadd.f32 %v1895, %v1934
    %v1981 = vxor.u32 %v1980, 2147483648
    %v1982 = vmul.f32 %v1981, 1.442695
    %v1983 = vpow.pop %v1982
    %v1984 = vadd.f32 %v1983, 1.0
    %v1985 = vrcp.pop %v1984
    %v1986 = vmul.f32 1.0, %v1985
    %v1987 = vadd.f32 %v1896, %v1936
    %v1988 = vxor.u32 %v1987, 2147483648
    %v1989 = vmul.f32 %v1988, 1.442695
    %v1990 = vpow.pop %v1989
    %v1991 = vadd.f32 %v1990, 1.0
    %v1992 = vrcp.pop %v1991
    %v1993 = vmul.f32 1.0, %v1992
    %v1994 = vmul.f32 %v1986, %v1975
    %v1995 = vadd.f32 %v1897, %v1994
    %v1996 = vtanh.pop %v1995
    %v1997 = vsub.f32 1.0, %v1993
    %v1998 = vmul.f32 %v1997, %v1996
    %v1999 = vmul.f32 %v1993, %v1782
    %v2000 = vadd.f32 %v1998, %v1999
    %2001 = vst [vmem:[%s1892] sm:$0xff] %v2000
    %s2002 = scalar_lea.vmem [#allocation3], 48
    %v2003 = vld [vmem:[%s2002] sm:$0xff]
    %v2004 = vld [vmem:[%s2002 + $0x8] sm:$0xff]
    %v2005 = vld [vmem:[%s2002 + $0x10] sm:$0xff]
    %v2006 = vpack.c.bf16 %v1891, %v1891
    %2007 = vmatprep.subr.bf16.mxu0 %v1307
    %2008 = vmatpush1.bf16.msra.mxu0 %v1306
    %2009 = vmatprep.subr.bf16.mxu0 %v1310
    %2010 = vmatpush1.bf16.msra.mxu0 %v1309
    %2011 = vmatprep.subr.bf16.mxu0 %v1313
    %2012 = vmatpush1.bf16.msra.mxu0 %v1312
    %2013 = vmatprep.subr.bf16.mxu0 %v1316
    %2014 = vmatpush1.bf16.msra.mxu0 %v1315
    %2015 = vmatprep.subr.bf16.mxu0 %v1319
    %2016 = vmatpush1.bf16.msra.mxu0 %v1318
    %2017 = vmatprep.subr.bf16.mxu0 %v1322
    %2018 = vmatpush1.bf16.msra.mxu0 %v1321
    %2019 = vmatprep.subr.bf16.mxu0 %v1325
    %2020 = vmatpush1.bf16.msra.mxu0 %v1324
    %2021 = vmatprep.subr.bf16.mxu0 %v1328
    %2022 = vmatpush1.bf16.msra.mxu0 %v1327
    %2023 = vmatprep.subr.bf16.mxu0 0
    %2024 = vmatpush1.bf16.msra.mxu0 0
    %2025 = vmatprep.subr.bf16.mxu0 0
    %2026 = vmatpush1.bf16.msra.mxu0 0
    %2027 = vmatprep.subr.bf16.mxu0 0
    %2028 = vmatpush1.bf16.msra.mxu0 0
    %2029 = vmatprep.subr.bf16.mxu0 0
    %2030 = vmatpush1.bf16.msra.mxu0 0
    %2031 = vmatprep.subr.bf16.mxu0 0
    %2032 = vmatpush1.bf16.msra.mxu0 0
    %2033 = vmatprep.subr.bf16.mxu0 0
    %2034 = vmatpush1.bf16.msra.mxu0 0
    %2035 = vmatprep.subr.bf16.mxu0 0
    %2036 = vmatpush1.bf16.msra.mxu0 0
    %2037 = vmatprep.subr.bf16.mxu0 0
    %2038 = vmatpush1.bf16.msra.mxu0 0
    %2039 = vmatprep.mubr.bf16.mxu0 0
    %2040 = vmatmul.mubr.bf16.gmra.mrb[0].mxu0 %v2006
    %v2041 = vpop.f32.mrb[0].mxu0
    %v2042 = vadd.f32 %v912, %v2041
    %v2043 = vpop.f32.mrb[0].mxu0
    %v2044 = vadd.f32 %v916, %v2043
    %v2045 = vpop.f32.mrb[0].mxu0
    %v2046 = vpop.f32.mrb[0].mxu0
    %2047 = vdwg.mxu0
    %2048 = vmatprep.subr.bf16.mxu0 0
    %2049 = vmatpush1.bf16.msra.mxu0 %v1308
    %2050 = vmatprep.subr.bf16.mxu0 0
    %2051 = vmatpush1.bf16.msra.mxu0 %v1311
    %2052 = vmatprep.subr.bf16.mxu0 0
    %2053 = vmatpush1.bf16.msra.mxu0 %v1314
    %2054 = vmatprep.subr.bf16.mxu0 0
    %2055 = vmatpush1.bf16.msra.mxu0 %v1317
    %2056 = vmatprep.subr.bf16.mxu0 0
    %2057 = vmatpush1.bf16.msra.mxu0 %v1320
    %2058 = vmatprep.subr.bf16.mxu0 0
    %2059 = vmatpush1.bf16.msra.mxu0 %v1323
    %2060 = vmatprep.subr.bf16.mxu0 0
    %2061 = vmatpush1.bf16.msra.mxu0 %v1326
    %2062 = vmatprep.subr.bf16.mxu0 0
    %2063 = vmatpush1.bf16.msra.mxu0 %v1329
    %2064 = vmatprep.subr.bf16.mxu0 0
    %2065 = vmatpush1.bf16.msra.mxu0 0
    %2066 = vmatprep.subr.bf16.mxu0 0
    %2067 = vmatpush1.bf16.msra.mxu0 0
    %2068 = vmatprep.subr.bf16.mxu0 0
    %2069 = vmatpush1.bf16.msra.mxu0 0
    %2070 = vmatprep.subr.bf16.mxu0 0
    %2071 = vmatpush1.bf16.msra.mxu0 0
    %2072 = vmatprep.subr.bf16.mxu0 0
    %2073 = vmatpush1.bf16.msra.mxu0 0
    %2074 = vmatprep.subr.bf16.mxu0 0
    %2075 = vmatpush1.bf16.msra.mxu0 0
    %2076 = vmatprep.subr.bf16.mxu0 0
    %2077 = vmatpush1.bf16.msra.mxu0 0
    %2078 = vmatprep.subr.bf16.mxu0 0
    %2079 = vmatpush1.bf16.msra.mxu0 0
    %2080 = vmatprep.mubr.bf16.mxu0 0
    %2081 = vmatmul.mubr.bf16.gmra.mrb[0].mxu0 %v2006
    %v2082 = vpop.f32.mrb[0].mxu0
    %v2083 = vadd.f32 %v920, %v2082
    %v2084 = vpop.f32.mrb[0].mxu0
    %v2085 = vpop.f32.mrb[0].mxu0
    %v2086 = vpop.f32.mrb[0].mxu0
    %2087 = vdwg.mxu0
    %v2088 = vadd.f32 %v2003, %v2042
    %v2089 = vxor.u32 %v2088, 2147483648
    %v2090 = vmul.f32 %v2089, 1.442695
    %v2091 = vpow.pop %v2090
    %v2092 = vadd.f32 %v2091, 1.0
    %v2093 = vrcp.pop %v2092
    %v2094 = vmul.f32 1.0, %v2093
    %v2095 = vadd.f32 %v2004, %v2044
    %v2096 = vxor.u32 %v2095, 2147483648
    %v2097 = vmul.f32 %v2096, 1.442695
    %v2098 = vpow.pop %v2097
    %v2099 = vadd.f32 %v2098, 1.0
    %v2100 = vrcp.pop %v2099
    %v2101 = vmul.f32 1.0, %v2100
    %v2102 = vmul.f32 %v2094, %v2083
    %v2103 = vadd.f32 %v2005, %v2102
    %v2104 = vtanh.pop %v2103
    %v2105 = vsub.f32 1.0, %v2101
    %v2106 = vmul.f32 %v2105, %v2104
    %v2107 = vmul.f32 %v2101, %v1891
    %v2108 = vadd.f32 %v2106, %v2107
    %2109 = vst [vmem:[%s1783 + $0x8] sm:$0xff] %v2108
    %s2110 = scalar_lea.vmem [#allocation2], 96
    %v2111 = vld [vmem:[%s2110] sm:$0xff]
    %v2112 = vld [vmem:[%s2110 + $0x8] sm:$0xff]
    %v2113 = vld [vmem:[%s2110 + $0x10] sm:$0xff]
    %v2114 = vpack.c.bf16 %v2000, %v2000
    %2115 = vmatprep.subr.bf16.mxu0 %v1072
    %2116 = vmatpush1.bf16.msra.mxu0 %v1071
    %2117 = vmatprep.subr.bf16.mxu0 %v1075
    %2118 = vmatpush1.bf16.msra.mxu0 %v1074
    %2119 = vmatprep.subr.bf16.mxu0 %v1078
    %2120 = vmatpush1.bf16.msra.mxu0 %v1077
    %2121 = vmatprep.subr.bf16.mxu0 %v1081
    %2122 = vmatpush1.bf16.msra.mxu0 %v1080
    %2123 = vmatprep.subr.bf16.mxu0 %v1084
    %2124 = vmatpush1.bf16.msra.mxu0 %v1083
    %2125 = vmatprep.subr.bf16.mxu0 %v1087
    %2126 = vmatpush1.bf16.msra.mxu0 %v1086
    %2127 = vmatprep.subr.bf16.mxu0 %v1090
    %2128 = vmatpush1.bf16.msra.mxu0 %v1089
    %2129 = vmatprep.subr.bf16.mxu0 %v1093
    %2130 = vmatpush1.bf16.msra.mxu0 %v1092
    %2131 = vmatprep.subr.bf16.mxu0 0
    %2132 = vmatpush1.bf16.msra.mxu0 0
    %2133 = vmatprep.subr.bf16.mxu0 0
    %2134 = vmatpush1.bf16.msra.mxu0 0
    %2135 = vmatprep.subr.bf16.mxu0 0
    %2136 = vmatpush1.bf16.msra.mxu0 0
    %2137 = vmatprep.subr.bf16.mxu0 0
    %2138 = vmatpush1.bf16.msra.mxu0 0
    %2139 = vmatprep.subr.bf16.mxu0 0
    %2140 = vmatpush1.bf16.msra.mxu0 0
    %2141 = vmatprep.subr.bf16.mxu0 0
    %2142 = vmatpush1.bf16.msra.mxu0 0
    %2143 = vmatprep.subr.bf16.mxu0 0
    %2144 = vmatpush1.bf16.msra.mxu0 0
    %2145 = vmatprep.subr.bf16.mxu0 0
    %2146 = vmatpush1.bf16.msra.mxu0 0
    %2147 = vmatprep.mubr.bf16.mxu0 0
    %2148 = vmatmul.mubr.bf16.gmra.mrb[0].mxu0 %v2114
    %v2149 = vpop.f32.mrb[0].mxu0
    %v2150 = vadd.f32 %v895, %v2149
    %v2151 = vpop.f32.mrb[0].mxu0
    %v2152 = vadd.f32 %v899, %v2151
    %v2153 = vpop.f32.mrb[0].mxu0
    %v2154 = vpop.f32.mrb[0].mxu0
    %2155 = vdwg.mxu0
    %2156 = vmatprep.subr.bf16.mxu0 0
    %2157 = vmatpush1.bf16.msra.mxu0 %v1073
    %2158 = vmatprep.subr.bf16.mxu0 0
    %2159 = vmatpush1.bf16.msra.mxu0 %v1076
    %2160 = vmatprep.subr.bf16.mxu0 0
    %2161 = vmatpush1.bf16.msra.mxu0 %v1079
    %2162 = vmatprep.subr.bf16.mxu0 0
    %2163 = vmatpush1.bf16.msra.mxu0 %v1082
    %2164 = vmatprep.subr.bf16.mxu0 0
    %2165 = vmatpush1.bf16.msra.mxu0 %v1085
    %2166 = vmatprep.subr.bf16.mxu0 0
    %2167 = vmatpush1.bf16.msra.mxu0 %v1088
    %2168 = vmatprep.subr.bf16.mxu0 0
    %2169 = vmatpush1.bf16.msra.mxu0 %v1091
    %2170 = vmatprep.subr.bf16.mxu0 0
    %2171 = vmatpush1.bf16.msra.mxu0 %v1094
    %2172 = vmatprep.subr.bf16.mxu0 0
    %2173 = vmatpush1.bf16.msra.mxu0 0
    %2174 = vmatprep.subr.bf16.mxu0 0
    %2175 = vmatpush1.bf16.msra.mxu0 0
    %2176 = vmatprep.subr.bf16.mxu0 0
    %2177 = vmatpush1.bf16.msra.mxu0 0
    %2178 = vmatprep.subr.bf16.mxu0 0
    %2179 = vmatpush1.bf16.msra.mxu0 0
    %2180 = vmatprep.subr.bf16.mxu0 0
    %2181 = vmatpush1.bf16.msra.mxu0 0
    %2182 = vmatprep.subr.bf16.mxu0 0
    %2183 = vmatpush1.bf16.msra.mxu0 0
    %2184 = vmatprep.subr.bf16.mxu0 0
    %2185 = vmatpush1.bf16.msra.mxu0 0
    %2186 = vmatprep.subr.bf16.mxu0 0
    %2187 = vmatpush1.bf16.msra.mxu0 0
    %2188 = vmatprep.mubr.bf16.mxu0 0
    %2189 = vmatmul.mubr.bf16.gmra.mrb[0].mxu0 %v2114
    %v2190 = vpop.f32.mrb[0].mxu0
    %v2191 = vadd.f32 %v903, %v2190
    %v2192 = vpop.f32.mrb[0].mxu0
    %v2193 = vpop.f32.mrb[0].mxu0
    %v2194 = vpop.f32.mrb[0].mxu0
    %2195 = vdwg.mxu0
    %v2196 = vadd.f32 %v2111, %v2150
    %v2197 = vxor.u32 %v2196, 2147483648
    %v2198 = vmul.f32 %v2197, 1.442695
    %v2199 = vpow.pop %v2198
    %v2200 = vadd.f32 %v2199, 1.0
    %v2201 = vrcp.pop %v2200
    %v2202 = vmul.f32 1.0, %v2201
    %v2203 = vadd.f32 %v2112, %v2152
    %v2204 = vxor.u32 %v2203, 2147483648
    %v2205 = vmul.f32 %v2204, 1.442695
    %v2206 = vpow.pop %v2205
    %v2207 = vadd.f32 %v2206, 1.0
    %v2208 = vrcp.pop %v2207
    %v2209 = vmul.f32 1.0, %v2208
    %v2210 = vmul.f32 %v2202, %v2191
    %v2211 = vadd.f32 %v2113, %v2210
    %v2212 = vtanh.pop %v2211
    %v2213 = vsub.f32 1.0, %v2209
    %v2214 = vmul.f32 %v2213, %v2212
    %v2215 = vmul.f32 %v2209, %v2000
    %v2216 = vadd.f32 %v2214, %v2215
    %2217 = vst [vmem:[%s1674] sm:$0xff] %v2216
    %s2218 = scalar_lea.vmem [#allocation3], 24
    %v2219 = vld [vmem:[%s2218] sm:$0xff]
    %v2220 = vld [vmem:[%s2218 + $0x8] sm:$0xff]
    %v2221 = vld [vmem:[%s2218 + $0x10] sm:$0xff]
    %v2222 = vpack.c.bf16 %v2108, %v2108
    %2223 = vmatprep.subr.bf16.mxu0 %v1307
    %2224 = vmatpush1.bf16.msra.mxu0 %v1306
    %2225 = vmatprep.subr.bf16.mxu0 %v1310
    %2226 = vmatpush1.bf16.msra.mxu0 %v1309
    %2227 = vmatprep.subr.bf16.mxu0 %v1313
    %2228 = vmatpush1.bf16.msra.mxu0 %v1312
    %2229 = vmatprep.subr.bf16.mxu0 %v1316
    %2230 = vmatpush1.bf16.msra.mxu0 %v1315
    %2231 = vmatprep.subr.bf16.mxu0 %v1319
    %2232 = vmatpush1.bf16.msra.mxu0 %v1318
    %2233 = vmatprep.subr.bf16.mxu0 %v1322
    %2234 = vmatpush1.bf16.msra.mxu0 %v1321
    %2235 = vmatprep.subr.bf16.mxu0 %v1325
    %2236 = vmatpush1.bf16.msra.mxu0 %v1324
    %2237 = vmatprep.subr.bf16.mxu0 %v1328
    %2238 = vmatpush1.bf16.msra.mxu0 %v1327
    %2239 = vmatprep.subr.bf16.mxu0 0
    %2240 = vmatpush1.bf16.msra.mxu0 0
    %2241 = vmatprep.subr.bf16.mxu0 0
    %2242 = vmatpush1.bf16.msra.mxu0 0
    %2243 = vmatprep.subr.bf16.mxu0 0
    %2244 = vmatpush1.bf16.msra.mxu0 0
    %2245 = vmatprep.subr.bf16.mxu0 0
    %2246 = vmatpush1.bf16.msra.mxu0 0
    %2247 = vmatprep.subr.bf16.mxu0 0
    %2248 = vmatpush1.bf16.msra.mxu0 0
    %2249 = vmatprep.subr.bf16.mxu0 0
    %2250 = vmatpush1.bf16.msra.mxu0 0
    %2251 = vmatprep.subr.bf16.mxu0 0
    %2252 = vmatpush1.bf16.msra.mxu0 0
    %2253 = vmatprep.subr.bf16.mxu0 0
    %2254 = vmatpush1.bf16.msra.mxu0 0
    %2255 = vmatprep.mubr.bf16.mxu0 0
    %2256 = vmatmul.mubr.bf16.gmra.mrb[0].mxu0 %v2222
    %v2257 = vpop.f32.mrb[0].mxu0
    %v2258 = vadd.f32 %v912, %v2257
    %v2259 = vpop.f32.mrb[0].mxu0
    %v2260 = vadd.f32 %v916, %v2259
    %v2261 = vpop.f32.mrb[0].mxu0
    %v2262 = vpop.f32.mrb[0].mxu0
    %2263 = vdwg.mxu0
    %2264 = vmatprep.subr.bf16.mxu0 0
    %2265 = vmatpush1.bf16.msra.mxu0 %v1308
    %2266 = vmatprep.subr.bf16.mxu0 0
    %2267 = vmatpush1.bf16.msra.mxu0 %v1311
    %2268 = vmatprep.subr.bf16.mxu0 0
    %2269 = vmatpush1.bf16.msra.mxu0 %v1314
    %2270 = vmatprep.subr.bf16.mxu0 0
    %2271 = vmatpush1.bf16.msra.mxu0 %v1317
    %2272 = vmatprep.subr.bf16.mxu0 0
    %2273 = vmatpush1.bf16.msra.mxu0 %v1320
    %2274 = vmatprep.subr.bf16.mxu0 0
    %2275 = vmatpush1.bf16.msra.mxu0 %v1323
    %2276 = vmatprep.subr.bf16.mxu0 0
    %2277 = vmatpush1.bf16.msra.mxu0 %v1326
    %2278 = vmatprep.subr.bf16.mxu0 0
    %2279 = vmatpush1.bf16.msra.mxu0 %v1329
    %2280 = vmatprep.subr.bf16.mxu0 0
    %2281 = vmatpush1.bf16.msra.mxu0 0
    %2282 = vmatprep.subr.bf16.mxu0 0
    %2283 = vmatpush1.bf16.msra.mxu0 0
    %2284 = vmatprep.subr.bf16.mxu0 0
    %2285 = vmatpush1.bf16.msra.mxu0 0
    %2286 = vmatprep.subr.bf16.mxu0 0
    %2287 = vmatpush1.bf16.msra.mxu0 0
    %2288 = vmatprep.subr.bf16.mxu0 0
    %2289 = vmatpush1.bf16.msra.mxu0 0
    %2290 = vmatprep.subr.bf16.mxu0 0
    %2291 = vmatpush1.bf16.msra.mxu0 0
    %2292 = vmatprep.subr.bf16.mxu0 0
    %2293 = vmatpush1.bf16.msra.mxu0 0
    %2294 = vmatprep.subr.bf16.mxu0 0
    %2295 = vmatpush1.bf16.msra.mxu0 0
    %2296 = vmatprep.mubr.bf16.mxu0 0
    %2297 = vmatmul.mubr.bf16.gmra.mrb[0].mxu0 %v2222
    %v2298 = vpop.f32.mrb[0].mxu0
    %v2299 = vadd.f32 %v920, %v2298
    %v2300 = vpop.f32.mrb[0].mxu0
    %v2301 = vpop.f32.mrb[0].mxu0
    %v2302 = vpop.f32.mrb[0].mxu0
    %2303 = vdwg.mxu0
    %v2304 = vadd.f32 %v2219, %v2258
    %v2305 = vxor.u32 %v2304, 2147483648
    %v2306 = vmul.f32 %v2305, 1.442695
    %v2307 = vpow.pop %v2306
    %v2308 = vadd.f32 %v2307, 1.0
    %v2309 = vrcp.pop %v2308
    %v2310 = vmul.f32 1.0, %v2309
    %v2311 = vadd.f32 %v2220, %v2260
    %v2312 = vxor.u32 %v2311, 2147483648
    %v2313 = vmul.f32 %v2312, 1.442695
    %v2314 = vpow.pop %v2313
    %v2315 = vadd.f32 %v2314, 1.0
    %v2316 = vrcp.pop %v2315
    %v2317 = vmul.f32 1.0, %v2316
    %v2318 = vmul.f32 %v2310, %v2299
    %v2319 = vadd.f32 %v2221, %v2318
    %v2320 = vtanh.pop %v2319
    %v2321 = vsub.f32 1.0, %v2317
    %v2322 = vmul.f32 %v2321, %v2320
    %v2323 = vmul.f32 %v2317, %v2108
    %v2324 = vadd.f32 %v2322, %v2323
    %2325 = vst [vmem:[%s1565 + $0x8] sm:$0xff] %v2324
    %s2326 = scalar_lea.vmem [#allocation2], 120
    %v2327 = vld [vmem:[%s2326] sm:$0xff]
    %v2328 = vld [vmem:[%s2326 + $0x8] sm:$0xff]
    %v2329 = vld [vmem:[%s2326 + $0x10] sm:$0xff]
    %v2330 = vpack.c.bf16 %v2216, %v2216
    %2331 = vmatprep.subr.bf16.mxu0 %v1072
    %2332 = vmatpush1.bf16.msra.mxu0 %v1071
    %2333 = vmatprep.subr.bf16.mxu0 %v1075
    %2334 = vmatpush1.bf16.msra.mxu0 %v1074
    %2335 = vmatprep.subr.bf16.mxu0 %v1078
    %2336 = vmatpush1.bf16.msra.mxu0 %v1077
    %2337 = vmatprep.subr.bf16.mxu0 %v1081
    %2338 = vmatpush1.bf16.msra.mxu0 %v1080
    %2339 = vmatprep.subr.bf16.mxu0 %v1084
    %2340 = vmatpush1.bf16.msra.mxu0 %v1083
    %2341 = vmatprep.subr.bf16.mxu0 %v1087
    %2342 = vmatpush1.bf16.msra.mxu0 %v1086
    %2343 = vmatprep.subr.bf16.mxu0 %v1090
    %2344 = vmatpush1.bf16.msra.mxu0 %v1089
    %2345 = vmatprep.subr.bf16.mxu0 %v1093
    %2346 = vmatpush1.bf16.msra.mxu0 %v1092
    %2347 = vmatprep.subr.bf16.mxu0 0
    %2348 = vmatpush1.bf16.msra.mxu0 0
    %2349 = vmatprep.subr.bf16.mxu0 0
    %2350 = vmatpush1.bf16.msra.mxu0 0
    %2351 = vmatprep.subr.bf16.mxu0 0
    %2352 = vmatpush1.bf16.msra.mxu0 0
    %2353 = vmatprep.subr.bf16.mxu0 0
    %2354 = vmatpush1.bf16.msra.mxu0 0
    %2355 = vmatprep.subr.bf16.mxu0 0
    %2356 = vmatpush1.bf16.msra.mxu0 0
    %2357 = vmatprep.subr.bf16.mxu0 0
    %2358 = vmatpush1.bf16.msra.mxu0 0
    %2359 = vmatprep.subr.bf16.mxu0 0
    %2360 = vmatpush1.bf16.msra.mxu0 0
    %2361 = vmatprep.subr.bf16.mxu0 0
    %2362 = vmatpush1.bf16.msra.mxu0 0
    %2363 = vmatprep.mubr.bf16.mxu0 0
    %2364 = vmatmul.mubr.bf16.gmra.mrb[0].mxu0 %v2330
    %v2365 = vpop.f32.mrb[0].mxu0
    %v2366 = vadd.f32 %v895, %v2365
    %v2367 = vpop.f32.mrb[0].mxu0
    %v2368 = vadd.f32 %v899, %v2367
    %v2369 = vpop.f32.mrb[0].mxu0
    %v2370 = vpop.f32.mrb[0].mxu0
    %2371 = vdwg.mxu0
    %2372 = vmatprep.subr.bf16.mxu0 0
    %2373 = vmatpush1.bf16.msra.mxu0 %v1073
    %2374 = vmatprep.subr.bf16.mxu0 0
    %2375 = vmatpush1.bf16.msra.mxu0 %v1076
    %2376 = vmatprep.subr.bf16.mxu0 0
    %2377 = vmatpush1.bf16.msra.mxu0 %v1079
    %2378 = vmatprep.subr.bf16.mxu0 0
    %2379 = vmatpush1.bf16.msra.mxu0 %v1082
    %2380 = vmatprep.subr.bf16.mxu0 0
    %2381 = vmatpush1.bf16.msra.mxu0 %v1085
    %2382 = vmatprep.subr.bf16.mxu0 0
    %2383 = vmatpush1.bf16.msra.mxu0 %v1088
    %2384 = vmatprep.subr.bf16.mxu0 0
    %2385 = vmatpush1.bf16.msra.mxu0 %v1091
    %2386 = vmatprep.subr.bf16.mxu0 0
    %2387 = vmatpush1.bf16.msra.mxu0 %v1094
    %2388 = vmatprep.subr.bf16.mxu0 0
    %2389 = vmatpush1.bf16.msra.mxu0 0
    %2390 = vmatprep.subr.bf16.mxu0 0
    %2391 = vmatpush1.bf16.msra.mxu0 0
    %2392 = vmatprep.subr.bf16.mxu0 0
    %2393 = vmatpush1.bf16.msra.mxu0 0
    %2394 = vmatprep.subr.bf16.mxu0 0
    %2395 = vmatpush1.bf16.msra.mxu0 0
    %2396 = vmatprep.subr.bf16.mxu0 0
    %2397 = vmatpush1.bf16.msra.mxu0 0
    %2398 = vmatprep.subr.bf16.mxu0 0
    %2399 = vmatpush1.bf16.msra.mxu0 0
    %2400 = vmatprep.subr.bf16.mxu0 0
    %2401 = vmatpush1.bf16.msra.mxu0 0
    %2402 = vmatprep.subr.bf16.mxu0 0
    %2403 = vmatpush1.bf16.msra.mxu0 0
    %2404 = vmatprep.mubr.bf16.mxu0 0
    %2405 = vmatmul.mubr.bf16.gmra.mrb[0].mxu0 %v2330
    %v2406 = vpop.f32.mrb[0].mxu0
    %v2407 = vadd.f32 %v903, %v2406
    %v2408 = vpop.f32.mrb[0].mxu0
    %v2409 = vpop.f32.mrb[0].mxu0
    %v2410 = vpop.f32.mrb[0].mxu0
    %2411 = vdwg.mxu0
    %v2412 = vadd.f32 %v2327, %v2366
    %v2413 = vxor.u32 %v2412, 2147483648
    %v2414 = vmul.f32 %v2413, 1.442695
    %v2415 = vpow.pop %v2414
    %v2416 = vadd.f32 %v2415, 1.0
    %v2417 = vrcp.pop %v2416
    %v2418 = vmul.f32 1.0, %v2417
    %v2419 = vadd.f32 %v2328, %v2368
    %v2420 = vxor.u32 %v2419, 2147483648
    %v2421 = vmul.f32 %v2420, 1.442695
    %v2422 = vpow.pop %v2421
    %v2423 = vadd.f32 %v2422, 1.0
    %v2424 = vrcp.pop %v2423
    %v2425 = vmul.f32 1.0, %v2424
    %v2426 = vmul.f32 %v2418, %v2407
    %v2427 = vadd.f32 %v2329, %v2426
    %v2428 = vtanh.pop %v2427
    %v2429 = vsub.f32 1.0, %v2425
    %v2430 = vmul.f32 %v2429, %v2428
    %v2431 = vmul.f32 %v2425, %v2216
    %v2432 = vadd.f32 %v2430, %v2431
    %2433 = vst [vmem:[%s1456] sm:$0xff] %v2432
    %v2434 = vld [vmem:[#allocation3] sm:$0xff]
    %v2435 = vld [vmem:[#allocation3 + $0x8] sm:$0xff]
    %v2436 = vld [vmem:[#allocation3 + $0x10] sm:$0xff]
    %v2437 = vpack.c.bf16 %v2324, %v2324
    %2438 = vmatprep.subr.bf16.mxu0 %v1307
    %2439 = vmatpush1.bf16.msra.mxu0 %v1306
    %2440 = vmatprep.subr.bf16.mxu0 %v1310
    %2441 = vmatpush1.bf16.msra.mxu0 %v1309
    %2442 = vmatprep.subr.bf16.mxu0 %v1313
    %2443 = vmatpush1.bf16.msra.mxu0 %v1312
    %2444 = vmatprep.subr.bf16.mxu0 %v1316
    %2445 = vmatpush1.bf16.msra.mxu0 %v1315
    %2446 = vmatprep.subr.bf16.mxu0 %v1319
    %2447 = vmatpush1.bf16.msra.mxu0 %v1318
    %2448 = vmatprep.subr.bf16.mxu0 %v1322
    %2449 = vmatpush1.bf16.msra.mxu0 %v1321
    %2450 = vmatprep.subr.bf16.mxu0 %v1325
    %2451 = vmatpush1.bf16.msra.mxu0 %v1324
    %2452 = vmatprep.subr.bf16.mxu0 %v1328
    %2453 = vmatpush1.bf16.msra.mxu0 %v1327
    %2454 = vmatprep.subr.bf16.mxu0 0
    %2455 = vmatpush1.bf16.msra.mxu0 0
    %2456 = vmatprep.subr.bf16.mxu0 0
    %2457 = vmatpush1.bf16.msra.mxu0 0
    %2458 = vmatprep.subr.bf16.mxu0 0
    %2459 = vmatpush1.bf16.msra.mxu0 0
    %2460 = vmatprep.subr.bf16.mxu0 0
    %2461 = vmatpush1.bf16.msra.mxu0 0
    %2462 = vmatprep.subr.bf16.mxu0 0
    %2463 = vmatpush1.bf16.msra.mxu0 0
    %2464 = vmatprep.subr.bf16.mxu0 0
    %2465 = vmatpush1.bf16.msra.mxu0 0
    %2466 = vmatprep.subr.bf16.mxu0 0
    %2467 = vmatpush1.bf16.msra.mxu0 0
    %2468 = vmatprep.subr.bf16.mxu0 0
    %2469 = vmatpush1.bf16.msra.mxu0 0
    %2470 = vmatprep.mubr.bf16.mxu0 0
    %2471 = vmatmul.mubr.bf16.gmra.mrb[0].mxu0 %v2437
    %v2472 = vpop.f32.mrb[0].mxu0
    %v2473 = vadd.f32 %v912, %v2472
    %v2474 = vpop.f32.mrb[0].mxu0
    %v2475 = vadd.f32 %v916, %v2474
    %v2476 = vpop.f32.mrb[0].mxu0
    %v2477 = vpop.f32.mrb[0].mxu0
    %2478 = vdwg.mxu0
    %2479 = vmatprep.subr.bf16.mxu0 0
    %2480 = vmatpush1.bf16.msra.mxu0 %v1308
    %2481 = vmatprep.subr.bf16.mxu0 0
    %2482 = vmatpush1.bf16.msra.mxu0 %v1311
    %2483 = vmatprep.subr.bf16.mxu0 0
    %2484 = vmatpush1.bf16.msra.mxu0 %v1314
    %2485 = vmatprep.subr.bf16.mxu0 0
    %2486 = vmatpush1.bf16.msra.mxu0 %v1317
    %2487 = vmatprep.subr.bf16.mxu0 0
    %2488 = vmatpush1.bf16.msra.mxu0 %v1320
    %2489 = vmatprep.subr.bf16.mxu0 0
    %2490 = vmatpush1.bf16.msra.mxu0 %v1323
    %2491 = vmatprep.subr.bf16.mxu0 0
    %2492 = vmatpush1.bf16.msra.mxu0 %v1326
    %2493 = vmatprep.subr.bf16.mxu0 0
    %2494 = vmatpush1.bf16.msra.mxu0 %v1329
    %2495 = vmatprep.subr.bf16.mxu0 0
    %2496 = vmatpush1.bf16.msra.mxu0 0
    %2497 = vmatprep.subr.bf16.mxu0 0
    %2498 = vmatpush1.bf16.msra.mxu0 0
    %2499 = vmatprep.subr.bf16.mxu0 0
    %2500 = vmatpush1.bf16.msra.mxu0 0
    %2501 = vmatprep.subr.bf16.mxu0 0
    %2502 = vmatpush1.bf16.msra.mxu0 0
    %2503 = vmatprep.subr.bf16.mxu0 0
    %2504 = vmatpush1.bf16.msra.mxu0 0
    %2505 = vmatprep.subr.bf16.mxu0 0
    %2506 = vmatpush1.bf16.msra.mxu0 0
    %2507 = vmatprep.subr.bf16.mxu0 0
    %2508 = vmatpush1.bf16.msra.mxu0 0
    %2509 = vmatprep.subr.bf16.mxu0 0
    %2510 = vmatpush1.bf16.msra.mxu0 0
    %2511 = vmatprep.mubr.bf16.mxu0 0
    %2512 = vmatmul.mubr.bf16.gmra.mrb[0].mxu0 %v2437
    %v2513 = vpop.f32.mrb[0].mxu0
    %v2514 = vadd.f32 %v920, %v2513
    %v2515 = vpop.f32.mrb[0].mxu0
    %v2516 = vpop.f32.mrb[0].mxu0
    %v2517 = vpop.f32.mrb[0].mxu0
    %2518 = vdwg.mxu0
    %v2519 = vadd.f32 %v2434, %v2473
    %v2520 = vxor.u32 %v2519, 2147483648
    %v2521 = vmul.f32 %v2520, 1.442695
    %v2522 = vpow.pop %v2521
    %v2523 = vadd.f32 %v2522, 1.0
    %v2524 = vrcp.pop %v2523
    %v2525 = vmul.f32 1.0, %v2524
    %v2526 = vadd.f32 %v2435, %v2475
    %v2527 = vxor.u32 %v2526, 2147483648
    %v2528 = vmul.f32 %v2527, 1.442695
    %v2529 = vpow.pop %v2528
    %v2530 = vadd.f32 %v2529, 1.0
    %v2531 = vrcp.pop %v2530
    %v2532 = vmul.f32 1.0, %v2531
    %v2533 = vmul.f32 %v2525, %v2514
    %v2534 = vadd.f32 %v2436, %v2533
    %v2535 = vtanh.pop %v2534
    %v2536 = vsub.f32 1.0, %v2532
    %v2537 = vmul.f32 %v2536, %v2535
    %v2538 = vmul.f32 %v2532, %v2324
    %v2539 = vadd.f32 %v2537, %v2538
    %2540 = vst [vmem:[%s7 + $0x8] sm:$0xff] %v2539
    // Predicated region
    $region34: #{han_forward.7} parent=1 // pred_check
      _
    $region35: #{han_forward.7} parent=1 // pred_check_branch
      %2542 = sbr.rel (0) target = $region37
    $region36: #{han_forward.7} parent=1 // pred_region
      _
    $region37: #{han_forward.7} parent=1 // pred_fallthru
      _
    // Predicated region
    $region38: #{han_forward.7} parent=1 // pred_check
      _
    $region39: #{han_forward.7} parent=1 // pred_check_branch
      %2544 = sbr.rel (0) target = $region41
    $region40: #{han_forward.7} parent=1 // pred_region
      _
    $region41: #{han_forward.7} parent=1 // pred_fallthru
      _
    %2545 = vsyncpa [#allocation5], 1

// kernel: han_forward.9
$region0: #{han_forward.9}
  #allocation0 [shape = 'u32[]', space=smem, size = 0x4, offset = 0x4, fixed_abs, tag = 'smem constant byte address 0x4 - core index']
  #allocation1 [shape = 'u32[144,128]{1,0:T(1,128)}', space=vmem, size = 0x12000, scoped, tag = 'internal scratch']
  #allocation2 [shape = 'f32[4,2,384]{2,1,0:T(2,128)}', space=vmem, size = 0x3000, scoped, tag = 'scratch operand']
  #allocation3 [shape = 'f32[4,2,384]{2,1,0:T(2,128)}', space=vmem, size = 0x3000, scoped, tag = 'scratch operand']
  %s0 = inlined_call_operand.vmem [shape: f32[4,2,256], index: 0, kind: input, shape index: {}]
  %s1 = inlined_call_operand.vmem [shape: bf16[256,768], index: 1, kind: input, shape index: {}]
  %s2 = inlined_call_operand.vmem [shape: f32[1,768], index: 2, kind: input, shape index: {}]
  %s3 = inlined_call_operand.vmem [shape: bf16[128,384], index: 3, kind: input, shape index: {}]
  %s4 = inlined_call_operand.vmem [shape: f32[1,384], index: 4, kind: input, shape index: {}]
  %s5 = inlined_call_operand.vmem [shape: bf16[128,384], index: 5, kind: input, shape index: {}]
  %s6 = inlined_call_operand.vmem [shape: f32[1,384], index: 6, kind: input, shape index: {}]
  %s7 = inlined_call_operand.vmem [shape: f32[4,2,256], index: 7, kind: output, shape index: {}]
  %s8 = sld [smem:[#allocation0]]
  $region38: #{han_forward.9} parent=0
    _
  %s10 = ssub.s32 1, %s8
  %s11 = scalar_select 0, %s10, %s8
  // Predicated region
  $region2: #{han_forward.9} parent=0 // pred_check
    _
  $region3: #{han_forward.9} parent=0 // pred_check_branch
    %13 = sbr.rel (0) target = $region5
  $region4: #{han_forward.9} parent=0 // pred_region
    _
  $region5: #{han_forward.9} parent=0 // pred_fallthru
    _
  // Predicated region
  $region6: #{han_forward.9} parent=0 // pred_check
    _
  $region7: #{han_forward.9} parent=0 // pred_check_branch
    %15 = sbr.rel (0) target = $region9
  $region8: #{han_forward.9} parent=0 // pred_region
    _
  $region9: #{han_forward.9} parent=0 // pred_fallthru
    _
  // Predicated region
  $region10: #{han_forward.9} parent=0 // pred_check
    _
  $region11: #{han_forward.9} parent=0 // pred_check_branch
    %17 = sbr.rel (0) target = $region13
  $region12: #{han_forward.9} parent=0 // pred_region
    _
  $region13: #{han_forward.9} parent=0 // pred_fallthru
    _
  // Predicated region
  $region14: #{han_forward.9} parent=0 // pred_check
    _
  $region15: #{han_forward.9} parent=0 // pred_check_branch
    %19 = sbr.rel (0) target = $region17
  $region16: #{han_forward.9} parent=0 // pred_region
    _
  $region17: #{han_forward.9} parent=0 // pred_fallthru
    _
  // Predicated region
  $region18: #{han_forward.9} parent=0 // pred_check
    _
  $region19: #{han_forward.9} parent=0 // pred_check_branch
    %21 = sbr.rel (0) target = $region21
  $region20: #{han_forward.9} parent=0 // pred_region
    _
  $region21: #{han_forward.9} parent=0 // pred_fallthru
    _
  // Predicated region
  $region22: #{han_forward.9} parent=0 // pred_check
    _
  $region23: #{han_forward.9} parent=0 // pred_check_branch
    %23 = sbr.rel (0) target = $region25
  $region24: #{han_forward.9} parent=0 // pred_region
    _
  $region25: #{han_forward.9} parent=0 // pred_fallthru
    _
  // Predicated region
  $region26: #{han_forward.9} parent=0 // pred_check
    _
  $region27: #{han_forward.9} parent=0 // pred_check_branch
    %25 = sbr.rel (0) target = $region29
  $region28: #{han_forward.9} parent=0 // pred_region
    _
  $region29: #{han_forward.9} parent=0 // pred_fallthru
    _
  %v27 = vld [vmem:[%s0] sm:$0xf]
  %v28 = vld [vmem:[%s0 + $0x4] sm:$0xf]
  %v29 = vld [vmem:[%s0 + $0x8] sm:$0xf]
  %v30 = vld [vmem:[%s0 + $0xc] sm:$0xf]
  %v35 = vcombine.low %v27, %v28
  %v36 = vcombine.low %v29, %v30
  %v38 = vunpack.c.l.s4 1983009808
  %v39 = vunpack.c.0.s8 %v38
  %v40 = vlaneseq
  %v41 = vshrl.u32 %v40, 7
  %v42 = vsub.s32 %v39, %v41
  %v43 = vrot.slane %v35, %v42
  %v45 = vunpack.c.l.s4 1983009808
  %v46 = vunpack.c.0.s8 %v45
  %v47 = vlaneseq
  %v48 = vshrl.u32 %v47, 7
  %v49 = vsub.s32 %v46, %v48
  %v50 = vrot.slane %v36, %v49
  %v51 = vcombine.low %v43, %v50
  %v52 = vcombine.high %v43, %v50
  %v55 = vpack.c.bf16 %v51, %v51
  %v56 = vpack.c.bf16 %v52, %v52
  %v57 = vld [vmem:[%s1] sm:$0xff]
  %v58 = vld [vmem:[%s1 + $0x8] sm:$0xff]
  %v59 = vld [vmem:[%s1 + $0x10] sm:$0xff]
  %v60 = vld [vmem:[%s1 + $0x18] sm:$0xff]
  %v61 = vld [vmem:[%s1 + $0x20] sm:$0xff]
  %v62 = vld [vmem:[%s1 + $0x28] sm:$0xff]
  %v63 = vld [vmem:[%s1 + $0x30] sm:$0xff]
  %v64 = vld [vmem:[%s1 + $0x38] sm:$0xff]
  %v65 = vld [vmem:[%s1 + $0x40] sm:$0xff]
  %v66 = vld [vmem:[%s1 + $0x48] sm:$0xff]
  %v67 = vld [vmem:[%s1 + $0x50] sm:$0xff]
  %v68 = vld [vmem:[%s1 + $0x58] sm:$0xff]
  %v69 = vld [vmem:[%s1 + $0x60] sm:$0xff]
  %v70 = vld [vmem:[%s1 + $0x68] sm:$0xff]
  %v71 = vld [vmem:[%s1 + $0x70] sm:$0xff]
  %v72 = vld [vmem:[%s1 + $0x78] sm:$0xff]
  %v73 = vld [vmem:[%s1 + $0x80] sm:$0xff]
  %v74 = vld [vmem:[%s1 + $0x88] sm:$0xff]
  %v75 = vld [vmem:[%s1 + $0x90] sm:$0xff]
  %v76 = vld [vmem:[%s1 + $0x98] sm:$0xff]
  %v77 = vld [vmem:[%s1 + $0xa0] sm:$0xff]
  %v78 = vld [vmem:[%s1 + $0xa8] sm:$0xff]
  %v79 = vld [vmem:[%s1 + $0xb0] sm:$0xff]
  %v80 = vld [vmem:[%s1 + $0xb8] sm:$0xff]
  %v81 = vld [vmem:[%s1 + $0xc0] sm:$0xff]
  %v82 = vld [vmem:[%s1 + $0xc8] sm:$0xff]
  %v83 = vld [vmem:[%s1 + $0xd0] sm:$0xff]
  %v84 = vld [vmem:[%s1 + $0xd8] sm:$0xff]
  %v85 = vld [vmem:[%s1 + $0xe0] sm:$0xff]
  %v86 = vld [vmem:[%s1 + $0xe8] sm:$0xff]
  %v87 = vld [vmem:[%s1 + $0xf0] sm:$0xff]
  %v88 = vld [vmem:[%s1 + $0xf8] sm:$0xff]
  %v89 = vld [vmem:[%s1 + $0x100] sm:$0xff]
  %v90 = vld [vmem:[%s1 + $0x108] sm:$0xff]
  %v91 = vld [vmem:[%s1 + $0x110] sm:$0xff]
  %v92 = vld [vmem:[%s1 + $0x118] sm:$0xff]
  %v93 = vld [vmem:[%s1 + $0x120] sm:$0xff]
  %v94 = vld [vmem:[%s1 + $0x128] sm:$0xff]
  %v95 = vld [vmem:[%s1 + $0x130] sm:$0xff]
  %v96 = vld [vmem:[%s1 + $0x138] sm:$0xff]
  %v97 = vld [vmem:[%s1 + $0x140] sm:$0xff]
  %v98 = vld [vmem:[%s1 + $0x148] sm:$0xff]
  %v99 = vld [vmem:[%s1 + $0x150] sm:$0xff]
  %v100 = vld [vmem:[%s1 + $0x158] sm:$0xff]
  %v101 = vld [vmem:[%s1 + $0x160] sm:$0xff]
  %v102 = vld [vmem:[%s1 + $0x168] sm:$0xff]
  %v103 = vld [vmem:[%s1 + $0x170] sm:$0xff]
  %v104 = vld [vmem:[%s1 + $0x178] sm:$0xff]
  %v105 = vld [vmem:[%s1 + $0x180] sm:$0xff]
  %v106 = vld [vmem:[%s1 + $0x188] sm:$0xff]
  %v107 = vld [vmem:[%s1 + $0x190] sm:$0xff]
  %v108 = vld [vmem:[%s1 + $0x198] sm:$0xff]
  %v109 = vld [vmem:[%s1 + $0x1a0] sm:$0xff]
  %v110 = vld [vmem:[%s1 + $0x1a8] sm:$0xff]
  %v111 = vld [vmem:[%s1 + $0x1b0] sm:$0xff]
  %v112 = vld [vmem:[%s1 + $0x1b8] sm:$0xff]
  %v113 = vld [vmem:[%s1 + $0x1c0] sm:$0xff]
  %v114 = vld [vmem:[%s1 + $0x1c8] sm:$0xff]
  %v115 = vld [vmem:[%s1 + $0x1d0] sm:$0xff]
  %v116 = vld [vmem:[%s1 + $0x1d8] sm:$0xff]
  %v117 = vld [vmem:[%s1 + $0x1e0] sm:$0xff]
  %v118 = vld [vmem:[%s1 + $0x1e8] sm:$0xff]
  %v119 = vld [vmem:[%s1 + $0x1f0] sm:$0xff]
  %v120 = vld [vmem:[%s1 + $0x1f8] sm:$0xff]
  %v121 = vld [vmem:[%s1 + $0x200] sm:$0xff]
  %v122 = vld [vmem:[%s1 + $0x208] sm:$0xff]
  %v123 = vld [vmem:[%s1 + $0x210] sm:$0xff]
  %v124 = vld [vmem:[%s1 + $0x218] sm:$0xff]
  %v125 = vld [vmem:[%s1 + $0x220] sm:$0xff]
  %v126 = vld [vmem:[%s1 + $0x228] sm:$0xff]
  %v127 = vld [vmem:[%s1 + $0x230] sm:$0xff]
  %v128 = vld [vmem:[%s1 + $0x238] sm:$0xff]
  %v129 = vld [vmem:[%s1 + $0x240] sm:$0xff]
  %v130 = vld [vmem:[%s1 + $0x248] sm:$0xff]
  %v131 = vld [vmem:[%s1 + $0x250] sm:$0xff]
  %v132 = vld [vmem:[%s1 + $0x258] sm:$0xff]
  %v133 = vld [vmem:[%s1 + $0x260] sm:$0xff]
  %v134 = vld [vmem:[%s1 + $0x268] sm:$0xff]
  %v135 = vld [vmem:[%s1 + $0x270] sm:$0xff]
  %v136 = vld [vmem:[%s1 + $0x278] sm:$0xff]
  %v137 = vld [vmem:[%s1 + $0x280] sm:$0xff]
  %v138 = vld [vmem:[%s1 + $0x288] sm:$0xff]
  %v139 = vld [vmem:[%s1 + $0x290] sm:$0xff]
  %v140 = vld [vmem:[%s1 + $0x298] sm:$0xff]
  %v141 = vld [vmem:[%s1 + $0x2a0] sm:$0xff]
  %v142 = vld [vmem:[%s1 + $0x2a8] sm:$0xff]
  %v143 = vld [vmem:[%s1 + $0x2b0] sm:$0xff]
  %v144 = vld [vmem:[%s1 + $0x2b8] sm:$0xff]
  %v145 = vld [vmem:[%s1 + $0x2c0] sm:$0xff]
  %v146 = vld [vmem:[%s1 + $0x2c8] sm:$0xff]
  %v147 = vld [vmem:[%s1 + $0x2d0] sm:$0xff]
  %v148 = vld [vmem:[%s1 + $0x2d8] sm:$0xff]
  %v149 = vld [vmem:[%s1 + $0x2e0] sm:$0xff]
  %v150 = vld [vmem:[%s1 + $0x2e8] sm:$0xff]
  %v151 = vld [vmem:[%s1 + $0x2f0] sm:$0xff]
  %v152 = vld [vmem:[%s1 + $0x2f8] sm:$0xff]
  %v153 = vld [vmem:[%s2] sm:$0x3f]
  %v155 = vlaneseq
  %v156 = vshrl.u32 %v155, 7
  %v157 = vsub.s32 0, %v156
  %v158 = vrot.slane %v153, %v157
  %v159 = vlaneseq
  %v160 = vshrl.u32 %v159, 7
  %v161 = vsub.s32 1, %v160
  %v162 = vrot.slane %v153, %v161
  %v163 = vlaneseq
  %v164 = vshrl.u32 %v163, 7
  %v165 = vsub.s32 2, %v164
  %v166 = vrot.slane %v153, %v165
  %v167 = vlaneseq
  %v168 = vshrl.u32 %v167, 7
  %v169 = vsub.s32 3, %v168
  %v170 = vrot.slane %v153, %v169
  %v171 = vlaneseq
  %v172 = vshrl.u32 %v171, 7
  %v173 = vsub.s32 4, %v172
  %v174 = vrot.slane %v153, %v173
  %v175 = vlaneseq
  %v176 = vshrl.u32 %v175, 7
  %v177 = vsub.s32 5, %v176
  %v178 = vrot.slane %v153, %v177
  %v281 = vunpack.c.l.b16 %v57
  %v282 = vunpack.c.h.b16 %v57
  %v283 = vunpack.c.l.b16 %v58
  %v284 = vunpack.c.h.b16 %v58
  %v285 = vunpack.c.l.b16 %v59
  %v286 = vunpack.c.h.b16 %v59
  %v287 = vunpack.c.l.b16 %v60
  %v288 = vunpack.c.h.b16 %v60
  %v289 = vunpack.c.l.b16 %v61
  %v290 = vunpack.c.h.b16 %v61
  %v291 = vunpack.c.l.b16 %v62
  %v292 = vunpack.c.h.b16 %v62
  %v293 = vunpack.c.l.b16 %v63
  %v294 = vunpack.c.h.b16 %v63
  %v295 = vunpack.c.l.b16 %v64
  %v296 = vunpack.c.h.b16 %v64
  %v297 = vunpack.c.l.b16 %v65
  %v298 = vunpack.c.h.b16 %v65
  %v299 = vunpack.c.l.b16 %v66
  %v300 = vunpack.c.h.b16 %v66
  %v301 = vunpack.c.l.b16 %v67
  %v302 = vunpack.c.h.b16 %v67
  %v303 = vunpack.c.l.b16 %v68
  %v304 = vunpack.c.h.b16 %v68
  %v305 = vunpack.c.l.b16 %v69
  %v306 = vunpack.c.h.b16 %v69
  %v307 = vunpack.c.l.b16 %v70
  %v308 = vunpack.c.h.b16 %v70
  %v309 = vunpack.c.l.b16 %v71
  %v310 = vunpack.c.h.b16 %v71
  %v311 = vunpack.c.l.b16 %v72
  %v312 = vunpack.c.h.b16 %v72
  %v313 = vunpack.c.l.b16 %v73
  %v314 = vunpack.c.h.b16 %v73
  %v315 = vunpack.c.l.b16 %v74
  %v316 = vunpack.c.h.b16 %v74
  %v317 = vunpack.c.l.b16 %v75
  %v318 = vunpack.c.h.b16 %v75
  %v319 = vunpack.c.l.b16 %v76
  %v320 = vunpack.c.h.b16 %v76
  %v321 = vunpack.c.l.b16 %v77
  %v322 = vunpack.c.h.b16 %v77
  %v323 = vunpack.c.l.b16 %v78
  %v324 = vunpack.c.h.b16 %v78
  %v325 = vunpack.c.l.b16 %v79
  %v326 = vunpack.c.h.b16 %v79
  %v327 = vunpack.c.l.b16 %v80
  %v328 = vunpack.c.h.b16 %v80
  %v329 = vunpack.c.l.b16 %v81
  %v330 = vunpack.c.h.b16 %v81
  %v331 = vunpack.c.l.b16 %v82
  %v332 = vunpack.c.h.b16 %v82
  %v333 = vunpack.c.l.b16 %v83
  %v334 = vunpack.c.h.b16 %v83
  %v335 = vunpack.c.l.b16 %v84
  %v336 = vunpack.c.h.b16 %v84
  %v337 = vunpack.c.l.b16 %v85
  %v338 = vunpack.c.h.b16 %v85
  %v339 = vunpack.c.l.b16 %v86
  %v340 = vunpack.c.h.b16 %v86
  %v341 = vunpack.c.l.b16 %v87
  %v342 = vunpack.c.h.b16 %v87
  %v343 = vunpack.c.l.b16 %v88
  %v344 = vunpack.c.h.b16 %v88
  %v345 = vunpack.c.l.b16 %v89
  %v346 = vunpack.c.h.b16 %v89
  %v347 = vunpack.c.l.b16 %v90
  %v348 = vunpack.c.h.b16 %v90
  %v349 = vunpack.c.l.b16 %v91
  %v350 = vunpack.c.h.b16 %v91
  %v351 = vunpack.c.l.b16 %v92
  %v352 = vunpack.c.h.b16 %v92
  %v353 = vunpack.c.l.b16 %v93
  %v354 = vunpack.c.h.b16 %v93
  %v355 = vunpack.c.l.b16 %v94
  %v356 = vunpack.c.h.b16 %v94
  %v357 = vunpack.c.l.b16 %v95
  %v358 = vunpack.c.h.b16 %v95
  %v359 = vunpack.c.l.b16 %v96
  %v360 = vunpack.c.h.b16 %v96
  %v361 = vunpack.c.l.b16 %v97
  %v362 = vunpack.c.h.b16 %v97
  %v363 = vunpack.c.l.b16 %v98
  %v364 = vunpack.c.h.b16 %v98
  %v365 = vunpack.c.l.b16 %v99
  %v366 = vunpack.c.h.b16 %v99
  %v367 = vunpack.c.l.b16 %v100
  %v368 = vunpack.c.h.b16 %v100
  %v369 = vunpack.c.l.b16 %v101
  %v370 = vunpack.c.h.b16 %v101
  %v371 = vunpack.c.l.b16 %v102
  %v372 = vunpack.c.h.b16 %v102
  %v373 = vunpack.c.l.b16 %v103
  %v374 = vunpack.c.h.b16 %v103
  %v375 = vunpack.c.l.b16 %v104
  %v376 = vunpack.c.h.b16 %v104
  %v377 = vunpack.c.l.b16 %v105
  %v378 = vunpack.c.h.b16 %v105
  %v379 = vunpack.c.l.b16 %v106
  %v380 = vunpack.c.h.b16 %v106
  %v381 = vunpack.c.l.b16 %v107
  %v382 = vunpack.c.h.b16 %v107
  %v383 = vunpack.c.l.b16 %v108
  %v384 = vunpack.c.h.b16 %v108
  %v385 = vunpack.c.l.b16 %v109
  %v386 = vunpack.c.h.b16 %v109
  %v387 = vunpack.c.l.b16 %v110
  %v388 = vunpack.c.h.b16 %v110
  %v389 = vunpack.c.l.b16 %v111
  %v390 = vunpack.c.h.b16 %v111
  %v391 = vunpack.c.l.b16 %v112
  %v392 = vunpack.c.h.b16 %v112
  %v393 = vunpack.c.l.b16 %v113
  %v394 = vunpack.c.h.b16 %v113
  %v395 = vunpack.c.l.b16 %v114
  %v396 = vunpack.c.h.b16 %v114
  %v397 = vunpack.c.l.b16 %v115
  %v398 = vunpack.c.h.b16 %v115
  %v399 = vunpack.c.l.b16 %v116
  %v400 = vunpack.c.h.b16 %v116
  %v401 = vunpack.c.l.b16 %v117
  %v402 = vunpack.c.h.b16 %v117
  %v403 = vunpack.c.l.b16 %v118
  %v404 = vunpack.c.h.b16 %v118
  %v405 = vunpack.c.l.b16 %v119
  %v406 = vunpack.c.h.b16 %v119
  %v407 = vunpack.c.l.b16 %v120
  %v408 = vunpack.c.h.b16 %v120
  %v409 = vunpack.c.l.b16 %v121
  %v410 = vunpack.c.h.b16 %v121
  %v411 = vunpack.c.l.b16 %v122
  %v412 = vunpack.c.h.b16 %v122
  %v413 = vunpack.c.l.b16 %v123
  %v414 = vunpack.c.h.b16 %v123
  %v415 = vunpack.c.l.b16 %v124
  %v416 = vunpack.c.h.b16 %v124
  %v417 = vunpack.c.l.b16 %v125
  %v418 = vunpack.c.h.b16 %v125
  %v419 = vunpack.c.l.b16 %v126
  %v420 = vunpack.c.h.b16 %v126
  %v421 = vunpack.c.l.b16 %v127
  %v422 = vunpack.c.h.b16 %v127
  %v423 = vunpack.c.l.b16 %v128
  %v424 = vunpack.c.h.b16 %v128
  %v425 = vunpack.c.l.b16 %v129
  %v426 = vunpack.c.h.b16 %v129
  %v427 = vunpack.c.l.b16 %v130
  %v428 = vunpack.c.h.b16 %v130
  %v429 = vunpack.c.l.b16 %v131
  %v430 = vunpack.c.h.b16 %v131
  %v431 = vunpack.c.l.b16 %v132
  %v432 = vunpack.c.h.b16 %v132
  %v433 = vunpack.c.l.b16 %v133
  %v434 = vunpack.c.h.b16 %v133
  %v435 = vunpack.c.l.b16 %v134
  %v436 = vunpack.c.h.b16 %v134
  %v437 = vunpack.c.l.b16 %v135
  %v438 = vunpack.c.h.b16 %v135
  %v439 = vunpack.c.l.b16 %v136
  %v440 = vunpack.c.h.b16 %v136
  %v441 = vunpack.c.l.b16 %v137
  %v442 = vunpack.c.h.b16 %v137
  %v443 = vunpack.c.l.b16 %v138
  %v444 = vunpack.c.h.b16 %v138
  %v445 = vunpack.c.l.b16 %v139
  %v446 = vunpack.c.h.b16 %v139
  %v447 = vunpack.c.l.b16 %v140
  %v448 = vunpack.c.h.b16 %v140
  %v449 = vunpack.c.l.b16 %v141
  %v450 = vunpack.c.h.b16 %v141
  %v451 = vunpack.c.l.b16 %v142
  %v452 = vunpack.c.h.b16 %v142
  %v453 = vunpack.c.l.b16 %v143
  %v454 = vunpack.c.h.b16 %v143
  %v455 = vunpack.c.l.b16 %v144
  %v456 = vunpack.c.h.b16 %v144
  %v457 = vunpack.c.l.b16 %v145
  %v458 = vunpack.c.h.b16 %v145
  %v459 = vunpack.c.l.b16 %v146
  %v460 = vunpack.c.h.b16 %v146
  %v461 = vunpack.c.l.b16 %v147
  %v462 = vunpack.c.h.b16 %v147
  %v463 = vunpack.c.l.b16 %v148
  %v464 = vunpack.c.h.b16 %v148
  %v465 = vunpack.c.l.b16 %v149
  %v466 = vunpack.c.h.b16 %v149
  %v467 = vunpack.c.l.b16 %v150
  %v468 = vunpack.c.h.b16 %v150
  %v469 = vunpack.c.l.b16 %v151
  %v470 = vunpack.c.h.b16 %v151
  %v471 = vunpack.c.l.b16 %v152
  %v472 = vunpack.c.h.b16 %v152
  %v473 = vpack.c.b16 %v287, %v281
  %v474 = vpack.c.b16 %v288, %v282
  %v475 = vpack.c.b16 %v289, %v283
  %v476 = vpack.c.b16 %v290, %v284
  %v477 = vpack.c.b16 %v291, %v285
  %v478 = vpack.c.b16 %v292, %v286
  %v479 = vpack.c.b16 %v299, %v293
  %v480 = vpack.c.b16 %v300, %v294
  %v481 = vpack.c.b16 %v301, %v295
  %v482 = vpack.c.b16 %v302, %v296
  %v483 = vpack.c.b16 %v303, %v297
  %v484 = vpack.c.b16 %v304, %v298
  %v485 = vpack.c.b16 %v311, %v305
  %v486 = vpack.c.b16 %v312, %v306
  %v487 = vpack.c.b16 %v313, %v307
  %v488 = vpack.c.b16 %v314, %v308
  %v489 = vpack.c.b16 %v315, %v309
  %v490 = vpack.c.b16 %v316, %v310
  %v491 = vpack.c.b16 %v323, %v317
  %v492 = vpack.c.b16 %v324, %v318
  %v493 = vpack.c.b16 %v325, %v319
  %v494 = vpack.c.b16 %v326, %v320
  %v495 = vpack.c.b16 %v327, %v321
  %v496 = vpack.c.b16 %v328, %v322
  %v497 = vpack.c.b16 %v335, %v329
  %v498 = vpack.c.b16 %v336, %v330
  %v499 = vpack.c.b16 %v337, %v331
  %v500 = vpack.c.b16 %v338, %v332
  %v501 = vpack.c.b16 %v339, %v333
  %v502 = vpack.c.b16 %v340, %v334
  %v503 = vpack.c.b16 %v347, %v341
  %v504 = vpack.c.b16 %v348, %v342
  %v505 = vpack.c.b16 %v349, %v343
  %v506 = vpack.c.b16 %v350, %v344
  %v507 = vpack.c.b16 %v351, %v345
  %v508 = vpack.c.b16 %v352, %v346
  %v509 = vpack.c.b16 %v359, %v353
  %v510 = vpack.c.b16 %v360, %v354
  %v511 = vpack.c.b16 %v361, %v355
  %v512 = vpack.c.b16 %v362, %v356
  %v513 = vpack.c.b16 %v363, %v357
  %v514 = vpack.c.b16 %v364, %v358
  %v515 = vpack.c.b16 %v371, %v365
  %v516 = vpack.c.b16 %v372, %v366
  %v517 = vpack.c.b16 %v373, %v367
  %v518 = vpack.c.b16 %v374, %v368
  %v519 = vpack.c.b16 %v375, %v369
  %v520 = vpack.c.b16 %v376, %v370
  %v521 = vpack.c.b16 %v383, %v377
  %v522 = vpack.c.b16 %v384, %v378
  %v523 = vpack.c.b16 %v385, %v379
  %v524 = vpack.c.b16 %v386, %v380
  %v525 = vpack.c.b16 %v387, %v381
  %v526 = vpack.c.b16 %v388, %v382
  %v527 = vpack.c.b16 %v395, %v389
  %v528 = vpack.c.b16 %v396, %v390
  %v529 = vpack.c.b16 %v397, %v391
  %v530 = vpack.c.b16 %v398, %v392
  %v531 = vpack.c.b16 %v399, %v393
  %v532 = vpack.c.b16 %v400, %v394
  %v533 = vpack.c.b16 %v407, %v401
  %v534 = vpack.c.b16 %v408, %v402
  %v535 = vpack.c.b16 %v409, %v403
  %v536 = vpack.c.b16 %v410, %v404
  %v537 = vpack.c.b16 %v411, %v405
  %v538 = vpack.c.b16 %v412, %v406
  %v539 = vpack.c.b16 %v419, %v413
  %v540 = vpack.c.b16 %v420, %v414
  %v541 = vpack.c.b16 %v421, %v415
  %v542 = vpack.c.b16 %v422, %v416
  %v543 = vpack.c.b16 %v423, %v417
  %v544 = vpack.c.b16 %v424, %v418
  %v545 = vpack.c.b16 %v431, %v425
  %v546 = vpack.c.b16 %v432, %v426
  %v547 = vpack.c.b16 %v433, %v427
  %v548 = vpack.c.b16 %v434, %v428
  %v549 = vpack.c.b16 %v435, %v429
  %v550 = vpack.c.b16 %v436, %v430
  %v551 = vpack.c.b16 %v443, %v437
  %v552 = vpack.c.b16 %v444, %v438
  %v553 = vpack.c.b16 %v445, %v439
  %v554 = vpack.c.b16 %v446, %v440
  %v555 = vpack.c.b16 %v447, %v441
  %v556 = vpack.c.b16 %v448, %v442
  %v557 = vpack.c.b16 %v455, %v449
  %v558 = vpack.c.b16 %v456, %v450
  %v559 = vpack.c.b16 %v457, %v451
  %v560 = vpack.c.b16 %v458, %v452
  %v561 = vpack.c.b16 %v459, %v453
  %v562 = vpack.c.b16 %v460, %v454
  %v563 = vpack.c.b16 %v467, %v461
  %v564 = vpack.c.b16 %v468, %v462
  %v565 = vpack.c.b16 %v469, %v463
  %v566 = vpack.c.b16 %v470, %v464
  %v567 = vpack.c.b16 %v471, %v465
  %v568 = vpack.c.b16 %v472, %v466
  %665 = vmatprep.subr.bf16.mxu0 %v474
  %666 = vmatpush1.bf16.msra.mxu0 %v473
  %667 = vmatprep.subr.bf16.mxu0 %v480
  %668 = vmatpush1.bf16.msra.mxu0 %v479
  %669 = vmatprep.subr.bf16.mxu0 %v486
  %670 = vmatpush1.bf16.msra.mxu0 %v485
  %671 = vmatprep.subr.bf16.mxu0 %v492
  %672 = vmatpush1.bf16.msra.mxu0 %v491
  %673 = vmatprep.subr.bf16.mxu0 %v498
  %674 = vmatpush1.bf16.msra.mxu0 %v497
  %675 = vmatprep.subr.bf16.mxu0 %v504
  %676 = vmatpush1.bf16.msra.mxu0 %v503
  %677 = vmatprep.subr.bf16.mxu0 %v510
  %678 = vmatpush1.bf16.msra.mxu0 %v509
  %679 = vmatprep.subr.bf16.mxu0 %v516
  %680 = vmatpush1.bf16.msra.mxu0 %v515
  %681 = vmatprep.subr.bf16.mxu0 %v522
  %682 = vmatpush1.bf16.msra.mxu0 %v521
  %683 = vmatprep.subr.bf16.mxu0 %v528
  %684 = vmatpush1.bf16.msra.mxu0 %v527
  %685 = vmatprep.subr.bf16.mxu0 %v534
  %686 = vmatpush1.bf16.msra.mxu0 %v533
  %687 = vmatprep.subr.bf16.mxu0 %v540
  %688 = vmatpush1.bf16.msra.mxu0 %v539
  %689 = vmatprep.subr.bf16.mxu0 %v546
  %690 = vmatpush1.bf16.msra.mxu0 %v545
  %691 = vmatprep.subr.bf16.mxu0 %v552
  %692 = vmatpush1.bf16.msra.mxu0 %v551
  %693 = vmatprep.subr.bf16.mxu0 %v558
  %694 = vmatpush1.bf16.msra.mxu0 %v557
  %695 = vmatprep.subr.bf16.mxu0 %v564
  %696 = vmatpush1.bf16.msra.mxu0 %v563
  %697 = vmatprep.mubr.bf16.mxu0 %v56
  %698 = vmatmul.mubr.bf16.gmra.mrb[0].mxu0 %v55
  %v699 = vpop.f32.mrb[0].mxu0
  %v700 = vadd.f32 %v158, %v699
  %v701 = vpop.f32.mrb[0].mxu0
  %v702 = vadd.f32 %v162, %v701
  %v703 = vpop.f32.mrb[0].mxu0
  %v704 = vpop.f32.mrb[0].mxu0
  %705 = vdwg.mxu0
  %706 = vmatprep.subr.bf16.mxu0 %v476
  %707 = vmatpush1.bf16.msra.mxu0 %v475
  %708 = vmatprep.subr.bf16.mxu0 %v482
  %709 = vmatpush1.bf16.msra.mxu0 %v481
  %710 = vmatprep.subr.bf16.mxu0 %v488
  %711 = vmatpush1.bf16.msra.mxu0 %v487
  %712 = vmatprep.subr.bf16.mxu0 %v494
  %713 = vmatpush1.bf16.msra.mxu0 %v493
  %714 = vmatprep.subr.bf16.mxu0 %v500
  %715 = vmatpush1.bf16.msra.mxu0 %v499
  %716 = vmatprep.subr.bf16.mxu0 %v506
  %717 = vmatpush1.bf16.msra.mxu0 %v505
  %718 = vmatprep.subr.bf16.mxu0 %v512
  %719 = vmatpush1.bf16.msra.mxu0 %v511
  %720 = vmatprep.subr.bf16.mxu0 %v518
  %721 = vmatpush1.bf16.msra.mxu0 %v517
  %722 = vmatprep.subr.bf16.mxu0 %v524
  %723 = vmatpush1.bf16.msra.mxu0 %v523
  %724 = vmatprep.subr.bf16.mxu0 %v530
  %725 = vmatpush1.bf16.msra.mxu0 %v529
  %726 = vmatprep.subr.bf16.mxu0 %v536
  %727 = vmatpush1.bf16.msra.mxu0 %v535
  %728 = vmatprep.subr.bf16.mxu0 %v542
  %729 = vmatpush1.bf16.msra.mxu0 %v541
  %730 = vmatprep.subr.bf16.mxu0 %v548
  %731 = vmatpush1.bf16.msra.mxu0 %v547
  %732 = vmatprep.subr.bf16.mxu0 %v554
  %733 = vmatpush1.bf16.msra.mxu0 %v553
  %734 = vmatprep.subr.bf16.mxu0 %v560
  %735 = vmatpush1.bf16.msra.mxu0 %v559
  %736 = vmatprep.subr.bf16.mxu0 %v566
  %737 = vmatpush1.bf16.msra.mxu0 %v565
  %738 = vmatprep.mubr.bf16.mxu0 %v56
  %739 = vmatmul.mubr.bf16.gmra.mrb[0].mxu0 %v55
  %v740 = vpop.f32.mrb[0].mxu0
  %v741 = vadd.f32 %v166, %v740
  %v742 = vpop.f32.mrb[0].mxu0
  %v743 = vadd.f32 %v170, %v742
  %v744 = vpop.f32.mrb[0].mxu0
  %v745 = vpop.f32.mrb[0].mxu0
  %746 = vdwg.mxu0
  %747 = vmatprep.subr.bf16.mxu0 %v478
  %748 = vmatpush1.bf16.msra.mxu0 %v477
  %749 = vmatprep.subr.bf16.mxu0 %v484
  %750 = vmatpush1.bf16.msra.mxu0 %v483
  %751 = vmatprep.subr.bf16.mxu0 %v490
  %752 = vmatpush1.bf16.msra.mxu0 %v489
  %753 = vmatprep.subr.bf16.mxu0 %v496
  %754 = vmatpush1.bf16.msra.mxu0 %v495
  %755 = vmatprep.subr.bf16.mxu0 %v502
  %756 = vmatpush1.bf16.msra.mxu0 %v501
  %757 = vmatprep.subr.bf16.mxu0 %v508
  %758 = vmatpush1.bf16.msra.mxu0 %v507
  %759 = vmatprep.subr.bf16.mxu0 %v514
  %760 = vmatpush1.bf16.msra.mxu0 %v513
  %761 = vmatprep.subr.bf16.mxu0 %v520
  %762 = vmatpush1.bf16.msra.mxu0 %v519
  %763 = vmatprep.subr.bf16.mxu0 %v526
  %764 = vmatpush1.bf16.msra.mxu0 %v525
  %765 = vmatprep.subr.bf16.mxu0 %v532
  %766 = vmatpush1.bf16.msra.mxu0 %v531
  %767 = vmatprep.subr.bf16.mxu0 %v538
  %768 = vmatpush1.bf16.msra.mxu0 %v537
  %769 = vmatprep.subr.bf16.mxu0 %v544
  %770 = vmatpush1.bf16.msra.mxu0 %v543
  %771 = vmatprep.subr.bf16.mxu0 %v550
  %772 = vmatpush1.bf16.msra.mxu0 %v549
  %773 = vmatprep.subr.bf16.mxu0 %v556
  %774 = vmatpush1.bf16.msra.mxu0 %v555
  %775 = vmatprep.subr.bf16.mxu0 %v562
  %776 = vmatpush1.bf16.msra.mxu0 %v561
  %777 = vmatprep.subr.bf16.mxu0 %v568
  %778 = vmatpush1.bf16.msra.mxu0 %v567
  %779 = vmatprep.mubr.bf16.mxu0 %v56
  %780 = vmatmul.mubr.bf16.gmra.mrb[0].mxu0 %v55
  %v781 = vpop.f32.mrb[0].mxu0
  %v782 = vadd.f32 %v174, %v781
  %v783 = vpop.f32.mrb[0].mxu0
  %v784 = vadd.f32 %v178, %v783
  %v785 = vpop.f32.mrb[0].mxu0
  %v786 = vpop.f32.mrb[0].mxu0
  %787 = vdwg.mxu0
  %v791 = vcombine.low %v700, %v702
  %v792 = vcombine.high %v700, %v702
  %v793 = vcombine.high %v741, %v741
  %v795 = vunpack.c.l.s4 1983009808
  %v796 = vunpack.c.0.s8 %v795
  %v797 = vlaneseq
  %v798 = vshrl.u32 %v797, 7
  %v799 = vsub.s32 %v796, %v798
  %v800 = vrot.slane %v791, %v799
  %v802 = vunpack.c.l.s4 1983009808
  %v803 = vunpack.c.0.s8 %v802
  %v804 = vlaneseq
  %v805 = vshrl.u32 %v804, 7
  %v806 = vsub.s32 %v803, %v805
  %v807 = vrot.slane %v792, %v806
  %v809 = vunpack.c.l.s4 1983009808
  %v810 = vunpack.c.0.s8 %v809
  %v811 = vlaneseq
  %v812 = vshrl.u32 %v811, 7
  %v813 = vsub.s32 %v810, %v812
  %v814 = vrot.slane %v741, %v813
  %v816 = vunpack.c.l.s4 1983009808
  %v817 = vunpack.c.0.s8 %v816
  %v818 = vlaneseq
  %v819 = vshrl.u32 %v818, 7
  %v820 = vsub.s32 %v817, %v819
  %v821 = vrot.slane %v793, %v820
  %v822 = vcombine.low %v800, %v814
  %v823 = vcombine.high %v800, %v814
  %v824 = vcombine.low %v807, %v821
  %v825 = vcombine.high %v807, %v821
  %830 = vst [vmem:[#allocation2] sm:$0x3f] %v822
  %831 = vst [vmem:[#allocation2 + $0x6] sm:$0x3f] %v823
  %832 = vst [vmem:[#allocation2 + $0xc] sm:$0x3f] %v824
  %833 = vst [vmem:[#allocation2 + $0x12] sm:$0x3f] %v825
  %v837 = vcombine.low %v743, %v782
  %v838 = vcombine.high %v743, %v782
  %v839 = vcombine.high %v784, %v784
  %v841 = vunpack.c.l.s4 1983009808
  %v842 = vunpack.c.0.s8 %v841
  %v843 = vlaneseq
  %v844 = vshrl.u32 %v843, 7
  %v845 = vsub.s32 %v842, %v844
  %v846 = vrot.slane %v837, %v845
  %v848 = vunpack.c.l.s4 1983009808
  %v849 = vunpack.c.0.s8 %v848
  %v850 = vlaneseq
  %v851 = vshrl.u32 %v850, 7
  %v852 = vsub.s32 %v849, %v851
  %v853 = vrot.slane %v838, %v852
  %v855 = vunpack.c.l.s4 1983009808
  %v856 = vunpack.c.0.s8 %v855
  %v857 = vlaneseq
  %v858 = vshrl.u32 %v857, 7
  %v859 = vsub.s32 %v856, %v858
  %v860 = vrot.slane %v784, %v859
  %v862 = vunpack.c.l.s4 1983009808
  %v863 = vunpack.c.0.s8 %v862
  %v864 = vlaneseq
  %v865 = vshrl.u32 %v864, 7
  %v866 = vsub.s32 %v863, %v865
  %v867 = vrot.slane %v839, %v866
  %v868 = vcombine.low %v846, %v860
  %v869 = vcombine.high %v846, %v860
  %v870 = vcombine.low %v853, %v867
  %v871 = vcombine.high %v853, %v867
  %876 = vst [vmem:[#allocation3] sm:$0x3f] %v868
  %877 = vst [vmem:[#allocation3 + $0x6] sm:$0x3f] %v869
  %878 = vst [vmem:[#allocation3 + $0xc] sm:$0x3f] %v870
  %879 = vst [vmem:[#allocation3 + $0x12] sm:$0x3f] %v871
  %v880 = vld [vmem:[%s4] sm:$0x7]
  %v882 = vlaneseq
  %v883 = vshrl.u32 %v882, 7
  %v884 = vsub.s32 0, %v883
  %v885 = vrot.slane %v880, %v884
  %v886 = vlaneseq
  %v887 = vshrl.u32 %v886, 7
  %v888 = vsub.s32 1, %v887
  %v889 = vrot.slane %v880, %v888
  %v890 = vlaneseq
  %v891 = vshrl.u32 %v890, 7
  %v892 = vsub.s32 2, %v891
  %v893 = vrot.slane %v880, %v892
  %v897 = vld [vmem:[%s6] sm:$0x7]
  %v899 = vlaneseq
  %v900 = vshrl.u32 %v899, 7
  %v901 = vsub.s32 0, %v900
  %v902 = vrot.slane %v897, %v901
  %v903 = vlaneseq
  %v904 = vshrl.u32 %v903, 7
  %v905 = vsub.s32 1, %v904
  %v906 = vrot.slane %v897, %v905
  %v907 = vlaneseq
  %v908 = vshrl.u32 %v907, 7
  %v909 = vsub.s32 2, %v908
  %v910 = vrot.slane %v897, %v909
  %v914 = vld [vmem:[%s3] sm:$0xff]
  %v915 = vld [vmem:[%s3 + $0x8] sm:$0xf]
  %v916 = vld [vmem:[%s3 + $0xc] sm:$0xff]
  %v917 = vld [vmem:[%s3 + $0x14] sm:$0xf]
  %v918 = vld [vmem:[%s3 + $0x18] sm:$0xff]
  %v919 = vld [vmem:[%s3 + $0x20] sm:$0xf]
  %v920 = vld [vmem:[%s3 + $0x24] sm:$0xff]
  %v921 = vld [vmem:[%s3 + $0x2c] sm:$0xf]
  %v922 = vld [vmem:[%s3 + $0x30] sm:$0xff]
  %v923 = vld [vmem:[%s3 + $0x38] sm:$0xf]
  %v924 = vld [vmem:[%s3 + $0x3c] sm:$0xff]
  %v925 = vld [vmem:[%s3 + $0x44] sm:$0xf]
  %v926 = vld [vmem:[%s3 + $0x48] sm:$0xff]
  %v927 = vld [vmem:[%s3 + $0x50] sm:$0xf]
  %v928 = vld [vmem:[%s3 + $0x54] sm:$0xff]
  %v929 = vld [vmem:[%s3 + $0x5c] sm:$0xf]
  %v930 = vld [vmem:[%s3 + $0x60] sm:$0xff]
  %v931 = vld [vmem:[%s3 + $0x68] sm:$0xf]
  %v932 = vld [vmem:[%s3 + $0x6c] sm:$0xff]
  %v933 = vld [vmem:[%s3 + $0x74] sm:$0xf]
  %v934 = vld [vmem:[%s3 + $0x78] sm:$0xff]
  %v935 = vld [vmem:[%s3 + $0x80] sm:$0xf]
  %v936 = vld [vmem:[%s3 + $0x84] sm:$0xff]
  %v937 = vld [vmem:[%s3 + $0x8c] sm:$0xf]
  %v938 = vld [vmem:[%s3 + $0x90] sm:$0xff]
  %v939 = vld [vmem:[%s3 + $0x98] sm:$0xf]
  %v940 = vld [vmem:[%s3 + $0x9c] sm:$0xff]
  %v941 = vld [vmem:[%s3 + $0xa4] sm:$0xf]
  %v942 = vld [vmem:[%s3 + $0xa8] sm:$0xff]
  %v943 = vld [vmem:[%s3 + $0xb0] sm:$0xf]
  %v944 = vld [vmem:[%s3 + $0xb4] sm:$0xff]
  %v945 = vld [vmem:[%s3 + $0xbc] sm:$0xf]
  %v946 = vld [vmem:[%s5] sm:$0xff]
  %v947 = vld [vmem:[%s5 + $0x8] sm:$0xf]
  %v948 = vld [vmem:[%s5 + $0xc] sm:$0xff]
  %v949 = vld [vmem:[%s5 + $0x14] sm:$0xf]
  %v950 = vld [vmem:[%s5 + $0x18] sm:$0xff]
  %v951 = vld [vmem:[%s5 + $0x20] sm:$0xf]
  %v952 = vld [vmem:[%s5 + $0x24] sm:$0xff]
  %v953 = vld [vmem:[%s5 + $0x2c] sm:$0xf]
  %v954 = vld [vmem:[%s5 + $0x30] sm:$0xff]
  %v955 = vld [vmem:[%s5 + $0x38] sm:$0xf]
  %v956 = vld [vmem:[%s5 + $0x3c] sm:$0xff]
  %v957 = vld [vmem:[%s5 + $0x44] sm:$0xf]
  %v958 = vld [vmem:[%s5 + $0x48] sm:$0xff]
  %v959 = vld [vmem:[%s5 + $0x50] sm:$0xf]
  %v960 = vld [vmem:[%s5 + $0x54] sm:$0xff]
  %v961 = vld [vmem:[%s5 + $0x5c] sm:$0xf]
  %v962 = vld [vmem:[%s5 + $0x60] sm:$0xff]
  %v963 = vld [vmem:[%s5 + $0x68] sm:$0xf]
  %v964 = vld [vmem:[%s5 + $0x6c] sm:$0xff]
  %v965 = vld [vmem:[%s5 + $0x74] sm:$0xf]
  %v966 = vld [vmem:[%s5 + $0x78] sm:$0xff]
  %v967 = vld [vmem:[%s5 + $0x80] sm:$0xf]
  %v968 = vld [vmem:[%s5 + $0x84] sm:$0xff]
  %v969 = vld [vmem:[%s5 + $0x8c] sm:$0xf]
  %v970 = vld [vmem:[%s5 + $0x90] sm:$0xff]
  %v971 = vld [vmem:[%s5 + $0x98] sm:$0xf]
  %v972 = vld [vmem:[%s5 + $0x9c] sm:$0xff]
  %v973 = vld [vmem:[%s5 + $0xa4] sm:$0xf]
  %v974 = vld [vmem:[%s5 + $0xa8] sm:$0xff]
  %v975 = vld [vmem:[%s5 + $0xb0] sm:$0xf]
  %v976 = vld [vmem:[%s5 + $0xb4] sm:$0xff]
  %v977 = vld [vmem:[%s5 + $0xbc] sm:$0xf]
  %v978 = vld [vmem:[#allocation2] sm:$0x3f]
  %v1011 = vunpack.c.l.b16 %v914
  %v1012 = vunpack.c.h.b16 %v914
  %v1013 = vunpack.c.l.b16 %v915
  %v1014 = vunpack.c.l.b16 %v916
  %v1015 = vunpack.c.h.b16 %v916
  %v1016 = vunpack.c.l.b16 %v917
  %v1017 = vunpack.c.l.b16 %v918
  %v1018 = vunpack.c.h.b16 %v918
  %v1019 = vunpack.c.l.b16 %v919
  %v1020 = vunpack.c.l.b16 %v920
  %v1021 = vunpack.c.h.b16 %v920
  %v1022 = vunpack.c.l.b16 %v921
  %v1023 = vunpack.c.l.b16 %v922
  %v1024 = vunpack.c.h.b16 %v922
  %v1025 = vunpack.c.l.b16 %v923
  %v1026 = vunpack.c.l.b16 %v924
  %v1027 = vunpack.c.h.b16 %v924
  %v1028 = vunpack.c.l.b16 %v925
  %v1029 = vunpack.c.l.b16 %v926
  %v1030 = vunpack.c.h.b16 %v926
  %v1031 = vunpack.c.l.b16 %v927
  %v1032 = vunpack.c.l.b16 %v928
  %v1033 = vunpack.c.h.b16 %v928
  %v1034 = vunpack.c.l.b16 %v929
  %v1035 = vunpack.c.l.b16 %v930
  %v1036 = vunpack.c.h.b16 %v930
  %v1037 = vunpack.c.l.b16 %v931
  %v1038 = vunpack.c.l.b16 %v932
  %v1039 = vunpack.c.h.b16 %v932
  %v1040 = vunpack.c.l.b16 %v933
  %v1041 = vunpack.c.l.b16 %v934
  %v1042 = vunpack.c.h.b16 %v934
  %v1043 = vunpack.c.l.b16 %v935
  %v1044 = vunpack.c.l.b16 %v936
  %v1045 = vunpack.c.h.b16 %v936
  %v1046 = vunpack.c.l.b16 %v937
  %v1047 = vunpack.c.l.b16 %v938
  %v1048 = vunpack.c.h.b16 %v938
  %v1049 = vunpack.c.l.b16 %v939
  %v1050 = vunpack.c.l.b16 %v940
  %v1051 = vunpack.c.h.b16 %v940
  %v1052 = vunpack.c.l.b16 %v941
  %v1053 = vunpack.c.l.b16 %v942
  %v1054 = vunpack.c.h.b16 %v942
  %v1055 = vunpack.c.l.b16 %v943
  %v1056 = vunpack.c.l.b16 %v944
  %v1057 = vunpack.c.h.b16 %v944
  %v1058 = vunpack.c.l.b16 %v945
  %v1059 = vpack.c.b16 %v1014, %v1011
  %v1060 = vpack.c.b16 %v1015, %v1012
  %v1061 = vpack.c.b16 %v1016, %v1013
  %v1062 = vpack.c.b16 %v1020, %v1017
  %v1063 = vpack.c.b16 %v1021, %v1018
  %v1064 = vpack.c.b16 %v1022, %v1019
  %v1065 = vpack.c.b16 %v1026, %v1023
  %v1066 = vpack.c.b16 %v1027, %v1024
  %v1067 = vpack.c.b16 %v1028, %v1025
  %v1068 = vpack.c.b16 %v1032, %v1029
  %v1069 = vpack.c.b16 %v1033, %v1030
  %v1070 = vpack.c.b16 %v1034, %v1031
  %v1071 = vpack.c.b16 %v1038, %v1035
  %v1072 = vpack.c.b16 %v1039, %v1036
  %v1073 = vpack.c.b16 %v1040, %v1037
  %v1074 = vpack.c.b16 %v1044, %v1041
  %v1075 = vpack.c.b16 %v1045, %v1042
  %v1076 = vpack.c.b16 %v1046, %v1043
  %v1077 = vpack.c.b16 %v1050, %v1047
  %v1078 = vpack.c.b16 %v1051, %v1048
  %v1079 = vpack.c.b16 %v1052, %v1049
  %v1080 = vpack.c.b16 %v1056, %v1053
  %v1081 = vpack.c.b16 %v1057, %v1054
  %v1082 = vpack.c.b16 %v1058, %v1055
  %1107 = vmatprep.subr.bf16.mxu0 %v1060
  %1108 = vmatpush1.bf16.msra.mxu0 %v1059
  %1109 = vmatprep.subr.bf16.mxu0 %v1063
  %1110 = vmatpush1.bf16.msra.mxu0 %v1062
  %1111 = vmatprep.subr.bf16.mxu0 %v1066
  %1112 = vmatpush1.bf16.msra.mxu0 %v1065
  %1113 = vmatprep.subr.bf16.mxu0 %v1069
  %1114 = vmatpush1.bf16.msra.mxu0 %v1068
  %1115 = vmatprep.subr.bf16.mxu0 %v1072
  %1116 = vmatpush1.bf16.msra.mxu0 %v1071
  %1117 = vmatprep.subr.bf16.mxu0 %v1075
  %1118 = vmatpush1.bf16.msra.mxu0 %v1074
  %1119 = vmatprep.subr.bf16.mxu0 %v1078
  %1120 = vmatpush1.bf16.msra.mxu0 %v1077
  %1121 = vmatprep.subr.bf16.mxu0 %v1081
  %1122 = vmatpush1.bf16.msra.mxu0 %v1080
  %1123 = vmatprep.subr.bf16.mxu0 0
  %1124 = vmatpush1.bf16.msra.mxu0 0
  %1125 = vmatprep.subr.bf16.mxu0 0
  %1126 = vmatpush1.bf16.msra.mxu0 0
  %1127 = vmatprep.subr.bf16.mxu0 0
  %1128 = vmatpush1.bf16.msra.mxu0 0
  %1129 = vmatprep.subr.bf16.mxu0 0
  %1130 = vmatpush1.bf16.msra.mxu0 0
  %1131 = vmatprep.subr.bf16.mxu0 0
  %1132 = vmatpush1.bf16.msra.mxu0 0
  %1133 = vmatprep.subr.bf16.mxu0 0
  %1134 = vmatpush1.bf16.msra.mxu0 0
  %1135 = vmatprep.subr.bf16.mxu0 0
  %1136 = vmatpush1.bf16.msra.mxu0 0
  %1137 = vmatprep.subr.bf16.mxu0 0
  %1138 = vmatpush1.bf16.msra.mxu0 0
  %1139 = vmatprep.mubr.bf16.mxu0 0
  %1140 = vmatmul.mubr.bf16.gmra.mrb[0].mxu0 0
  %v1141 = vpop.f32.mrb[0].mxu0
  %v1142 = vadd.f32 %v885, %v1141
  %v1143 = vpop.f32.mrb[0].mxu0
  %v1144 = vadd.f32 %v889, %v1143
  %v1145 = vpop.f32.mrb[0].mxu0
  %v1146 = vpop.f32.mrb[0].mxu0
  %1147 = vdwg.mxu0
  %1148 = vmatprep.subr.bf16.mxu0 0
  %1149 = vmatpush1.bf16.msra.mxu0 %v1061
  %1150 = vmatprep.subr.bf16.mxu0 0
  %1151 = vmatpush1.bf16.msra.mxu0 %v1064
  %1152 = vmatprep.subr.bf16.mxu0 0
  %1153 = vmatpush1.bf16.msra.mxu0 %v1067
  %1154 = vmatprep.subr.bf16.mxu0 0
  %1155 = vmatpush1.bf16.msra.mxu0 %v1070
  %1156 = vmatprep.subr.bf16.mxu0 0
  %1157 = vmatpush1.bf16.msra.mxu0 %v1073
  %1158 = vmatprep.subr.bf16.mxu0 0
  %1159 = vmatpush1.bf16.msra.mxu0 %v1076
  %1160 = vmatprep.subr.bf16.mxu0 0
  %1161 = vmatpush1.bf16.msra.mxu0 %v1079
  %1162 = vmatprep.subr.bf16.mxu0 0
  %1163 = vmatpush1.bf16.msra.mxu0 %v1082
  %1164 = vmatprep.subr.bf16.mxu0 0
  %1165 = vmatpush1.bf16.msra.mxu0 0
  %1166 = vmatprep.subr.bf16.mxu0 0
  %1167 = vmatpush1.bf16.msra.mxu0 0
  %1168 = vmatprep.subr.bf16.mxu0 0
  %1169 = vmatpush1.bf16.msra.mxu0 0
  %1170 = vmatprep.subr.bf16.mxu0 0
  %1171 = vmatpush1.bf16.msra.mxu0 0
  %1172 = vmatprep.subr.bf16.mxu0 0
  %1173 = vmatpush1.bf16.msra.mxu0 0
  %1174 = vmatprep.subr.bf16.mxu0 0
  %1175 = vmatpush1.bf16.msra.mxu0 0
  %1176 = vmatprep.subr.bf16.mxu0 0
  %1177 = vmatpush1.bf16.msra.mxu0 0
  %1178 = vmatprep.subr.bf16.mxu0 0
  %1179 = vmatpush1.bf16.msra.mxu0 0
  %1180 = vmatprep.mubr.bf16.mxu0 0
  %1181 = vmatmul.mubr.bf16.gmra.mrb[0].mxu0 0
  %v1182 = vpop.f32.mrb[0].mxu0
  %v1183 = vadd.f32 %v893, %v1182
  %v1184 = vpop.f32.mrb[0].mxu0
  %v1185 = vpop.f32.mrb[0].mxu0
  %v1186 = vpop.f32.mrb[0].mxu0
  %1187 = vdwg.mxu0
  %v1188 = vadd.f32 %v978, %v1142
  %v1189 = vxor.u32 %v1188, 2147483648
  %v1190 = vmul.f32 %v1189, 1.442695
  %v1191 = vpow.pop %v1190
  %v1192 = vadd.f32 %v1191, 1.0
  %v1193 = vrcp.pop %v1192
  %v1194 = vmul.f32 1.0, %v1193
  %v1196 = vrot.slane %v978, 2
  %v1198 = vadd.f32 %v1196, %v1144
  %v1199 = vxor.u32 %v1198, 2147483648
  %v1200 = vmul.f32 %v1199, 1.442695
  %v1201 = vpow.pop %v1200
  %v1202 = vadd.f32 %v1201, 1.0
  %v1203 = vrcp.pop %v1202
  %v1204 = vmul.f32 1.0, %v1203
  %v1205 = vmul.f32 %v1194, %v1183
  %v1206 = vrot.slane %v978, 4
  %v1208 = vadd.f32 %v1206, %v1205
  %v1209 = vtanh.pop %v1208
  %v1210 = vsub.f32 1.0, %v1204
  %v1211 = vmul.f32 %v1210, %v1209
  %v1212 = vmul.f32 %v1204, 0.0
  %v1213 = vadd.f32 %v1211, %v1212
  %1214 = vst [vmem:[%s7] sm:$0x3] %v1213
  %s1215 = scalar_lea.vmem [#allocation3], 18
  %v1216 = vld [vmem:[%s1215] sm:$0x3f]
  %v1249 = vunpack.c.l.b16 %v946
  %v1250 = vunpack.c.h.b16 %v946
  %v1251 = vunpack.c.l.b16 %v947
  %v1252 = vunpack.c.l.b16 %v948
  %v1253 = vunpack.c.h.b16 %v948
  %v1254 = vunpack.c.l.b16 %v949
  %v1255 = vunpack.c.l.b16 %v950
  %v1256 = vunpack.c.h.b16 %v950
  %v1257 = vunpack.c.l.b16 %v951
  %v1258 = vunpack.c.l.b16 %v952
  %v1259 = vunpack.c.h.b16 %v952
  %v1260 = vunpack.c.l.b16 %v953
  %v1261 = vunpack.c.l.b16 %v954
  %v1262 = vunpack.c.h.b16 %v954
  %v1263 = vunpack.c.l.b16 %v955
  %v1264 = vunpack.c.l.b16 %v956
  %v1265 = vunpack.c.h.b16 %v956
  %v1266 = vunpack.c.l.b16 %v957
  %v1267 = vunpack.c.l.b16 %v958
  %v1268 = vunpack.c.h.b16 %v958
  %v1269 = vunpack.c.l.b16 %v959
  %v1270 = vunpack.c.l.b16 %v960
  %v1271 = vunpack.c.h.b16 %v960
  %v1272 = vunpack.c.l.b16 %v961
  %v1273 = vunpack.c.l.b16 %v962
  %v1274 = vunpack.c.h.b16 %v962
  %v1275 = vunpack.c.l.b16 %v963
  %v1276 = vunpack.c.l.b16 %v964
  %v1277 = vunpack.c.h.b16 %v964
  %v1278 = vunpack.c.l.b16 %v965
  %v1279 = vunpack.c.l.b16 %v966
  %v1280 = vunpack.c.h.b16 %v966
  %v1281 = vunpack.c.l.b16 %v967
  %v1282 = vunpack.c.l.b16 %v968
  %v1283 = vunpack.c.h.b16 %v968
  %v1284 = vunpack.c.l.b16 %v969
  %v1285 = vunpack.c.l.b16 %v970
  %v1286 = vunpack.c.h.b16 %v970
  %v1287 = vunpack.c.l.b16 %v971
  %v1288 = vunpack.c.l.b16 %v972
  %v1289 = vunpack.c.h.b16 %v972
  %v1290 = vunpack.c.l.b16 %v973
  %v1291 = vunpack.c.l.b16 %v974
  %v1292 = vunpack.c.h.b16 %v974
  %v1293 = vunpack.c.l.b16 %v975
  %v1294 = vunpack.c.l.b16 %v976
  %v1295 = vunpack.c.h.b16 %v976
  %v1296 = vunpack.c.l.b16 %v977
  %v1297 = vpack.c.b16 %v1252, %v1249
  %v1298 = vpack.c.b16 %v1253, %v1250
  %v1299 = vpack.c.b16 %v1254, %v1251
  %v1300 = vpack.c.b16 %v1258, %v1255
  %v1301 = vpack.c.b16 %v1259, %v1256
  %v1302 = vpack.c.b16 %v1260, %v1257
  %v1303 = vpack.c.b16 %v1264, %v1261
  %v1304 = vpack.c.b16 %v1265, %v1262
  %v1305 = vpack.c.b16 %v1266, %v1263
  %v1306 = vpack.c.b16 %v1270, %v1267
  %v1307 = vpack.c.b16 %v1271, %v1268
  %v1308 = vpack.c.b16 %v1272, %v1269
  %v1309 = vpack.c.b16 %v1276, %v1273
  %v1310 = vpack.c.b16 %v1277, %v1274
  %v1311 = vpack.c.b16 %v1278, %v1275
  %v1312 = vpack.c.b16 %v1282, %v1279
  %v1313 = vpack.c.b16 %v1283, %v1280
  %v1314 = vpack.c.b16 %v1284, %v1281
  %v1315 = vpack.c.b16 %v1288, %v1285
  %v1316 = vpack.c.b16 %v1289, %v1286
  %v1317 = vpack.c.b16 %v1290, %v1287
  %v1318 = vpack.c.b16 %v1294, %v1291
  %v1319 = vpack.c.b16 %v1295, %v1292
  %v1320 = vpack.c.b16 %v1296, %v1293
  %1345 = vmatprep.subr.bf16.mxu0 %v1298
  %1346 = vmatpush1.bf16.msra.mxu0 %v1297
  %1347 = vmatprep.subr.bf16.mxu0 %v1301
  %1348 = vmatpush1.bf16.msra.mxu0 %v1300
  %1349 = vmatprep.subr.bf16.mxu0 %v1304
  %1350 = vmatpush1.bf16.msra.mxu0 %v1303
  %1351 = vmatprep.subr.bf16.mxu0 %v1307
  %1352 = vmatpush1.bf16.msra.mxu0 %v1306
  %1353 = vmatprep.subr.bf16.mxu0 %v1310
  %1354 = vmatpush1.bf16.msra.mxu0 %v1309
  %1355 = vmatprep.subr.bf16.mxu0 %v1313
  %1356 = vmatpush1.bf16.msra.mxu0 %v1312
  %1357 = vmatprep.subr.bf16.mxu0 %v1316
  %1358 = vmatpush1.bf16.msra.mxu0 %v1315
  %1359 = vmatprep.subr.bf16.mxu0 %v1319
  %1360 = vmatpush1.bf16.msra.mxu0 %v1318
  %1361 = vmatprep.subr.bf16.mxu0 0
  %1362 = vmatpush1.bf16.msra.mxu0 0
  %1363 = vmatprep.subr.bf16.mxu0 0
  %1364 = vmatpush1.bf16.msra.mxu0 0
  %1365 = vmatprep.subr.bf16.mxu0 0
  %1366 = vmatpush1.bf16.msra.mxu0 0
  %1367 = vmatprep.subr.bf16.mxu0 0
  %1368 = vmatpush1.bf16.msra.mxu0 0
  %1369 = vmatprep.subr.bf16.mxu0 0
  %1370 = vmatpush1.bf16.msra.mxu0 0
  %1371 = vmatprep.subr.bf16.mxu0 0
  %1372 = vmatpush1.bf16.msra.mxu0 0
  %1373 = vmatprep.subr.bf16.mxu0 0
  %1374 = vmatpush1.bf16.msra.mxu0 0
  %1375 = vmatprep.subr.bf16.mxu0 0
  %1376 = vmatpush1.bf16.msra.mxu0 0
  %1377 = vmatprep.mubr.bf16.mxu0 0
  %1378 = vmatmul.mubr.bf16.gmra.mrb[0].mxu0 0
  %v1379 = vpop.f32.mrb[0].mxu0
  %v1380 = vadd.f32 %v902, %v1379
  %v1381 = vpop.f32.mrb[0].mxu0
  %v1382 = vadd.f32 %v906, %v1381
  %v1383 = vpop.f32.mrb[0].mxu0
  %v1384 = vpop.f32.mrb[0].mxu0
  %1385 = vdwg.mxu0
  %1386 = vmatprep.subr.bf16.mxu0 0
  %1387 = vmatpush1.bf16.msra.mxu0 %v1299
  %1388 = vmatprep.subr.bf16.mxu0 0
  %1389 = vmatpush1.bf16.msra.mxu0 %v1302
  %1390 = vmatprep.subr.bf16.mxu0 0
  %1391 = vmatpush1.bf16.msra.mxu0 %v1305
  %1392 = vmatprep.subr.bf16.mxu0 0
  %1393 = vmatpush1.bf16.msra.mxu0 %v1308
  %1394 = vmatprep.subr.bf16.mxu0 0
  %1395 = vmatpush1.bf16.msra.mxu0 %v1311
  %1396 = vmatprep.subr.bf16.mxu0 0
  %1397 = vmatpush1.bf16.msra.mxu0 %v1314
  %1398 = vmatprep.subr.bf16.mxu0 0
  %1399 = vmatpush1.bf16.msra.mxu0 %v1317
  %1400 = vmatprep.subr.bf16.mxu0 0
  %1401 = vmatpush1.bf16.msra.mxu0 %v1320
  %1402 = vmatprep.subr.bf16.mxu0 0
  %1403 = vmatpush1.bf16.msra.mxu0 0
  %1404 = vmatprep.subr.bf16.mxu0 0
  %1405 = vmatpush1.bf16.msra.mxu0 0
  %1406 = vmatprep.subr.bf16.mxu0 0
  %1407 = vmatpush1.bf16.msra.mxu0 0
  %1408 = vmatprep.subr.bf16.mxu0 0
  %1409 = vmatpush1.bf16.msra.mxu0 0
  %1410 = vmatprep.subr.bf16.mxu0 0
  %1411 = vmatpush1.bf16.msra.mxu0 0
  %1412 = vmatprep.subr.bf16.mxu0 0
  %1413 = vmatpush1.bf16.msra.mxu0 0
  %1414 = vmatprep.subr.bf16.mxu0 0
  %1415 = vmatpush1.bf16.msra.mxu0 0
  %1416 = vmatprep.subr.bf16.mxu0 0
  %1417 = vmatpush1.bf16.msra.mxu0 0
  %1418 = vmatprep.mubr.bf16.mxu0 0
  %1419 = vmatmul.mubr.bf16.gmra.mrb[0].mxu0 0
  %v1420 = vpop.f32.mrb[0].mxu0
  %v1421 = vadd.f32 %v910, %v1420
  %v1422 = vpop.f32.mrb[0].mxu0
  %v1423 = vpop.f32.mrb[0].mxu0
  %v1424 = vpop.f32.mrb[0].mxu0
  %1425 = vdwg.mxu0
  %v1426 = vadd.f32 %v1216, %v1380
  %v1427 = vxor.u32 %v1426, 2147483648
  %v1428 = vmul.f32 %v1427, 1.442695
  %v1429 = vpow.pop %v1428
  %v1430 = vadd.f32 %v1429, 1.0
  %v1431 = vrcp.pop %v1430
  %v1432 = vmul.f32 1.0, %v1431
  %v1434 = vrot.slane %v1216, 2
  %v1436 = vadd.f32 %v1434, %v1382
  %v1437 = vxor.u32 %v1436, 2147483648
  %v1438 = vmul.f32 %v1437, 1.442695
  %v1439 = vpow.pop %v1438
  %v1440 = vadd.f32 %v1439, 1.0
  %v1441 = vrcp.pop %v1440
  %v1442 = vmul.f32 1.0, %v1441
  %v1443 = vmul.f32 %v1432, %v1421
  %v1444 = vrot.slane %v1216, 4
  %v1446 = vadd.f32 %v1444, %v1443
  %v1447 = vtanh.pop %v1446
  %v1448 = vsub.f32 1.0, %v1442
  %v1449 = vmul.f32 %v1448, %v1447
  %v1450 = vmul.f32 %v1442, 0.0
  %v1451 = vadd.f32 %v1449, %v1450
  %s1452 = scalar_lea.vmem %s7, 12
  %1453 = vst [vmem:[%s1452 + $0x2] sm:$0x3] %v1451
  %s1454 = scalar_lea.vmem [#allocation2], 6
  %v1455 = vld [vmem:[%s1454] sm:$0x3f]
  %v1456 = vpack.c.bf16 %v1213, %v1213
  %1457 = vmatprep.subr.bf16.mxu0 %v1060
  %1458 = vmatpush1.bf16.msra.mxu0 %v1059
  %1459 = vmatprep.subr.bf16.mxu0 %v1063
  %1460 = vmatpush1.bf16.msra.mxu0 %v1062
  %1461 = vmatprep.subr.bf16.mxu0 %v1066
  %1462 = vmatpush1.bf16.msra.mxu0 %v1065
  %1463 = vmatprep.subr.bf16.mxu0 %v1069
  %1464 = vmatpush1.bf16.msra.mxu0 %v1068
  %1465 = vmatprep.subr.bf16.mxu0 %v1072
  %1466 = vmatpush1.bf16.msra.mxu0 %v1071
  %1467 = vmatprep.subr.bf16.mxu0 %v1075
  %1468 = vmatpush1.bf16.msra.mxu0 %v1074
  %1469 = vmatprep.subr.bf16.mxu0 %v1078
  %1470 = vmatpush1.bf16.msra.mxu0 %v1077
  %1471 = vmatprep.subr.bf16.mxu0 %v1081
  %1472 = vmatpush1.bf16.msra.mxu0 %v1080
  %1473 = vmatprep.subr.bf16.mxu0 0
  %1474 = vmatpush1.bf16.msra.mxu0 0
  %1475 = vmatprep.subr.bf16.mxu0 0
  %1476 = vmatpush1.bf16.msra.mxu0 0
  %1477 = vmatprep.subr.bf16.mxu0 0
  %1478 = vmatpush1.bf16.msra.mxu0 0
  %1479 = vmatprep.subr.bf16.mxu0 0
  %1480 = vmatpush1.bf16.msra.mxu0 0
  %1481 = vmatprep.subr.bf16.mxu0 0
  %1482 = vmatpush1.bf16.msra.mxu0 0
  %1483 = vmatprep.subr.bf16.mxu0 0
  %1484 = vmatpush1.bf16.msra.mxu0 0
  %1485 = vmatprep.subr.bf16.mxu0 0
  %1486 = vmatpush1.bf16.msra.mxu0 0
  %1487 = vmatprep.subr.bf16.mxu0 0
  %1488 = vmatpush1.bf16.msra.mxu0 0
  %1489 = vmatprep.mubr.bf16.mxu0 0
  %1490 = vmatmul.mubr.bf16.gmra.mrb[0].mxu0 %v1456
  %v1491 = vpop.f32.mrb[0].mxu0
  %v1492 = vadd.f32 %v885, %v1491
  %v1493 = vpop.f32.mrb[0].mxu0
  %v1494 = vadd.f32 %v889, %v1493
  %v1495 = vpop.f32.mrb[0].mxu0
  %v1496 = vpop.f32.mrb[0].mxu0
  %1497 = vdwg.mxu0
  %1498 = vmatprep.subr.bf16.mxu0 0
  %1499 = vmatpush1.bf16.msra.mxu0 %v1061
  %1500 = vmatprep.subr.bf16.mxu0 0
  %1501 = vmatpush1.bf16.msra.mxu0 %v1064
  %1502 = vmatprep.subr.bf16.mxu0 0
  %1503 = vmatpush1.bf16.msra.mxu0 %v1067
  %1504 = vmatprep.subr.bf16.mxu0 0
  %1505 = vmatpush1.bf16.msra.mxu0 %v1070
  %1506 = vmatprep.subr.bf16.mxu0 0
  %1507 = vmatpush1.bf16.msra.mxu0 %v1073
  %1508 = vmatprep.subr.bf16.mxu0 0
  %1509 = vmatpush1.bf16.msra.mxu0 %v1076
  %1510 = vmatprep.subr.bf16.mxu0 0
  %1511 = vmatpush1.bf16.msra.mxu0 %v1079
  %1512 = vmatprep.subr.bf16.mxu0 0
  %1513 = vmatpush1.bf16.msra.mxu0 %v1082
  %1514 = vmatprep.subr.bf16.mxu0 0
  %1515 = vmatpush1.bf16.msra.mxu0 0
  %1516 = vmatprep.subr.bf16.mxu0 0
  %1517 = vmatpush1.bf16.msra.mxu0 0
  %1518 = vmatprep.subr.bf16.mxu0 0
  %1519 = vmatpush1.bf16.msra.mxu0 0
  %1520 = vmatprep.subr.bf16.mxu0 0
  %1521 = vmatpush1.bf16.msra.mxu0 0
  %1522 = vmatprep.subr.bf16.mxu0 0
  %1523 = vmatpush1.bf16.msra.mxu0 0
  %1524 = vmatprep.subr.bf16.mxu0 0
  %1525 = vmatpush1.bf16.msra.mxu0 0
  %1526 = vmatprep.subr.bf16.mxu0 0
  %1527 = vmatpush1.bf16.msra.mxu0 0
  %1528 = vmatprep.subr.bf16.mxu0 0
  %1529 = vmatpush1.bf16.msra.mxu0 0
  %1530 = vmatprep.mubr.bf16.mxu0 0
  %1531 = vmatmul.mubr.bf16.gmra.mrb[0].mxu0 %v1456
  %v1532 = vpop.f32.mrb[0].mxu0
  %v1533 = vadd.f32 %v893, %v1532
  %v1534 = vpop.f32.mrb[0].mxu0
  %v1535 = vpop.f32.mrb[0].mxu0
  %v1536 = vpop.f32.mrb[0].mxu0
  %1537 = vdwg.mxu0
  %v1538 = vadd.f32 %v1455, %v1492
  %v1539 = vxor.u32 %v1538, 2147483648
  %v1540 = vmul.f32 %v1539, 1.442695
  %v1541 = vpow.pop %v1540
  %v1542 = vadd.f32 %v1541, 1.0
  %v1543 = vrcp.pop %v1542
  %v1544 = vmul.f32 1.0, %v1543
  %v1546 = vrot.slane %v1455, 2
  %v1548 = vadd.f32 %v1546, %v1494
  %v1549 = vxor.u32 %v1548, 2147483648
  %v1550 = vmul.f32 %v1549, 1.442695
  %v1551 = vpow.pop %v1550
  %v1552 = vadd.f32 %v1551, 1.0
  %v1553 = vrcp.pop %v1552
  %v1554 = vmul.f32 1.0, %v1553
  %v1555 = vmul.f32 %v1544, %v1533
  %v1556 = vrot.slane %v1455, 4
  %v1558 = vadd.f32 %v1556, %v1555
  %v1559 = vtanh.pop %v1558
  %v1560 = vsub.f32 1.0, %v1554
  %v1561 = vmul.f32 %v1560, %v1559
  %v1562 = vmul.f32 %v1554, %v1213
  %v1563 = vadd.f32 %v1561, %v1562
  %s1564 = scalar_lea.vmem %s7, 4
  %1565 = vst [vmem:[%s1564] sm:$0x3] %v1563
  %s1566 = scalar_lea.vmem [#allocation3], 12
  %v1567 = vld [vmem:[%s1566] sm:$0x3f]
  %v1568 = vpack.c.bf16 %v1451, %v1451
  %1569 = vmatprep.subr.bf16.mxu0 %v1298
  %1570 = vmatpush1.bf16.msra.mxu0 %v1297
  %1571 = vmatprep.subr.bf16.mxu0 %v1301
  %1572 = vmatpush1.bf16.msra.mxu0 %v1300
  %1573 = vmatprep.subr.bf16.mxu0 %v1304
  %1574 = vmatpush1.bf16.msra.mxu0 %v1303
  %1575 = vmatprep.subr.bf16.mxu0 %v1307
  %1576 = vmatpush1.bf16.msra.mxu0 %v1306
  %1577 = vmatprep.subr.bf16.mxu0 %v1310
  %1578 = vmatpush1.bf16.msra.mxu0 %v1309
  %1579 = vmatprep.subr.bf16.mxu0 %v1313
  %1580 = vmatpush1.bf16.msra.mxu0 %v1312
  %1581 = vmatprep.subr.bf16.mxu0 %v1316
  %1582 = vmatpush1.bf16.msra.mxu0 %v1315
  %1583 = vmatprep.subr.bf16.mxu0 %v1319
  %1584 = vmatpush1.bf16.msra.mxu0 %v1318
  %1585 = vmatprep.subr.bf16.mxu0 0
  %1586 = vmatpush1.bf16.msra.mxu0 0
  %1587 = vmatprep.subr.bf16.mxu0 0
  %1588 = vmatpush1.bf16.msra.mxu0 0
  %1589 = vmatprep.subr.bf16.mxu0 0
  %1590 = vmatpush1.bf16.msra.mxu0 0
  %1591 = vmatprep.subr.bf16.mxu0 0
  %1592 = vmatpush1.bf16.msra.mxu0 0
  %1593 = vmatprep.subr.bf16.mxu0 0
  %1594 = vmatpush1.bf16.msra.mxu0 0
  %1595 = vmatprep.subr.bf16.mxu0 0
  %1596 = vmatpush1.bf16.msra.mxu0 0
  %1597 = vmatprep.subr.bf16.mxu0 0
  %1598 = vmatpush1.bf16.msra.mxu0 0
  %1599 = vmatprep.subr.bf16.mxu0 0
  %1600 = vmatpush1.bf16.msra.mxu0 0
  %1601 = vmatprep.mubr.bf16.mxu0 0
  %1602 = vmatmul.mubr.bf16.gmra.mrb[0].mxu0 %v1568
  %v1603 = vpop.f32.mrb[0].mxu0
  %v1604 = vadd.f32 %v902, %v1603
  %v1605 = vpop.f32.mrb[0].mxu0
  %v1606 = vadd.f32 %v906, %v1605
  %v1607 = vpop.f32.mrb[0].mxu0
  %v1608 = vpop.f32.mrb[0].mxu0
  %1609 = vdwg.mxu0
  %1610 = vmatprep.subr.bf16.mxu0 0
  %1611 = vmatpush1.bf16.msra.mxu0 %v1299
  %1612 = vmatprep.subr.bf16.mxu0 0
  %1613 = vmatpush1.bf16.msra.mxu0 %v1302
  %1614 = vmatprep.subr.bf16.mxu0 0
  %1615 = vmatpush1.bf16.msra.mxu0 %v1305
  %1616 = vmatprep.subr.bf16.mxu0 0
  %1617 = vmatpush1.bf16.msra.mxu0 %v1308
  %1618 = vmatprep.subr.bf16.mxu0 0
  %1619 = vmatpush1.bf16.msra.mxu0 %v1311
  %1620 = vmatprep.subr.bf16.mxu0 0
  %1621 = vmatpush1.bf16.msra.mxu0 %v1314
  %1622 = vmatprep.subr.bf16.mxu0 0
  %1623 = vmatpush1.bf16.msra.mxu0 %v1317
  %1624 = vmatprep.subr.bf16.mxu0 0
  %1625 = vmatpush1.bf16.msra.mxu0 %v1320
  %1626 = vmatprep.subr.bf16.mxu0 0
  %1627 = vmatpush1.bf16.msra.mxu0 0
  %1628 = vmatprep.subr.bf16.mxu0 0
  %1629 = vmatpush1.bf16.msra.mxu0 0
  %1630 = vmatprep.subr.bf16.mxu0 0
  %1631 = vmatpush1.bf16.msra.mxu0 0
  %1632 = vmatprep.subr.bf16.mxu0 0
  %1633 = vmatpush1.bf16.msra.mxu0 0
  %1634 = vmatprep.subr.bf16.mxu0 0
  %1635 = vmatpush1.bf16.msra.mxu0 0
  %1636 = vmatprep.subr.bf16.mxu0 0
  %1637 = vmatpush1.bf16.msra.mxu0 0
  %1638 = vmatprep.subr.bf16.mxu0 0
  %1639 = vmatpush1.bf16.msra.mxu0 0
  %1640 = vmatprep.subr.bf16.mxu0 0
  %1641 = vmatpush1.bf16.msra.mxu0 0
  %1642 = vmatprep.mubr.bf16.mxu0 0
  %1643 = vmatmul.mubr.bf16.gmra.mrb[0].mxu0 %v1568
  %v1644 = vpop.f32.mrb[0].mxu0
  %v1645 = vadd.f32 %v910, %v1644
  %v1646 = vpop.f32.mrb[0].mxu0
  %v1647 = vpop.f32.mrb[0].mxu0
  %v1648 = vpop.f32.mrb[0].mxu0
  %1649 = vdwg.mxu0
  %v1650 = vadd.f32 %v1567, %v1604
  %v1651 = vxor.u32 %v1650, 2147483648
  %v1652 = vmul.f32 %v1651, 1.442695
  %v1653 = vpow.pop %v1652
  %v1654 = vadd.f32 %v1653, 1.0
  %v1655 = vrcp.pop %v1654
  %v1656 = vmul.f32 1.0, %v1655
  %v1658 = vrot.slane %v1567, 2
  %v1660 = vadd.f32 %v1658, %v1606
  %v1661 = vxor.u32 %v1660, 2147483648
  %v1662 = vmul.f32 %v1661, 1.442695
  %v1663 = vpow.pop %v1662
  %v1664 = vadd.f32 %v1663, 1.0
  %v1665 = vrcp.pop %v1664
  %v1666 = vmul.f32 1.0, %v1665
  %v1667 = vmul.f32 %v1656, %v1645
  %v1668 = vrot.slane %v1567, 4
  %v1670 = vadd.f32 %v1668, %v1667
  %v1671 = vtanh.pop %v1670
  %v1672 = vsub.f32 1.0, %v1666
  %v1673 = vmul.f32 %v1672, %v1671
  %v1674 = vmul.f32 %v1666, %v1451
  %v1675 = vadd.f32 %v1673, %v1674
  %s1676 = scalar_lea.vmem %s7, 8
  %1677 = vst [vmem:[%s1676 + $0x2] sm:$0x3] %v1675
  %s1678 = scalar_lea.vmem [#allocation2], 12
  %v1679 = vld [vmem:[%s1678] sm:$0x3f]
  %v1680 = vpack.c.bf16 %v1563, %v1563
  %1681 = vmatprep.subr.bf16.mxu0 %v1060
  %1682 = vmatpush1.bf16.msra.mxu0 %v1059
  %1683 = vmatprep.subr.bf16.mxu0 %v1063
  %1684 = vmatpush1.bf16.msra.mxu0 %v1062
  %1685 = vmatprep.subr.bf16.mxu0 %v1066
  %1686 = vmatpush1.bf16.msra.mxu0 %v1065
  %1687 = vmatprep.subr.bf16.mxu0 %v1069
  %1688 = vmatpush1.bf16.msra.mxu0 %v1068
  %1689 = vmatprep.subr.bf16.mxu0 %v1072
  %1690 = vmatpush1.bf16.msra.mxu0 %v1071
  %1691 = vmatprep.subr.bf16.mxu0 %v1075
  %1692 = vmatpush1.bf16.msra.mxu0 %v1074
  %1693 = vmatprep.subr.bf16.mxu0 %v1078
  %1694 = vmatpush1.bf16.msra.mxu0 %v1077
  %1695 = vmatprep.subr.bf16.mxu0 %v1081
  %1696 = vmatpush1.bf16.msra.mxu0 %v1080
  %1697 = vmatprep.subr.bf16.mxu0 0
  %1698 = vmatpush1.bf16.msra.mxu0 0
  %1699 = vmatprep.subr.bf16.mxu0 0
  %1700 = vmatpush1.bf16.msra.mxu0 0
  %1701 = vmatprep.subr.bf16.mxu0 0
  %1702 = vmatpush1.bf16.msra.mxu0 0
  %1703 = vmatprep.subr.bf16.mxu0 0
  %1704 = vmatpush1.bf16.msra.mxu0 0
  %1705 = vmatprep.subr.bf16.mxu0 0
  %1706 = vmatpush1.bf16.msra.mxu0 0
  %1707 = vmatprep.subr.bf16.mxu0 0
  %1708 = vmatpush1.bf16.msra.mxu0 0
  %1709 = vmatprep.subr.bf16.mxu0 0
  %1710 = vmatpush1.bf16.msra.mxu0 0
  %1711 = vmatprep.subr.bf16.mxu0 0
  %1712 = vmatpush1.bf16.msra.mxu0 0
  %1713 = vmatprep.mubr.bf16.mxu0 0
  %1714 = vmatmul.mubr.bf16.gmra.mrb[0].mxu0 %v1680
  %v1715 = vpop.f32.mrb[0].mxu0
  %v1716 = vadd.f32 %v885, %v1715
  %v1717 = vpop.f32.mrb[0].mxu0
  %v1718 = vadd.f32 %v889, %v1717
  %v1719 = vpop.f32.mrb[0].mxu0
  %v1720 = vpop.f32.mrb[0].mxu0
  %1721 = vdwg.mxu0
  %1722 = vmatprep.subr.bf16.mxu0 0
  %1723 = vmatpush1.bf16.msra.mxu0 %v1061
  %1724 = vmatprep.subr.bf16.mxu0 0
  %1725 = vmatpush1.bf16.msra.mxu0 %v1064
  %1726 = vmatprep.subr.bf16.mxu0 0
  %1727 = vmatpush1.bf16.msra.mxu0 %v1067
  %1728 = vmatprep.subr.bf16.mxu0 0
  %1729 = vmatpush1.bf16.msra.mxu0 %v1070
  %1730 = vmatprep.subr.bf16.mxu0 0
  %1731 = vmatpush1.bf16.msra.mxu0 %v1073
  %1732 = vmatprep.subr.bf16.mxu0 0
  %1733 = vmatpush1.bf16.msra.mxu0 %v1076
  %1734 = vmatprep.subr.bf16.mxu0 0
  %1735 = vmatpush1.bf16.msra.mxu0 %v1079
  %1736 = vmatprep.subr.bf16.mxu0 0
  %1737 = vmatpush1.bf16.msra.mxu0 %v1082
  %1738 = vmatprep.subr.bf16.mxu0 0
  %1739 = vmatpush1.bf16.msra.mxu0 0
  %1740 = vmatprep.subr.bf16.mxu0 0
  %1741 = vmatpush1.bf16.msra.mxu0 0
  %1742 = vmatprep.subr.bf16.mxu0 0
  %1743 = vmatpush1.bf16.msra.mxu0 0
  %1744 = vmatprep.subr.bf16.mxu0 0
  %1745 = vmatpush1.bf16.msra.mxu0 0
  %1746 = vmatprep.subr.bf16.mxu0 0
  %1747 = vmatpush1.bf16.msra.mxu0 0
  %1748 = vmatprep.subr.bf16.mxu0 0
  %1749 = vmatpush1.bf16.msra.mxu0 0
  %1750 = vmatprep.subr.bf16.mxu0 0
  %1751 = vmatpush1.bf16.msra.mxu0 0
  %1752 = vmatprep.subr.bf16.mxu0 0
  %1753 = vmatpush1.bf16.msra.mxu0 0
  %1754 = vmatprep.mubr.bf16.mxu0 0
  %1755 = vmatmul.mubr.bf16.gmra.mrb[0].mxu0 %v1680
  %v1756 = vpop.f32.mrb[0].mxu0
  %v1757 = vadd.f32 %v893, %v1756
  %v1758 = vpop.f32.mrb[0].mxu0
  %v1759 = vpop.f32.mrb[0].mxu0
  %v1760 = vpop.f32.mrb[0].mxu0
  %1761 = vdwg.mxu0
  %v1762 = vadd.f32 %v1679, %v1716
  %v1763 = vxor.u32 %v1762, 2147483648
  %v1764 = vmul.f32 %v1763, 1.442695
  %v1765 = vpow.pop %v1764
  %v1766 = vadd.f32 %v1765, 1.0
  %v1767 = vrcp.pop %v1766
  %v1768 = vmul.f32 1.0, %v1767
  %v1770 = vrot.slane %v1679, 2
  %v1772 = vadd.f32 %v1770, %v1718
  %v1773 = vxor.u32 %v1772, 2147483648
  %v1774 = vmul.f32 %v1773, 1.442695
  %v1775 = vpow.pop %v1774
  %v1776 = vadd.f32 %v1775, 1.0
  %v1777 = vrcp.pop %v1776
  %v1778 = vmul.f32 1.0, %v1777
  %v1779 = vmul.f32 %v1768, %v1757
  %v1780 = vrot.slane %v1679, 4
  %v1782 = vadd.f32 %v1780, %v1779
  %v1783 = vtanh.pop %v1782
  %v1784 = vsub.f32 1.0, %v1778
  %v1785 = vmul.f32 %v1784, %v1783
  %v1786 = vmul.f32 %v1778, %v1563
  %v1787 = vadd.f32 %v1785, %v1786
  %1788 = vst [vmem:[%s1676] sm:$0x3] %v1787
  %s1789 = scalar_lea.vmem [#allocation3], 6
  %v1790 = vld [vmem:[%s1789] sm:$0x3f]
  %v1791 = vpack.c.bf16 %v1675, %v1675
  %1792 = vmatprep.subr.bf16.mxu0 %v1298
  %1793 = vmatpush1.bf16.msra.mxu0 %v1297
  %1794 = vmatprep.subr.bf16.mxu0 %v1301
  %1795 = vmatpush1.bf16.msra.mxu0 %v1300
  %1796 = vmatprep.subr.bf16.mxu0 %v1304
  %1797 = vmatpush1.bf16.msra.mxu0 %v1303
  %1798 = vmatprep.subr.bf16.mxu0 %v1307
  %1799 = vmatpush1.bf16.msra.mxu0 %v1306
  %1800 = vmatprep.subr.bf16.mxu0 %v1310
  %1801 = vmatpush1.bf16.msra.mxu0 %v1309
  %1802 = vmatprep.subr.bf16.mxu0 %v1313
  %1803 = vmatpush1.bf16.msra.mxu0 %v1312
  %1804 = vmatprep.subr.bf16.mxu0 %v1316
  %1805 = vmatpush1.bf16.msra.mxu0 %v1315
  %1806 = vmatprep.subr.bf16.mxu0 %v1319
  %1807 = vmatpush1.bf16.msra.mxu0 %v1318
  %1808 = vmatprep.subr.bf16.mxu0 0
  %1809 = vmatpush1.bf16.msra.mxu0 0
  %1810 = vmatprep.subr.bf16.mxu0 0
  %1811 = vmatpush1.bf16.msra.mxu0 0
  %1812 = vmatprep.subr.bf16.mxu0 0
  %1813 = vmatpush1.bf16.msra.mxu0 0
  %1814 = vmatprep.subr.bf16.mxu0 0
  %1815 = vmatpush1.bf16.msra.mxu0 0
  %1816 = vmatprep.subr.bf16.mxu0 0
  %1817 = vmatpush1.bf16.msra.mxu0 0
  %1818 = vmatprep.subr.bf16.mxu0 0
  %1819 = vmatpush1.bf16.msra.mxu0 0
  %1820 = vmatprep.subr.bf16.mxu0 0
  %1821 = vmatpush1.bf16.msra.mxu0 0
  %1822 = vmatprep.subr.bf16.mxu0 0
  %1823 = vmatpush1.bf16.msra.mxu0 0
  %1824 = vmatprep.mubr.bf16.mxu0 0
  %1825 = vmatmul.mubr.bf16.gmra.mrb[0].mxu0 %v1791
  %v1826 = vpop.f32.mrb[0].mxu0
  %v1827 = vadd.f32 %v902, %v1826
  %v1828 = vpop.f32.mrb[0].mxu0
  %v1829 = vadd.f32 %v906, %v1828
  %v1830 = vpop.f32.mrb[0].mxu0
  %v1831 = vpop.f32.mrb[0].mxu0
  %1832 = vdwg.mxu0
  %1833 = vmatprep.subr.bf16.mxu0 0
  %1834 = vmatpush1.bf16.msra.mxu0 %v1299
  %1835 = vmatprep.subr.bf16.mxu0 0
  %1836 = vmatpush1.bf16.msra.mxu0 %v1302
  %1837 = vmatprep.subr.bf16.mxu0 0
  %1838 = vmatpush1.bf16.msra.mxu0 %v1305
  %1839 = vmatprep.subr.bf16.mxu0 0
  %1840 = vmatpush1.bf16.msra.mxu0 %v1308
  %1841 = vmatprep.subr.bf16.mxu0 0
  %1842 = vmatpush1.bf16.msra.mxu0 %v1311
  %1843 = vmatprep.subr.bf16.mxu0 0
  %1844 = vmatpush1.bf16.msra.mxu0 %v1314
  %1845 = vmatprep.subr.bf16.mxu0 0
  %1846 = vmatpush1.bf16.msra.mxu0 %v1317
  %1847 = vmatprep.subr.bf16.mxu0 0
  %1848 = vmatpush1.bf16.msra.mxu0 %v1320
  %1849 = vmatprep.subr.bf16.mxu0 0
  %1850 = vmatpush1.bf16.msra.mxu0 0
  %1851 = vmatprep.subr.bf16.mxu0 0
  %1852 = vmatpush1.bf16.msra.mxu0 0
  %1853 = vmatprep.subr.bf16.mxu0 0
  %1854 = vmatpush1.bf16.msra.mxu0 0
  %1855 = vmatprep.subr.bf16.mxu0 0
  %1856 = vmatpush1.bf16.msra.mxu0 0
  %1857 = vmatprep.subr.bf16.mxu0 0
  %1858 = vmatpush1.bf16.msra.mxu0 0
  %1859 = vmatprep.subr.bf16.mxu0 0
  %1860 = vmatpush1.bf16.msra.mxu0 0
  %1861 = vmatprep.subr.bf16.mxu0 0
  %1862 = vmatpush1.bf16.msra.mxu0 0
  %1863 = vmatprep.subr.bf16.mxu0 0
  %1864 = vmatpush1.bf16.msra.mxu0 0
  %1865 = vmatprep.mubr.bf16.mxu0 0
  %1866 = vmatmul.mubr.bf16.gmra.mrb[0].mxu0 %v1791
  %v1867 = vpop.f32.mrb[0].mxu0
  %v1868 = vadd.f32 %v910, %v1867
  %v1869 = vpop.f32.mrb[0].mxu0
  %v1870 = vpop.f32.mrb[0].mxu0
  %v1871 = vpop.f32.mrb[0].mxu0
  %1872 = vdwg.mxu0
  %v1873 = vadd.f32 %v1790, %v1827
  %v1874 = vxor.u32 %v1873, 2147483648
  %v1875 = vmul.f32 %v1874, 1.442695
  %v1876 = vpow.pop %v1875
  %v1877 = vadd.f32 %v1876, 1.0
  %v1878 = vrcp.pop %v1877
  %v1879 = vmul.f32 1.0, %v1878
  %v1881 = vrot.slane %v1790, 2
  %v1883 = vadd.f32 %v1881, %v1829
  %v1884 = vxor.u32 %v1883, 2147483648
  %v1885 = vmul.f32 %v1884, 1.442695
  %v1886 = vpow.pop %v1885
  %v1887 = vadd.f32 %v1886, 1.0
  %v1888 = vrcp.pop %v1887
  %v1889 = vmul.f32 1.0, %v1888
  %v1890 = vmul.f32 %v1879, %v1868
  %v1891 = vrot.slane %v1790, 4
  %v1893 = vadd.f32 %v1891, %v1890
  %v1894 = vtanh.pop %v1893
  %v1895 = vsub.f32 1.0, %v1889
  %v1896 = vmul.f32 %v1895, %v1894
  %v1897 = vmul.f32 %v1889, %v1675
  %v1898 = vadd.f32 %v1896, %v1897
  %1899 = vst [vmem:[%s1564 + $0x2] sm:$0x3] %v1898
  %s1900 = scalar_lea.vmem [#allocation2], 18
  %v1901 = vld [vmem:[%s1900] sm:$0x3f]
  %v1902 = vpack.c.bf16 %v1787, %v1787
  %1903 = vmatprep.subr.bf16.mxu0 %v1060
  %1904 = vmatpush1.bf16.msra.mxu0 %v1059
  %1905 = vmatprep.subr.bf16.mxu0 %v1063
  %1906 = vmatpush1.bf16.msra.mxu0 %v1062
  %1907 = vmatprep.subr.bf16.mxu0 %v1066
  %1908 = vmatpush1.bf16.msra.mxu0 %v1065
  %1909 = vmatprep.subr.bf16.mxu0 %v1069
  %1910 = vmatpush1.bf16.msra.mxu0 %v1068
  %1911 = vmatprep.subr.bf16.mxu0 %v1072
  %1912 = vmatpush1.bf16.msra.mxu0 %v1071
  %1913 = vmatprep.subr.bf16.mxu0 %v1075
  %1914 = vmatpush1.bf16.msra.mxu0 %v1074
  %1915 = vmatprep.subr.bf16.mxu0 %v1078
  %1916 = vmatpush1.bf16.msra.mxu0 %v1077
  %1917 = vmatprep.subr.bf16.mxu0 %v1081
  %1918 = vmatpush1.bf16.msra.mxu0 %v1080
  %1919 = vmatprep.subr.bf16.mxu0 0
  %1920 = vmatpush1.bf16.msra.mxu0 0
  %1921 = vmatprep.subr.bf16.mxu0 0
  %1922 = vmatpush1.bf16.msra.mxu0 0
  %1923 = vmatprep.subr.bf16.mxu0 0
  %1924 = vmatpush1.bf16.msra.mxu0 0
  %1925 = vmatprep.subr.bf16.mxu0 0
  %1926 = vmatpush1.bf16.msra.mxu0 0
  %1927 = vmatprep.subr.bf16.mxu0 0
  %1928 = vmatpush1.bf16.msra.mxu0 0
  %1929 = vmatprep.subr.bf16.mxu0 0
  %1930 = vmatpush1.bf16.msra.mxu0 0
  %1931 = vmatprep.subr.bf16.mxu0 0
  %1932 = vmatpush1.bf16.msra.mxu0 0
  %1933 = vmatprep.subr.bf16.mxu0 0
  %1934 = vmatpush1.bf16.msra.mxu0 0
  %1935 = vmatprep.mubr.bf16.mxu0 0
  %1936 = vmatmul.mubr.bf16.gmra.mrb[0].mxu0 %v1902
  %v1937 = vpop.f32.mrb[0].mxu0
  %v1938 = vadd.f32 %v885, %v1937
  %v1939 = vpop.f32.mrb[0].mxu0
  %v1940 = vadd.f32 %v889, %v1939
  %v1941 = vpop.f32.mrb[0].mxu0
  %v1942 = vpop.f32.mrb[0].mxu0
  %1943 = vdwg.mxu0
  %1944 = vmatprep.subr.bf16.mxu0 0
  %1945 = vmatpush1.bf16.msra.mxu0 %v1061
  %1946 = vmatprep.subr.bf16.mxu0 0
  %1947 = vmatpush1.bf16.msra.mxu0 %v1064
  %1948 = vmatprep.subr.bf16.mxu0 0
  %1949 = vmatpush1.bf16.msra.mxu0 %v1067
  %1950 = vmatprep.subr.bf16.mxu0 0
  %1951 = vmatpush1.bf16.msra.mxu0 %v1070
  %1952 = vmatprep.subr.bf16.mxu0 0
  %1953 = vmatpush1.bf16.msra.mxu0 %v1073
  %1954 = vmatprep.subr.bf16.mxu0 0
  %1955 = vmatpush1.bf16.msra.mxu0 %v1076
  %1956 = vmatprep.subr.bf16.mxu0 0
  %1957 = vmatpush1.bf16.msra.mxu0 %v1079
  %1958 = vmatprep.subr.bf16.mxu0 0
  %1959 = vmatpush1.bf16.msra.mxu0 %v1082
  %1960 = vmatprep.subr.bf16.mxu0 0
  %1961 = vmatpush1.bf16.msra.mxu0 0
  %1962 = vmatprep.subr.bf16.mxu0 0
  %1963 = vmatpush1.bf16.msra.mxu0 0
  %1964 = vmatprep.subr.bf16.mxu0 0
  %1965 = vmatpush1.bf16.msra.mxu0 0
  %1966 = vmatprep.subr.bf16.mxu0 0
  %1967 = vmatpush1.bf16.msra.mxu0 0
  %1968 = vmatprep.subr.bf16.mxu0 0
  %1969 = vmatpush1.bf16.msra.mxu0 0
  %1970 = vmatprep.subr.bf16.mxu0 0
  %1971 = vmatpush1.bf16.msra.mxu0 0
  %1972 = vmatprep.subr.bf16.mxu0 0
  %1973 = vmatpush1.bf16.msra.mxu0 0
  %1974 = vmatprep.subr.bf16.mxu0 0
  %1975 = vmatpush1.bf16.msra.mxu0 0
  %1976 = vmatprep.mubr.bf16.mxu0 0
  %1977 = vmatmul.mubr.bf16.gmra.mrb[0].mxu0 %v1902
  %v1978 = vpop.f32.mrb[0].mxu0
  %v1979 = vadd.f32 %v893, %v1978
  %v1980 = vpop.f32.mrb[0].mxu0
  %v1981 = vpop.f32.mrb[0].mxu0
  %v1982 = vpop.f32.mrb[0].mxu0
  %1983 = vdwg.mxu0
  %v1984 = vadd.f32 %v1901, %v1938
  %v1985 = vxor.u32 %v1984, 2147483648
  %v1986 = vmul.f32 %v1985, 1.442695
  %v1987 = vpow.pop %v1986
  %v1988 = vadd.f32 %v1987, 1.0
  %v1989 = vrcp.pop %v1988
  %v1990 = vmul.f32 1.0, %v1989
  %v1992 = vrot.slane %v1901, 2
  %v1994 = vadd.f32 %v1992, %v1940
  %v1995 = vxor.u32 %v1994, 2147483648
  %v1996 = vmul.f32 %v1995, 1.442695
  %v1997 = vpow.pop %v1996
  %v1998 = vadd.f32 %v1997, 1.0
  %v1999 = vrcp.pop %v1998
  %v2000 = vmul.f32 1.0, %v1999
  %v2001 = vmul.f32 %v1990, %v1979
  %v2002 = vrot.slane %v1901, 4
  %v2004 = vadd.f32 %v2002, %v2001
  %v2005 = vtanh.pop %v2004
  %v2006 = vsub.f32 1.0, %v2000
  %v2007 = vmul.f32 %v2006, %v2005
  %v2008 = vmul.f32 %v2000, %v1787
  %v2009 = vadd.f32 %v2007, %v2008
  %2010 = vst [vmem:[%s1452] sm:$0x3] %v2009
  %v2011 = vld [vmem:[#allocation3] sm:$0x3f]
  %v2012 = vpack.c.bf16 %v1898, %v1898
  %2013 = vmatprep.subr.bf16.mxu0 %v1298
  %2014 = vmatpush1.bf16.msra.mxu0 %v1297
  %2015 = vmatprep.subr.bf16.mxu0 %v1301
  %2016 = vmatpush1.bf16.msra.mxu0 %v1300
  %2017 = vmatprep.subr.bf16.mxu0 %v1304
  %2018 = vmatpush1.bf16.msra.mxu0 %v1303
  %2019 = vmatprep.subr.bf16.mxu0 %v1307
  %2020 = vmatpush1.bf16.msra.mxu0 %v1306
  %2021 = vmatprep.subr.bf16.mxu0 %v1310
  %2022 = vmatpush1.bf16.msra.mxu0 %v1309
  %2023 = vmatprep.subr.bf16.mxu0 %v1313
  %2024 = vmatpush1.bf16.msra.mxu0 %v1312
  %2025 = vmatprep.subr.bf16.mxu0 %v1316
  %2026 = vmatpush1.bf16.msra.mxu0 %v1315
  %2027 = vmatprep.subr.bf16.mxu0 %v1319
  %2028 = vmatpush1.bf16.msra.mxu0 %v1318
  %2029 = vmatprep.subr.bf16.mxu0 0
  %2030 = vmatpush1.bf16.msra.mxu0 0
  %2031 = vmatprep.subr.bf16.mxu0 0
  %2032 = vmatpush1.bf16.msra.mxu0 0
  %2033 = vmatprep.subr.bf16.mxu0 0
  %2034 = vmatpush1.bf16.msra.mxu0 0
  %2035 = vmatprep.subr.bf16.mxu0 0
  %2036 = vmatpush1.bf16.msra.mxu0 0
  %2037 = vmatprep.subr.bf16.mxu0 0
  %2038 = vmatpush1.bf16.msra.mxu0 0
  %2039 = vmatprep.subr.bf16.mxu0 0
  %2040 = vmatpush1.bf16.msra.mxu0 0
  %2041 = vmatprep.subr.bf16.mxu0 0
  %2042 = vmatpush1.bf16.msra.mxu0 0
  %2043 = vmatprep.subr.bf16.mxu0 0
  %2044 = vmatpush1.bf16.msra.mxu0 0
  %2045 = vmatprep.mubr.bf16.mxu0 0
  %2046 = vmatmul.mubr.bf16.gmra.mrb[0].mxu0 %v2012
  %v2047 = vpop.f32.mrb[0].mxu0
  %v2048 = vadd.f32 %v902, %v2047
  %v2049 = vpop.f32.mrb[0].mxu0
  %v2050 = vadd.f32 %v906, %v2049
  %v2051 = vpop.f32.mrb[0].mxu0
  %v2052 = vpop.f32.mrb[0].mxu0
  %2053 = vdwg.mxu0
  %2054 = vmatprep.subr.bf16.mxu0 0
  %2055 = vmatpush1.bf16.msra.mxu0 %v1299
  %2056 = vmatprep.subr.bf16.mxu0 0
  %2057 = vmatpush1.bf16.msra.mxu0 %v1302
  %2058 = vmatprep.subr.bf16.mxu0 0
  %2059 = vmatpush1.bf16.msra.mxu0 %v1305
  %2060 = vmatprep.subr.bf16.mxu0 0
  %2061 = vmatpush1.bf16.msra.mxu0 %v1308
  %2062 = vmatprep.subr.bf16.mxu0 0
  %2063 = vmatpush1.bf16.msra.mxu0 %v1311
  %2064 = vmatprep.subr.bf16.mxu0 0
  %2065 = vmatpush1.bf16.msra.mxu0 %v1314
  %2066 = vmatprep.subr.bf16.mxu0 0
  %2067 = vmatpush1.bf16.msra.mxu0 %v1317
  %2068 = vmatprep.subr.bf16.mxu0 0
  %2069 = vmatpush1.bf16.msra.mxu0 %v1320
  %2070 = vmatprep.subr.bf16.mxu0 0
  %2071 = vmatpush1.bf16.msra.mxu0 0
  %2072 = vmatprep.subr.bf16.mxu0 0
  %2073 = vmatpush1.bf16.msra.mxu0 0
  %2074 = vmatprep.subr.bf16.mxu0 0
  %2075 = vmatpush1.bf16.msra.mxu0 0
  %2076 = vmatprep.subr.bf16.mxu0 0
  %2077 = vmatpush1.bf16.msra.mxu0 0
  %2078 = vmatprep.subr.bf16.mxu0 0
  %2079 = vmatpush1.bf16.msra.mxu0 0
  %2080 = vmatprep.subr.bf16.mxu0 0
  %2081 = vmatpush1.bf16.msra.mxu0 0
  %2082 = vmatprep.subr.bf16.mxu0 0
  %2083 = vmatpush1.bf16.msra.mxu0 0
  %2084 = vmatprep.subr.bf16.mxu0 0
  %2085 = vmatpush1.bf16.msra.mxu0 0
  %2086 = vmatprep.mubr.bf16.mxu0 0
  %2087 = vmatmul.mubr.bf16.gmra.mrb[0].mxu0 %v2012
  %v2088 = vpop.f32.mrb[0].mxu0
  %v2089 = vadd.f32 %v910, %v2088
  %v2090 = vpop.f32.mrb[0].mxu0
  %v2091 = vpop.f32.mrb[0].mxu0
  %v2092 = vpop.f32.mrb[0].mxu0
  %2093 = vdwg.mxu0
  %v2094 = vadd.f32 %v2011, %v2048
  %v2095 = vxor.u32 %v2094, 2147483648
  %v2096 = vmul.f32 %v2095, 1.442695
  %v2097 = vpow.pop %v2096
  %v2098 = vadd.f32 %v2097, 1.0
  %v2099 = vrcp.pop %v2098
  %v2100 = vmul.f32 1.0, %v2099
  %v2102 = vrot.slane %v2011, 2
  %v2104 = vadd.f32 %v2102, %v2050
  %v2105 = vxor.u32 %v2104, 2147483648
  %v2106 = vmul.f32 %v2105, 1.442695
  %v2107 = vpow.pop %v2106
  %v2108 = vadd.f32 %v2107, 1.0
  %v2109 = vrcp.pop %v2108
  %v2110 = vmul.f32 1.0, %v2109
  %v2111 = vmul.f32 %v2100, %v2089
  %v2112 = vrot.slane %v2011, 4
  %v2114 = vadd.f32 %v2112, %v2111
  %v2115 = vtanh.pop %v2114
  %v2116 = vsub.f32 1.0, %v2110
  %v2117 = vmul.f32 %v2116, %v2115
  %v2118 = vmul.f32 %v2110, %v1898
  %v2119 = vadd.f32 %v2117, %v2118
  %2120 = vst [vmem:[%s7 + $0x2] sm:$0x3] %v2119
  // Predicated region
  $region30: #{han_forward.9} parent=0 // pred_check
    _
  $region31: #{han_forward.9} parent=0 // pred_check_branch
    %2122 = sbr.rel (0) target = $region33
  $region32: #{han_forward.9} parent=0 // pred_region
    _
  $region33: #{han_forward.9} parent=0 // pred_fallthru
    _
  // Predicated region
  $region34: #{han_forward.9} parent=0 // pred_check
    _
  $region35: #{han_forward.9} parent=0 // pred_check_branch
    %2124 = sbr.rel (0) target = $region37
  $region36: #{han_forward.9} parent=0 // pred_region
    _
  $region37: #{han_forward.9} parent=0 // pred_fallthru
    _

// kernel: han_forward.11
$region0: #{han_forward.11}
  #allocation0 [shape = 'u32[]', space=smem, size = 0x4, offset = 0x4, fixed_abs, tag = 'smem constant byte address 0x4 - core index']
  #allocation1 [shape = 'u32[144,128]{1,0:T(1,128)}', space=vmem, size = 0x12000, scoped, tag = 'internal scratch']
  %s0 = inlined_call_operand.vmem [shape: f32[2,4,256], index: 0, kind: input, shape index: {}]
  %s1 = inlined_call_operand.vmem [shape: bf16[256,4], index: 1, kind: input, shape index: {}]
  %s2 = inlined_call_operand.vmem [shape: f32[1,4], index: 2, kind: input, shape index: {}]
  %s3 = inlined_call_operand.vmem [shape: f32[1,4], index: 3, kind: input, shape index: {}]
  %s4 = inlined_call_operand.vmem [shape: f32[256,4], index: 4, kind: input, shape index: {}]
  %s5 = inlined_call_operand.vmem [shape: f32[1,4], index: 5, kind: input, shape index: {}]
  %s6 = inlined_call_operand.hbm [shape: f32[2,4], index: 6, kind: output, shape index: {}]
  %s7 = sld [smem:[#allocation0]]
  $region34: #{han_forward.11} parent=0
    _
  %s9 = ssub.s32 1, %s7
  %s10 = scalar_select 0, %s9, %s7
  $region1: #{han_forward.11} parent=0
    #allocation2 [shape = 'u8[1024]{0}', space=vmem, size = 0x400, scoped, tag = 'output window, operand 0, single buffered']
    #allocation3 [shape = 's32[1]{0}', space=sflag, size = 0x4, scoped, tag = 'scoped memory for han_forward.11']
    %11 = vsyncpa [#allocation3], 0
    // Predicated region
    $region2: #{han_forward.11} parent=1 // pred_check
      _
    $region3: #{han_forward.11} parent=1 // pred_check_branch
      %13 = sbr.rel (0) target = $region5
    $region4: #{han_forward.11} parent=1 // pred_region
      _
    $region5: #{han_forward.11} parent=1 // pred_fallthru
      _
    // Predicated region
    $region6: #{han_forward.11} parent=1 // pred_check
      _
    $region7: #{han_forward.11} parent=1 // pred_check_branch
      %15 = sbr.rel (0) target = $region9
    $region8: #{han_forward.11} parent=1 // pred_region
      _
    $region9: #{han_forward.11} parent=1 // pred_fallthru
      _
    // Predicated region
    $region10: #{han_forward.11} parent=1 // pred_check
      _
    $region11: #{han_forward.11} parent=1 // pred_check_branch
      %17 = sbr.rel (0) target = $region13
    $region12: #{han_forward.11} parent=1 // pred_region
      _
    $region13: #{han_forward.11} parent=1 // pred_fallthru
      _
    // Predicated region
    $region14: #{han_forward.11} parent=1 // pred_check
      _
    $region15: #{han_forward.11} parent=1 // pred_check_branch
      %19 = sbr.rel (0) target = $region17
    $region16: #{han_forward.11} parent=1 // pred_region
      _
    $region17: #{han_forward.11} parent=1 // pred_fallthru
      _
    // Predicated region
    $region18: #{han_forward.11} parent=1 // pred_check
      _
    $region19: #{han_forward.11} parent=1 // pred_check_branch
      %21 = sbr.rel (0) target = $region21
    $region20: #{han_forward.11} parent=1 // pred_region
      _
    $region21: #{han_forward.11} parent=1 // pred_fallthru
      _
    // Predicated region
    $region22: #{han_forward.11} parent=1 // pred_check
      _
    $region23: #{han_forward.11} parent=1 // pred_check_branch
      %23 = sbr.rel (0) target = $region25
    $region24: #{han_forward.11} parent=1 // pred_region
      _
    $region25: #{han_forward.11} parent=1 // pred_fallthru
      _
    %v25 = vld [vmem:[%s0] sm:$0xff]
    %v26 = vld [vmem:[%s0 + $0x8] sm:$0xff]
    %v29 = vcombine.low %v25, %v26
    %v30 = vcombine.high %v25, %v26
    %v33 = vpack.c.bf16 %v29, %v29
    %v34 = vpack.c.bf16 %v30, %v30
    %v35 = vld [vmem:[%s1] sm:$0xf]
    %v36 = vld [vmem:[%s1 + $0x4] sm:$0xf]
    %v37 = vld [vmem:[%s1 + $0x8] sm:$0xf]
    %v38 = vld [vmem:[%s1 + $0xc] sm:$0xf]
    %v39 = vld [vmem:[%s1 + $0x10] sm:$0xf]
    %v40 = vld [vmem:[%s1 + $0x14] sm:$0xf]
    %v41 = vld [vmem:[%s1 + $0x18] sm:$0xf]
    %v42 = vld [vmem:[%s1 + $0x1c] sm:$0xf]
    %v43 = vld [vmem:[%s1 + $0x20] sm:$0xf]
    %v44 = vld [vmem:[%s1 + $0x24] sm:$0xf]
    %v45 = vld [vmem:[%s1 + $0x28] sm:$0xf]
    %v46 = vld [vmem:[%s1 + $0x2c] sm:$0xf]
    %v47 = vld [vmem:[%s1 + $0x30] sm:$0xf]
    %v48 = vld [vmem:[%s1 + $0x34] sm:$0xf]
    %v49 = vld [vmem:[%s1 + $0x38] sm:$0xf]
    %v50 = vld [vmem:[%s1 + $0x3c] sm:$0xf]
    %v51 = vld [vmem:[%s1 + $0x40] sm:$0xf]
    %v52 = vld [vmem:[%s1 + $0x44] sm:$0xf]
    %v53 = vld [vmem:[%s1 + $0x48] sm:$0xf]
    %v54 = vld [vmem:[%s1 + $0x4c] sm:$0xf]
    %v55 = vld [vmem:[%s1 + $0x50] sm:$0xf]
    %v56 = vld [vmem:[%s1 + $0x54] sm:$0xf]
    %v57 = vld [vmem:[%s1 + $0x58] sm:$0xf]
    %v58 = vld [vmem:[%s1 + $0x5c] sm:$0xf]
    %v59 = vld [vmem:[%s1 + $0x60] sm:$0xf]
    %v60 = vld [vmem:[%s1 + $0x64] sm:$0xf]
    %v61 = vld [vmem:[%s1 + $0x68] sm:$0xf]
    %v62 = vld [vmem:[%s1 + $0x6c] sm:$0xf]
    %v63 = vld [vmem:[%s1 + $0x70] sm:$0xf]
    %v64 = vld [vmem:[%s1 + $0x74] sm:$0xf]
    %v65 = vld [vmem:[%s1 + $0x78] sm:$0xf]
    %v66 = vld [vmem:[%s1 + $0x7c] sm:$0xf]
    %v67 = vld [vmem:[%s2] sm:$0x1]
    %v69 = vlaneseq
    %v70 = vshrl.u32 %v69, 7
    %v71 = vsub.s32 0, %v70
    %v72 = vrot.slane %v67, %v71
    %v106 = vunpack.c.l.b16 %v35
    %v107 = vunpack.c.l.b16 %v36
    %v108 = vunpack.c.l.b16 %v37
    %v109 = vunpack.c.l.b16 %v38
    %v110 = vunpack.c.l.b16 %v39
    %v111 = vunpack.c.l.b16 %v40
    %v112 = vunpack.c.l.b16 %v41
    %v113 = vunpack.c.l.b16 %v42
    %v114 = vunpack.c.l.b16 %v43
    %v115 = vunpack.c.l.b16 %v44
    %v116 = vunpack.c.l.b16 %v45
    %v117 = vunpack.c.l.b16 %v46
    %v118 = vunpack.c.l.b16 %v47
    %v119 = vunpack.c.l.b16 %v48
    %v120 = vunpack.c.l.b16 %v49
    %v121 = vunpack.c.l.b16 %v50
    %v122 = vunpack.c.l.b16 %v51
    %v123 = vunpack.c.l.b16 %v52
    %v124 = vunpack.c.l.b16 %v53
    %v125 = vunpack.c.l.b16 %v54
    %v126 = vunpack.c.l.b16 %v55
    %v127 = vunpack.c.l.b16 %v56
    %v128 = vunpack.c.l.b16 %v57
    %v129 = vunpack.c.l.b16 %v58
    %v130 = vunpack.c.l.b16 %v59
    %v131 = vunpack.c.l.b16 %v60
    %v132 = vunpack.c.l.b16 %v61
    %v133 = vunpack.c.l.b16 %v62
    %v134 = vunpack.c.l.b16 %v63
    %v135 = vunpack.c.l.b16 %v64
    %v136 = vunpack.c.l.b16 %v65
    %v137 = vunpack.c.l.b16 %v66
    %v138 = vpack.c.b16 %v107, %v106
    %v139 = vpack.c.b16 %v109, %v108
    %v140 = vpack.c.b16 %v111, %v110
    %v141 = vpack.c.b16 %v113, %v112
    %v142 = vpack.c.b16 %v115, %v114
    %v143 = vpack.c.b16 %v117, %v116
    %v144 = vpack.c.b16 %v119, %v118
    %v145 = vpack.c.b16 %v121, %v120
    %v146 = vpack.c.b16 %v123, %v122
    %v147 = vpack.c.b16 %v125, %v124
    %v148 = vpack.c.b16 %v127, %v126
    %v149 = vpack.c.b16 %v129, %v128
    %v150 = vpack.c.b16 %v131, %v130
    %v151 = vpack.c.b16 %v133, %v132
    %v152 = vpack.c.b16 %v135, %v134
    %v153 = vpack.c.b16 %v137, %v136
    %170 = vmatprep.subr.bf16.mxu0 0
    %171 = vmatpush1.bf16.msra.mxu0 %v138
    %172 = vmatprep.subr.bf16.mxu0 0
    %173 = vmatpush1.bf16.msra.mxu0 %v139
    %174 = vmatprep.subr.bf16.mxu0 0
    %175 = vmatpush1.bf16.msra.mxu0 %v140
    %176 = vmatprep.subr.bf16.mxu0 0
    %177 = vmatpush1.bf16.msra.mxu0 %v141
    %178 = vmatprep.subr.bf16.mxu0 0
    %179 = vmatpush1.bf16.msra.mxu0 %v142
    %180 = vmatprep.subr.bf16.mxu0 0
    %181 = vmatpush1.bf16.msra.mxu0 %v143
    %182 = vmatprep.subr.bf16.mxu0 0
    %183 = vmatpush1.bf16.msra.mxu0 %v144
    %184 = vmatprep.subr.bf16.mxu0 0
    %185 = vmatpush1.bf16.msra.mxu0 %v145
    %186 = vmatprep.subr.bf16.mxu0 0
    %187 = vmatpush1.bf16.msra.mxu0 %v146
    %188 = vmatprep.subr.bf16.mxu0 0
    %189 = vmatpush1.bf16.msra.mxu0 %v147
    %190 = vmatprep.subr.bf16.mxu0 0
    %191 = vmatpush1.bf16.msra.mxu0 %v148
    %192 = vmatprep.subr.bf16.mxu0 0
    %193 = vmatpush1.bf16.msra.mxu0 %v149
    %194 = vmatprep.subr.bf16.mxu0 0
    %195 = vmatpush1.bf16.msra.mxu0 %v150
    %196 = vmatprep.subr.bf16.mxu0 0
    %197 = vmatpush1.bf16.msra.mxu0 %v151
    %198 = vmatprep.subr.bf16.mxu0 0
    %199 = vmatpush1.bf16.msra.mxu0 %v152
    %200 = vmatprep.subr.bf16.mxu0 0
    %201 = vmatpush1.bf16.msra.mxu0 %v153
    %202 = vmatprep.mubr.bf16.mxu0 %v34
    %203 = vmatmul.mubr.bf16.gmra.mrb[0].mxu0 %v33
    %v204 = vpop.f32.mrb[0].mxu0
    %v205 = vadd.f32 %v72, %v204
    %v206 = vpop.f32.mrb[0].mxu0
    %v207 = vpop.f32.mrb[0].mxu0
    %v208 = vpop.f32.mrb[0].mxu0
    %209 = vdwg.mxu0
    %v210 = vtanh.pop %v205
    %v212 = vcombine.high %v210, %v210
    %v214 = vld [vmem:[%s3] sm:$0x1]
    %v216 = vlaneseq
    %v217 = vshrl.u32 %v216, 7
    %v218 = vsub.s32 0, %v217
    %v219 = vrot.slane %v214, %v218
    %v221 = vmul.f32 %v210, %v219
    %v222 = vmul.f32 %v212, %v219
    %vm223 = vcmask 27648
    %v224 = vsel %vm223, %v221, 0.0
    %225 = vadd.xlane.f32.xlu0 %v224
    %v226 = vpop.xlane.xlu0 %225
    %v227 = vsel %vm223, %v222, 0.0
    %228 = vadd.xlane.f32.xlu0 %v227
    %v229 = vpop.xlane.xlu0 %228
    %v232 = vlaneseq
    %v233 = vand.u32 %v232, 127
    %v234 = vlaneseq
    %v235 = vshrl.u32 %v234, 7
    %v236 = vsub.s32 %v233, %v235
    %v237 = vrot.slane %v226, %v236
    %v238 = vlaneseq
    %v239 = vshrl.u32 %v238, 7
    %v240 = vsub.s32 %v233, %v239
    %v241 = vrot.slane %v229, %v240
    %vm242 = vcmask 1041409
    %v243 = vsel %vm242, %v241, %v237
    %vm245 = vcmask 25600
    %v246 = vsel %vm245, %v243, -inf
    %247 = vmax.xlane.f32.xlu0 %v246
    %v248 = vpop.xlane.xlu0 %247
    %v250 = vlaneseq
    %v251 = vshrl.u32 %v250, 7
    %v252 = vsub.s32 0, %v251
    %v253 = vrot.slane %v248, %v252
    %v254 = vlaneseq
    %v255 = vshrl.u32 %v254, 7
    %v256 = vsub.s32 1, %v255
    %v257 = vrot.slane %v248, %v256
    %v260 = vsub.f32 %v226, %v253
    %v261 = vsub.f32 %v229, %v257
    %v262 = vmul.f32 %v260, 1.442695
    %v263 = vpow.pop %v262
    %v264 = vmul.f32 %v261, 1.442695
    %v265 = vpow.pop %v264
    %268 = vset.pattern.permute.xlu0 0
    %269 = vperm.xlu0 %268, %v263
    %v270 = vpop.permute.xlu0 %269
    %271 = vset.pattern.permute.xlu0 0
    %272 = vperm.xlu0 %271, %v265
    %v273 = vpop.permute.xlu0 %272
    %v274 = vlaneseq
    %v275 = vshrl.u32 %v274, 7
    %v276 = vsub.s32 %v233, %v275
    %v277 = vrot.slane %v270, %v276
    %v278 = vlaneseq
    %v279 = vshrl.u32 %v278, 7
    %v280 = vsub.s32 %v233, %v279
    %v281 = vrot.slane %v273, %v280
    %v282 = vsel %vm242, %v281, %v277
    %v284 = vsel %vm245, %v282, 0.0
    %285 = vadd.xlane.f32.xlu0 %v284
    %v286 = vpop.xlane.xlu0 %285
    %v288 = vlaneseq
    %v289 = vshrl.u32 %v288, 7
    %v290 = vsub.s32 0, %v289
    %v291 = vrot.slane %v286, %v290
    %v292 = vlaneseq
    %v293 = vshrl.u32 %v292, 7
    %v294 = vsub.s32 1, %v293
    %v295 = vrot.slane %v286, %v294
    %v298 = vrcp.pop %v291
    %v299 = vmul.f32 %v263, %v298
    %v300 = vrcp.pop %v295
    %v301 = vmul.f32 %v265, %v300
    %303 = vset.pattern.permute.xlu0 0
    %304 = vperm.xlu0 %303, %v299
    %v305 = vpop.permute.xlu0 %304
    %307 = vset.pattern.permute.xlu0 0
    %308 = vperm.xlu0 %307, %v301
    %v309 = vpop.permute.xlu0 %308
    %v311 = vunpack.c.l.s4 839922192
    %v312 = vunpack.c.0.s8 %v311
    %v313 = vlaneseq
    %v314 = vshrl.u32 %v313, 7
    %v315 = vsub.s32 %v312, %v314
    %v316 = vrot.slane %v305, %v315
    %v318 = vunpack.c.l.s4 839922192
    %v319 = vunpack.c.0.s8 %v318
    %v320 = vlaneseq
    %v321 = vshrl.u32 %v320, 7
    %v322 = vsub.s32 %v319, %v321
    %v323 = vrot.slane %v309, %v322
    %v326 = vmul.f32 %v25, %v316
    %v327 = vmul.f32 %v26, %v323
    %v330 = vcombine.high %v326, %v326
    %v331 = vcombine.high %v327, %v327
    %vm334 = vcmask 1043456
    %v335 = vsel %vm334, %v326, 0.0
    %v336 = vrot.slane %v335, 4
    %v337 = vadd.f32 %v335, %v336
    %v338 = vrot.slane %v337, 2
    %v339 = vadd.f32 %v337, %v338
    %v340 = vrot.slane %v339, 1
    %v341 = vadd.f32 %v339, %v340
    %v342 = vsel %vm334, %v330, 0.0
    %v343 = vrot.slane %v342, 4
    %v344 = vadd.f32 %v342, %v343
    %v345 = vrot.slane %v344, 2
    %v346 = vadd.f32 %v344, %v345
    %v347 = vrot.slane %v346, 1
    %v348 = vadd.f32 %v346, %v347
    %v349 = vsel %vm334, %v327, 0.0
    %v350 = vrot.slane %v349, 4
    %v351 = vadd.f32 %v349, %v350
    %v352 = vrot.slane %v351, 2
    %v353 = vadd.f32 %v351, %v352
    %v354 = vrot.slane %v353, 1
    %v355 = vadd.f32 %v353, %v354
    %v356 = vsel %vm334, %v331, 0.0
    %v357 = vrot.slane %v356, 4
    %v358 = vadd.f32 %v356, %v357
    %v359 = vrot.slane %v358, 2
    %v360 = vadd.f32 %v358, %v359
    %v361 = vrot.slane %v360, 1
    %v362 = vadd.f32 %v360, %v361
    %v363 = vld [vmem:[%s4] sm:$0xff]
    %v364 = vld [vmem:[%s4 + $0x8] sm:$0xff]
    %v365 = vld [vmem:[%s4 + $0x10] sm:$0xff]
    %v366 = vld [vmem:[%s4 + $0x18] sm:$0xff]
    %v367 = vld [vmem:[%s4 + $0x20] sm:$0xff]
    %v368 = vld [vmem:[%s4 + $0x28] sm:$0xff]
    %v369 = vld [vmem:[%s4 + $0x30] sm:$0xff]
    %v370 = vld [vmem:[%s4 + $0x38] sm:$0xff]
    %v371 = vld [vmem:[%s4 + $0x40] sm:$0xff]
    %v372 = vld [vmem:[%s4 + $0x48] sm:$0xff]
    %v373 = vld [vmem:[%s4 + $0x50] sm:$0xff]
    %v374 = vld [vmem:[%s4 + $0x58] sm:$0xff]
    %v375 = vld [vmem:[%s4 + $0x60] sm:$0xff]
    %v376 = vld [vmem:[%s4 + $0x68] sm:$0xff]
    %v377 = vld [vmem:[%s4 + $0x70] sm:$0xff]
    %v378 = vld [vmem:[%s4 + $0x78] sm:$0xff]
    %v379 = vld [vmem:[%s4 + $0x80] sm:$0xff]
    %v380 = vld [vmem:[%s4 + $0x88] sm:$0xff]
    %v381 = vld [vmem:[%s4 + $0x90] sm:$0xff]
    %v382 = vld [vmem:[%s4 + $0x98] sm:$0xff]
    %v383 = vld [vmem:[%s4 + $0xa0] sm:$0xff]
    %v384 = vld [vmem:[%s4 + $0xa8] sm:$0xff]
    %v385 = vld [vmem:[%s4 + $0xb0] sm:$0xff]
    %v386 = vld [vmem:[%s4 + $0xb8] sm:$0xff]
    %v387 = vld [vmem:[%s4 + $0xc0] sm:$0xff]
    %v388 = vld [vmem:[%s4 + $0xc8] sm:$0xff]
    %v389 = vld [vmem:[%s4 + $0xd0] sm:$0xff]
    %v390 = vld [vmem:[%s4 + $0xd8] sm:$0xff]
    %v391 = vld [vmem:[%s4 + $0xe0] sm:$0xff]
    %v392 = vld [vmem:[%s4 + $0xe8] sm:$0xff]
    %v393 = vld [vmem:[%s4 + $0xf0] sm:$0xff]
    %v394 = vld [vmem:[%s4 + $0xf8] sm:$0xff]
    %v395 = vld [vmem:[%s5] sm:$0x1]
    %v397 = vlaneseq
    %v398 = vshrl.u32 %v397, 7
    %v399 = vsub.s32 0, %v398
    %v400 = vrot.slane %v395, %v399
    %v406 = vsel %vm242, %v355, %v341
    %v407 = vsel %vm242, %v362, %v348
    %410 = vmatprep.subr.mxu0 0.0
    %411 = vmatpush1.msra.mxu0 %v363
    %412 = vmatprep.subr.mxu0 0.0
    %413 = vmatpush1.msra.mxu0 %v364
    %414 = vmatprep.subr.mxu0 0.0
    %415 = vmatpush1.msra.mxu0 %v365
    %416 = vmatprep.subr.mxu0 0.0
    %417 = vmatpush1.msra.mxu0 %v366
    %418 = vmatprep.subr.mxu0 0.0
    %419 = vmatpush1.msra.mxu0 %v367
    %420 = vmatprep.subr.mxu0 0.0
    %421 = vmatpush1.msra.mxu0 %v368
    %422 = vmatprep.subr.mxu0 0.0
    %423 = vmatpush1.msra.mxu0 %v369
    %424 = vmatprep.subr.mxu0 0.0
    %425 = vmatpush1.msra.mxu0 %v370
    %426 = vmatprep.subr.mxu0 0.0
    %427 = vmatpush1.msra.mxu0 %v371
    %428 = vmatprep.subr.mxu0 0.0
    %429 = vmatpush1.msra.mxu0 %v372
    %430 = vmatprep.subr.mxu0 0.0
    %431 = vmatpush1.msra.mxu0 %v373
    %432 = vmatprep.subr.mxu0 0.0
    %433 = vmatpush1.msra.mxu0 %v374
    %434 = vmatprep.subr.mxu0 0.0
    %435 = vmatpush1.msra.mxu0 %v375
    %436 = vmatprep.subr.mxu0 0.0
    %437 = vmatpush1.msra.mxu0 %v376
    %438 = vmatprep.subr.mxu0 0.0
    %439 = vmatpush1.msra.mxu0 %v377
    %440 = vmatprep.subr.mxu0 0.0
    %441 = vmatpush1.msra.mxu0 %v378
    %442 = vmatprep.subr.mxu0 0.0
    %443 = vmatpush1.msra.mxu0 %v379
    %444 = vmatprep.subr.mxu0 0.0
    %445 = vmatpush1.msra.mxu0 %v380
    %446 = vmatprep.subr.mxu0 0.0
    %447 = vmatpush1.msra.mxu0 %v381
    %448 = vmatprep.subr.mxu0 0.0
    %449 = vmatpush1.msra.mxu0 %v382
    %450 = vmatprep.subr.mxu0 0.0
    %451 = vmatpush1.msra.mxu0 %v383
    %452 = vmatprep.subr.mxu0 0.0
    %453 = vmatpush1.msra.mxu0 %v384
    %454 = vmatprep.subr.mxu0 0.0
    %455 = vmatpush1.msra.mxu0 %v385
    %456 = vmatprep.subr.mxu0 0.0
    %457 = vmatpush1.msra.mxu0 %v386
    %458 = vmatprep.subr.mxu0 0.0
    %459 = vmatpush1.msra.mxu0 %v387
    %460 = vmatprep.subr.mxu0 0.0
    %461 = vmatpush1.msra.mxu0 %v388
    %462 = vmatprep.subr.mxu0 0.0
    %463 = vmatpush1.msra.mxu0 %v389
    %464 = vmatprep.subr.mxu0 0.0
    %465 = vmatpush1.msra.mxu0 %v390
    %466 = vmatprep.subr.mxu0 0.0
    %467 = vmatpush1.msra.mxu0 %v391
    %468 = vmatprep.subr.mxu0 0.0
    %469 = vmatpush1.msra.mxu0 %v392
    %470 = vmatprep.subr.mxu0 0.0
    %471 = vmatpush1.msra.mxu0 %v393
    %472 = vmatprep.subr.mxu0 0.0
    %473 = vmatpush1.msra.mxu0 %v394
    %474 = vmatprep.mubr.f32.mxu0 %v407
    %475 = vmatmul.mubr.f32.gmra.mrb[0].mxu0 %v406
    %v476 = vpop.f32.mrb[0].mxu0
    %v477 = vadd.f32 %v400, %v476
    %v478 = vpop.f32.mrb[0].mxu0
    %479 = vdwg.mxu0
    %v480 = vsel %vm245, %v477, -inf
    %481 = vmax.xlane.f32.xlu0 %v480
    %v482 = vpop.xlane.xlu0 %481
    %v483 = vsub.f32 %v477, %v482
    %v484 = vmul.f32 %v483, 1.442695
    %v485 = vpow.pop %v484
    %v486 = vsel %vm245, %v485, 0.0
    %487 = vadd.xlane.f32.xlu0 %v486
    %v488 = vpop.xlane.xlu0 %487
    %v489 = vlog2.pop %v488
    %v490 = vmul.f32 %v489, 0.6931472
    %v491 = vsub.f32 %v483, %v490
    %492 = vst.msk [vmem:[#allocation2] sm:$0x3] %vm245, %v491
    // Predicated region
    $region26: #{han_forward.11} parent=1 // pred_check
      _
    $region27: #{han_forward.11} parent=1 // pred_check_branch
      %494 = sbr.rel (0) target = $region29
    $region28: #{han_forward.11} parent=1 // pred_region
      %s496 = ssub.s32 32, 32
      %497 = vsyncadd [#allocation3], %s496
      %s499 = sshll.u32 [#allocation2], 4
      %s500 = int_to_ptr.vmem [resolvable:$true] %s499
      %502 = dma.vmem_to_hbm [thread:$0]  %s500, 32, %s6, [#allocation3]
    $region29: #{han_forward.11} parent=1 // pred_fallthru
      _
    // Predicated region
    $region30: #{han_forward.11} parent=1 // pred_check
      _
    $region31: #{han_forward.11} parent=1 // pred_check_branch
      %504 = sbr.rel (0) target = $region33
    $region32: #{han_forward.11} parent=1 // pred_region
      %505 = dma.done [#allocation3], 32
    $region33: #{han_forward.11} parent=1 // pred_fallthru
      _
    %506 = vsyncpa [#allocation3], 1

</llo_original>
